<compile_context>
chip_gen: v5e
topology: v5e:2x2
jax: 0.10.0
libtpu: 0.0.40
codegen_flags: <defaults>
</compile_context>

<pallas_src>
import functools

import jax
import jax.numpy as jnp
from jax.experimental import pallas as pl
from jax.experimental.pallas import tpu as pltpu


def _round_up(n, m):
    return ((n + m - 1) // m) * m


def _vmem_limit_bytes():
    # Scoped-VMEM budget per generation: ~96 MiB on 128-MiB parts (v5e/v6e),
    # ~48 MiB on v7x (64 MiB physical). Falls back gracefully if the query
    # is unavailable.
    try:
        cap = int(pltpu.get_tpu_info().vmem_capacity_bytes)
    except Exception:
        cap = 64 * 1024 * 1024
    return int(min(cap * 3 // 4, 96 * 1024 * 1024))


def _pick_tm(n, target=512):
    # Big row tiles always (85%+ of HBM roofline at 512 vs ~30% at 64-128);
    # ragged last tile is handled by pl.cdiv grid + masked boundary blocks.
    if n >= target:
        return target
    return max(8, _round_up(n, 8))


# ----------------------------------------------------------------------------
# Kernel 1: fused proj_in (1x1) + 7x7 depthwise conv
# ----------------------------------------------------------------------------
def _front_kernel(x_ref, wy_ref, by_ref, wd_ref, bd_ref, wdw_ref, bdw_ref,
                  y_ref, dw_ref, xp_ref, *, H, W, K, th, col0, scale):
    """grid = (B, n_strips). Per image: strip 0 projects the resident image
    into the zero-haloed scratch (and writes the y slab); every strip then
    computes its th output rows of the depthwise conv from the scratch."""
    pad = (K - 1) // 2
    Hp, Wp, Cd = xp_ref.shape
    s = pl.program_id(1)

    @pl.when(s == 0)
    def _():
        zdt = xp_ref.dtype
        # Zero only the halo border; the interior is fully overwritten below.
        # Done per image so it stays correct if the batch axis is split across
        # TensorCores (each core owns its own scratch instance).
        xp_ref[0:pad, :, :] = jnp.zeros((pad, Wp, Cd), zdt)
        xp_ref[pad + H:, :, :] = jnp.zeros((Hp - pad - H, Wp, Cd), zdt)
        xp_ref[:, 0:col0, :] = jnp.zeros((Hp, col0, Cd), zdt)
        xp_ref[:, col0 + W:, :] = jnp.zeros((Hp, Wp - col0 - W, Cd), zdt)

        # Fused proj_in: whole image is resident -> MXU matmuls straight into
        # the padded scratch (px never goes to HBM) + the tiny y projection.
        xf = x_ref[0].reshape(H * W, x_ref.shape[-1]).astype(jnp.float32)
        yv = (jnp.dot(xf, wy_ref[...], preferred_element_type=jnp.float32)
              + by_ref[...])
        y_ref[0] = yv.reshape(H, W, y_ref.shape[-1]).astype(y_ref.dtype)
        xd = (jnp.dot(xf, wd_ref[...], preferred_element_type=jnp.float32)
              + bd_ref[...])
        xp_ref[pad:pad + H, col0:col0 + W, :] = xd.reshape(H, W, Cd).astype(zdt)

    # 7x7 depthwise conv for this output row strip. Each tap window is loaded
    # directly from the scratch ref (bounded live ranges; no 49x-sliced band).
    r0 = pl.multiple_of(s * th, th)
    acc = jnp.zeros((th, W, Cd), jnp.float32)
    for ki in range(K):
        for kj in range(K):
            cj = col0 - pad + kj
            tap = xp_ref[pl.ds(r0 + ki, th), cj:cj + W, :].astype(jnp.float32)
            acc = acc + tap * wdw_ref[ki * K + kj, :]
    acc = acc + bdw_ref[0]
    if scale != 1.0:                 # static check: skip the mul when scale==1
        acc = acc * scale
    dw_ref[0] = acc.astype(dw_ref.dtype)


def front_conv(x_nhwc, w_in, b_in, w_dw, b_dw, dims, scale, K, slab_dtype):
    B, H, W, dim = x_nhwc.shape
    dims0 = dims[0]
    sumd = sum(dims)
    pad = (K - 1) // 2

    # Split proj_in so y and xdw come from two clean matmuls (no in-kernel
    # lane-slicing of the px value, and only sum(dims) channels are stored).
    w_y, w_d = w_in[:, :dims0], w_in[:, dims0:]
    b_y, b_d = b_in[:, :dims0], b_in[:, dims0:]

    th = min(8, H)
    n_strips = pl.cdiv(H, th)
    col0 = _round_up(pad, 8)                  # 8-aligned image columns
    Hp = n_strips * th + 2 * pad              # covers ragged-last-strip reads
    Wp = col0 + W + pad

    kernel = functools.partial(_front_kernel, H=H, W=W, K=K, th=th,
                               col0=col0, scale=scale)
    y, dw = pl.pallas_call(
        kernel,
        out_shape=(jax.ShapeDtypeStruct((B, H, W, dims0), slab_dtype),
                   jax.ShapeDtypeStruct((B, H, W, sumd), slab_dtype)),
        grid=(B, n_strips),
        in_specs=[pl.BlockSpec((1, H, W, dim), lambda bi, s: (bi, 0, 0, 0)),
                  pl.BlockSpec(w_y.shape, lambda bi, s: (0, 0)),
                  pl.BlockSpec(b_y.shape, lambda bi, s: (0, 0)),
                  pl.BlockSpec(w_d.shape, lambda bi, s: (0, 0)),
                  pl.BlockSpec(b_d.shape, lambda bi, s: (0, 0)),
                  pl.BlockSpec(w_dw.shape, lambda bi, s: (0, 0)),
                  pl.BlockSpec(b_dw.shape, lambda bi, s: (0, 0))],
        out_specs=(pl.BlockSpec((1, H, W, dims0), lambda bi, s: (bi, 0, 0, 0)),
                   pl.BlockSpec((1, th, W, sumd), lambda bi, s: (bi, s, 0, 0))),
        scratch_shapes=[pltpu.VMEM((Hp, Wp, sumd), slab_dtype)],
        # Strip axis must stay "arbitrary": the scratch filled at strip 0 is
        # reused by later strips of the same image. Batch axis is parallel.
        compiler_params=pltpu.CompilerParams(
            dimension_semantics=("parallel", "arbitrary"),
            vmem_limit_bytes=_vmem_limit_bytes()),
    )(x_nhwc, w_y, b_y, w_d, b_d, w_dw, b_dw)
    return y, dw


# ----------------------------------------------------------------------------
# Kernel 2: fused gated chain + proj_out
# ----------------------------------------------------------------------------
def _chain_kernel(y_ref, dw_ref, *rest, dims):
    """rest = (proj_w0, proj_b0, ..., w_out, b_out, o_ref). All intermediates
    stay in VMEM/vregs; inputs are bf16 slabs, compute is f32."""
    o_ref = rest[-1]
    w_out_ref, b_out_ref = rest[-3], rest[-2]
    proj_refs = rest[:-3]

    dw = dw_ref[...].astype(jnp.float32)
    cur = y_ref[...].astype(jnp.float32) * dw[:, :dims[0]]
    off = dims[0]
    for i in range(len(dims) - 1):
        w = proj_refs[2 * i][...]
        b = proj_refs[2 * i + 1][...]
        cout = w.shape[1]
        # Tiny-cin matmuls also go to the MXU: the extended slot is idle in
        # these stages and this avoids per-k lane broadcasts on the VPU/XLU.
        cur = (jnp.dot(cur, w, preferred_element_type=jnp.float32) + b) \
              * dw[:, off:off + cout]
        off += cout
    out = (jnp.dot(cur, w_out_ref[...], preferred_element_type=jnp.float32)
           + b_out_ref[...])
    o_ref[...] = out.astype(o_ref.dtype)


def gated_chain(y, dw, proj_w, proj_b, w_out, b_out, dims, out_dtype, tm):
    N, dims0 = y.shape
    sumd = dw.shape[1]
    dim = w_out.shape[1]
    kernel = functools.partial(_chain_kernel, dims=tuple(dims))
    args = [y, dw]
    in_specs = [pl.BlockSpec((tm, dims0), lambda i: (i, 0)),
                pl.BlockSpec((tm, sumd), lambda i: (i, 0))]
    for wi, bi in zip(proj_w, proj_b):
        in_specs.append(pl.BlockSpec(wi.shape, lambda i: (0, 0)))
        in_specs.append(pl.BlockSpec(bi.shape, lambda i: (0, 0)))
        args += [wi, bi]
    in_specs.append(pl.BlockSpec(w_out.shape, lambda i: (0, 0)))
    in_specs.append(pl.BlockSpec(b_out.shape, lambda i: (0, 0)))
    args += [w_out, b_out]
    return pl.pallas_call(
        kernel,
        out_shape=jax.ShapeDtypeStruct((N, dim), out_dtype),
        grid=(pl.cdiv(N, tm),),          # ragged last tile handled by masking
        in_specs=in_specs,
        out_specs=pl.BlockSpec((tm, dim), lambda i: (i, 0)),
        compiler_params=pltpu.CompilerParams(
            dimension_semantics=("parallel",),
            vmem_limit_bytes=_vmem_limit_bytes()),
    )(*args)


# ----------------------------------------------------------------------------
# gnConv module (params + forward)
# ----------------------------------------------------------------------------
def init_gnconv_params(key, dim, order=5, kernel_size=7):
    dims = [dim // 2 ** i for i in range(order)]
    dims.reverse()                      # e.g. dim=32 -> [2, 4, 8, 16, 32]
    sd = sum(dims)
    keys = iter(jax.random.split(key, 64))

    def conv_w(cin, cout):              # fan-in scaled so signals stay O(1)
        return jax.random.normal(next(keys), (cin, cout), jnp.float32) / jnp.sqrt(cin)

    def conv_b(cout):
        return 0.1 * jax.random.normal(next(keys), (1, cout), jnp.float32)

    p = {
        # proj_in: Conv2d(dim, 2*dim, 1), weights stored as (Cin, Cout)
        "w_in": conv_w(dim, 2 * dim), "b_in": conv_b(2 * dim),
        # dwconv: Conv2d(sd, sd, 7, padding=3, groups=sd) -> taps (K*K, C)
        "w_dw": jax.random.normal(next(keys), (kernel_size * kernel_size, sd),
                                  jnp.float32) / kernel_size,
        "b_dw": 0.1 * jax.random.normal(next(keys), (1, sd), jnp.float32),
        # projs[i]: Conv2d(dims[i], dims[i+1], 1)
        "proj_w": [conv_w(dims[i], dims[i + 1]) for i in range(order - 1)],
        "proj_b": [conv_b(dims[i + 1]) for i in range(order - 1)],
        # proj_out: Conv2d(dim, dim, 1)
        "w_out": conv_w(dim, dim), "b_out": conv_b(dim),
    }
    return p, dims


def gnconv_forward(x_nchw, params, dims, scale=1.0, kernel_size=7, tm=512,
                   slab_dtype=jnp.bfloat16):
    B, dim, H, W = x_nchw.shape
    x = jnp.transpose(x_nchw, (0, 2, 3, 1))              # NCHW -> NHWC
    N = B * H * W

    # 1) fused proj_in + 7x7 depthwise (px never touches HBM; bf16 slabs out).
    y, dw = front_conv(x, params["w_in"], params["b_in"],
                       params["w_dw"], params["b_dw"], dims,
                       scale=scale, K=kernel_size, slab_dtype=slab_dtype)

    # 2) fused gated chain + proj_out in one row-tiled kernel.
    tm = _pick_tm(N, tm)
    out_flat = gated_chain(y.reshape(N, dims[0]), dw.reshape(N, sum(dims)),
                           params["proj_w"], params["proj_b"],
                           params["w_out"], params["b_out"], dims,
                           out_dtype=x_nchw.dtype, tm=tm)
    return jnp.transpose(out_flat.reshape(B, H, W, dim), (0, 3, 1, 2))


# ----------------------------------------------------------------------------
# Pure-JAX reference (same math, same params) for a sanity check
# ----------------------------------------------------------------------------
def ref_forward(x_nchw, params, dims, scale=1.0, K=7):
    B, dim, H, W = x_nchw.shape
    sd = sum(dims)
    x = jnp.transpose(x_nchw, (0, 2, 3, 1))
    px = jnp.einsum("bhwc,cd->bhwd", x, params["w_in"],
                    precision="highest") + params["b_in"][0]
    y = px[..., :dims[0]]
    xdw = px[..., dims[0]:]
    pad = (K - 1) // 2
    xp = jnp.pad(xdw, ((0, 0), (pad, pad), (pad, pad), (0, 0)))
    acc = jnp.zeros((B, H, W, sd), jnp.float32)
    for ki in range(K):
        for kj in range(K):
            acc = acc + xp[:, ki:ki + H, kj:kj + W, :] * params["w_dw"][ki * K + kj]
    dw = (acc + params["b_dw"][0]) * scale
    offs = [0]
    for d in dims:
        offs.append(offs[-1] + d)
    cur = y * dw[..., offs[0]:offs[1]]
    for i in range(len(dims) - 1):
        cur = (jnp.einsum("bhwc,cd->bhwd", cur, params["proj_w"][i],
                          precision="highest") + params["proj_b"][i][0]) \
              * dw[..., offs[i + 1]:offs[i + 2]]
    out = jnp.einsum("bhwc,cd->bhwd", cur, params["w_out"],
                     precision="highest") + params["b_out"][0]
    return jnp.transpose(out, (0, 3, 1, 2))


# ----------------------------------------------------------------------------
if __name__ == "__main__":
    key = jax.random.PRNGKey(0)
    B, dim, H, W = 2, 32, 16, 16          # dim divisible by 2**(order-1)
    order, scale = 5, 1.0

    kx, kp = jax.random.split(key)
    x = jax.random.normal(kx, (B, dim, H, W), jnp.float32)
    params, dims = init_gnconv_params(kp, dim, order=order, kernel_size=7)

    out = gnconv_forward(x, params, dims, scale=scale)
    out = jax.block_until_ready(out)

    ref = ref_forward(x, params, dims, scale=scale)
    assert out.shape == (B, dim, H, W)
    rel_err = float(jnp.max(jnp.abs(out - ref)) / (jnp.max(jnp.abs(ref)) + 1e-8))
    # bf16 inter-kernel slabs (f32 accumulation in-kernel): expect ~1e-2 max
    # relative error vs the f32/precision-highest reference.
    assert rel_err < 3e-2, f"mismatch vs reference: rel err {rel_err}"

    print("KERNEL_OK")
</pallas_src>

<mosaic_0001>
module attributes {stable_mosaic.version = 11 : i64} {
  func.func @_front_kernel(%arg0: i32, %arg1: i32, %arg2: memref<1x16x16x32xf32, #tpu.memory_space<vmem>>, %arg3: memref<32x2xf32, #tpu.memory_space<vmem>>, %arg4: memref<1x2xf32, #tpu.memory_space<vmem>>, %arg5: memref<32x62xf32, #tpu.memory_space<vmem>>, %arg6: memref<1x62xf32, #tpu.memory_space<vmem>>, %arg7: memref<49x62xf32, #tpu.memory_space<vmem>>, %arg8: memref<1x62xf32, #tpu.memory_space<vmem>>, %arg9: memref<1x16x16x2xbf16, #tpu.memory_space<vmem>>, %arg10: memref<1x8x16x62xbf16, #tpu.memory_space<vmem>>, %arg11: memref<22x27x62xbf16, #tpu.memory_space<vmem>>) attributes {dimension_semantics = [#tpu.dimension_semantics<parallel>, #tpu.dimension_semantics<arbitrary>], iteration_bounds = array<i64: 2, 2>, scalar_prefetch = 0 : i64, scratch_operands = 1 : i64, tpu.core_type = #tpu.core_type<tc>, window_params = [{transform_indices = @transform_0, window_bounds = array<i64: 1, 16, 16, 32>}, {pipeline_mode = #tpu.pipeline_mode<synchronous>, transform_indices = @transform_1, window_bounds = array<i64: 32, 2>}, {pipeline_mode = #tpu.pipeline_mode<synchronous>, transform_indices = @transform_2, window_bounds = array<i64: 1, 2>}, {pipeline_mode = #tpu.pipeline_mode<synchronous>, transform_indices = @transform_3, window_bounds = array<i64: 32, 62>}, {pipeline_mode = #tpu.pipeline_mode<synchronous>, transform_indices = @transform_4, window_bounds = array<i64: 1, 62>}, {pipeline_mode = #tpu.pipeline_mode<synchronous>, transform_indices = @transform_5, window_bounds = array<i64: 49, 62>}, {pipeline_mode = #tpu.pipeline_mode<synchronous>, transform_indices = @transform_6, window_bounds = array<i64: 1, 62>}, {transform_indices = @transform_7, window_bounds = array<i64: 1, 16, 16, 2>}, {transform_indices = @transform_8, window_bounds = array<i64: 1, 8, 16, 62>}]} {
    %c0_i32 = arith.constant 0 : i32
    %0 = arith.cmpi eq, %arg1, %c0_i32 : i32
    %1 = arith.extui %0 : i1 to i32
    %c0_i32_0 = arith.constant 0 : i32
    %2 = arith.cmpi ne, %1, %c0_i32_0 : i32
    scf.if %2 {
      %cst_197 = arith.constant 0.000000e+00 : bf16
      %505 = vector.broadcast %cst_197 : bf16 to vector<3x27x62xbf16>
      %c0_198 = arith.constant 0 : index
      %c0_199 = arith.constant 0 : index
      %c0_200 = arith.constant 0 : index
      %506 = vector.load %arg11[%c0_198, %c0_199, %c0_200] : memref<22x27x62xbf16, #tpu.memory_space<vmem>>, vector<3x27x62xbf16>
      tpu.vector_store %arg11[%c0_198, %c0_199, %c0_200], %505 {strides = array<i32>} : memref<22x27x62xbf16, #tpu.memory_space<vmem>>, vector<3x27x62xbf16>,
      %cst_201 = arith.constant 0.000000e+00 : bf16
      %507 = vector.broadcast %cst_201 : bf16 to vector<3x27x62xbf16>
      %c19_202 = arith.constant 19 : index
      %c0_203 = arith.constant 0 : index
      %c0_204 = arith.constant 0 : index
      %508 = vector.load %arg11[%c19_202, %c0_203, %c0_204] : memref<22x27x62xbf16, #tpu.memory_space<vmem>>, vector<3x27x62xbf16>
      tpu.vector_store %arg11[%c19_202, %c0_203, %c0_204], %507 {strides = array<i32>} : memref<22x27x62xbf16, #tpu.memory_space<vmem>>, vector<3x27x62xbf16>,
      %cst_205 = arith.constant 0.000000e+00 : bf16
      %509 = vector.broadcast %cst_205 : bf16 to vector<22x8x62xbf16>
      %c0_206 = arith.constant 0 : index
      %c0_207 = arith.constant 0 : index
      %c0_208 = arith.constant 0 : index
      %510 = vector.load %arg11[%c0_206, %c0_207, %c0_208] : memref<22x27x62xbf16, #tpu.memory_space<vmem>>, vector<22x8x62xbf16>
      tpu.vector_store %arg11[%c0_206, %c0_207, %c0_208], %509 {strides = array<i32>} : memref<22x27x62xbf16, #tpu.memory_space<vmem>>, vector<22x8x62xbf16>,
      %cst_209 = arith.constant 0.000000e+00 : bf16
      %511 = vector.broadcast %cst_209 : bf16 to vector<22x3x62xbf16>
      %c0_210 = arith.constant 0 : index
      %c24_211 = arith.constant 24 : index
      %c0_212 = arith.constant 0 : index
      %512 = vector.load %arg11[%c0_210, %c24_211, %c0_212] : memref<22x27x62xbf16, #tpu.memory_space<vmem>>, vector<22x3x62xbf16>
      tpu.vector_store %arg11[%c0_210, %c24_211, %c0_212], %511 {strides = array<i32>} : memref<22x27x62xbf16, #tpu.memory_space<vmem>>, vector<22x3x62xbf16>,
      %c0_213 = arith.constant 0 : index
      %c0_214 = arith.constant 0 : index
      %c0_215 = arith.constant 0 : index
      %c0_216 = arith.constant 0 : index
      %513 = vector.load %arg2[%c0_213, %c0_214, %c0_215, %c0_216] : memref<1x16x16x32xf32, #tpu.memory_space<vmem>>, vector<1x16x16x32xf32>
      %514 = vector.shape_cast %513 : vector<1x16x16x32xf32> to vector<16x16x32xf32>
      %515 = vector.shape_cast %514 : vector<16x16x32xf32> to vector<256x32xf32>
      %c0_217 = arith.constant 0 : index
      %c0_218 = arith.constant 0 : index
      %516 = vector.load %arg3[%c0_217, %c0_218] : memref<32x2xf32, #tpu.memory_space<vmem>>, vector<32x2xf32>
      %cst_219 = arith.constant dense<0.000000e+00> : vector<256x2xf32>
      %517 = tpu.matmul %515, %516, %cst_219 {dimension_numbers = #tpu.dot_dimension_numbers<[1], [0], [0], [1], [0, 0, 1, 1], [], []>} : vector<256x32xf32>, vector<32x2xf32>, vector<256x2xf32> -> vector<256x2xf32>
      %c0_220 = arith.constant 0 : index
      %c0_221 = arith.constant 0 : index
      %518 = vector.load %arg4[%c0_220, %c0_221] : memref<1x2xf32, #tpu.memory_space<vmem>>, vector<1x2xf32>
      %519 = vector.broadcast %518 : vector<1x2xf32> to vector<256x2xf32>
      %520 = arith.addf %517, %519 : vector<256x2xf32>
      %521 = vector.shape_cast %520 : vector<256x2xf32> to vector<16x16x2xf32>
      %522 = arith.truncf %521 : vector<16x16x2xf32> to vector<16x16x2xbf16>
      %c0_222 = arith.constant 0 : index
      %c0_223 = arith.constant 0 : index
      %c0_224 = arith.constant 0 : index
      %c0_225 = arith.constant 0 : index
      %523 = vector.load %arg9[%c0_222, %c0_223, %c0_224, %c0_225] : memref<1x16x16x2xbf16, #tpu.memory_space<vmem>>, vector<1x16x16x2xbf16>
      %524 = vector.shape_cast %523 : vector<1x16x16x2xbf16> to vector<16x16x2xbf16>
      %525 = vector.shape_cast %522 : vector<16x16x2xbf16> to vector<1x16x16x2xbf16>
      tpu.vector_store %arg9[%c0_222, %c0_223, %c0_224, %c0_225], %525 {strides = array<i32>} : memref<1x16x16x2xbf16, #tpu.memory_space<vmem>>, vector<1x16x16x2xbf16>,
      %c0_226 = arith.constant 0 : index
      %c0_227 = arith.constant 0 : index
      %526 = vector.load %arg5[%c0_226, %c0_227] : memref<32x62xf32, #tpu.memory_space<vmem>>, vector<32x62xf32>
      %cst_228 = arith.constant dense<0.000000e+00> : vector<256x62xf32>
      %527 = tpu.matmul %515, %526, %cst_228 {dimension_numbers = #tpu.dot_dimension_numbers<[1], [0], [0], [1], [0, 0, 1, 1], [], []>} : vector<256x32xf32>, vector<32x62xf32>, vector<256x62xf32> -> vector<256x62xf32>
      %c0_229 = arith.constant 0 : index
      %c0_230 = arith.constant 0 : index
      %528 = vector.load %arg6[%c0_229, %c0_230] : memref<1x62xf32, #tpu.memory_space<vmem>>, vector<1x62xf32>
      %529 = vector.broadcast %528 : vector<1x62xf32> to vector<256x62xf32>
      %530 = arith.addf %527, %529 : vector<256x62xf32>
      %531 = vector.shape_cast %530 : vector<256x62xf32> to vector<16x16x62xf32>
      %532 = arith.truncf %531 : vector<16x16x62xf32> to vector<16x16x62xbf16>
      %c3_231 = arith.constant 3 : index
      %c8_232 = arith.constant 8 : index
      %c0_233 = arith.constant 0 : index
      %533 = vector.load %arg11[%c3_231, %c8_232, %c0_233] : memref<22x27x62xbf16, #tpu.memory_space<vmem>>, vector<16x16x62xbf16>
      tpu.vector_store %arg11[%c3_231, %c8_232, %c0_233], %532 {strides = array<i32>} : memref<22x27x62xbf16, #tpu.memory_space<vmem>>, vector<16x16x62xbf16>,
    } else {
    }
    %c8_i32 = arith.constant 8 : i32
    %3 = arith.muli %arg1, %c8_i32 : i32
    %4 = tpu.assume_multiple %3, 8 : i32
    %cst = arith.constant 0.000000e+00 : f32
    %5 = vector.broadcast %cst : f32 to vector<8x16x62xf32>
    %c0_i32_1 = arith.constant 0 : i32
    %6 = arith.addi %4, %c0_i32_1 : i32
    %7 = arith.index_cast %6 : i32 to index
    %c5 = arith.constant 5 : index
    %c0 = arith.constant 0 : index
    %8 = vector.load %arg11[%7, %c5, %c0] : memref<22x27x62xbf16, #tpu.memory_space<vmem>>, vector<8x16x62xbf16>
    %9 = arith.extf %8 : vector<8x16x62xbf16> to vector<8x16x62xf32>
    %c0_2 = arith.constant 0 : index
    %c0_3 = arith.constant 0 : index
    %10 = vector.load %arg7[%c0_2, %c0_3] : memref<49x62xf32, #tpu.memory_space<vmem>>, vector<1x62xf32>
    %11 = vector.shape_cast %10 : vector<1x62xf32> to vector<62xf32>
    %12 = vector.shape_cast %11 : vector<62xf32> to vector<1x1x62xf32>
    %13 = vector.broadcast %12 : vector<1x1x62xf32> to vector<8x16x62xf32>
    %14 = arith.mulf %9, %13 : vector<8x16x62xf32>
    %15 = arith.addf %5, %14 : vector<8x16x62xf32>
    %c0_i32_4 = arith.constant 0 : i32
    %16 = arith.addi %4, %c0_i32_4 : i32
    %17 = arith.index_cast %16 : i32 to index
    %c6 = arith.constant 6 : index
    %c0_5 = arith.constant 0 : index
    %18 = vector.load %arg11[%17, %c6, %c0_5] : memref<22x27x62xbf16, #tpu.memory_space<vmem>>, vector<8x16x62xbf16>
    %19 = arith.extf %18 : vector<8x16x62xbf16> to vector<8x16x62xf32>
    %c1 = arith.constant 1 : index
    %c0_6 = arith.constant 0 : index
    %20 = vector.load %arg7[%c1, %c0_6] : memref<49x62xf32, #tpu.memory_space<vmem>>, vector<1x62xf32>
    %21 = vector.shape_cast %20 : vector<1x62xf32> to vector<62xf32>
    %22 = vector.shape_cast %21 : vector<62xf32> to vector<1x1x62xf32>
    %23 = vector.broadcast %22 : vector<1x1x62xf32> to vector<8x16x62xf32>
    %24 = arith.mulf %19, %23 : vector<8x16x62xf32>
    %25 = arith.addf %15, %24 : vector<8x16x62xf32>
    %c0_i32_7 = arith.constant 0 : i32
    %26 = arith.addi %4, %c0_i32_7 : i32
    %27 = arith.index_cast %26 : i32 to index
    %c7 = arith.constant 7 : index
    %c0_8 = arith.constant 0 : index
    %28 = vector.load %arg11[%27, %c7, %c0_8] : memref<22x27x62xbf16, #tpu.memory_space<vmem>>, vector<8x16x62xbf16>
    %29 = arith.extf %28 : vector<8x16x62xbf16> to vector<8x16x62xf32>
    %c2 = arith.constant 2 : index
    %c0_9 = arith.constant 0 : index
    %30 = vector.load %arg7[%c2, %c0_9] : memref<49x62xf32, #tpu.memory_space<vmem>>, vector<1x62xf32>
    %31 = vector.shape_cast %30 : vector<1x62xf32> to vector<62xf32>
    %32 = vector.shape_cast %31 : vector<62xf32> to vector<1x1x62xf32>
    %33 = vector.broadcast %32 : vector<1x1x62xf32> to vector<8x16x62xf32>
    %34 = arith.mulf %29, %33 : vector<8x16x62xf32>
    %35 = arith.addf %25, %34 : vector<8x16x62xf32>
    %c0_i32_10 = arith.constant 0 : i32
    %36 = arith.addi %4, %c0_i32_10 : i32
    %37 = arith.index_cast %36 : i32 to index
    %c8 = arith.constant 8 : index
    %c0_11 = arith.constant 0 : index
    %38 = vector.load %arg11[%37, %c8, %c0_11] : memref<22x27x62xbf16, #tpu.memory_space<vmem>>, vector<8x16x62xbf16>
    %39 = arith.extf %38 : vector<8x16x62xbf16> to vector<8x16x62xf32>
    %c3 = arith.constant 3 : index
    %c0_12 = arith.constant 0 : index
    %40 = vector.load %arg7[%c3, %c0_12] : memref<49x62xf32, #tpu.memory_space<vmem>>, vector<1x62xf32>
    %41 = vector.shape_cast %40 : vector<1x62xf32> to vector<62xf32>
    %42 = vector.shape_cast %41 : vector<62xf32> to vector<1x1x62xf32>
    %43 = vector.broadcast %42 : vector<1x1x62xf32> to vector<8x16x62xf32>
    %44 = arith.mulf %39, %43 : vector<8x16x62xf32>
    %45 = arith.addf %35, %44 : vector<8x16x62xf32>
    %c0_i32_13 = arith.constant 0 : i32
    %46 = arith.addi %4, %c0_i32_13 : i32
    %47 = arith.index_cast %46 : i32 to index
    %c9 = arith.constant 9 : index
    %c0_14 = arith.constant 0 : index
    %48 = vector.load %arg11[%47, %c9, %c0_14] : memref<22x27x62xbf16, #tpu.memory_space<vmem>>, vector<8x16x62xbf16>
    %49 = arith.extf %48 : vector<8x16x62xbf16> to vector<8x16x62xf32>
    %c4 = arith.constant 4 : index
    %c0_15 = arith.constant 0 : index
    %50 = vector.load %arg7[%c4, %c0_15] : memref<49x62xf32, #tpu.memory_space<vmem>>, vector<1x62xf32>
    %51 = vector.shape_cast %50 : vector<1x62xf32> to vector<62xf32>
    %52 = vector.shape_cast %51 : vector<62xf32> to vector<1x1x62xf32>
    %53 = vector.broadcast %52 : vector<1x1x62xf32> to vector<8x16x62xf32>
    %54 = arith.mulf %49, %53 : vector<8x16x62xf32>
    %55 = arith.addf %45, %54 : vector<8x16x62xf32>
    %c0_i32_16 = arith.constant 0 : i32
    %56 = arith.addi %4, %c0_i32_16 : i32
    %57 = arith.index_cast %56 : i32 to index
    %c10 = arith.constant 10 : index
    %c0_17 = arith.constant 0 : index
    %58 = vector.load %arg11[%57, %c10, %c0_17] : memref<22x27x62xbf16, #tpu.memory_space<vmem>>, vector<8x16x62xbf16>
    %59 = arith.extf %58 : vector<8x16x62xbf16> to vector<8x16x62xf32>
    %c5_18 = arith.constant 5 : index
    %c0_19 = arith.constant 0 : index
    %60 = vector.load %arg7[%c5_18, %c0_19] : memref<49x62xf32, #tpu.memory_space<vmem>>, vector<1x62xf32>
    %61 = vector.shape_cast %60 : vector<1x62xf32> to vector<62xf32>
    %62 = vector.shape_cast %61 : vector<62xf32> to vector<1x1x62xf32>
    %63 = vector.broadcast %62 : vector<1x1x62xf32> to vector<8x16x62xf32>
    %64 = arith.mulf %59, %63 : vector<8x16x62xf32>
    %65 = arith.addf %55, %64 : vector<8x16x62xf32>
    %c0_i32_20 = arith.constant 0 : i32
    %66 = arith.addi %4, %c0_i32_20 : i32
    %67 = arith.index_cast %66 : i32 to index
    %c11 = arith.constant 11 : index
    %c0_21 = arith.constant 0 : index
    %68 = vector.load %arg11[%67, %c11, %c0_21] : memref<22x27x62xbf16, #tpu.memory_space<vmem>>, vector<8x16x62xbf16>
    %69 = arith.extf %68 : vector<8x16x62xbf16> to vector<8x16x62xf32>
    %c6_22 = arith.constant 6 : index
    %c0_23 = arith.constant 0 : index
    %70 = vector.load %arg7[%c6_22, %c0_23] : memref<49x62xf32, #tpu.memory_space<vmem>>, vector<1x62xf32>
    %71 = vector.shape_cast %70 : vector<1x62xf32> to vector<62xf32>
    %72 = vector.shape_cast %71 : vector<62xf32> to vector<1x1x62xf32>
    %73 = vector.broadcast %72 : vector<1x1x62xf32> to vector<8x16x62xf32>
    %74 = arith.mulf %69, %73 : vector<8x16x62xf32>
    %75 = arith.addf %65, %74 : vector<8x16x62xf32>
    %c1_i32 = arith.constant 1 : i32
    %76 = arith.addi %4, %c1_i32 : i32
    %77 = arith.index_cast %76 : i32 to index
    %c5_24 = arith.constant 5 : index
    %c0_25 = arith.constant 0 : index
    %78 = vector.load %arg11[%77, %c5_24, %c0_25] : memref<22x27x62xbf16, #tpu.memory_space<vmem>>, vector<8x16x62xbf16>
    %79 = arith.extf %78 : vector<8x16x62xbf16> to vector<8x16x62xf32>
    %c7_26 = arith.constant 7 : index
    %c0_27 = arith.constant 0 : index
    %80 = vector.load %arg7[%c7_26, %c0_27] : memref<49x62xf32, #tpu.memory_space<vmem>>, vector<1x62xf32>
    %81 = vector.shape_cast %80 : vector<1x62xf32> to vector<62xf32>
    %82 = vector.shape_cast %81 : vector<62xf32> to vector<1x1x62xf32>
    %83 = vector.broadcast %82 : vector<1x1x62xf32> to vector<8x16x62xf32>
    %84 = arith.mulf %79, %83 : vector<8x16x62xf32>
    %85 = arith.addf %75, %84 : vector<8x16x62xf32>
    %c1_i32_28 = arith.constant 1 : i32
    %86 = arith.addi %4, %c1_i32_28 : i32
    %87 = arith.index_cast %86 : i32 to index
    %c6_29 = arith.constant 6 : index
    %c0_30 = arith.constant 0 : index
    %88 = vector.load %arg11[%87, %c6_29, %c0_30] : memref<22x27x62xbf16, #tpu.memory_space<vmem>>, vector<8x16x62xbf16>
    %89 = arith.extf %88 : vector<8x16x62xbf16> to vector<8x16x62xf32>
    %c8_31 = arith.constant 8 : index
    %c0_32 = arith.constant 0 : index
    %90 = vector.load %arg7[%c8_31, %c0_32] : memref<49x62xf32, #tpu.memory_space<vmem>>, vector<1x62xf32>
    %91 = vector.shape_cast %90 : vector<1x62xf32> to vector<62xf32>
    %92 = vector.shape_cast %91 : vector<62xf32> to vector<1x1x62xf32>
    %93 = vector.broadcast %92 : vector<1x1x62xf32> to vector<8x16x62xf32>
    %94 = arith.mulf %89, %93 : vector<8x16x62xf32>
    %95 = arith.addf %85, %94 : vector<8x16x62xf32>
    %c1_i32_33 = arith.constant 1 : i32
    %96 = arith.addi %4, %c1_i32_33 : i32
    %97 = arith.index_cast %96 : i32 to index
    %c7_34 = arith.constant 7 : index
    %c0_35 = arith.constant 0 : index
    %98 = vector.load %arg11[%97, %c7_34, %c0_35] : memref<22x27x62xbf16, #tpu.memory_space<vmem>>, vector<8x16x62xbf16>
    %99 = arith.extf %98 : vector<8x16x62xbf16> to vector<8x16x62xf32>
    %c9_36 = arith.constant 9 : index
    %c0_37 = arith.constant 0 : index
    %100 = vector.load %arg7[%c9_36, %c0_37] : memref<49x62xf32, #tpu.memory_space<vmem>>, vector<1x62xf32>
    %101 = vector.shape_cast %100 : vector<1x62xf32> to vector<62xf32>
    %102 = vector.shape_cast %101 : vector<62xf32> to vector<1x1x62xf32>
    %103 = vector.broadcast %102 : vector<1x1x62xf32> to vector<8x16x62xf32>
    %104 = arith.mulf %99, %103 : vector<8x16x62xf32>
    %105 = arith.addf %95, %104 : vector<8x16x62xf32>
    %c1_i32_38 = arith.constant 1 : i32
    %106 = arith.addi %4, %c1_i32_38 : i32
    %107 = arith.index_cast %106 : i32 to index
    %c8_39 = arith.constant 8 : index
    %c0_40 = arith.constant 0 : index
    %108 = vector.load %arg11[%107, %c8_39, %c0_40] : memref<22x27x62xbf16, #tpu.memory_space<vmem>>, vector<8x16x62xbf16>
    %109 = arith.extf %108 : vector<8x16x62xbf16> to vector<8x16x62xf32>
    %c10_41 = arith.constant 10 : index
    %c0_42 = arith.constant 0 : index
    %110 = vector.load %arg7[%c10_41, %c0_42] : memref<49x62xf32, #tpu.memory_space<vmem>>, vector<1x62xf32>
    %111 = vector.shape_cast %110 : vector<1x62xf32> to vector<62xf32>
    %112 = vector.shape_cast %111 : vector<62xf32> to vector<1x1x62xf32>
    %113 = vector.broadcast %112 : vector<1x1x62xf32> to vector<8x16x62xf32>
    %114 = arith.mulf %109, %113 : vector<8x16x62xf32>
    %115 = arith.addf %105, %114 : vector<8x16x62xf32>
    %c1_i32_43 = arith.constant 1 : i32
    %116 = arith.addi %4, %c1_i32_43 : i32
    %117 = arith.index_cast %116 : i32 to index
    %c9_44 = arith.constant 9 : index
    %c0_45 = arith.constant 0 : index
    %118 = vector.load %arg11[%117, %c9_44, %c0_45] : memref<22x27x62xbf16, #tpu.memory_space<vmem>>, vector<8x16x62xbf16>
    %119 = arith.extf %118 : vector<8x16x62xbf16> to vector<8x16x62xf32>
    %c11_46 = arith.constant 11 : index
    %c0_47 = arith.constant 0 : index
    %120 = vector.load %arg7[%c11_46, %c0_47] : memref<49x62xf32, #tpu.memory_space<vmem>>, vector<1x62xf32>
    %121 = vector.shape_cast %120 : vector<1x62xf32> to vector<62xf32>
    %122 = vector.shape_cast %121 : vector<62xf32> to vector<1x1x62xf32>
    %123 = vector.broadcast %122 : vector<1x1x62xf32> to vector<8x16x62xf32>
    %124 = arith.mulf %119, %123 : vector<8x16x62xf32>
    %125 = arith.addf %115, %124 : vector<8x16x62xf32>
    %c1_i32_48 = arith.constant 1 : i32
    %126 = arith.addi %4, %c1_i32_48 : i32
    %127 = arith.index_cast %126 : i32 to index
    %c10_49 = arith.constant 10 : index
    %c0_50 = arith.constant 0 : index
    %128 = vector.load %arg11[%127, %c10_49, %c0_50] : memref<22x27x62xbf16, #tpu.memory_space<vmem>>, vector<8x16x62xbf16>
    %129 = arith.extf %128 : vector<8x16x62xbf16> to vector<8x16x62xf32>
    %c12 = arith.constant 12 : index
    %c0_51 = arith.constant 0 : index
    %130 = vector.load %arg7[%c12, %c0_51] : memref<49x62xf32, #tpu.memory_space<vmem>>, vector<1x62xf32>
    %131 = vector.shape_cast %130 : vector<1x62xf32> to vector<62xf32>
    %132 = vector.shape_cast %131 : vector<62xf32> to vector<1x1x62xf32>
    %133 = vector.broadcast %132 : vector<1x1x62xf32> to vector<8x16x62xf32>
    %134 = arith.mulf %129, %133 : vector<8x16x62xf32>
    %135 = arith.addf %125, %134 : vector<8x16x62xf32>
    %c1_i32_52 = arith.constant 1 : i32
    %136 = arith.addi %4, %c1_i32_52 : i32
    %137 = arith.index_cast %136 : i32 to index
    %c11_53 = arith.constant 11 : index
    %c0_54 = arith.constant 0 : index
    %138 = vector.load %arg11[%137, %c11_53, %c0_54] : memref<22x27x62xbf16, #tpu.memory_space<vmem>>, vector<8x16x62xbf16>
    %139 = arith.extf %138 : vector<8x16x62xbf16> to vector<8x16x62xf32>
    %c13 = arith.constant 13 : index
    %c0_55 = arith.constant 0 : index
    %140 = vector.load %arg7[%c13, %c0_55] : memref<49x62xf32, #tpu.memory_space<vmem>>, vector<1x62xf32>
    %141 = vector.shape_cast %140 : vector<1x62xf32> to vector<62xf32>
    %142 = vector.shape_cast %141 : vector<62xf32> to vector<1x1x62xf32>
    %143 = vector.broadcast %142 : vector<1x1x62xf32> to vector<8x16x62xf32>
    %144 = arith.mulf %139, %143 : vector<8x16x62xf32>
    %145 = arith.addf %135, %144 : vector<8x16x62xf32>
    %c2_i32 = arith.constant 2 : i32
    %146 = arith.addi %4, %c2_i32 : i32
    %147 = arith.index_cast %146 : i32 to index
    %c5_56 = arith.constant 5 : index
    %c0_57 = arith.constant 0 : index
    %148 = vector.load %arg11[%147, %c5_56, %c0_57] : memref<22x27x62xbf16, #tpu.memory_space<vmem>>, vector<8x16x62xbf16>
    %149 = arith.extf %148 : vector<8x16x62xbf16> to vector<8x16x62xf32>
    %c14 = arith.constant 14 : index
    %c0_58 = arith.constant 0 : index
    %150 = vector.load %arg7[%c14, %c0_58] : memref<49x62xf32, #tpu.memory_space<vmem>>, vector<1x62xf32>
    %151 = vector.shape_cast %150 : vector<1x62xf32> to vector<62xf32>
    %152 = vector.shape_cast %151 : vector<62xf32> to vector<1x1x62xf32>
    %153 = vector.broadcast %152 : vector<1x1x62xf32> to vector<8x16x62xf32>
    %154 = arith.mulf %149, %153 : vector<8x16x62xf32>
    %155 = arith.addf %145, %154 : vector<8x16x62xf32>
    %c2_i32_59 = arith.constant 2 : i32
    %156 = arith.addi %4, %c2_i32_59 : i32
    %157 = arith.index_cast %156 : i32 to index
    %c6_60 = arith.constant 6 : index
    %c0_61 = arith.constant 0 : index
    %158 = vector.load %arg11[%157, %c6_60, %c0_61] : memref<22x27x62xbf16, #tpu.memory_space<vmem>>, vector<8x16x62xbf16>
    %159 = arith.extf %158 : vector<8x16x62xbf16> to vector<8x16x62xf32>
    %c15 = arith.constant 15 : index
    %c0_62 = arith.constant 0 : index
    %160 = vector.load %arg7[%c15, %c0_62] : memref<49x62xf32, #tpu.memory_space<vmem>>, vector<1x62xf32>
    %161 = vector.shape_cast %160 : vector<1x62xf32> to vector<62xf32>
    %162 = vector.shape_cast %161 : vector<62xf32> to vector<1x1x62xf32>
    %163 = vector.broadcast %162 : vector<1x1x62xf32> to vector<8x16x62xf32>
    %164 = arith.mulf %159, %163 : vector<8x16x62xf32>
    %165 = arith.addf %155, %164 : vector<8x16x62xf32>
    %c2_i32_63 = arith.constant 2 : i32
    %166 = arith.addi %4, %c2_i32_63 : i32
    %167 = arith.index_cast %166 : i32 to index
    %c7_64 = arith.constant 7 : index
    %c0_65 = arith.constant 0 : index
    %168 = vector.load %arg11[%167, %c7_64, %c0_65] : memref<22x27x62xbf16, #tpu.memory_space<vmem>>, vector<8x16x62xbf16>
    %169 = arith.extf %168 : vector<8x16x62xbf16> to vector<8x16x62xf32>
    %c16 = arith.constant 16 : index
    %c0_66 = arith.constant 0 : index
    %170 = vector.load %arg7[%c16, %c0_66] : memref<49x62xf32, #tpu.memory_space<vmem>>, vector<1x62xf32>
    %171 = vector.shape_cast %170 : vector<1x62xf32> to vector<62xf32>
    %172 = vector.shape_cast %171 : vector<62xf32> to vector<1x1x62xf32>
    %173 = vector.broadcast %172 : vector<1x1x62xf32> to vector<8x16x62xf32>
    %174 = arith.mulf %169, %173 : vector<8x16x62xf32>
    %175 = arith.addf %165, %174 : vector<8x16x62xf32>
    %c2_i32_67 = arith.constant 2 : i32
    %176 = arith.addi %4, %c2_i32_67 : i32
    %177 = arith.index_cast %176 : i32 to index
    %c8_68 = arith.constant 8 : index
    %c0_69 = arith.constant 0 : index
    %178 = vector.load %arg11[%177, %c8_68, %c0_69] : memref<22x27x62xbf16, #tpu.memory_space<vmem>>, vector<8x16x62xbf16>
    %179 = arith.extf %178 : vector<8x16x62xbf16> to vector<8x16x62xf32>
    %c17 = arith.constant 17 : index
    %c0_70 = arith.constant 0 : index
    %180 = vector.load %arg7[%c17, %c0_70] : memref<49x62xf32, #tpu.memory_space<vmem>>, vector<1x62xf32>
    %181 = vector.shape_cast %180 : vector<1x62xf32> to vector<62xf32>
    %182 = vector.shape_cast %181 : vector<62xf32> to vector<1x1x62xf32>
    %183 = vector.broadcast %182 : vector<1x1x62xf32> to vector<8x16x62xf32>
    %184 = arith.mulf %179, %183 : vector<8x16x62xf32>
    %185 = arith.addf %175, %184 : vector<8x16x62xf32>
    %c2_i32_71 = arith.constant 2 : i32
    %186 = arith.addi %4, %c2_i32_71 : i32
    %187 = arith.index_cast %186 : i32 to index
    %c9_72 = arith.constant 9 : index
    %c0_73 = arith.constant 0 : index
    %188 = vector.load %arg11[%187, %c9_72, %c0_73] : memref<22x27x62xbf16, #tpu.memory_space<vmem>>, vector<8x16x62xbf16>
    %189 = arith.extf %188 : vector<8x16x62xbf16> to vector<8x16x62xf32>
    %c18 = arith.constant 18 : index
    %c0_74 = arith.constant 0 : index
    %190 = vector.load %arg7[%c18, %c0_74] : memref<49x62xf32, #tpu.memory_space<vmem>>, vector<1x62xf32>
    %191 = vector.shape_cast %190 : vector<1x62xf32> to vector<62xf32>
    %192 = vector.shape_cast %191 : vector<62xf32> to vector<1x1x62xf32>
    %193 = vector.broadcast %192 : vector<1x1x62xf32> to vector<8x16x62xf32>
    %194 = arith.mulf %189, %193 : vector<8x16x62xf32>
    %195 = arith.addf %185, %194 : vector<8x16x62xf32>
    %c2_i32_75 = arith.constant 2 : i32
    %196 = arith.addi %4, %c2_i32_75 : i32
    %197 = arith.index_cast %196 : i32 to index
    %c10_76 = arith.constant 10 : index
    %c0_77 = arith.constant 0 : index
    %198 = vector.load %arg11[%197, %c10_76, %c0_77] : memref<22x27x62xbf16, #tpu.memory_space<vmem>>, vector<8x16x62xbf16>
    %199 = arith.extf %198 : vector<8x16x62xbf16> to vector<8x16x62xf32>
    %c19 = arith.constant 19 : index
    %c0_78 = arith.constant 0 : index
    %200 = vector.load %arg7[%c19, %c0_78] : memref<49x62xf32, #tpu.memory_space<vmem>>, vector<1x62xf32>
    %201 = vector.shape_cast %200 : vector<1x62xf32> to vector<62xf32>
    %202 = vector.shape_cast %201 : vector<62xf32> to vector<1x1x62xf32>
    %203 = vector.broadcast %202 : vector<1x1x62xf32> to vector<8x16x62xf32>
    %204 = arith.mulf %199, %203 : vector<8x16x62xf32>
    %205 = arith.addf %195, %204 : vector<8x16x62xf32>
    %c2_i32_79 = arith.constant 2 : i32
    %206 = arith.addi %4, %c2_i32_79 : i32
    %207 = arith.index_cast %206 : i32 to index
    %c11_80 = arith.constant 11 : index
    %c0_81 = arith.constant 0 : index
    %208 = vector.load %arg11[%207, %c11_80, %c0_81] : memref<22x27x62xbf16, #tpu.memory_space<vmem>>, vector<8x16x62xbf16>
    %209 = arith.extf %208 : vector<8x16x62xbf16> to vector<8x16x62xf32>
    %c20 = arith.constant 20 : index
    %c0_82 = arith.constant 0 : index
    %210 = vector.load %arg7[%c20, %c0_82] : memref<49x62xf32, #tpu.memory_space<vmem>>, vector<1x62xf32>
    %211 = vector.shape_cast %210 : vector<1x62xf32> to vector<62xf32>
    %212 = vector.shape_cast %211 : vector<62xf32> to vector<1x1x62xf32>
    %213 = vector.broadcast %212 : vector<1x1x62xf32> to vector<8x16x62xf32>
    %214 = arith.mulf %209, %213 : vector<8x16x62xf32>
    %215 = arith.addf %205, %214 : vector<8x16x62xf32>
    %c3_i32 = arith.constant 3 : i32
    %216 = arith.addi %4, %c3_i32 : i32
    %217 = arith.index_cast %216 : i32 to index
    %c5_83 = arith.constant 5 : index
    %c0_84 = arith.constant 0 : index
    %218 = vector.load %arg11[%217, %c5_83, %c0_84] : memref<22x27x62xbf16, #tpu.memory_space<vmem>>, vector<8x16x62xbf16>
    %219 = arith.extf %218 : vector<8x16x62xbf16> to vector<8x16x62xf32>
    %c21 = arith.constant 21 : index
    %c0_85 = arith.constant 0 : index
    %220 = vector.load %arg7[%c21, %c0_85] : memref<49x62xf32, #tpu.memory_space<vmem>>, vector<1x62xf32>
    %221 = vector.shape_cast %220 : vector<1x62xf32> to vector<62xf32>
    %222 = vector.shape_cast %221 : vector<62xf32> to vector<1x1x62xf32>
    %223 = vector.broadcast %222 : vector<1x1x62xf32> to vector<8x16x62xf32>
    %224 = arith.mulf %219, %223 : vector<8x16x62xf32>
    %225 = arith.addf %215, %224 : vector<8x16x62xf32>
    %c3_i32_86 = arith.constant 3 : i32
    %226 = arith.addi %4, %c3_i32_86 : i32
    %227 = arith.index_cast %226 : i32 to index
    %c6_87 = arith.constant 6 : index
    %c0_88 = arith.constant 0 : index
    %228 = vector.load %arg11[%227, %c6_87, %c0_88] : memref<22x27x62xbf16, #tpu.memory_space<vmem>>, vector<8x16x62xbf16>
    %229 = arith.extf %228 : vector<8x16x62xbf16> to vector<8x16x62xf32>
    %c22 = arith.constant 22 : index
    %c0_89 = arith.constant 0 : index
    %230 = vector.load %arg7[%c22, %c0_89] : memref<49x62xf32, #tpu.memory_space<vmem>>, vector<1x62xf32>
    %231 = vector.shape_cast %230 : vector<1x62xf32> to vector<62xf32>
    %232 = vector.shape_cast %231 : vector<62xf32> to vector<1x1x62xf32>
    %233 = vector.broadcast %232 : vector<1x1x62xf32> to vector<8x16x62xf32>
    %234 = arith.mulf %229, %233 : vector<8x16x62xf32>
    %235 = arith.addf %225, %234 : vector<8x16x62xf32>
    %c3_i32_90 = arith.constant 3 : i32
    %236 = arith.addi %4, %c3_i32_90 : i32
    %237 = arith.index_cast %236 : i32 to index
    %c7_91 = arith.constant 7 : index
    %c0_92 = arith.constant 0 : index
    %238 = vector.load %arg11[%237, %c7_91, %c0_92] : memref<22x27x62xbf16, #tpu.memory_space<vmem>>, vector<8x16x62xbf16>
    %239 = arith.extf %238 : vector<8x16x62xbf16> to vector<8x16x62xf32>
    %c23 = arith.constant 23 : index
    %c0_93 = arith.constant 0 : index
    %240 = vector.load %arg7[%c23, %c0_93] : memref<49x62xf32, #tpu.memory_space<vmem>>, vector<1x62xf32>
    %241 = vector.shape_cast %240 : vector<1x62xf32> to vector<62xf32>
    %242 = vector.shape_cast %241 : vector<62xf32> to vector<1x1x62xf32>
    %243 = vector.broadcast %242 : vector<1x1x62xf32> to vector<8x16x62xf32>
    %244 = arith.mulf %239, %243 : vector<8x16x62xf32>
    %245 = arith.addf %235, %244 : vector<8x16x62xf32>
    %c3_i32_94 = arith.constant 3 : i32
    %246 = arith.addi %4, %c3_i32_94 : i32
    %247 = arith.index_cast %246 : i32 to index
    %c8_95 = arith.constant 8 : index
    %c0_96 = arith.constant 0 : index
    %248 = vector.load %arg11[%247, %c8_95, %c0_96] : memref<22x27x62xbf16, #tpu.memory_space<vmem>>, vector<8x16x62xbf16>
    %249 = arith.extf %248 : vector<8x16x62xbf16> to vector<8x16x62xf32>
    %c24 = arith.constant 24 : index
    %c0_97 = arith.constant 0 : index
    %250 = vector.load %arg7[%c24, %c0_97] : memref<49x62xf32, #tpu.memory_space<vmem>>, vector<1x62xf32>
    %251 = vector.shape_cast %250 : vector<1x62xf32> to vector<62xf32>
    %252 = vector.shape_cast %251 : vector<62xf32> to vector<1x1x62xf32>
    %253 = vector.broadcast %252 : vector<1x1x62xf32> to vector<8x16x62xf32>
    %254 = arith.mulf %249, %253 : vector<8x16x62xf32>
    %255 = arith.addf %245, %254 : vector<8x16x62xf32>
    %c3_i32_98 = arith.constant 3 : i32
    %256 = arith.addi %4, %c3_i32_98 : i32
    %257 = arith.index_cast %256 : i32 to index
    %c9_99 = arith.constant 9 : index
    %c0_100 = arith.constant 0 : index
    %258 = vector.load %arg11[%257, %c9_99, %c0_100] : memref<22x27x62xbf16, #tpu.memory_space<vmem>>, vector<8x16x62xbf16>
    %259 = arith.extf %258 : vector<8x16x62xbf16> to vector<8x16x62xf32>
    %c25 = arith.constant 25 : index
    %c0_101 = arith.constant 0 : index
    %260 = vector.load %arg7[%c25, %c0_101] : memref<49x62xf32, #tpu.memory_space<vmem>>, vector<1x62xf32>
    %261 = vector.shape_cast %260 : vector<1x62xf32> to vector<62xf32>
    %262 = vector.shape_cast %261 : vector<62xf32> to vector<1x1x62xf32>
    %263 = vector.broadcast %262 : vector<1x1x62xf32> to vector<8x16x62xf32>
    %264 = arith.mulf %259, %263 : vector<8x16x62xf32>
    %265 = arith.addf %255, %264 : vector<8x16x62xf32>
    %c3_i32_102 = arith.constant 3 : i32
    %266 = arith.addi %4, %c3_i32_102 : i32
    %267 = arith.index_cast %266 : i32 to index
    %c10_103 = arith.constant 10 : index
    %c0_104 = arith.constant 0 : index
    %268 = vector.load %arg11[%267, %c10_103, %c0_104] : memref<22x27x62xbf16, #tpu.memory_space<vmem>>, vector<8x16x62xbf16>
    %269 = arith.extf %268 : vector<8x16x62xbf16> to vector<8x16x62xf32>
    %c26 = arith.constant 26 : index
    %c0_105 = arith.constant 0 : index
    %270 = vector.load %arg7[%c26, %c0_105] : memref<49x62xf32, #tpu.memory_space<vmem>>, vector<1x62xf32>
    %271 = vector.shape_cast %270 : vector<1x62xf32> to vector<62xf32>
    %272 = vector.shape_cast %271 : vector<62xf32> to vector<1x1x62xf32>
    %273 = vector.broadcast %272 : vector<1x1x62xf32> to vector<8x16x62xf32>
    %274 = arith.mulf %269, %273 : vector<8x16x62xf32>
    %275 = arith.addf %265, %274 : vector<8x16x62xf32>
    %c3_i32_106 = arith.constant 3 : i32
    %276 = arith.addi %4, %c3_i32_106 : i32
    %277 = arith.index_cast %276 : i32 to index
    %c11_107 = arith.constant 11 : index
    %c0_108 = arith.constant 0 : index
    %278 = vector.load %arg11[%277, %c11_107, %c0_108] : memref<22x27x62xbf16, #tpu.memory_space<vmem>>, vector<8x16x62xbf16>
    %279 = arith.extf %278 : vector<8x16x62xbf16> to vector<8x16x62xf32>
    %c27 = arith.constant 27 : index
    %c0_109 = arith.constant 0 : index
    %280 = vector.load %arg7[%c27, %c0_109] : memref<49x62xf32, #tpu.memory_space<vmem>>, vector<1x62xf32>
    %281 = vector.shape_cast %280 : vector<1x62xf32> to vector<62xf32>
    %282 = vector.shape_cast %281 : vector<62xf32> to vector<1x1x62xf32>
    %283 = vector.broadcast %282 : vector<1x1x62xf32> to vector<8x16x62xf32>
    %284 = arith.mulf %279, %283 : vector<8x16x62xf32>
    %285 = arith.addf %275, %284 : vector<8x16x62xf32>
    %c4_i32 = arith.constant 4 : i32
    %286 = arith.addi %4, %c4_i32 : i32
    %287 = arith.index_cast %286 : i32 to index
    %c5_110 = arith.constant 5 : index
    %c0_111 = arith.constant 0 : index
    %288 = vector.load %arg11[%287, %c5_110, %c0_111] : memref<22x27x62xbf16, #tpu.memory_space<vmem>>, vector<8x16x62xbf16>
    %289 = arith.extf %288 : vector<8x16x62xbf16> to vector<8x16x62xf32>
    %c28 = arith.constant 28 : index
    %c0_112 = arith.constant 0 : index
    %290 = vector.load %arg7[%c28, %c0_112] : memref<49x62xf32, #tpu.memory_space<vmem>>, vector<1x62xf32>
    %291 = vector.shape_cast %290 : vector<1x62xf32> to vector<62xf32>
    %292 = vector.shape_cast %291 : vector<62xf32> to vector<1x1x62xf32>
    %293 = vector.broadcast %292 : vector<1x1x62xf32> to vector<8x16x62xf32>
    %294 = arith.mulf %289, %293 : vector<8x16x62xf32>
    %295 = arith.addf %285, %294 : vector<8x16x62xf32>
    %c4_i32_113 = arith.constant 4 : i32
    %296 = arith.addi %4, %c4_i32_113 : i32
    %297 = arith.index_cast %296 : i32 to index
    %c6_114 = arith.constant 6 : index
    %c0_115 = arith.constant 0 : index
    %298 = vector.load %arg11[%297, %c6_114, %c0_115] : memref<22x27x62xbf16, #tpu.memory_space<vmem>>, vector<8x16x62xbf16>
    %299 = arith.extf %298 : vector<8x16x62xbf16> to vector<8x16x62xf32>
    %c29 = arith.constant 29 : index
    %c0_116 = arith.constant 0 : index
    %300 = vector.load %arg7[%c29, %c0_116] : memref<49x62xf32, #tpu.memory_space<vmem>>, vector<1x62xf32>
    %301 = vector.shape_cast %300 : vector<1x62xf32> to vector<62xf32>
    %302 = vector.shape_cast %301 : vector<62xf32> to vector<1x1x62xf32>
    %303 = vector.broadcast %302 : vector<1x1x62xf32> to vector<8x16x62xf32>
    %304 = arith.mulf %299, %303 : vector<8x16x62xf32>
    %305 = arith.addf %295, %304 : vector<8x16x62xf32>
    %c4_i32_117 = arith.constant 4 : i32
    %306 = arith.addi %4, %c4_i32_117 : i32
    %307 = arith.index_cast %306 : i32 to index
    %c7_118 = arith.constant 7 : index
    %c0_119 = arith.constant 0 : index
    %308 = vector.load %arg11[%307, %c7_118, %c0_119] : memref<22x27x62xbf16, #tpu.memory_space<vmem>>, vector<8x16x62xbf16>
    %309 = arith.extf %308 : vector<8x16x62xbf16> to vector<8x16x62xf32>
    %c30 = arith.constant 30 : index
    %c0_120 = arith.constant 0 : index
    %310 = vector.load %arg7[%c30, %c0_120] : memref<49x62xf32, #tpu.memory_space<vmem>>, vector<1x62xf32>
    %311 = vector.shape_cast %310 : vector<1x62xf32> to vector<62xf32>
    %312 = vector.shape_cast %311 : vector<62xf32> to vector<1x1x62xf32>
    %313 = vector.broadcast %312 : vector<1x1x62xf32> to vector<8x16x62xf32>
    %314 = arith.mulf %309, %313 : vector<8x16x62xf32>
    %315 = arith.addf %305, %314 : vector<8x16x62xf32>
    %c4_i32_121 = arith.constant 4 : i32
    %316 = arith.addi %4, %c4_i32_121 : i32
    %317 = arith.index_cast %316 : i32 to index
    %c8_122 = arith.constant 8 : index
    %c0_123 = arith.constant 0 : index
    %318 = vector.load %arg11[%317, %c8_122, %c0_123] : memref<22x27x62xbf16, #tpu.memory_space<vmem>>, vector<8x16x62xbf16>
    %319 = arith.extf %318 : vector<8x16x62xbf16> to vector<8x16x62xf32>
    %c31 = arith.constant 31 : index
    %c0_124 = arith.constant 0 : index
    %320 = vector.load %arg7[%c31, %c0_124] : memref<49x62xf32, #tpu.memory_space<vmem>>, vector<1x62xf32>
    %321 = vector.shape_cast %320 : vector<1x62xf32> to vector<62xf32>
    %322 = vector.shape_cast %321 : vector<62xf32> to vector<1x1x62xf32>
    %323 = vector.broadcast %322 : vector<1x1x62xf32> to vector<8x16x62xf32>
    %324 = arith.mulf %319, %323 : vector<8x16x62xf32>
    %325 = arith.addf %315, %324 : vector<8x16x62xf32>
    %c4_i32_125 = arith.constant 4 : i32
    %326 = arith.addi %4, %c4_i32_125 : i32
    %327 = arith.index_cast %326 : i32 to index
    %c9_126 = arith.constant 9 : index
    %c0_127 = arith.constant 0 : index
    %328 = vector.load %arg11[%327, %c9_126, %c0_127] : memref<22x27x62xbf16, #tpu.memory_space<vmem>>, vector<8x16x62xbf16>
    %329 = arith.extf %328 : vector<8x16x62xbf16> to vector<8x16x62xf32>
    %c32 = arith.constant 32 : index
    %c0_128 = arith.constant 0 : index
    %330 = vector.load %arg7[%c32, %c0_128] : memref<49x62xf32, #tpu.memory_space<vmem>>, vector<1x62xf32>
    %331 = vector.shape_cast %330 : vector<1x62xf32> to vector<62xf32>
    %332 = vector.shape_cast %331 : vector<62xf32> to vector<1x1x62xf32>
    %333 = vector.broadcast %332 : vector<1x1x62xf32> to vector<8x16x62xf32>
    %334 = arith.mulf %329, %333 : vector<8x16x62xf32>
    %335 = arith.addf %325, %334 : vector<8x16x62xf32>
    %c4_i32_129 = arith.constant 4 : i32
    %336 = arith.addi %4, %c4_i32_129 : i32
    %337 = arith.index_cast %336 : i32 to index
    %c10_130 = arith.constant 10 : index
    %c0_131 = arith.constant 0 : index
    %338 = vector.load %arg11[%337, %c10_130, %c0_131] : memref<22x27x62xbf16, #tpu.memory_space<vmem>>, vector<8x16x62xbf16>
    %339 = arith.extf %338 : vector<8x16x62xbf16> to vector<8x16x62xf32>
    %c33 = arith.constant 33 : index
    %c0_132 = arith.constant 0 : index
    %340 = vector.load %arg7[%c33, %c0_132] : memref<49x62xf32, #tpu.memory_space<vmem>>, vector<1x62xf32>
    %341 = vector.shape_cast %340 : vector<1x62xf32> to vector<62xf32>
    %342 = vector.shape_cast %341 : vector<62xf32> to vector<1x1x62xf32>
    %343 = vector.broadcast %342 : vector<1x1x62xf32> to vector<8x16x62xf32>
    %344 = arith.mulf %339, %343 : vector<8x16x62xf32>
    %345 = arith.addf %335, %344 : vector<8x16x62xf32>
    %c4_i32_133 = arith.constant 4 : i32
    %346 = arith.addi %4, %c4_i32_133 : i32
    %347 = arith.index_cast %346 : i32 to index
    %c11_134 = arith.constant 11 : index
    %c0_135 = arith.constant 0 : index
    %348 = vector.load %arg11[%347, %c11_134, %c0_135] : memref<22x27x62xbf16, #tpu.memory_space<vmem>>, vector<8x16x62xbf16>
    %349 = arith.extf %348 : vector<8x16x62xbf16> to vector<8x16x62xf32>
    %c34 = arith.constant 34 : index
    %c0_136 = arith.constant 0 : index
    %350 = vector.load %arg7[%c34, %c0_136] : memref<49x62xf32, #tpu.memory_space<vmem>>, vector<1x62xf32>
    %351 = vector.shape_cast %350 : vector<1x62xf32> to vector<62xf32>
    %352 = vector.shape_cast %351 : vector<62xf32> to vector<1x1x62xf32>
    %353 = vector.broadcast %352 : vector<1x1x62xf32> to vector<8x16x62xf32>
    %354 = arith.mulf %349, %353 : vector<8x16x62xf32>
    %355 = arith.addf %345, %354 : vector<8x16x62xf32>
    %c5_i32 = arith.constant 5 : i32
    %356 = arith.addi %4, %c5_i32 : i32
    %357 = arith.index_cast %356 : i32 to index
    %c5_137 = arith.constant 5 : index
    %c0_138 = arith.constant 0 : index
    %358 = vector.load %arg11[%357, %c5_137, %c0_138] : memref<22x27x62xbf16, #tpu.memory_space<vmem>>, vector<8x16x62xbf16>
    %359 = arith.extf %358 : vector<8x16x62xbf16> to vector<8x16x62xf32>
    %c35 = arith.constant 35 : index
    %c0_139 = arith.constant 0 : index
    %360 = vector.load %arg7[%c35, %c0_139] : memref<49x62xf32, #tpu.memory_space<vmem>>, vector<1x62xf32>
    %361 = vector.shape_cast %360 : vector<1x62xf32> to vector<62xf32>
    %362 = vector.shape_cast %361 : vector<62xf32> to vector<1x1x62xf32>
    %363 = vector.broadcast %362 : vector<1x1x62xf32> to vector<8x16x62xf32>
    %364 = arith.mulf %359, %363 : vector<8x16x62xf32>
    %365 = arith.addf %355, %364 : vector<8x16x62xf32>
    %c5_i32_140 = arith.constant 5 : i32
    %366 = arith.addi %4, %c5_i32_140 : i32
    %367 = arith.index_cast %366 : i32 to index
    %c6_141 = arith.constant 6 : index
    %c0_142 = arith.constant 0 : index
    %368 = vector.load %arg11[%367, %c6_141, %c0_142] : memref<22x27x62xbf16, #tpu.memory_space<vmem>>, vector<8x16x62xbf16>
    %369 = arith.extf %368 : vector<8x16x62xbf16> to vector<8x16x62xf32>
    %c36 = arith.constant 36 : index
    %c0_143 = arith.constant 0 : index
    %370 = vector.load %arg7[%c36, %c0_143] : memref<49x62xf32, #tpu.memory_space<vmem>>, vector<1x62xf32>
    %371 = vector.shape_cast %370 : vector<1x62xf32> to vector<62xf32>
    %372 = vector.shape_cast %371 : vector<62xf32> to vector<1x1x62xf32>
    %373 = vector.broadcast %372 : vector<1x1x62xf32> to vector<8x16x62xf32>
    %374 = arith.mulf %369, %373 : vector<8x16x62xf32>
    %375 = arith.addf %365, %374 : vector<8x16x62xf32>
    %c5_i32_144 = arith.constant 5 : i32
    %376 = arith.addi %4, %c5_i32_144 : i32
    %377 = arith.index_cast %376 : i32 to index
    %c7_145 = arith.constant 7 : index
    %c0_146 = arith.constant 0 : index
    %378 = vector.load %arg11[%377, %c7_145, %c0_146] : memref<22x27x62xbf16, #tpu.memory_space<vmem>>, vector<8x16x62xbf16>
    %379 = arith.extf %378 : vector<8x16x62xbf16> to vector<8x16x62xf32>
    %c37 = arith.constant 37 : index
    %c0_147 = arith.constant 0 : index
    %380 = vector.load %arg7[%c37, %c0_147] : memref<49x62xf32, #tpu.memory_space<vmem>>, vector<1x62xf32>
    %381 = vector.shape_cast %380 : vector<1x62xf32> to vector<62xf32>
    %382 = vector.shape_cast %381 : vector<62xf32> to vector<1x1x62xf32>
    %383 = vector.broadcast %382 : vector<1x1x62xf32> to vector<8x16x62xf32>
    %384 = arith.mulf %379, %383 : vector<8x16x62xf32>
    %385 = arith.addf %375, %384 : vector<8x16x62xf32>
    %c5_i32_148 = arith.constant 5 : i32
    %386 = arith.addi %4, %c5_i32_148 : i32
    %387 = arith.index_cast %386 : i32 to index
    %c8_149 = arith.constant 8 : index
    %c0_150 = arith.constant 0 : index
    %388 = vector.load %arg11[%387, %c8_149, %c0_150] : memref<22x27x62xbf16, #tpu.memory_space<vmem>>, vector<8x16x62xbf16>
    %389 = arith.extf %388 : vector<8x16x62xbf16> to vector<8x16x62xf32>
    %c38 = arith.constant 38 : index
    %c0_151 = arith.constant 0 : index
    %390 = vector.load %arg7[%c38, %c0_151] : memref<49x62xf32, #tpu.memory_space<vmem>>, vector<1x62xf32>
    %391 = vector.shape_cast %390 : vector<1x62xf32> to vector<62xf32>
    %392 = vector.shape_cast %391 : vector<62xf32> to vector<1x1x62xf32>
    %393 = vector.broadcast %392 : vector<1x1x62xf32> to vector<8x16x62xf32>
    %394 = arith.mulf %389, %393 : vector<8x16x62xf32>
    %395 = arith.addf %385, %394 : vector<8x16x62xf32>
    %c5_i32_152 = arith.constant 5 : i32
    %396 = arith.addi %4, %c5_i32_152 : i32
    %397 = arith.index_cast %396 : i32 to index
    %c9_153 = arith.constant 9 : index
    %c0_154 = arith.constant 0 : index
    %398 = vector.load %arg11[%397, %c9_153, %c0_154] : memref<22x27x62xbf16, #tpu.memory_space<vmem>>, vector<8x16x62xbf16>
    %399 = arith.extf %398 : vector<8x16x62xbf16> to vector<8x16x62xf32>
    %c39 = arith.constant 39 : index
    %c0_155 = arith.constant 0 : index
    %400 = vector.load %arg7[%c39, %c0_155] : memref<49x62xf32, #tpu.memory_space<vmem>>, vector<1x62xf32>
    %401 = vector.shape_cast %400 : vector<1x62xf32> to vector<62xf32>
    %402 = vector.shape_cast %401 : vector<62xf32> to vector<1x1x62xf32>
    %403 = vector.broadcast %402 : vector<1x1x62xf32> to vector<8x16x62xf32>
    %404 = arith.mulf %399, %403 : vector<8x16x62xf32>
    %405 = arith.addf %395, %404 : vector<8x16x62xf32>
    %c5_i32_156 = arith.constant 5 : i32
    %406 = arith.addi %4, %c5_i32_156 : i32
    %407 = arith.index_cast %406 : i32 to index
    %c10_157 = arith.constant 10 : index
    %c0_158 = arith.constant 0 : index
    %408 = vector.load %arg11[%407, %c10_157, %c0_158] : memref<22x27x62xbf16, #tpu.memory_space<vmem>>, vector<8x16x62xbf16>
    %409 = arith.extf %408 : vector<8x16x62xbf16> to vector<8x16x62xf32>
    %c40 = arith.constant 40 : index
    %c0_159 = arith.constant 0 : index
    %410 = vector.load %arg7[%c40, %c0_159] : memref<49x62xf32, #tpu.memory_space<vmem>>, vector<1x62xf32>
    %411 = vector.shape_cast %410 : vector<1x62xf32> to vector<62xf32>
    %412 = vector.shape_cast %411 : vector<62xf32> to vector<1x1x62xf32>
    %413 = vector.broadcast %412 : vector<1x1x62xf32> to vector<8x16x62xf32>
    %414 = arith.mulf %409, %413 : vector<8x16x62xf32>
    %415 = arith.addf %405, %414 : vector<8x16x62xf32>
    %c5_i32_160 = arith.constant 5 : i32
    %416 = arith.addi %4, %c5_i32_160 : i32
    %417 = arith.index_cast %416 : i32 to index
    %c11_161 = arith.constant 11 : index
    %c0_162 = arith.constant 0 : index
    %418 = vector.load %arg11[%417, %c11_161, %c0_162] : memref<22x27x62xbf16, #tpu.memory_space<vmem>>, vector<8x16x62xbf16>
    %419 = arith.extf %418 : vector<8x16x62xbf16> to vector<8x16x62xf32>
    %c41 = arith.constant 41 : index
    %c0_163 = arith.constant 0 : index
    %420 = vector.load %arg7[%c41, %c0_163] : memref<49x62xf32, #tpu.memory_space<vmem>>, vector<1x62xf32>
    %421 = vector.shape_cast %420 : vector<1x62xf32> to vector<62xf32>
    %422 = vector.shape_cast %421 : vector<62xf32> to vector<1x1x62xf32>
    %423 = vector.broadcast %422 : vector<1x1x62xf32> to vector<8x16x62xf32>
    %424 = arith.mulf %419, %423 : vector<8x16x62xf32>
    %425 = arith.addf %415, %424 : vector<8x16x62xf32>
    %c6_i32 = arith.constant 6 : i32
    %426 = arith.addi %4, %c6_i32 : i32
    %427 = arith.index_cast %426 : i32 to index
    %c5_164 = arith.constant 5 : index
    %c0_165 = arith.constant 0 : index
    %428 = vector.load %arg11[%427, %c5_164, %c0_165] : memref<22x27x62xbf16, #tpu.memory_space<vmem>>, vector<8x16x62xbf16>
    %429 = arith.extf %428 : vector<8x16x62xbf16> to vector<8x16x62xf32>
    %c42 = arith.constant 42 : index
    %c0_166 = arith.constant 0 : index
    %430 = vector.load %arg7[%c42, %c0_166] : memref<49x62xf32, #tpu.memory_space<vmem>>, vector<1x62xf32>
    %431 = vector.shape_cast %430 : vector<1x62xf32> to vector<62xf32>
    %432 = vector.shape_cast %431 : vector<62xf32> to vector<1x1x62xf32>
    %433 = vector.broadcast %432 : vector<1x1x62xf32> to vector<8x16x62xf32>
    %434 = arith.mulf %429, %433 : vector<8x16x62xf32>
    %435 = arith.addf %425, %434 : vector<8x16x62xf32>
    %c6_i32_167 = arith.constant 6 : i32
    %436 = arith.addi %4, %c6_i32_167 : i32
    %437 = arith.index_cast %436 : i32 to index
    %c6_168 = arith.constant 6 : index
    %c0_169 = arith.constant 0 : index
    %438 = vector.load %arg11[%437, %c6_168, %c0_169] : memref<22x27x62xbf16, #tpu.memory_space<vmem>>, vector<8x16x62xbf16>
    %439 = arith.extf %438 : vector<8x16x62xbf16> to vector<8x16x62xf32>
    %c43 = arith.constant 43 : index
    %c0_170 = arith.constant 0 : index
    %440 = vector.load %arg7[%c43, %c0_170] : memref<49x62xf32, #tpu.memory_space<vmem>>, vector<1x62xf32>
    %441 = vector.shape_cast %440 : vector<1x62xf32> to vector<62xf32>
    %442 = vector.shape_cast %441 : vector<62xf32> to vector<1x1x62xf32>
    %443 = vector.broadcast %442 : vector<1x1x62xf32> to vector<8x16x62xf32>
    %444 = arith.mulf %439, %443 : vector<8x16x62xf32>
    %445 = arith.addf %435, %444 : vector<8x16x62xf32>
    %c6_i32_171 = arith.constant 6 : i32
    %446 = arith.addi %4, %c6_i32_171 : i32
    %447 = arith.index_cast %446 : i32 to index
    %c7_172 = arith.constant 7 : index
    %c0_173 = arith.constant 0 : index
    %448 = vector.load %arg11[%447, %c7_172, %c0_173] : memref<22x27x62xbf16, #tpu.memory_space<vmem>>, vector<8x16x62xbf16>
    %449 = arith.extf %448 : vector<8x16x62xbf16> to vector<8x16x62xf32>
    %c44 = arith.constant 44 : index
    %c0_174 = arith.constant 0 : index
    %450 = vector.load %arg7[%c44, %c0_174] : memref<49x62xf32, #tpu.memory_space<vmem>>, vector<1x62xf32>
    %451 = vector.shape_cast %450 : vector<1x62xf32> to vector<62xf32>
    %452 = vector.shape_cast %451 : vector<62xf32> to vector<1x1x62xf32>
    %453 = vector.broadcast %452 : vector<1x1x62xf32> to vector<8x16x62xf32>
    %454 = arith.mulf %449, %453 : vector<8x16x62xf32>
    %455 = arith.addf %445, %454 : vector<8x16x62xf32>
    %c6_i32_175 = arith.constant 6 : i32
    %456 = arith.addi %4, %c6_i32_175 : i32
    %457 = arith.index_cast %456 : i32 to index
    %c8_176 = arith.constant 8 : index
    %c0_177 = arith.constant 0 : index
    %458 = vector.load %arg11[%457, %c8_176, %c0_177] : memref<22x27x62xbf16, #tpu.memory_space<vmem>>, vector<8x16x62xbf16>
    %459 = arith.extf %458 : vector<8x16x62xbf16> to vector<8x16x62xf32>
    %c45 = arith.constant 45 : index
    %c0_178 = arith.constant 0 : index
    %460 = vector.load %arg7[%c45, %c0_178] : memref<49x62xf32, #tpu.memory_space<vmem>>, vector<1x62xf32>
    %461 = vector.shape_cast %460 : vector<1x62xf32> to vector<62xf32>
    %462 = vector.shape_cast %461 : vector<62xf32> to vector<1x1x62xf32>
    %463 = vector.broadcast %462 : vector<1x1x62xf32> to vector<8x16x62xf32>
    %464 = arith.mulf %459, %463 : vector<8x16x62xf32>
    %465 = arith.addf %455, %464 : vector<8x16x62xf32>
    %c6_i32_179 = arith.constant 6 : i32
    %466 = arith.addi %4, %c6_i32_179 : i32
    %467 = arith.index_cast %466 : i32 to index
    %c9_180 = arith.constant 9 : index
    %c0_181 = arith.constant 0 : index
    %468 = vector.load %arg11[%467, %c9_180, %c0_181] : memref<22x27x62xbf16, #tpu.memory_space<vmem>>, vector<8x16x62xbf16>
    %469 = arith.extf %468 : vector<8x16x62xbf16> to vector<8x16x62xf32>
    %c46 = arith.constant 46 : index
    %c0_182 = arith.constant 0 : index
    %470 = vector.load %arg7[%c46, %c0_182] : memref<49x62xf32, #tpu.memory_space<vmem>>, vector<1x62xf32>
    %471 = vector.shape_cast %470 : vector<1x62xf32> to vector<62xf32>
    %472 = vector.shape_cast %471 : vector<62xf32> to vector<1x1x62xf32>
    %473 = vector.broadcast %472 : vector<1x1x62xf32> to vector<8x16x62xf32>
    %474 = arith.mulf %469, %473 : vector<8x16x62xf32>
    %475 = arith.addf %465, %474 : vector<8x16x62xf32>
    %c6_i32_183 = arith.constant 6 : i32
    %476 = arith.addi %4, %c6_i32_183 : i32
    %477 = arith.index_cast %476 : i32 to index
    %c10_184 = arith.constant 10 : index
    %c0_185 = arith.constant 0 : index
    %478 = vector.load %arg11[%477, %c10_184, %c0_185] : memref<22x27x62xbf16, #tpu.memory_space<vmem>>, vector<8x16x62xbf16>
    %479 = arith.extf %478 : vector<8x16x62xbf16> to vector<8x16x62xf32>
    %c47 = arith.constant 47 : index
    %c0_186 = arith.constant 0 : index
    %480 = vector.load %arg7[%c47, %c0_186] : memref<49x62xf32, #tpu.memory_space<vmem>>, vector<1x62xf32>
    %481 = vector.shape_cast %480 : vector<1x62xf32> to vector<62xf32>
    %482 = vector.shape_cast %481 : vector<62xf32> to vector<1x1x62xf32>
    %483 = vector.broadcast %482 : vector<1x1x62xf32> to vector<8x16x62xf32>
    %484 = arith.mulf %479, %483 : vector<8x16x62xf32>
    %485 = arith.addf %475, %484 : vector<8x16x62xf32>
    %c6_i32_187 = arith.constant 6 : i32
    %486 = arith.addi %4, %c6_i32_187 : i32
    %487 = arith.index_cast %486 : i32 to index
    %c11_188 = arith.constant 11 : index
    %c0_189 = arith.constant 0 : index
    %488 = vector.load %arg11[%487, %c11_188, %c0_189] : memref<22x27x62xbf16, #tpu.memory_space<vmem>>, vector<8x16x62xbf16>
    %489 = arith.extf %488 : vector<8x16x62xbf16> to vector<8x16x62xf32>
    %c48 = arith.constant 48 : index
    %c0_190 = arith.constant 0 : index
    %490 = vector.load %arg7[%c48, %c0_190] : memref<49x62xf32, #tpu.memory_space<vmem>>, vector<1x62xf32>
    %491 = vector.shape_cast %490 : vector<1x62xf32> to vector<62xf32>
    %492 = vector.shape_cast %491 : vector<62xf32> to vector<1x1x62xf32>
    %493 = vector.broadcast %492 : vector<1x1x62xf32> to vector<8x16x62xf32>
    %494 = arith.mulf %489, %493 : vector<8x16x62xf32>
    %495 = arith.addf %485, %494 : vector<8x16x62xf32>
    %c0_191 = arith.constant 0 : index
    %c0_192 = arith.constant 0 : index
    %496 = vector.load %arg8[%c0_191, %c0_192] : memref<1x62xf32, #tpu.memory_space<vmem>>, vector<1x62xf32>
    %497 = vector.shape_cast %496 : vector<1x62xf32> to vector<62xf32>
    %498 = vector.shape_cast %497 : vector<62xf32> to vector<1x1x62xf32>
    %499 = vector.broadcast %498 : vector<1x1x62xf32> to vector<8x16x62xf32>
    %500 = arith.addf %495, %499 : vector<8x16x62xf32>
    %501 = arith.truncf %500 : vector<8x16x62xf32> to vector<8x16x62xbf16>
    %c0_193 = arith.constant 0 : index
    %c0_194 = arith.constant 0 : index
    %c0_195 = arith.constant 0 : index
    %c0_196 = arith.constant 0 : index
    %502 = vector.load %arg10[%c0_193, %c0_194, %c0_195, %c0_196] : memref<1x8x16x62xbf16, #tpu.memory_space<vmem>>, vector<1x8x16x62xbf16>
    %503 = vector.shape_cast %502 : vector<1x8x16x62xbf16> to vector<8x16x62xbf16>
    %504 = vector.shape_cast %501 : vector<8x16x62xbf16> to vector<1x8x16x62xbf16>
    tpu.vector_store %arg10[%c0_193, %c0_194, %c0_195, %c0_196], %504 {strides = array<i32>} : memref<1x8x16x62xbf16, #tpu.memory_space<vmem>>, vector<1x8x16x62xbf16>,
    return
  }
  func.func @transform_0(%arg0: i32, %arg1: i32) -> (i32, i32, i32, i32) {
    %c0_i32 = arith.constant 0 : i32
    %c0_i32_0 = arith.constant 0 : i32
    %c0_i32_1 = arith.constant 0 : i32
    %c0_i32_2 = arith.constant 0 : i32
    return %arg0, %c0_i32, %c0_i32_0, %c0_i32_1 : i32, i32, i32, i32
  }
  func.func @transform_1(%arg0: i32, %arg1: i32) -> (i32, i32) {
    %c0_i32 = arith.constant 0 : i32
    %c0_i32_0 = arith.constant 0 : i32
    %c0_i32_1 = arith.constant 0 : i32
    return %c0_i32, %c0_i32_0 : i32, i32
  }
  func.func @transform_2(%arg0: i32, %arg1: i32) -> (i32, i32) {
    %c0_i32 = arith.constant 0 : i32
    %c0_i32_0 = arith.constant 0 : i32
    %c0_i32_1 = arith.constant 0 : i32
    return %c0_i32, %c0_i32_0 : i32, i32
  }
  func.func @transform_3(%arg0: i32, %arg1: i32) -> (i32, i32) {
    %c0_i32 = arith.constant 0 : i32
    %c0_i32_0 = arith.constant 0 : i32
    %c0_i32_1 = arith.constant 0 : i32
    return %c0_i32, %c0_i32_0 : i32, i32
  }
  func.func @transform_4(%arg0: i32, %arg1: i32) -> (i32, i32) {
    %c0_i32 = arith.constant 0 : i32
    %c0_i32_0 = arith.constant 0 : i32
    %c0_i32_1 = arith.constant 0 : i32
    return %c0_i32, %c0_i32_0 : i32, i32
  }
  func.func @transform_5(%arg0: i32, %arg1: i32) -> (i32, i32) {
    %c0_i32 = arith.constant 0 : i32
    %c0_i32_0 = arith.constant 0 : i32
    %c0_i32_1 = arith.constant 0 : i32
    return %c0_i32, %c0_i32_0 : i32, i32
  }
  func.func @transform_6(%arg0: i32, %arg1: i32) -> (i32, i32) {
    %c0_i32 = arith.constant 0 : i32
    %c0_i32_0 = arith.constant 0 : i32
    %c0_i32_1 = arith.constant 0 : i32
    return %c0_i32, %c0_i32_0 : i32, i32
  }
  func.func @transform_7(%arg0: i32, %arg1: i32) -> (i32, i32, i32, i32) {
    %c0_i32 = arith.constant 0 : i32
    %c0_i32_0 = arith.constant 0 : i32
    %c0_i32_1 = arith.constant 0 : i32
    %c0_i32_2 = arith.constant 0 : i32
    return %arg0, %c0_i32, %c0_i32_0, %c0_i32_1 : i32, i32, i32, i32
  }
  func.func @transform_8(%arg0: i32, %arg1: i32) -> (i32, i32, i32, i32) {
    %c0_i32 = arith.constant 0 : i32
    %c0_i32_0 = arith.constant 0 : i32
    %c0_i32_1 = arith.constant 0 : i32
    return %arg0, %arg1, %c0_i32, %c0_i32_0 : i32, i32, i32, i32
  }
}

</mosaic_0001>

<llo_original>
// kernel: tpu_custom_call.1
$region0: #{tpu_custom_call.1}
  #allocation0 [shape = 'u32[]', space=smem, size = 0x4, offset = 0x4, fixed_abs, tag = 'smem constant byte address 0x4 - core index']
  #allocation1 [shape = 'u32[72,128]{1,0:T(1,128)}', space=vmem, size = 0x9000, scoped, tag = 'internal scratch']
  #allocation2 [shape = 'bf16[22,27,62]{2,1,0:T(8,128)(2,1)}', space=vmem, size = 0x2c000, scoped, tag = 'scratch operand']
  %s0 = inlined_call_operand.hbm [shape: f32[2,16,16,32], index: 0, kind: input, shape index: {}]
  %s1 = inlined_call_operand.vmem [shape: f32[32,2], index: 1, kind: input, shape index: {}]
  %s2 = inlined_call_operand.vmem [shape: f32[1,2], index: 2, kind: input, shape index: {}]
  %s3 = inlined_call_operand.vmem [shape: f32[32,62], index: 3, kind: input, shape index: {}]
  %s4 = inlined_call_operand.vmem [shape: f32[1,62], index: 4, kind: input, shape index: {}]
  %s5 = inlined_call_operand.hbm [shape: f32[49,62], index: 5, kind: input, shape index: {}]
  %s6 = inlined_call_operand.vmem [shape: f32[1,62], index: 6, kind: input, shape index: {}]
  %s7 = inlined_call_operand.vmem [shape: bf16[2,16,16,2], index: 7, kind: output, shape index: {0}]
  %s8 = inlined_call_operand.hbm [shape: bf16[2,16,16,62], index: 8, kind: output, shape index: {1}]
  %9 = xla_tuple %s7, %s8
  %s10 = sld [smem:[#allocation0]]
  $region81: #{tpu_custom_call.1} parent=0
    _
  %s12 = ssub.s32 1, %s10
  %s13 = scalar_select 0, %s12, %s10
  $region1: #{tpu_custom_call.1} parent=0
    #allocation3 [shape = 'u8[262144]{0}', space=vmem, size = 0x40000, scoped, tag = 'input window, operand 0']
    #allocation4 [shape = 's32[2]{0}', space=sflag, size = 0x8, scoped, tag = 'scoped memory for tpu_custom_call.1']
    #allocation5 [shape = 's32[2]{0}', space=sflag, size = 0x8, scoped, tag = 'scoped memory for tpu_custom_call.1']
    #allocation6 [shape = 'u8[28672]{0}', space=vmem, size = 0x7000, scoped, tag = 'input window, operand 5, single buffered']
    #allocation7 [shape = 's32[1]{0}', space=sflag, size = 0x4, scoped, tag = 'scoped memory for tpu_custom_call.1']
    #allocation8 [shape = 'u8[65536]{0}', space=vmem, size = 0x10000, scoped, tag = 'output window, operand 1']
    %14 = vsyncpa [#allocation4], 0
    %s15 = scalar_lea.sflag [#allocation4], 1
    %16 = vsyncpa %s15, 0
    %17 = vsyncpa [#allocation7], 0
    %18 = vsyncpa [#allocation5], 0
    %s19 = scalar_lea.sflag [#allocation5], 1
    %20 = vsyncpa %s19, 0
    loop: start=0, step=1, limit=6
    $region2: #{tpu_custom_call.1} parent=1 // loop_pre_header
      _
    $region3: #{tpu_custom_call.1} parent=1 // loop_header
      %s22 = sphi 0, %s26
      %p23 = scmp.ge.s32.totalorder %s22, 6
      %s29 = sphi 0, %s41
      %s30 = sphi 0, %s37
      %s31 = sphi 0, %s29
      %s32 = sphi 0, %s30
      %s33 = sphi 0, %s31
      %s34 = sphi 0, %s32
      %s44 = sphi 0, %s46
      %s47 = sphi 0, %s44
      %s48 = sphi 0, %s47
      %s64 = sphi 0, %s48
      %s68 = sphi 0, %s68
      %s70 = sphi 0, %s68
      %s71 = sphi 0, %s70
      %s85 = sphi 0, %s71
      %s89 = sphi 0, %s89
      %s91 = sphi 0, %s89
      %s92 = sphi 0, %s91
      %s106 = sphi 0, %s92
      %s110 = sphi 0, %s110
      %s112 = sphi 0, %s110
      %s113 = sphi 0, %s112
      %s127 = sphi 0, %s113
      %s131 = sphi 0, %s131
      %s133 = sphi 0, %s131
      %s134 = sphi 0, %s133
      %s148 = sphi 0, %s134
      %s152 = sphi 0, %s152
      %s154 = sphi 0, %s152
      %s155 = sphi 0, %s154
      %s169 = sphi 0, %s155
      %s173 = sphi 0, %s173
      %s175 = sphi 0, %s173
      %s176 = sphi 0, %s175
      %s190 = sphi 0, %s176
      %s196 = sphi 0, %s198
      %s199 = sphi 0, %s196
      %s200 = sphi 0, %s199
      %s216 = sphi 0, %s200
      %s224 = sphi 0, %s226
      %s227 = sphi 0, %s224
      %s228 = sphi 0, %s227
      %s244 = sphi 0, %s228
    $region4: #{tpu_custom_call.1} parent=1 // loop_header_branch
      %25 = sbr.rel (%p23) target = $region8
    $region5: #{tpu_custom_call.1} parent=1 // loop_body
      %s27 = ssub.s32 %s22, 1
      %s28 = ssub.s32 %s22, 2
      %s35 = sadd.s32 1, %s30
      %p36 = scmp.ge.s32.totalorder %s35, 2
      %s37 = scalar_select %p36, 0, %s35
      %s38 = sadd.s32 1, %s29
      %s39 = scalar_select %p36, %s38, %s29
      %p40 = scmp.ge.s32.totalorder %s39, 2
      %s41 = scalar_select %p40, 0, %s39
      %s42 = ssub.s32 %s29, %s41
      %p43 = scmp.eq.s32.totalorder %s42, 0
      %s45 = sadd.s32 %s44, 1
      %s46 = scalar_select %p43, %s44, %s45
      %p49 = pneg %p43
      %p50 = scmp.eq.s32.totalorder %s22, 3
      %p51 = por %p49, %p50
      %p52 = scmp.ne.s32.totalorder %s44, %s47
      %p53 = scmp.eq.s32.totalorder %s22, 0
      %p54 = por %p52, %p53
      %p55 = scmp.ne.s32.totalorder %s44, %s47
      %p56 = scmp.eq.s32.totalorder %s27, 3
      %p57 = por %p55, %p56
      %p58 = scmp.ne.s32.totalorder %s47, %s48
      %p59 = scmp.eq.s32.totalorder %s27, 0
      %p60 = por %p58, %p59
      %p61 = scmp.ne.s32.totalorder %s47, %s48
      %p62 = scmp.eq.s32.totalorder %s28, 3
      %p63 = por %p61, %p62
      %p65 = scmp.ne.s32.totalorder %s48, %s64
      %p66 = scmp.eq.s32.totalorder %s28, 0
      %p67 = por %p65, %p66
      %s69 = sadd.s32 %s68, 1
      %p72 = scmp.eq.s32.totalorder %s22, 3
      %p73 = scmp.ne.s32.totalorder %s68, %s70
      %p74 = scmp.eq.s32.totalorder %s22, 0
      %p75 = por %p73, %p74
      %p76 = scmp.ne.s32.totalorder %s68, %s70
      %p77 = scmp.eq.s32.totalorder %s27, 3
      %p78 = por %p76, %p77
      %p79 = scmp.ne.s32.totalorder %s70, %s71
      %p80 = scmp.eq.s32.totalorder %s27, 0
      %p81 = por %p79, %p80
      %p82 = scmp.ne.s32.totalorder %s70, %s71
      %p83 = scmp.eq.s32.totalorder %s28, 3
      %p84 = por %p82, %p83
      %p86 = scmp.ne.s32.totalorder %s71, %s85
      %p87 = scmp.eq.s32.totalorder %s28, 0
      %p88 = por %p86, %p87
      %s90 = sadd.s32 %s89, 1
      %p93 = scmp.eq.s32.totalorder %s22, 3
      %p94 = scmp.ne.s32.totalorder %s89, %s91
      %p95 = scmp.eq.s32.totalorder %s22, 0
      %p96 = por %p94, %p95
      %p97 = scmp.ne.s32.totalorder %s89, %s91
      %p98 = scmp.eq.s32.totalorder %s27, 3
      %p99 = por %p97, %p98
      %p100 = scmp.ne.s32.totalorder %s91, %s92
      %p101 = scmp.eq.s32.totalorder %s27, 0
      %p102 = por %p100, %p101
      %p103 = scmp.ne.s32.totalorder %s91, %s92
      %p104 = scmp.eq.s32.totalorder %s28, 3
      %p105 = por %p103, %p104
      %p107 = scmp.ne.s32.totalorder %s92, %s106
      %p108 = scmp.eq.s32.totalorder %s28, 0
      %p109 = por %p107, %p108
      %s111 = sadd.s32 %s110, 1
      %p114 = scmp.eq.s32.totalorder %s22, 3
      %p115 = scmp.ne.s32.totalorder %s110, %s112
      %p116 = scmp.eq.s32.totalorder %s22, 0
      %p117 = por %p115, %p116
      %p118 = scmp.ne.s32.totalorder %s110, %s112
      %p119 = scmp.eq.s32.totalorder %s27, 3
      %p120 = por %p118, %p119
      %p121 = scmp.ne.s32.totalorder %s112, %s113
      %p122 = scmp.eq.s32.totalorder %s27, 0
      %p123 = por %p121, %p122
      %p124 = scmp.ne.s32.totalorder %s112, %s113
      %p125 = scmp.eq.s32.totalorder %s28, 3
      %p126 = por %p124, %p125
      %p128 = scmp.ne.s32.totalorder %s113, %s127
      %p129 = scmp.eq.s32.totalorder %s28, 0
      %p130 = por %p128, %p129
      %s132 = sadd.s32 %s131, 1
      %p135 = scmp.eq.s32.totalorder %s22, 3
      %p136 = scmp.ne.s32.totalorder %s131, %s133
      %p137 = scmp.eq.s32.totalorder %s22, 0
      %p138 = por %p136, %p137
      %p139 = scmp.ne.s32.totalorder %s131, %s133
      %p140 = scmp.eq.s32.totalorder %s27, 3
      %p141 = por %p139, %p140
      %p142 = scmp.ne.s32.totalorder %s133, %s134
      %p143 = scmp.eq.s32.totalorder %s27, 0
      %p144 = por %p142, %p143
      %p145 = scmp.ne.s32.totalorder %s133, %s134
      %p146 = scmp.eq.s32.totalorder %s28, 3
      %p147 = por %p145, %p146
      %p149 = scmp.ne.s32.totalorder %s134, %s148
      %p150 = scmp.eq.s32.totalorder %s28, 0
      %p151 = por %p149, %p150
      %s153 = sadd.s32 %s152, 1
      %p156 = scmp.eq.s32.totalorder %s22, 3
      %p157 = scmp.ne.s32.totalorder %s152, %s154
      %p158 = scmp.eq.s32.totalorder %s22, 0
      %p159 = por %p157, %p158
      %p160 = scmp.ne.s32.totalorder %s152, %s154
      %p161 = scmp.eq.s32.totalorder %s27, 3
      %p162 = por %p160, %p161
      %p163 = scmp.ne.s32.totalorder %s154, %s155
      %p164 = scmp.eq.s32.totalorder %s27, 0
      %p165 = por %p163, %p164
      %p166 = scmp.ne.s32.totalorder %s154, %s155
      %p167 = scmp.eq.s32.totalorder %s28, 3
      %p168 = por %p166, %p167
      %p170 = scmp.ne.s32.totalorder %s155, %s169
      %p171 = scmp.eq.s32.totalorder %s28, 0
      %p172 = por %p170, %p171
      %s174 = sadd.s32 %s173, 1
      %p177 = scmp.eq.s32.totalorder %s22, 3
      %p178 = scmp.ne.s32.totalorder %s173, %s175
      %p179 = scmp.eq.s32.totalorder %s22, 0
      %p180 = por %p178, %p179
      %p181 = scmp.ne.s32.totalorder %s173, %s175
      %p182 = scmp.eq.s32.totalorder %s27, 3
      %p183 = por %p181, %p182
      %p184 = scmp.ne.s32.totalorder %s175, %s176
      %p185 = scmp.eq.s32.totalorder %s27, 0
      %p186 = por %p184, %p185
      %p187 = scmp.ne.s32.totalorder %s175, %s176
      %p188 = scmp.eq.s32.totalorder %s28, 3
      %p189 = por %p187, %p188
      %p191 = scmp.ne.s32.totalorder %s176, %s190
      %p192 = scmp.eq.s32.totalorder %s28, 0
      %p193 = por %p191, %p192
      %s194 = ssub.s32 %s29, %s41
      %p195 = scmp.eq.s32.totalorder %s194, 0
      %s197 = sadd.s32 %s196, 1
      %s198 = scalar_select %p195, %s196, %s197
      %p201 = pneg %p195
      %p202 = scmp.eq.s32.totalorder %s22, 3
      %p203 = por %p201, %p202
      %p204 = scmp.ne.s32.totalorder %s196, %s199
      %p205 = scmp.eq.s32.totalorder %s22, 0
      %p206 = por %p204, %p205
      %p207 = scmp.ne.s32.totalorder %s196, %s199
      %p208 = scmp.eq.s32.totalorder %s27, 3
      %p209 = por %p207, %p208
      %p210 = scmp.ne.s32.totalorder %s199, %s200
      %p211 = scmp.eq.s32.totalorder %s27, 0
      %p212 = por %p210, %p211
      %p213 = scmp.ne.s32.totalorder %s199, %s200
      %p214 = scmp.eq.s32.totalorder %s28, 3
      %p215 = por %p213, %p214
      %p217 = scmp.ne.s32.totalorder %s200, %s216
      %p218 = scmp.eq.s32.totalorder %s28, 0
      %p219 = por %p217, %p218
      %s220 = ssub.s32 %s29, %s41
      %s221 = ssub.s32 %s30, %s37
      %s222 = sor.u32 %s220, %s221
      %p223 = scmp.eq.s32.totalorder %s222, 0
      %s225 = sadd.s32 %s224, 1
      %s226 = scalar_select %p223, %s224, %s225
      %p229 = pneg %p223
      %p230 = scmp.eq.s32.totalorder %s22, 3
      %p231 = por %p229, %p230
      %p232 = scmp.ne.s32.totalorder %s224, %s227
      %p233 = scmp.eq.s32.totalorder %s22, 0
      %p234 = por %p232, %p233
      %p235 = scmp.ne.s32.totalorder %s224, %s227
      %p236 = scmp.eq.s32.totalorder %s27, 3
      %p237 = por %p235, %p236
      %p238 = scmp.ne.s32.totalorder %s227, %s228
      %p239 = scmp.eq.s32.totalorder %s27, 0
      %p240 = por %p238, %p239
      %p241 = scmp.ne.s32.totalorder %s227, %s228
      %p242 = scmp.eq.s32.totalorder %s28, 3
      %p243 = por %p241, %p242
      %p245 = scmp.ne.s32.totalorder %s228, %s244
      %p246 = scmp.eq.s32.totalorder %s28, 0
      %p247 = por %p245, %p246
      %p248 = scmp.le.s32.totalorder 1, %s22
      %p249 = scmp.lt.s32.totalorder %s22, 5
      %p250 = pnand %p248, %p249
      %p251 = pneg %p250
      // Predicated region
      $region9: #{tpu_custom_call.1} parent=5 // pred_check
        _
      $region10: #{tpu_custom_call.1} parent=5 // pred_check_branch
        %253 = sbr.rel (%p250) target = $region12
      $region11: #{tpu_custom_call.1} parent=5 // pred_region
        %s254 = ssub.s32 %s22, 1
        // Predicated region
        $region13: #{tpu_custom_call.1} parent=11 // pred_check
          %p255 = pneg %p81
        $region14: #{tpu_custom_call.1} parent=11 // pred_check_branch
          %257 = sbr.rel (%p255) target = $region16
        $region15: #{tpu_custom_call.1} parent=11 // pred_region
          _
        $region16: #{tpu_custom_call.1} parent=11 // pred_fallthru
          _
        // Predicated region
        $region17: #{tpu_custom_call.1} parent=11 // pred_check
          %p258 = pneg %p102
        $region18: #{tpu_custom_call.1} parent=11 // pred_check_branch
          %260 = sbr.rel (%p258) target = $region20
        $region19: #{tpu_custom_call.1} parent=11 // pred_region
          _
        $region20: #{tpu_custom_call.1} parent=11 // pred_fallthru
          _
        // Predicated region
        $region21: #{tpu_custom_call.1} parent=11 // pred_check
          %p261 = pneg %p123
        $region22: #{tpu_custom_call.1} parent=11 // pred_check_branch
          %263 = sbr.rel (%p261) target = $region24
        $region23: #{tpu_custom_call.1} parent=11 // pred_region
          _
        $region24: #{tpu_custom_call.1} parent=11 // pred_fallthru
          _
        // Predicated region
        $region25: #{tpu_custom_call.1} parent=11 // pred_check
          %p264 = pneg %p144
        $region26: #{tpu_custom_call.1} parent=11 // pred_check_branch
          %266 = sbr.rel (%p264) target = $region28
        $region27: #{tpu_custom_call.1} parent=11 // pred_region
          _
        $region28: #{tpu_custom_call.1} parent=11 // pred_fallthru
          _
        // Predicated region
        $region29: #{tpu_custom_call.1} parent=11 // pred_check
          %p267 = pneg %p165
        $region30: #{tpu_custom_call.1} parent=11 // pred_check_branch
          %269 = sbr.rel (%p267) target = $region32
        $region31: #{tpu_custom_call.1} parent=11 // pred_region
          %271 = vsyncadd [#allocation7], 0
          %s272 = sshll.u32 %s5, 4
          %s273 = int_to_ptr.hbm [resolvable:$true] %s272
          %s274 = sshll.u32 [#allocation6], 4
          %s275 = int_to_ptr.vmem [resolvable:$true] %s274
          %280 = dma.hbm_to_vmem [thread:$0]  %s273, 896, %s275, [#allocation7], 128, 128, 8
        $region32: #{tpu_custom_call.1} parent=11 // pred_fallthru
          _
        // Predicated region
        $region33: #{tpu_custom_call.1} parent=11 // pred_check
          %p281 = pneg %p186
        $region34: #{tpu_custom_call.1} parent=11 // pred_check_branch
          %283 = sbr.rel (%p281) target = $region36
        $region35: #{tpu_custom_call.1} parent=11 // pred_region
          _
        $region36: #{tpu_custom_call.1} parent=11 // pred_fallthru
          _
      $region12: #{tpu_custom_call.1} parent=5 // pred_fallthru
        _
      %p284 = scmp.lt.s32.totalorder %s22, 4
      // Predicated region
      $region37: #{tpu_custom_call.1} parent=5 // pred_check
        %p285 = pneg %p284
      $region38: #{tpu_custom_call.1} parent=5 // pred_check_branch
        %287 = sbr.rel (%p285) target = $region40
      $region39: #{tpu_custom_call.1} parent=5 // pred_region
        // Predicated region
        $region41: #{tpu_custom_call.1} parent=39 // pred_check
          %p288 = pneg %p54
        $region42: #{tpu_custom_call.1} parent=39 // pred_check_branch
          %290 = sbr.rel (%p288) target = $region44
        $region43: #{tpu_custom_call.1} parent=39 // pred_region
          %s291 = sand.u32 %s44, 1
          %s292 = scalar_lea.sflag [#allocation4], %s291
          %s293 = sand.u32 %s44, 1
          %s294 = smul.addr %s293, 256
          %s295 = scalar_lea.vmem [#allocation3], %s294
          %297 = vsyncadd %s292, 0
          %s298 = smul.addr %s29, 32
          %s299 = smul.addr %s298, 8
          %s300 = scalar_lea.hbm %s0, %s299
          %s301 = sshll.u32 %s300, 4
          %s302 = int_to_ptr.hbm [resolvable:$true] %s301
          %s303 = sshll.u32 %s295, 4
          %s304 = int_to_ptr.vmem [resolvable:$true] %s303
          %309 = dma.hbm_to_vmem [thread:$0]  %s302, 4096, %s304, %s292, 128, 128, 8
        $region44: #{tpu_custom_call.1} parent=39 // pred_fallthru
          _
      $region40: #{tpu_custom_call.1} parent=5 // pred_fallthru
        _
      %p310 = scmp.le.s32.totalorder 1, %s22
      %p311 = scmp.lt.s32.totalorder %s22, 5
      %p312 = pnand %p310, %p311
      %p313 = pneg %p312
      // Predicated region
      $region45: #{tpu_custom_call.1} parent=5 // pred_check
        _
      $region46: #{tpu_custom_call.1} parent=5 // pred_check_branch
        %315 = sbr.rel (%p312) target = $region48
      $region47: #{tpu_custom_call.1} parent=5 // pred_region
        %s316 = ssub.s32 %s22, 1
        %s317 = sand.u32 %s47, 1
        %s318 = scalar_lea.sflag [#allocation4], %s317
        %s319 = sand.u32 %s47, 1
        %s320 = smul.addr %s319, 256
        %s321 = scalar_lea.vmem [#allocation3], %s320
        // Predicated region
        $region49: #{tpu_custom_call.1} parent=47 // pred_check
          %p322 = pneg %p60
        $region50: #{tpu_custom_call.1} parent=47 // pred_check_branch
          %324 = sbr.rel (%p322) target = $region52
        $region51: #{tpu_custom_call.1} parent=47 // pred_region
          %326 = dma.done %s318, 4096
        $region52: #{tpu_custom_call.1} parent=47 // pred_fallthru
          _
        // Predicated region
        $region53: #{tpu_custom_call.1} parent=47 // pred_check
          %p327 = pneg %p165
        $region54: #{tpu_custom_call.1} parent=47 // pred_check_branch
          %329 = sbr.rel (%p327) target = $region56
        $region55: #{tpu_custom_call.1} parent=47 // pred_region
          %331 = dma.done [#allocation7], 896
        $region56: #{tpu_custom_call.1} parent=47 // pred_fallthru
          _
        %s332 = sand.u32 %s47, 1
        %s333 = scalar_lea.sflag [#allocation4], %s332
        %s334 = sand.u32 %s47, 1
        %s335 = smul.addr %s334, 256
        %s336 = scalar_lea.vmem [#allocation3], %s335
        %p337 = pneg %p60
        %p338 = pneg %p57
        %p339 = pneg %p81
        %p340 = pneg %p78
        %p341 = pneg %p102
        %p342 = pneg %p99
        %p343 = pneg %p123
        %p344 = pneg %p120
        %p345 = pneg %p144
        %p346 = pneg %p141
        %p347 = pneg %p165
        %p348 = pneg %p162
        %p349 = pneg %p186
        %p350 = pneg %p183
        %p351 = pneg %p212
        %p352 = pneg %p209
        %p353 = scmp.lt.s32.totalorder %s31, 1
        %s354 = scalar_select %p353, %s31, 1
        %s355 = smul.addr %s354, 32
        %s356 = smul.addr %s355, 4
        %s357 = scalar_lea.vmem %s7, %s356
        %p358 = pneg %p240
        %p359 = pneg %p237
        %s360 = sand.u32 %s227, 1
        %s361 = scalar_lea.sflag [#allocation5], %s360
        %s362 = sand.u32 %s227, 1
        %s363 = smul.addr %s362, 64
        %s364 = scalar_lea.vmem [#allocation8], %s363
        %p365 = scmp.lt.s32.totalorder %s31, 1
        %s366 = scalar_select %p365, %s31, 1
        %s367 = smul.addr %s366, 32
        %s368 = smul.addr %s367, 4
        %s369 = scalar_lea.vmem %s7, %s368
        %s370 = smul.u32 8, %s32
        %p372 = scmp.eq.s32.totalorder %s32, 0
        // Predicated region
        $region57: #{tpu_custom_call.1} parent=47 // pred_check
          %p373 = pneg %p372
        $region58: #{tpu_custom_call.1} parent=47 // pred_check_branch
          %375 = sbr.rel (%p373) target = $region60
        $region59: #{tpu_custom_call.1} parent=47 // pred_region
          %vm376 = vcmask 502784
          %377 = vst.msk [vmem:[#allocation2] sm:$0xf] %vm376, 0
          %378 = vst.msk [vmem:[#allocation2 + $0x4] sm:$0xf] %vm376, 0
          %379 = vst.msk [vmem:[#allocation2 + $0x8] sm:$0xf] %vm376, 0
          %vm380 = vcmask 500736
          %vm381 = vsmask.f32 1280
          %vm382 = vmand %vm380, %vm381
          %v383 = vld [vmem:[#allocation2 + $0xc] sm:$0x3]
          %v384 = vsel %vm382, 0, %v383
          %385 = vst [vmem:[#allocation2 + $0xc] sm:$0x3] %v384
          %386 = vst.msk [vmem:[#allocation2 + $0x10] sm:$0xf] %vm376, 0
          %387 = vst.msk [vmem:[#allocation2 + $0x14] sm:$0xf] %vm376, 0
          %388 = vst.msk [vmem:[#allocation2 + $0x18] sm:$0xf] %vm376, 0
          %v389 = vld [vmem:[#allocation2 + $0x1c] sm:$0x3]
          %v390 = vsel %vm382, 0, %v389
          %391 = vst [vmem:[#allocation2 + $0x1c] sm:$0x3] %v390
          %392 = vst.msk [vmem:[#allocation2 + $0x20] sm:$0xf] %vm376, 0
          %393 = vst.msk [vmem:[#allocation2 + $0x24] sm:$0xf] %vm376, 0
          %394 = vst.msk [vmem:[#allocation2 + $0x28] sm:$0xf] %vm376, 0
          %v395 = vld [vmem:[#allocation2 + $0x2c] sm:$0x3]
          %v396 = vsel %vm382, 0, %v395
          %397 = vst [vmem:[#allocation2 + $0x2c] sm:$0x3] %v396
          %s398 = scalar_lea.vmem [#allocation2], 304
          %399 = vst.msk [vmem:[%s398] sm:$0xf] %vm376, 0
          %400 = vst.msk [vmem:[%s398 + $0x4] sm:$0xf] %vm376, 0
          %401 = vst.msk [vmem:[%s398 + $0x8] sm:$0xf] %vm376, 0
          %v402 = vld [vmem:[%s398 + $0xc] sm:$0x3]
          %v403 = vsel %vm382, 0, %v402
          %404 = vst [vmem:[%s398 + $0xc] sm:$0x3] %v403
          %405 = vst.msk [vmem:[%s398 + $0x10] sm:$0xf] %vm376, 0
          %406 = vst.msk [vmem:[%s398 + $0x14] sm:$0xf] %vm376, 0
          %407 = vst.msk [vmem:[%s398 + $0x18] sm:$0xf] %vm376, 0
          %v408 = vld [vmem:[%s398 + $0x1c] sm:$0x3]
          %v409 = vsel %vm382, 0, %v408
          %410 = vst [vmem:[%s398 + $0x1c] sm:$0x3] %v409
          %411 = vst.msk [vmem:[%s398 + $0x20] sm:$0xf] %vm376, 0
          %412 = vst.msk [vmem:[%s398 + $0x24] sm:$0xf] %vm376, 0
          %413 = vst.msk [vmem:[%s398 + $0x28] sm:$0xf] %vm376, 0
          %v414 = vld [vmem:[%s398 + $0x2c] sm:$0x3]
          %v415 = vsel %vm382, 0, %v414
          %416 = vst [vmem:[%s398 + $0x2c] sm:$0x3] %v415
          %417 = vst.msk [vmem:[#allocation2] sm:$0xf] %vm376, 0
          %418 = vst.msk [vmem:[#allocation2 + $0x10] sm:$0xf] %vm376, 0
          %419 = vst.msk [vmem:[#allocation2 + $0x20] sm:$0xf] %vm376, 0
          %420 = vst.msk [vmem:[#allocation2 + $0x30] sm:$0xf] %vm376, 0
          %421 = vst.msk [vmem:[#allocation2 + $0x40] sm:$0xf] %vm376, 0
          %422 = vst.msk [vmem:[#allocation2 + $0x50] sm:$0xf] %vm376, 0
          %423 = vst.msk [vmem:[#allocation2 + $0x60] sm:$0xf] %vm376, 0
          %424 = vst.msk [vmem:[#allocation2 + $0x70] sm:$0xf] %vm376, 0
          %425 = vst.msk [vmem:[#allocation2 + $0x80] sm:$0xf] %vm376, 0
          %426 = vst.msk [vmem:[#allocation2 + $0x90] sm:$0xf] %vm376, 0
          %427 = vst.msk [vmem:[#allocation2 + $0xa0] sm:$0xf] %vm376, 0
          %428 = vst.msk [vmem:[#allocation2 + $0xb0] sm:$0xf] %vm376, 0
          %429 = vst.msk [vmem:[#allocation2 + $0xc0] sm:$0xf] %vm376, 0
          %430 = vst.msk [vmem:[#allocation2 + $0xd0] sm:$0xf] %vm376, 0
          %431 = vst.msk [vmem:[#allocation2 + $0xe0] sm:$0xf] %vm376, 0
          %432 = vst.msk [vmem:[#allocation2 + $0xf0] sm:$0xf] %vm376, 0
          %433 = vst.msk [vmem:[#allocation2 + $0x100] sm:$0xf] %vm376, 0
          %434 = vst.msk [vmem:[#allocation2 + $0x110] sm:$0xf] %vm376, 0
          %435 = vst.msk [vmem:[#allocation2 + $0x120] sm:$0xf] %vm376, 0
          %436 = vst.msk [vmem:[#allocation2 + $0x130] sm:$0xf] %vm376, 0
          %437 = vst.msk [vmem:[#allocation2 + $0x140] sm:$0xf] %vm376, 0
          %438 = vst.msk [vmem:[#allocation2 + $0x150] sm:$0xf] %vm376, 0
          %v439 = vld [vmem:[#allocation2 + $0xc] sm:$0x3]
          %v440 = vsel %vm382, 0, %v439
          %441 = vst [vmem:[#allocation2 + $0xc] sm:$0x3] %v440
          %v442 = vld [vmem:[#allocation2 + $0x1c] sm:$0x3]
          %v443 = vsel %vm382, 0, %v442
          %444 = vst [vmem:[#allocation2 + $0x1c] sm:$0x3] %v443
          %v445 = vld [vmem:[#allocation2 + $0x2c] sm:$0x3]
          %v446 = vsel %vm382, 0, %v445
          %447 = vst [vmem:[#allocation2 + $0x2c] sm:$0x3] %v446
          %v448 = vld [vmem:[#allocation2 + $0x3c] sm:$0x3]
          %v449 = vsel %vm382, 0, %v448
          %450 = vst [vmem:[#allocation2 + $0x3c] sm:$0x3] %v449
          %v451 = vld [vmem:[#allocation2 + $0x4c] sm:$0x3]
          %v452 = vsel %vm382, 0, %v451
          %453 = vst [vmem:[#allocation2 + $0x4c] sm:$0x3] %v452
          %v454 = vld [vmem:[#allocation2 + $0x5c] sm:$0x3]
          %v455 = vsel %vm382, 0, %v454
          %456 = vst [vmem:[#allocation2 + $0x5c] sm:$0x3] %v455
          %v457 = vld [vmem:[#allocation2 + $0x6c] sm:$0x3]
          %v458 = vsel %vm382, 0, %v457
          %459 = vst [vmem:[#allocation2 + $0x6c] sm:$0x3] %v458
          %v460 = vld [vmem:[#allocation2 + $0x7c] sm:$0x3]
          %v461 = vsel %vm382, 0, %v460
          %462 = vst [vmem:[#allocation2 + $0x7c] sm:$0x3] %v461
          %v463 = vld [vmem:[#allocation2 + $0x8c] sm:$0x3]
          %v464 = vsel %vm382, 0, %v463
          %465 = vst [vmem:[#allocation2 + $0x8c] sm:$0x3] %v464
          %v466 = vld [vmem:[#allocation2 + $0x9c] sm:$0x3]
          %v467 = vsel %vm382, 0, %v466
          %468 = vst [vmem:[#allocation2 + $0x9c] sm:$0x3] %v467
          %v469 = vld [vmem:[#allocation2 + $0xac] sm:$0x3]
          %v470 = vsel %vm382, 0, %v469
          %471 = vst [vmem:[#allocation2 + $0xac] sm:$0x3] %v470
          %v472 = vld [vmem:[#allocation2 + $0xbc] sm:$0x3]
          %v473 = vsel %vm382, 0, %v472
          %474 = vst [vmem:[#allocation2 + $0xbc] sm:$0x3] %v473
          %v475 = vld [vmem:[#allocation2 + $0xcc] sm:$0x3]
          %v476 = vsel %vm382, 0, %v475
          %477 = vst [vmem:[#allocation2 + $0xcc] sm:$0x3] %v476
          %v478 = vld [vmem:[#allocation2 + $0xdc] sm:$0x3]
          %v479 = vsel %vm382, 0, %v478
          %480 = vst [vmem:[#allocation2 + $0xdc] sm:$0x3] %v479
          %v481 = vld [vmem:[#allocation2 + $0xec] sm:$0x3]
          %v482 = vsel %vm382, 0, %v481
          %483 = vst [vmem:[#allocation2 + $0xec] sm:$0x3] %v482
          %v484 = vld [vmem:[#allocation2 + $0xfc] sm:$0x3]
          %v485 = vsel %vm382, 0, %v484
          %486 = vst [vmem:[#allocation2 + $0xfc] sm:$0x3] %v485
          %v487 = vld [vmem:[#allocation2 + $0x10c] sm:$0x3]
          %v488 = vsel %vm382, 0, %v487
          %489 = vst [vmem:[#allocation2 + $0x10c] sm:$0x3] %v488
          %v490 = vld [vmem:[#allocation2 + $0x11c] sm:$0x3]
          %v491 = vsel %vm382, 0, %v490
          %492 = vst [vmem:[#allocation2 + $0x11c] sm:$0x3] %v491
          %v493 = vld [vmem:[#allocation2 + $0x12c] sm:$0x3]
          %v494 = vsel %vm382, 0, %v493
          %495 = vst [vmem:[#allocation2 + $0x12c] sm:$0x3] %v494
          %v496 = vld [vmem:[#allocation2 + $0x13c] sm:$0x3]
          %v497 = vsel %vm382, 0, %v496
          %498 = vst [vmem:[#allocation2 + $0x13c] sm:$0x3] %v497
          %v499 = vld [vmem:[#allocation2 + $0x14c] sm:$0x3]
          %v500 = vsel %vm382, 0, %v499
          %501 = vst [vmem:[#allocation2 + $0x14c] sm:$0x3] %v500
          %v502 = vld [vmem:[#allocation2 + $0x15c] sm:$0x3]
          %v503 = vsel %vm382, 0, %v502
          %504 = vst [vmem:[#allocation2 + $0x15c] sm:$0x3] %v503
          %v505 = vld [vmem:[%s321] sm:$0xff]
          %v506 = vld [vmem:[%s321 + $0x8] sm:$0xff]
          %v507 = vld [vmem:[%s321 + $0x10] sm:$0xff]
          %v508 = vld [vmem:[%s321 + $0x18] sm:$0xff]
          %v509 = vld [vmem:[%s321 + $0x20] sm:$0xff]
          %v510 = vld [vmem:[%s321 + $0x28] sm:$0xff]
          %v511 = vld [vmem:[%s321 + $0x30] sm:$0xff]
          %v512 = vld [vmem:[%s321 + $0x38] sm:$0xff]
          %v513 = vld [vmem:[%s321 + $0x40] sm:$0xff]
          %v514 = vld [vmem:[%s321 + $0x48] sm:$0xff]
          %v515 = vld [vmem:[%s321 + $0x50] sm:$0xff]
          %v516 = vld [vmem:[%s321 + $0x58] sm:$0xff]
          %v517 = vld [vmem:[%s321 + $0x60] sm:$0xff]
          %v518 = vld [vmem:[%s321 + $0x68] sm:$0xff]
          %v519 = vld [vmem:[%s321 + $0x70] sm:$0xff]
          %v520 = vld [vmem:[%s321 + $0x78] sm:$0xff]
          %v521 = vld [vmem:[%s321 + $0x80] sm:$0xff]
          %v522 = vld [vmem:[%s321 + $0x88] sm:$0xff]
          %v523 = vld [vmem:[%s321 + $0x90] sm:$0xff]
          %v524 = vld [vmem:[%s321 + $0x98] sm:$0xff]
          %v525 = vld [vmem:[%s321 + $0xa0] sm:$0xff]
          %v526 = vld [vmem:[%s321 + $0xa8] sm:$0xff]
          %v527 = vld [vmem:[%s321 + $0xb0] sm:$0xff]
          %v528 = vld [vmem:[%s321 + $0xb8] sm:$0xff]
          %v529 = vld [vmem:[%s321 + $0xc0] sm:$0xff]
          %v530 = vld [vmem:[%s321 + $0xc8] sm:$0xff]
          %v531 = vld [vmem:[%s321 + $0xd0] sm:$0xff]
          %v532 = vld [vmem:[%s321 + $0xd8] sm:$0xff]
          %v533 = vld [vmem:[%s321 + $0xe0] sm:$0xff]
          %v534 = vld [vmem:[%s321 + $0xe8] sm:$0xff]
          %v535 = vld [vmem:[%s321 + $0xf0] sm:$0xff]
          %v536 = vld [vmem:[%s321 + $0xf8] sm:$0xff]
          %v537 = vld [vmem:[%s1] sm:$0xff]
          %v538 = vld [vmem:[%s1 + $0x8] sm:$0xff]
          %v539 = vld [vmem:[%s1 + $0x10] sm:$0xff]
          %v540 = vld [vmem:[%s1 + $0x18] sm:$0xff]
          %v541 = vld [vmem:[%s2] sm:$0x1]
          %v543 = vperm.slane %v541, 0
          %vm545 = vcmask 261120
          %v547 = vsel %vm545, %v505, 0
          %v550 = vsel %vm545, %v506, 0
          %v553 = vsel %vm545, %v507, 0
          %v556 = vsel %vm545, %v508, 0
          %v559 = vsel %vm545, %v509, 0
          %v562 = vsel %vm545, %v510, 0
          %v565 = vsel %vm545, %v511, 0
          %v568 = vsel %vm545, %v512, 0
          %v571 = vsel %vm545, %v513, 0
          %v574 = vsel %vm545, %v514, 0
          %v577 = vsel %vm545, %v515, 0
          %v580 = vsel %vm545, %v516, 0
          %v583 = vsel %vm545, %v517, 0
          %v586 = vsel %vm545, %v518, 0
          %v589 = vsel %vm545, %v519, 0
          %v592 = vsel %vm545, %v520, 0
          %v595 = vsel %vm545, %v521, 0
          %v598 = vsel %vm545, %v522, 0
          %v601 = vsel %vm545, %v523, 0
          %v604 = vsel %vm545, %v524, 0
          %v607 = vsel %vm545, %v525, 0
          %v610 = vsel %vm545, %v526, 0
          %v613 = vsel %vm545, %v527, 0
          %v616 = vsel %vm545, %v528, 0
          %v619 = vsel %vm545, %v529, 0
          %v622 = vsel %vm545, %v530, 0
          %v625 = vsel %vm545, %v531, 0
          %v628 = vsel %vm545, %v532, 0
          %v631 = vsel %vm545, %v533, 0
          %v634 = vsel %vm545, %v534, 0
          %v637 = vsel %vm545, %v535, 0
          %v640 = vsel %vm545, %v536, 0
          %642 = vmatpush.msra.mxu0 0.0
          %643 = vmatpush.msra.mxu0 0.0
          %644 = vmatpush.msra.mxu0 0.0
          %645 = vmatpush.msra.mxu0 0.0
          %646 = vmatpush.msra.mxu0 0.0
          %647 = vmatpush.msra.mxu0 0.0
          %648 = vmatpush.msra.mxu0 0.0
          %649 = vmatpush.msra.mxu0 0.0
          %650 = vmatpush.msra.mxu0 0.0
          %651 = vmatpush.msra.mxu0 0.0
          %652 = vmatpush.msra.mxu0 0.0
          %653 = vmatpush.msra.mxu0 0.0
          %654 = vmatpush.msra.mxu0 %v540
          %655 = vmatpush.msra.mxu0 %v539
          %656 = vmatpush.msra.mxu0 %v538
          %657 = vmatpush.msra.mxu0 %v537
          %658 = vmatmul.f32.gmra.mxu0 %v547
          %v659 = vpop.f32.mrf.mxu0
          %v660 = vadd.f32 %v543, %v659
          %661 = vmatmul.f32.gmra.mxu0 %v550
          %v662 = vpop.f32.mrf.mxu0
          %v663 = vadd.f32 %v543, %v662
          %664 = vmatmul.f32.gmra.mxu0 %v553
          %v665 = vpop.f32.mrf.mxu0
          %v666 = vadd.f32 %v543, %v665
          %667 = vmatmul.f32.gmra.mxu0 %v556
          %v668 = vpop.f32.mrf.mxu0
          %v669 = vadd.f32 %v543, %v668
          %670 = vmatmul.f32.gmra.mxu0 %v559
          %v671 = vpop.f32.mrf.mxu0
          %v672 = vadd.f32 %v543, %v671
          %673 = vmatmul.f32.gmra.mxu0 %v562
          %v674 = vpop.f32.mrf.mxu0
          %v675 = vadd.f32 %v543, %v674
          %676 = vmatmul.f32.gmra.mxu0 %v565
          %v677 = vpop.f32.mrf.mxu0
          %v678 = vadd.f32 %v543, %v677
          %679 = vmatmul.f32.gmra.mxu0 %v568
          %v680 = vpop.f32.mrf.mxu0
          %v681 = vadd.f32 %v543, %v680
          %682 = vmatmul.f32.gmra.mxu0 %v571
          %v683 = vpop.f32.mrf.mxu0
          %v684 = vadd.f32 %v543, %v683
          %685 = vmatmul.f32.gmra.mxu0 %v574
          %v686 = vpop.f32.mrf.mxu0
          %v687 = vadd.f32 %v543, %v686
          %688 = vmatmul.f32.gmra.mxu0 %v577
          %v689 = vpop.f32.mrf.mxu0
          %v690 = vadd.f32 %v543, %v689
          %691 = vmatmul.f32.gmra.mxu0 %v580
          %v692 = vpop.f32.mrf.mxu0
          %v693 = vadd.f32 %v543, %v692
          %694 = vmatmul.f32.gmra.mxu0 %v583
          %v695 = vpop.f32.mrf.mxu0
          %v696 = vadd.f32 %v543, %v695
          %697 = vmatmul.f32.gmra.mxu0 %v586
          %v698 = vpop.f32.mrf.mxu0
          %v699 = vadd.f32 %v543, %v698
          %700 = vmatmul.f32.gmra.mxu0 %v589
          %v701 = vpop.f32.mrf.mxu0
          %v702 = vadd.f32 %v543, %v701
          %703 = vmatmul.f32.gmra.mxu0 %v592
          %v704 = vpop.f32.mrf.mxu0
          %v705 = vadd.f32 %v543, %v704
          %706 = vmatmul.f32.gmra.mxu0 %v595
          %v707 = vpop.f32.mrf.mxu0
          %v708 = vadd.f32 %v543, %v707
          %709 = vmatmul.f32.gmra.mxu0 %v598
          %v710 = vpop.f32.mrf.mxu0
          %v711 = vadd.f32 %v543, %v710
          %712 = vmatmul.f32.gmra.mxu0 %v601
          %v713 = vpop.f32.mrf.mxu0
          %v714 = vadd.f32 %v543, %v713
          %715 = vmatmul.f32.gmra.mxu0 %v604
          %v716 = vpop.f32.mrf.mxu0
          %v717 = vadd.f32 %v543, %v716
          %718 = vmatmul.f32.gmra.mxu0 %v607
          %v719 = vpop.f32.mrf.mxu0
          %v720 = vadd.f32 %v543, %v719
          %721 = vmatmul.f32.gmra.mxu0 %v610
          %v722 = vpop.f32.mrf.mxu0
          %v723 = vadd.f32 %v543, %v722
          %724 = vmatmul.f32.gmra.mxu0 %v613
          %v725 = vpop.f32.mrf.mxu0
          %v726 = vadd.f32 %v543, %v725
          %727 = vmatmul.f32.gmra.mxu0 %v616
          %v728 = vpop.f32.mrf.mxu0
          %v729 = vadd.f32 %v543, %v728
          %730 = vmatmul.f32.gmra.mxu0 %v619
          %v731 = vpop.f32.mrf.mxu0
          %v732 = vadd.f32 %v543, %v731
          %733 = vmatmul.f32.gmra.mxu0 %v622
          %v734 = vpop.f32.mrf.mxu0
          %v735 = vadd.f32 %v543, %v734
          %736 = vmatmul.f32.gmra.mxu0 %v625
          %v737 = vpop.f32.mrf.mxu0
          %v738 = vadd.f32 %v543, %v737
          %739 = vmatmul.f32.gmra.mxu0 %v628
          %v740 = vpop.f32.mrf.mxu0
          %v741 = vadd.f32 %v543, %v740
          %742 = vmatmul.f32.gmra.mxu0 %v631
          %v743 = vpop.f32.mrf.mxu0
          %v744 = vadd.f32 %v543, %v743
          %745 = vmatmul.f32.gmra.mxu0 %v634
          %v746 = vpop.f32.mrf.mxu0
          %v747 = vadd.f32 %v543, %v746
          %748 = vmatmul.f32.gmra.mxu0 %v637
          %v749 = vpop.f32.mrf.mxu0
          %v750 = vadd.f32 %v543, %v749
          %751 = vmatmul.f32.gmra.mxu0 %v640
          %v752 = vpop.f32.mrf.mxu0
          %v753 = vadd.f32 %v543, %v752
          %754 = vdwg.mxu0
          %v755 = vpack.c.bf16 %v660, %v660
          %v756 = vpack.c.bf16 %v663, %v663
          %v757 = vpack.c.bf16 %v666, %v666
          %v758 = vpack.c.bf16 %v669, %v669
          %v759 = vpack.c.bf16 %v672, %v672
          %v760 = vpack.c.bf16 %v675, %v675
          %v761 = vpack.c.bf16 %v678, %v678
          %v762 = vpack.c.bf16 %v681, %v681
          %v763 = vpack.c.bf16 %v684, %v684
          %v764 = vpack.c.bf16 %v687, %v687
          %v765 = vpack.c.bf16 %v690, %v690
          %v766 = vpack.c.bf16 %v693, %v693
          %v767 = vpack.c.bf16 %v696, %v696
          %v768 = vpack.c.bf16 %v699, %v699
          %v769 = vpack.c.bf16 %v702, %v702
          %v770 = vpack.c.bf16 %v705, %v705
          %v771 = vpack.c.bf16 %v708, %v708
          %v772 = vpack.c.bf16 %v711, %v711
          %v773 = vpack.c.bf16 %v714, %v714
          %v774 = vpack.c.bf16 %v717, %v717
          %v775 = vpack.c.bf16 %v720, %v720
          %v776 = vpack.c.bf16 %v723, %v723
          %v777 = vpack.c.bf16 %v726, %v726
          %v778 = vpack.c.bf16 %v729, %v729
          %v779 = vpack.c.bf16 %v732, %v732
          %v780 = vpack.c.bf16 %v735, %v735
          %v781 = vpack.c.bf16 %v738, %v738
          %v782 = vpack.c.bf16 %v741, %v741
          %v783 = vpack.c.bf16 %v744, %v744
          %v784 = vpack.c.bf16 %v747, %v747
          %v785 = vpack.c.bf16 %v750, %v750
          %v786 = vpack.c.bf16 %v753, %v753
          %vm787 = vcmask 11264
          %788 = vst.msk [vmem:[%s369] sm:$0xf] %vm787, %v755
          %789 = vst.msk [vmem:[%s369 + $0x4] sm:$0xf] %vm787, %v756
          %790 = vst.msk [vmem:[%s369 + $0x8] sm:$0xf] %vm787, %v757
          %791 = vst.msk [vmem:[%s369 + $0xc] sm:$0xf] %vm787, %v758
          %792 = vst.msk [vmem:[%s369 + $0x10] sm:$0xf] %vm787, %v759
          %793 = vst.msk [vmem:[%s369 + $0x14] sm:$0xf] %vm787, %v760
          %794 = vst.msk [vmem:[%s369 + $0x18] sm:$0xf] %vm787, %v761
          %795 = vst.msk [vmem:[%s369 + $0x1c] sm:$0xf] %vm787, %v762
          %796 = vst.msk [vmem:[%s369 + $0x20] sm:$0xf] %vm787, %v763
          %797 = vst.msk [vmem:[%s369 + $0x24] sm:$0xf] %vm787, %v764
          %798 = vst.msk [vmem:[%s369 + $0x28] sm:$0xf] %vm787, %v765
          %799 = vst.msk [vmem:[%s369 + $0x2c] sm:$0xf] %vm787, %v766
          %800 = vst.msk [vmem:[%s369 + $0x30] sm:$0xf] %vm787, %v767
          %801 = vst.msk [vmem:[%s369 + $0x34] sm:$0xf] %vm787, %v768
          %802 = vst.msk [vmem:[%s369 + $0x38] sm:$0xf] %vm787, %v769
          %803 = vst.msk [vmem:[%s369 + $0x3c] sm:$0xf] %vm787, %v770
          %804 = vst.msk [vmem:[%s369 + $0x40] sm:$0xf] %vm787, %v771
          %805 = vst.msk [vmem:[%s369 + $0x44] sm:$0xf] %vm787, %v772
          %806 = vst.msk [vmem:[%s369 + $0x48] sm:$0xf] %vm787, %v773
          %807 = vst.msk [vmem:[%s369 + $0x4c] sm:$0xf] %vm787, %v774
          %808 = vst.msk [vmem:[%s369 + $0x50] sm:$0xf] %vm787, %v775
          %809 = vst.msk [vmem:[%s369 + $0x54] sm:$0xf] %vm787, %v776
          %810 = vst.msk [vmem:[%s369 + $0x58] sm:$0xf] %vm787, %v777
          %811 = vst.msk [vmem:[%s369 + $0x5c] sm:$0xf] %vm787, %v778
          %812 = vst.msk [vmem:[%s369 + $0x60] sm:$0xf] %vm787, %v779
          %813 = vst.msk [vmem:[%s369 + $0x64] sm:$0xf] %vm787, %v780
          %814 = vst.msk [vmem:[%s369 + $0x68] sm:$0xf] %vm787, %v781
          %815 = vst.msk [vmem:[%s369 + $0x6c] sm:$0xf] %vm787, %v782
          %816 = vst.msk [vmem:[%s369 + $0x70] sm:$0xf] %vm787, %v783
          %817 = vst.msk [vmem:[%s369 + $0x74] sm:$0xf] %vm787, %v784
          %818 = vst.msk [vmem:[%s369 + $0x78] sm:$0xf] %vm787, %v785
          %819 = vst.msk [vmem:[%s369 + $0x7c] sm:$0xf] %vm787, %v786
          %v820 = vld [vmem:[%s3] sm:$0xff]
          %v821 = vld [vmem:[%s3 + $0x8] sm:$0xff]
          %v822 = vld [vmem:[%s3 + $0x10] sm:$0xff]
          %v823 = vld [vmem:[%s3 + $0x18] sm:$0xff]
          %v824 = vld [vmem:[%s4] sm:$0x1]
          %v826 = vperm.slane %v824, 0
          %828 = vmatpush.msra.mxu0 0.0
          %829 = vmatpush.msra.mxu0 0.0
          %830 = vmatpush.msra.mxu0 0.0
          %831 = vmatpush.msra.mxu0 0.0
          %832 = vmatpush.msra.mxu0 0.0
          %833 = vmatpush.msra.mxu0 0.0
          %834 = vmatpush.msra.mxu0 0.0
          %835 = vmatpush.msra.mxu0 0.0
          %836 = vmatpush.msra.mxu0 0.0
          %837 = vmatpush.msra.mxu0 0.0
          %838 = vmatpush.msra.mxu0 0.0
          %839 = vmatpush.msra.mxu0 0.0
          %840 = vmatpush.msra.mxu0 %v823
          %841 = vmatpush.msra.mxu0 %v822
          %842 = vmatpush.msra.mxu0 %v821
          %843 = vmatpush.msra.mxu0 %v820
          %844 = vmatmul.f32.gmra.mxu0 %v547
          %v845 = vpop.f32.mrf.mxu0
          %v846 = vadd.f32 %v826, %v845
          %847 = vmatmul.f32.gmra.mxu0 %v550
          %v848 = vpop.f32.mrf.mxu0
          %v849 = vadd.f32 %v826, %v848
          %850 = vmatmul.f32.gmra.mxu0 %v553
          %v851 = vpop.f32.mrf.mxu0
          %v852 = vadd.f32 %v826, %v851
          %853 = vmatmul.f32.gmra.mxu0 %v556
          %v854 = vpop.f32.mrf.mxu0
          %v855 = vadd.f32 %v826, %v854
          %856 = vmatmul.f32.gmra.mxu0 %v559
          %v857 = vpop.f32.mrf.mxu0
          %v858 = vadd.f32 %v826, %v857
          %859 = vmatmul.f32.gmra.mxu0 %v562
          %v860 = vpop.f32.mrf.mxu0
          %v861 = vadd.f32 %v826, %v860
          %862 = vmatmul.f32.gmra.mxu0 %v565
          %v863 = vpop.f32.mrf.mxu0
          %v864 = vadd.f32 %v826, %v863
          %865 = vmatmul.f32.gmra.mxu0 %v568
          %v866 = vpop.f32.mrf.mxu0
          %v867 = vadd.f32 %v826, %v866
          %868 = vmatmul.f32.gmra.mxu0 %v571
          %v869 = vpop.f32.mrf.mxu0
          %v870 = vadd.f32 %v826, %v869
          %871 = vmatmul.f32.gmra.mxu0 %v574
          %v872 = vpop.f32.mrf.mxu0
          %v873 = vadd.f32 %v826, %v872
          %874 = vmatmul.f32.gmra.mxu0 %v577
          %v875 = vpop.f32.mrf.mxu0
          %v876 = vadd.f32 %v826, %v875
          %877 = vmatmul.f32.gmra.mxu0 %v580
          %v878 = vpop.f32.mrf.mxu0
          %v879 = vadd.f32 %v826, %v878
          %880 = vmatmul.f32.gmra.mxu0 %v583
          %v881 = vpop.f32.mrf.mxu0
          %v882 = vadd.f32 %v826, %v881
          %883 = vmatmul.f32.gmra.mxu0 %v586
          %v884 = vpop.f32.mrf.mxu0
          %v885 = vadd.f32 %v826, %v884
          %886 = vmatmul.f32.gmra.mxu0 %v589
          %v887 = vpop.f32.mrf.mxu0
          %v888 = vadd.f32 %v826, %v887
          %889 = vmatmul.f32.gmra.mxu0 %v592
          %v890 = vpop.f32.mrf.mxu0
          %v891 = vadd.f32 %v826, %v890
          %892 = vmatmul.f32.gmra.mxu0 %v595
          %v893 = vpop.f32.mrf.mxu0
          %v894 = vadd.f32 %v826, %v893
          %895 = vmatmul.f32.gmra.mxu0 %v598
          %v896 = vpop.f32.mrf.mxu0
          %v897 = vadd.f32 %v826, %v896
          %898 = vmatmul.f32.gmra.mxu0 %v601
          %v899 = vpop.f32.mrf.mxu0
          %v900 = vadd.f32 %v826, %v899
          %901 = vmatmul.f32.gmra.mxu0 %v604
          %v902 = vpop.f32.mrf.mxu0
          %v903 = vadd.f32 %v826, %v902
          %904 = vmatmul.f32.gmra.mxu0 %v607
          %v905 = vpop.f32.mrf.mxu0
          %v906 = vadd.f32 %v826, %v905
          %907 = vmatmul.f32.gmra.mxu0 %v610
          %v908 = vpop.f32.mrf.mxu0
          %v909 = vadd.f32 %v826, %v908
          %910 = vmatmul.f32.gmra.mxu0 %v613
          %v911 = vpop.f32.mrf.mxu0
          %v912 = vadd.f32 %v826, %v911
          %913 = vmatmul.f32.gmra.mxu0 %v616
          %v914 = vpop.f32.mrf.mxu0
          %v915 = vadd.f32 %v826, %v914
          %916 = vmatmul.f32.gmra.mxu0 %v619
          %v917 = vpop.f32.mrf.mxu0
          %v918 = vadd.f32 %v826, %v917
          %919 = vmatmul.f32.gmra.mxu0 %v622
          %v920 = vpop.f32.mrf.mxu0
          %v921 = vadd.f32 %v826, %v920
          %922 = vmatmul.f32.gmra.mxu0 %v625
          %v923 = vpop.f32.mrf.mxu0
          %v924 = vadd.f32 %v826, %v923
          %925 = vmatmul.f32.gmra.mxu0 %v628
          %v926 = vpop.f32.mrf.mxu0
          %v927 = vadd.f32 %v826, %v926
          %928 = vmatmul.f32.gmra.mxu0 %v631
          %v929 = vpop.f32.mrf.mxu0
          %v930 = vadd.f32 %v826, %v929
          %931 = vmatmul.f32.gmra.mxu0 %v634
          %v932 = vpop.f32.mrf.mxu0
          %v933 = vadd.f32 %v826, %v932
          %934 = vmatmul.f32.gmra.mxu0 %v637
          %v935 = vpop.f32.mrf.mxu0
          %v936 = vadd.f32 %v826, %v935
          %937 = vmatmul.f32.gmra.mxu0 %v640
          %v938 = vpop.f32.mrf.mxu0
          %v939 = vadd.f32 %v826, %v938
          %940 = vdwg.mxu0
          %v941 = vpack.c.bf16 %v846, %v846
          %v942 = vpack.c.bf16 %v849, %v849
          %v943 = vpack.c.bf16 %v852, %v852
          %v944 = vpack.c.bf16 %v855, %v855
          %v945 = vpack.c.bf16 %v858, %v858
          %v946 = vpack.c.bf16 %v861, %v861
          %v947 = vpack.c.bf16 %v864, %v864
          %v948 = vpack.c.bf16 %v867, %v867
          %v949 = vpack.c.bf16 %v870, %v870
          %v950 = vpack.c.bf16 %v873, %v873
          %v951 = vpack.c.bf16 %v876, %v876
          %v952 = vpack.c.bf16 %v879, %v879
          %v953 = vpack.c.bf16 %v882, %v882
          %v954 = vpack.c.bf16 %v885, %v885
          %v955 = vpack.c.bf16 %v888, %v888
          %v956 = vpack.c.bf16 %v891, %v891
          %v957 = vpack.c.bf16 %v894, %v894
          %v958 = vpack.c.bf16 %v897, %v897
          %v959 = vpack.c.bf16 %v900, %v900
          %v960 = vpack.c.bf16 %v903, %v903
          %v961 = vpack.c.bf16 %v906, %v906
          %v962 = vpack.c.bf16 %v909, %v909
          %v963 = vpack.c.bf16 %v912, %v912
          %v964 = vpack.c.bf16 %v915, %v915
          %v965 = vpack.c.bf16 %v918, %v918
          %v966 = vpack.c.bf16 %v921, %v921
          %v967 = vpack.c.bf16 %v924, %v924
          %v968 = vpack.c.bf16 %v927, %v927
          %v969 = vpack.c.bf16 %v930, %v930
          %v970 = vpack.c.bf16 %v933, %v933
          %v971 = vpack.c.bf16 %v936, %v936
          %v972 = vpack.c.bf16 %v939, %v939
          %s973 = scalar_lea.vmem [#allocation2], 48
          %974 = vst.msk [vmem:[%s973 + $0x4] sm:$0xf] %vm376, %v941
          %975 = vst.msk [vmem:[%s973 + $0x8] sm:$0xf] %vm376, %v942
          %976 = vst.msk [vmem:[%s973 + $0x14] sm:$0xf] %vm376, %v943
          %977 = vst.msk [vmem:[%s973 + $0x18] sm:$0xf] %vm376, %v944
          %978 = vst.msk [vmem:[%s973 + $0x24] sm:$0xf] %vm376, %v945
          %979 = vst.msk [vmem:[%s973 + $0x28] sm:$0xf] %vm376, %v946
          %980 = vst.msk [vmem:[%s973 + $0x34] sm:$0xf] %vm376, %v947
          %981 = vst.msk [vmem:[%s973 + $0x38] sm:$0xf] %vm376, %v948
          %982 = vst.msk [vmem:[%s973 + $0x44] sm:$0xf] %vm376, %v949
          %983 = vst.msk [vmem:[%s973 + $0x48] sm:$0xf] %vm376, %v950
          %984 = vst.msk [vmem:[%s973 + $0x54] sm:$0xf] %vm376, %v951
          %985 = vst.msk [vmem:[%s973 + $0x58] sm:$0xf] %vm376, %v952
          %986 = vst.msk [vmem:[%s973 + $0x64] sm:$0xf] %vm376, %v953
          %987 = vst.msk [vmem:[%s973 + $0x68] sm:$0xf] %vm376, %v954
          %988 = vst.msk [vmem:[%s973 + $0x74] sm:$0xf] %vm376, %v955
          %989 = vst.msk [vmem:[%s973 + $0x78] sm:$0xf] %vm376, %v956
          %990 = vst.msk [vmem:[%s973 + $0x84] sm:$0xf] %vm376, %v957
          %991 = vst.msk [vmem:[%s973 + $0x88] sm:$0xf] %vm376, %v958
          %992 = vst.msk [vmem:[%s973 + $0x94] sm:$0xf] %vm376, %v959
          %993 = vst.msk [vmem:[%s973 + $0x98] sm:$0xf] %vm376, %v960
          %994 = vst.msk [vmem:[%s973 + $0xa4] sm:$0xf] %vm376, %v961
          %995 = vst.msk [vmem:[%s973 + $0xa8] sm:$0xf] %vm376, %v962
          %996 = vst.msk [vmem:[%s973 + $0xb4] sm:$0xf] %vm376, %v963
          %997 = vst.msk [vmem:[%s973 + $0xb8] sm:$0xf] %vm376, %v964
          %998 = vst.msk [vmem:[%s973 + $0xc4] sm:$0xf] %vm376, %v965
          %999 = vst.msk [vmem:[%s973 + $0xc8] sm:$0xf] %vm376, %v966
          %1000 = vst.msk [vmem:[%s973 + $0xd4] sm:$0xf] %vm376, %v967
          %1001 = vst.msk [vmem:[%s973 + $0xd8] sm:$0xf] %vm376, %v968
          %1002 = vst.msk [vmem:[%s973 + $0xe4] sm:$0xf] %vm376, %v969
          %1003 = vst.msk [vmem:[%s973 + $0xe8] sm:$0xf] %vm376, %v970
          %1004 = vst.msk [vmem:[%s973 + $0xf4] sm:$0xf] %vm376, %v971
          %1005 = vst.msk [vmem:[%s973 + $0xf8] sm:$0xf] %vm376, %v972
        $region60: #{tpu_custom_call.1} parent=47 // pred_fallthru
          _
        %s1006 = smul.u32 %s32, 8
        %s1007 = smul.u32 %s1006, 4
        %s1008 = smul.addr %s1007, 4
        %s1009 = scalar_lea.vmem [#allocation2], %s1008
        %v1010 = vld [vmem:[%s1009] sm:$0xc]
        %v1011 = vld [vmem:[%s1009 + $0x4] sm:$0xf]
        %v1012 = vld [vmem:[%s1009 + $0x8] sm:$0x7]
        %v1013 = vld [vmem:[%s1009 + $0x10] sm:$0xc]
        %v1014 = vld [vmem:[%s1009 + $0x14] sm:$0xf]
        %v1015 = vld [vmem:[%s1009 + $0x18] sm:$0x7]
        %v1016 = vld [vmem:[%s1009 + $0x20] sm:$0xc]
        %v1017 = vld [vmem:[%s1009 + $0x24] sm:$0xf]
        %v1018 = vld [vmem:[%s1009 + $0x28] sm:$0x7]
        %v1019 = vld [vmem:[%s1009 + $0x30] sm:$0xc]
        %v1020 = vld [vmem:[%s1009 + $0x34] sm:$0xf]
        %v1021 = vld [vmem:[%s1009 + $0x38] sm:$0x7]
        %v1022 = vld [vmem:[%s1009 + $0x40] sm:$0xc]
        %v1023 = vld [vmem:[%s1009 + $0x44] sm:$0xf]
        %v1024 = vld [vmem:[%s1009 + $0x48] sm:$0x7]
        %v1025 = vld [vmem:[%s1009 + $0x50] sm:$0xc]
        %v1026 = vld [vmem:[%s1009 + $0x54] sm:$0xf]
        %v1027 = vld [vmem:[%s1009 + $0x58] sm:$0x7]
        %v1028 = vld [vmem:[%s1009 + $0x60] sm:$0xc]
        %v1029 = vld [vmem:[%s1009 + $0x64] sm:$0xf]
        %v1030 = vld [vmem:[%s1009 + $0x68] sm:$0x7]
        %v1031 = vld [vmem:[%s1009 + $0x70] sm:$0xc]
        %v1032 = vld [vmem:[%s1009 + $0x74] sm:$0xf]
        %v1033 = vld [vmem:[%s1009 + $0x78] sm:$0x7]
        %v1034 = vunpack.c.l.bf16 %v1010
        %v1035 = vunpack.c.l.bf16 %v1011
        %v1036 = vunpack.c.l.bf16 %v1012
        %v1037 = vunpack.c.l.bf16 %v1013
        %v1038 = vunpack.c.l.bf16 %v1014
        %v1039 = vunpack.c.l.bf16 %v1015
        %v1040 = vunpack.c.l.bf16 %v1016
        %v1041 = vunpack.c.l.bf16 %v1017
        %v1042 = vunpack.c.l.bf16 %v1018
        %v1043 = vunpack.c.l.bf16 %v1019
        %v1044 = vunpack.c.l.bf16 %v1020
        %v1045 = vunpack.c.l.bf16 %v1021
        %v1046 = vunpack.c.l.bf16 %v1022
        %v1047 = vunpack.c.l.bf16 %v1023
        %v1048 = vunpack.c.l.bf16 %v1024
        %v1049 = vunpack.c.l.bf16 %v1025
        %v1050 = vunpack.c.l.bf16 %v1026
        %v1051 = vunpack.c.l.bf16 %v1027
        %v1052 = vunpack.c.l.bf16 %v1028
        %v1053 = vunpack.c.l.bf16 %v1029
        %v1054 = vunpack.c.l.bf16 %v1030
        %v1055 = vunpack.c.l.bf16 %v1031
        %v1056 = vunpack.c.l.bf16 %v1032
        %v1057 = vunpack.c.l.bf16 %v1033
        %v1058 = vld [vmem:[#allocation6] sm:$0x1]
        %v1059 = vperm.slane %v1058, 0
        %v1060 = vmul.f32 %v1034, %v1059
        %v1061 = vmul.f32 %v1035, %v1059
        %v1062 = vmul.f32 %v1036, %v1059
        %v1063 = vmul.f32 %v1037, %v1059
        %v1064 = vmul.f32 %v1038, %v1059
        %v1065 = vmul.f32 %v1039, %v1059
        %v1066 = vmul.f32 %v1040, %v1059
        %v1067 = vmul.f32 %v1041, %v1059
        %v1068 = vmul.f32 %v1042, %v1059
        %v1069 = vmul.f32 %v1043, %v1059
        %v1070 = vmul.f32 %v1044, %v1059
        %v1071 = vmul.f32 %v1045, %v1059
        %v1072 = vmul.f32 %v1046, %v1059
        %v1073 = vmul.f32 %v1047, %v1059
        %v1074 = vmul.f32 %v1048, %v1059
        %v1075 = vmul.f32 %v1049, %v1059
        %v1076 = vmul.f32 %v1050, %v1059
        %v1077 = vmul.f32 %v1051, %v1059
        %v1078 = vmul.f32 %v1052, %v1059
        %v1079 = vmul.f32 %v1053, %v1059
        %v1080 = vmul.f32 %v1054, %v1059
        %v1081 = vmul.f32 %v1055, %v1059
        %v1082 = vmul.f32 %v1056, %v1059
        %v1083 = vmul.f32 %v1057, %v1059
        %v1084 = vadd.f32 %v1060, 0.0
        %v1085 = vadd.f32 %v1061, 0.0
        %v1086 = vadd.f32 %v1062, 0.0
        %v1087 = vadd.f32 %v1063, 0.0
        %v1088 = vadd.f32 %v1064, 0.0
        %v1089 = vadd.f32 %v1065, 0.0
        %v1090 = vadd.f32 %v1066, 0.0
        %v1091 = vadd.f32 %v1067, 0.0
        %v1092 = vadd.f32 %v1068, 0.0
        %v1093 = vadd.f32 %v1069, 0.0
        %v1094 = vadd.f32 %v1070, 0.0
        %v1095 = vadd.f32 %v1071, 0.0
        %v1096 = vadd.f32 %v1072, 0.0
        %v1097 = vadd.f32 %v1073, 0.0
        %v1098 = vadd.f32 %v1074, 0.0
        %v1099 = vadd.f32 %v1075, 0.0
        %v1100 = vadd.f32 %v1076, 0.0
        %v1101 = vadd.f32 %v1077, 0.0
        %v1102 = vadd.f32 %v1078, 0.0
        %v1103 = vadd.f32 %v1079, 0.0
        %v1104 = vadd.f32 %v1080, 0.0
        %v1105 = vadd.f32 %v1081, 0.0
        %v1106 = vadd.f32 %v1082, 0.0
        %v1107 = vadd.f32 %v1083, 0.0
        %v1108 = vld [vmem:[%s1009] sm:$0x8]
        %v1109 = vld [vmem:[%s1009 + $0x10] sm:$0x8]
        %v1110 = vld [vmem:[%s1009 + $0x20] sm:$0x8]
        %v1111 = vld [vmem:[%s1009 + $0x30] sm:$0x8]
        %v1112 = vld [vmem:[%s1009 + $0x40] sm:$0x8]
        %v1113 = vld [vmem:[%s1009 + $0x50] sm:$0x8]
        %v1114 = vld [vmem:[%s1009 + $0x60] sm:$0x8]
        %v1115 = vld [vmem:[%s1009 + $0x70] sm:$0x8]
        %v1116 = vunpack.c.l.bf16 %v1108
        %v1117 = vunpack.c.l.bf16 %v1109
        %v1118 = vunpack.c.l.bf16 %v1110
        %v1119 = vunpack.c.l.bf16 %v1111
        %v1120 = vunpack.c.l.bf16 %v1112
        %v1121 = vunpack.c.l.bf16 %v1113
        %v1122 = vunpack.c.l.bf16 %v1114
        %v1123 = vunpack.c.l.bf16 %v1115
        %v1124 = vld [vmem:[#allocation6 + $0x1] sm:$0x1]
        %v1125 = vperm.slane %v1124, 0
        %v1126 = vmul.f32 %v1116, %v1125
        %v1127 = vmul.f32 %v1035, %v1125
        %v1128 = vmul.f32 %v1036, %v1125
        %v1129 = vmul.f32 %v1117, %v1125
        %v1130 = vmul.f32 %v1038, %v1125
        %v1131 = vmul.f32 %v1039, %v1125
        %v1132 = vmul.f32 %v1118, %v1125
        %v1133 = vmul.f32 %v1041, %v1125
        %v1134 = vmul.f32 %v1042, %v1125
        %v1135 = vmul.f32 %v1119, %v1125
        %v1136 = vmul.f32 %v1044, %v1125
        %v1137 = vmul.f32 %v1045, %v1125
        %v1138 = vmul.f32 %v1120, %v1125
        %v1139 = vmul.f32 %v1047, %v1125
        %v1140 = vmul.f32 %v1048, %v1125
        %v1141 = vmul.f32 %v1121, %v1125
        %v1142 = vmul.f32 %v1050, %v1125
        %v1143 = vmul.f32 %v1051, %v1125
        %v1144 = vmul.f32 %v1122, %v1125
        %v1145 = vmul.f32 %v1053, %v1125
        %v1146 = vmul.f32 %v1054, %v1125
        %v1147 = vmul.f32 %v1123, %v1125
        %v1148 = vmul.f32 %v1056, %v1125
        %v1149 = vmul.f32 %v1057, %v1125
        %vm1174 = vcmask 1046528
        %v1175 = vrot.slane %v1126, 1
        %v1176 = vrot.slane %v1127, 1
        %v1177 = vsel %vm1174, %v1175, %v1176
        %v1178 = vrot.slane %v1128, 1
        %v1179 = vsel %vm1174, %v1176, %v1178
        %v1180 = vrot.slane %v1129, 1
        %v1181 = vrot.slane %v1130, 1
        %v1182 = vsel %vm1174, %v1180, %v1181
        %v1183 = vrot.slane %v1131, 1
        %v1184 = vsel %vm1174, %v1181, %v1183
        %v1185 = vrot.slane %v1132, 1
        %v1186 = vrot.slane %v1133, 1
        %v1187 = vsel %vm1174, %v1185, %v1186
        %v1188 = vrot.slane %v1134, 1
        %v1189 = vsel %vm1174, %v1186, %v1188
        %v1190 = vrot.slane %v1135, 1
        %v1191 = vrot.slane %v1136, 1
        %v1192 = vsel %vm1174, %v1190, %v1191
        %v1193 = vrot.slane %v1137, 1
        %v1194 = vsel %vm1174, %v1191, %v1193
        %v1195 = vrot.slane %v1138, 1
        %v1196 = vrot.slane %v1139, 1
        %v1197 = vsel %vm1174, %v1195, %v1196
        %v1198 = vrot.slane %v1140, 1
        %v1199 = vsel %vm1174, %v1196, %v1198
        %v1200 = vrot.slane %v1141, 1
        %v1201 = vrot.slane %v1142, 1
        %v1202 = vsel %vm1174, %v1200, %v1201
        %v1203 = vrot.slane %v1143, 1
        %v1204 = vsel %vm1174, %v1201, %v1203
        %v1205 = vrot.slane %v1144, 1
        %v1206 = vrot.slane %v1145, 1
        %v1207 = vsel %vm1174, %v1205, %v1206
        %v1208 = vrot.slane %v1146, 1
        %v1209 = vsel %vm1174, %v1206, %v1208
        %v1210 = vrot.slane %v1147, 1
        %v1211 = vrot.slane %v1148, 1
        %v1212 = vsel %vm1174, %v1210, %v1211
        %v1213 = vrot.slane %v1149, 1
        %v1214 = vsel %vm1174, %v1211, %v1213
        %v1239 = vadd.f32 %v1084, %v1177
        %v1240 = vadd.f32 %v1085, %v1179
        %v1241 = vadd.f32 %v1086, %v1178
        %v1242 = vadd.f32 %v1087, %v1182
        %v1243 = vadd.f32 %v1088, %v1184
        %v1244 = vadd.f32 %v1089, %v1183
        %v1245 = vadd.f32 %v1090, %v1187
        %v1246 = vadd.f32 %v1091, %v1189
        %v1247 = vadd.f32 %v1092, %v1188
        %v1248 = vadd.f32 %v1093, %v1192
        %v1249 = vadd.f32 %v1094, %v1194
        %v1250 = vadd.f32 %v1095, %v1193
        %v1251 = vadd.f32 %v1096, %v1197
        %v1252 = vadd.f32 %v1097, %v1199
        %v1253 = vadd.f32 %v1098, %v1198
        %v1254 = vadd.f32 %v1099, %v1202
        %v1255 = vadd.f32 %v1100, %v1204
        %v1256 = vadd.f32 %v1101, %v1203
        %v1257 = vadd.f32 %v1102, %v1207
        %v1258 = vadd.f32 %v1103, %v1209
        %v1259 = vadd.f32 %v1104, %v1208
        %v1260 = vadd.f32 %v1105, %v1212
        %v1261 = vadd.f32 %v1106, %v1214
        %v1262 = vadd.f32 %v1107, %v1213
        %v1263 = vld [vmem:[%s1009 + $0x8] sm:$0xf]
        %v1264 = vld [vmem:[%s1009 + $0x18] sm:$0xf]
        %v1265 = vld [vmem:[%s1009 + $0x28] sm:$0xf]
        %v1266 = vld [vmem:[%s1009 + $0x38] sm:$0xf]
        %v1267 = vld [vmem:[%s1009 + $0x48] sm:$0xf]
        %v1268 = vld [vmem:[%s1009 + $0x58] sm:$0xf]
        %v1269 = vld [vmem:[%s1009 + $0x68] sm:$0xf]
        %v1270 = vld [vmem:[%s1009 + $0x78] sm:$0xf]
        %v1271 = vunpack.c.l.bf16 %v1263
        %v1272 = vunpack.c.l.bf16 %v1264
        %v1273 = vunpack.c.l.bf16 %v1265
        %v1274 = vunpack.c.l.bf16 %v1266
        %v1275 = vunpack.c.l.bf16 %v1267
        %v1276 = vunpack.c.l.bf16 %v1268
        %v1277 = vunpack.c.l.bf16 %v1269
        %v1278 = vunpack.c.l.bf16 %v1270
        %v1279 = vld [vmem:[#allocation6 + $0x2] sm:$0x1]
        %v1280 = vperm.slane %v1279, 0
        %v1281 = vmul.f32 %v1116, %v1280
        %v1282 = vmul.f32 %v1035, %v1280
        %v1283 = vmul.f32 %v1271, %v1280
        %v1284 = vmul.f32 %v1117, %v1280
        %v1285 = vmul.f32 %v1038, %v1280
        %v1286 = vmul.f32 %v1272, %v1280
        %v1287 = vmul.f32 %v1118, %v1280
        %v1288 = vmul.f32 %v1041, %v1280
        %v1289 = vmul.f32 %v1273, %v1280
        %v1290 = vmul.f32 %v1119, %v1280
        %v1291 = vmul.f32 %v1044, %v1280
        %v1292 = vmul.f32 %v1274, %v1280
        %v1293 = vmul.f32 %v1120, %v1280
        %v1294 = vmul.f32 %v1047, %v1280
        %v1295 = vmul.f32 %v1275, %v1280
        %v1296 = vmul.f32 %v1121, %v1280
        %v1297 = vmul.f32 %v1050, %v1280
        %v1298 = vmul.f32 %v1276, %v1280
        %v1299 = vmul.f32 %v1122, %v1280
        %v1300 = vmul.f32 %v1053, %v1280
        %v1301 = vmul.f32 %v1277, %v1280
        %v1302 = vmul.f32 %v1123, %v1280
        %v1303 = vmul.f32 %v1056, %v1280
        %v1304 = vmul.f32 %v1278, %v1280
        %vm1329 = vcmask 1045504
        %v1330 = vrot.slane %v1281, 2
        %v1331 = vrot.slane %v1282, 2
        %v1332 = vsel %vm1329, %v1330, %v1331
        %v1333 = vrot.slane %v1283, 2
        %v1334 = vsel %vm1329, %v1331, %v1333
        %v1335 = vrot.slane %v1284, 2
        %v1336 = vrot.slane %v1285, 2
        %v1337 = vsel %vm1329, %v1335, %v1336
        %v1338 = vrot.slane %v1286, 2
        %v1339 = vsel %vm1329, %v1336, %v1338
        %v1340 = vrot.slane %v1287, 2
        %v1341 = vrot.slane %v1288, 2
        %v1342 = vsel %vm1329, %v1340, %v1341
        %v1343 = vrot.slane %v1289, 2
        %v1344 = vsel %vm1329, %v1341, %v1343
        %v1345 = vrot.slane %v1290, 2
        %v1346 = vrot.slane %v1291, 2
        %v1347 = vsel %vm1329, %v1345, %v1346
        %v1348 = vrot.slane %v1292, 2
        %v1349 = vsel %vm1329, %v1346, %v1348
        %v1350 = vrot.slane %v1293, 2
        %v1351 = vrot.slane %v1294, 2
        %v1352 = vsel %vm1329, %v1350, %v1351
        %v1353 = vrot.slane %v1295, 2
        %v1354 = vsel %vm1329, %v1351, %v1353
        %v1355 = vrot.slane %v1296, 2
        %v1356 = vrot.slane %v1297, 2
        %v1357 = vsel %vm1329, %v1355, %v1356
        %v1358 = vrot.slane %v1298, 2
        %v1359 = vsel %vm1329, %v1356, %v1358
        %v1360 = vrot.slane %v1299, 2
        %v1361 = vrot.slane %v1300, 2
        %v1362 = vsel %vm1329, %v1360, %v1361
        %v1363 = vrot.slane %v1301, 2
        %v1364 = vsel %vm1329, %v1361, %v1363
        %v1365 = vrot.slane %v1302, 2
        %v1366 = vrot.slane %v1303, 2
        %v1367 = vsel %vm1329, %v1365, %v1366
        %v1368 = vrot.slane %v1304, 2
        %v1369 = vsel %vm1329, %v1366, %v1368
        %v1394 = vadd.f32 %v1239, %v1332
        %v1395 = vadd.f32 %v1240, %v1334
        %v1396 = vadd.f32 %v1241, %v1333
        %v1397 = vadd.f32 %v1242, %v1337
        %v1398 = vadd.f32 %v1243, %v1339
        %v1399 = vadd.f32 %v1244, %v1338
        %v1400 = vadd.f32 %v1245, %v1342
        %v1401 = vadd.f32 %v1246, %v1344
        %v1402 = vadd.f32 %v1247, %v1343
        %v1403 = vadd.f32 %v1248, %v1347
        %v1404 = vadd.f32 %v1249, %v1349
        %v1405 = vadd.f32 %v1250, %v1348
        %v1406 = vadd.f32 %v1251, %v1352
        %v1407 = vadd.f32 %v1252, %v1354
        %v1408 = vadd.f32 %v1253, %v1353
        %v1409 = vadd.f32 %v1254, %v1357
        %v1410 = vadd.f32 %v1255, %v1359
        %v1411 = vadd.f32 %v1256, %v1358
        %v1412 = vadd.f32 %v1257, %v1362
        %v1413 = vadd.f32 %v1258, %v1364
        %v1414 = vadd.f32 %v1259, %v1363
        %v1415 = vadd.f32 %v1260, %v1367
        %v1416 = vadd.f32 %v1261, %v1369
        %v1417 = vadd.f32 %v1262, %v1368
        %v1418 = vld [vmem:[#allocation6 + $0x3] sm:$0x1]
        %v1419 = vperm.slane %v1418, 0
        %v1420 = vmul.f32 %v1035, %v1419
        %v1421 = vmul.f32 %v1271, %v1419
        %v1422 = vmul.f32 %v1038, %v1419
        %v1423 = vmul.f32 %v1272, %v1419
        %v1424 = vmul.f32 %v1041, %v1419
        %v1425 = vmul.f32 %v1273, %v1419
        %v1426 = vmul.f32 %v1044, %v1419
        %v1427 = vmul.f32 %v1274, %v1419
        %v1428 = vmul.f32 %v1047, %v1419
        %v1429 = vmul.f32 %v1275, %v1419
        %v1430 = vmul.f32 %v1050, %v1419
        %v1431 = vmul.f32 %v1276, %v1419
        %v1432 = vmul.f32 %v1053, %v1419
        %v1433 = vmul.f32 %v1277, %v1419
        %v1434 = vmul.f32 %v1056, %v1419
        %v1435 = vmul.f32 %v1278, %v1419
        %vm1452 = vcmask 1044480
        %v1453 = vrot.slane %v1420, 3
        %v1454 = vrot.slane %v1421, 3
        %v1455 = vsel %vm1452, %v1453, %v1454
        %v1456 = vrot.slane %v1422, 3
        %v1457 = vrot.slane %v1423, 3
        %v1458 = vsel %vm1452, %v1456, %v1457
        %v1459 = vrot.slane %v1424, 3
        %v1460 = vrot.slane %v1425, 3
        %v1461 = vsel %vm1452, %v1459, %v1460
        %v1462 = vrot.slane %v1426, 3
        %v1463 = vrot.slane %v1427, 3
        %v1464 = vsel %vm1452, %v1462, %v1463
        %v1465 = vrot.slane %v1428, 3
        %v1466 = vrot.slane %v1429, 3
        %v1467 = vsel %vm1452, %v1465, %v1466
        %v1468 = vrot.slane %v1430, 3
        %v1469 = vrot.slane %v1431, 3
        %v1470 = vsel %vm1452, %v1468, %v1469
        %v1471 = vrot.slane %v1432, 3
        %v1472 = vrot.slane %v1433, 3
        %v1473 = vsel %vm1452, %v1471, %v1472
        %v1474 = vrot.slane %v1434, 3
        %v1475 = vrot.slane %v1435, 3
        %v1476 = vsel %vm1452, %v1474, %v1475
        %v1501 = vadd.f32 %v1394, %v1453
        %v1502 = vadd.f32 %v1395, %v1455
        %v1503 = vadd.f32 %v1396, %v1454
        %v1504 = vadd.f32 %v1397, %v1456
        %v1505 = vadd.f32 %v1398, %v1458
        %v1506 = vadd.f32 %v1399, %v1457
        %v1507 = vadd.f32 %v1400, %v1459
        %v1508 = vadd.f32 %v1401, %v1461
        %v1509 = vadd.f32 %v1402, %v1460
        %v1510 = vadd.f32 %v1403, %v1462
        %v1511 = vadd.f32 %v1404, %v1464
        %v1512 = vadd.f32 %v1405, %v1463
        %v1513 = vadd.f32 %v1406, %v1465
        %v1514 = vadd.f32 %v1407, %v1467
        %v1515 = vadd.f32 %v1408, %v1466
        %v1516 = vadd.f32 %v1409, %v1468
        %v1517 = vadd.f32 %v1410, %v1470
        %v1518 = vadd.f32 %v1411, %v1469
        %v1519 = vadd.f32 %v1412, %v1471
        %v1520 = vadd.f32 %v1413, %v1473
        %v1521 = vadd.f32 %v1414, %v1472
        %v1522 = vadd.f32 %v1415, %v1474
        %v1523 = vadd.f32 %v1416, %v1476
        %v1524 = vadd.f32 %v1417, %v1475
        %v1525 = vld [vmem:[%s1009 + $0xc] sm:$0x1]
        %v1526 = vld [vmem:[%s1009 + $0x1c] sm:$0x1]
        %v1527 = vld [vmem:[%s1009 + $0x2c] sm:$0x1]
        %v1528 = vld [vmem:[%s1009 + $0x3c] sm:$0x1]
        %v1529 = vld [vmem:[%s1009 + $0x4c] sm:$0x1]
        %v1530 = vld [vmem:[%s1009 + $0x5c] sm:$0x1]
        %v1531 = vld [vmem:[%s1009 + $0x6c] sm:$0x1]
        %v1532 = vld [vmem:[%s1009 + $0x7c] sm:$0x1]
        %v1533 = vunpack.c.l.bf16 %v1525
        %v1534 = vunpack.c.l.bf16 %v1526
        %v1535 = vunpack.c.l.bf16 %v1527
        %v1536 = vunpack.c.l.bf16 %v1528
        %v1537 = vunpack.c.l.bf16 %v1529
        %v1538 = vunpack.c.l.bf16 %v1530
        %v1539 = vunpack.c.l.bf16 %v1531
        %v1540 = vunpack.c.l.bf16 %v1532
        %v1541 = vld [vmem:[#allocation6 + $0x4] sm:$0x1]
        %v1542 = vperm.slane %v1541, 0
        %v1543 = vmul.f32 %v1035, %v1542
        %v1544 = vmul.f32 %v1271, %v1542
        %v1545 = vmul.f32 %v1533, %v1542
        %v1546 = vmul.f32 %v1038, %v1542
        %v1547 = vmul.f32 %v1272, %v1542
        %v1548 = vmul.f32 %v1534, %v1542
        %v1549 = vmul.f32 %v1041, %v1542
        %v1550 = vmul.f32 %v1273, %v1542
        %v1551 = vmul.f32 %v1535, %v1542
        %v1552 = vmul.f32 %v1044, %v1542
        %v1553 = vmul.f32 %v1274, %v1542
        %v1554 = vmul.f32 %v1536, %v1542
        %v1555 = vmul.f32 %v1047, %v1542
        %v1556 = vmul.f32 %v1275, %v1542
        %v1557 = vmul.f32 %v1537, %v1542
        %v1558 = vmul.f32 %v1050, %v1542
        %v1559 = vmul.f32 %v1276, %v1542
        %v1560 = vmul.f32 %v1538, %v1542
        %v1561 = vmul.f32 %v1053, %v1542
        %v1562 = vmul.f32 %v1277, %v1542
        %v1563 = vmul.f32 %v1539, %v1542
        %v1564 = vmul.f32 %v1056, %v1542
        %v1565 = vmul.f32 %v1278, %v1542
        %v1566 = vmul.f32 %v1540, %v1542
        %vm1591 = vcmask 1043456
        %v1592 = vrot.slane %v1543, 4
        %v1593 = vrot.slane %v1544, 4
        %v1594 = vsel %vm1591, %v1592, %v1593
        %v1595 = vrot.slane %v1545, 4
        %v1596 = vsel %vm1591, %v1593, %v1595
        %v1597 = vrot.slane %v1546, 4
        %v1598 = vrot.slane %v1547, 4
        %v1599 = vsel %vm1591, %v1597, %v1598
        %v1600 = vrot.slane %v1548, 4
        %v1601 = vsel %vm1591, %v1598, %v1600
        %v1602 = vrot.slane %v1549, 4
        %v1603 = vrot.slane %v1550, 4
        %v1604 = vsel %vm1591, %v1602, %v1603
        %v1605 = vrot.slane %v1551, 4
        %v1606 = vsel %vm1591, %v1603, %v1605
        %v1607 = vrot.slane %v1552, 4
        %v1608 = vrot.slane %v1553, 4
        %v1609 = vsel %vm1591, %v1607, %v1608
        %v1610 = vrot.slane %v1554, 4
        %v1611 = vsel %vm1591, %v1608, %v1610
        %v1612 = vrot.slane %v1555, 4
        %v1613 = vrot.slane %v1556, 4
        %v1614 = vsel %vm1591, %v1612, %v1613
        %v1615 = vrot.slane %v1557, 4
        %v1616 = vsel %vm1591, %v1613, %v1615
        %v1617 = vrot.slane %v1558, 4
        %v1618 = vrot.slane %v1559, 4
        %v1619 = vsel %vm1591, %v1617, %v1618
        %v1620 = vrot.slane %v1560, 4
        %v1621 = vsel %vm1591, %v1618, %v1620
        %v1622 = vrot.slane %v1561, 4
        %v1623 = vrot.slane %v1562, 4
        %v1624 = vsel %vm1591, %v1622, %v1623
        %v1625 = vrot.slane %v1563, 4
        %v1626 = vsel %vm1591, %v1623, %v1625
        %v1627 = vrot.slane %v1564, 4
        %v1628 = vrot.slane %v1565, 4
        %v1629 = vsel %vm1591, %v1627, %v1628
        %v1630 = vrot.slane %v1566, 4
        %v1631 = vsel %vm1591, %v1628, %v1630
        %v1656 = vadd.f32 %v1501, %v1592
        %v1657 = vadd.f32 %v1502, %v1594
        %v1658 = vadd.f32 %v1503, %v1596
        %v1659 = vadd.f32 %v1504, %v1597
        %v1660 = vadd.f32 %v1505, %v1599
        %v1661 = vadd.f32 %v1506, %v1601
        %v1662 = vadd.f32 %v1507, %v1602
        %v1663 = vadd.f32 %v1508, %v1604
        %v1664 = vadd.f32 %v1509, %v1606
        %v1665 = vadd.f32 %v1510, %v1607
        %v1666 = vadd.f32 %v1511, %v1609
        %v1667 = vadd.f32 %v1512, %v1611
        %v1668 = vadd.f32 %v1513, %v1612
        %v1669 = vadd.f32 %v1514, %v1614
        %v1670 = vadd.f32 %v1515, %v1616
        %v1671 = vadd.f32 %v1516, %v1617
        %v1672 = vadd.f32 %v1517, %v1619
        %v1673 = vadd.f32 %v1518, %v1621
        %v1674 = vadd.f32 %v1519, %v1622
        %v1675 = vadd.f32 %v1520, %v1624
        %v1676 = vadd.f32 %v1521, %v1626
        %v1677 = vadd.f32 %v1522, %v1627
        %v1678 = vadd.f32 %v1523, %v1629
        %v1679 = vadd.f32 %v1524, %v1631
        %v1680 = vld [vmem:[%s1009 + $0x4] sm:$0xe]
        %v1681 = vld [vmem:[%s1009 + $0x14] sm:$0xe]
        %v1682 = vld [vmem:[%s1009 + $0x24] sm:$0xe]
        %v1683 = vld [vmem:[%s1009 + $0x34] sm:$0xe]
        %v1684 = vld [vmem:[%s1009 + $0x44] sm:$0xe]
        %v1685 = vld [vmem:[%s1009 + $0x54] sm:$0xe]
        %v1686 = vld [vmem:[%s1009 + $0x64] sm:$0xe]
        %v1687 = vld [vmem:[%s1009 + $0x74] sm:$0xe]
        %v1688 = vunpack.c.l.bf16 %v1680
        %v1689 = vunpack.c.l.bf16 %v1681
        %v1690 = vunpack.c.l.bf16 %v1682
        %v1691 = vunpack.c.l.bf16 %v1683
        %v1692 = vunpack.c.l.bf16 %v1684
        %v1693 = vunpack.c.l.bf16 %v1685
        %v1694 = vunpack.c.l.bf16 %v1686
        %v1695 = vunpack.c.l.bf16 %v1687
        %v1696 = vld [vmem:[#allocation6 + $0x5] sm:$0x1]
        %v1697 = vperm.slane %v1696, 0
        %v1698 = vmul.f32 %v1688, %v1697
        %v1699 = vmul.f32 %v1271, %v1697
        %v1700 = vmul.f32 %v1533, %v1697
        %v1701 = vmul.f32 %v1689, %v1697
        %v1702 = vmul.f32 %v1272, %v1697
        %v1703 = vmul.f32 %v1534, %v1697
        %v1704 = vmul.f32 %v1690, %v1697
        %v1705 = vmul.f32 %v1273, %v1697
        %v1706 = vmul.f32 %v1535, %v1697
        %v1707 = vmul.f32 %v1691, %v1697
        %v1708 = vmul.f32 %v1274, %v1697
        %v1709 = vmul.f32 %v1536, %v1697
        %v1710 = vmul.f32 %v1692, %v1697
        %v1711 = vmul.f32 %v1275, %v1697
        %v1712 = vmul.f32 %v1537, %v1697
        %v1713 = vmul.f32 %v1693, %v1697
        %v1714 = vmul.f32 %v1276, %v1697
        %v1715 = vmul.f32 %v1538, %v1697
        %v1716 = vmul.f32 %v1694, %v1697
        %v1717 = vmul.f32 %v1277, %v1697
        %v1718 = vmul.f32 %v1539, %v1697
        %v1719 = vmul.f32 %v1695, %v1697
        %v1720 = vmul.f32 %v1278, %v1697
        %v1721 = vmul.f32 %v1540, %v1697
        %vm1746 = vcmask 1042432
        %v1747 = vrot.slane %v1698, 5
        %v1748 = vrot.slane %v1699, 5
        %v1749 = vsel %vm1746, %v1747, %v1748
        %v1750 = vrot.slane %v1700, 5
        %v1751 = vsel %vm1746, %v1748, %v1750
        %v1752 = vrot.slane %v1701, 5
        %v1753 = vrot.slane %v1702, 5
        %v1754 = vsel %vm1746, %v1752, %v1753
        %v1755 = vrot.slane %v1703, 5
        %v1756 = vsel %vm1746, %v1753, %v1755
        %v1757 = vrot.slane %v1704, 5
        %v1758 = vrot.slane %v1705, 5
        %v1759 = vsel %vm1746, %v1757, %v1758
        %v1760 = vrot.slane %v1706, 5
        %v1761 = vsel %vm1746, %v1758, %v1760
        %v1762 = vrot.slane %v1707, 5
        %v1763 = vrot.slane %v1708, 5
        %v1764 = vsel %vm1746, %v1762, %v1763
        %v1765 = vrot.slane %v1709, 5
        %v1766 = vsel %vm1746, %v1763, %v1765
        %v1767 = vrot.slane %v1710, 5
        %v1768 = vrot.slane %v1711, 5
        %v1769 = vsel %vm1746, %v1767, %v1768
        %v1770 = vrot.slane %v1712, 5
        %v1771 = vsel %vm1746, %v1768, %v1770
        %v1772 = vrot.slane %v1713, 5
        %v1773 = vrot.slane %v1714, 5
        %v1774 = vsel %vm1746, %v1772, %v1773
        %v1775 = vrot.slane %v1715, 5
        %v1776 = vsel %vm1746, %v1773, %v1775
        %v1777 = vrot.slane %v1716, 5
        %v1778 = vrot.slane %v1717, 5
        %v1779 = vsel %vm1746, %v1777, %v1778
        %v1780 = vrot.slane %v1718, 5
        %v1781 = vsel %vm1746, %v1778, %v1780
        %v1782 = vrot.slane %v1719, 5
        %v1783 = vrot.slane %v1720, 5
        %v1784 = vsel %vm1746, %v1782, %v1783
        %v1785 = vrot.slane %v1721, 5
        %v1786 = vsel %vm1746, %v1783, %v1785
        %v1811 = vadd.f32 %v1656, %v1747
        %v1812 = vadd.f32 %v1657, %v1749
        %v1813 = vadd.f32 %v1658, %v1751
        %v1814 = vadd.f32 %v1659, %v1752
        %v1815 = vadd.f32 %v1660, %v1754
        %v1816 = vadd.f32 %v1661, %v1756
        %v1817 = vadd.f32 %v1662, %v1757
        %v1818 = vadd.f32 %v1663, %v1759
        %v1819 = vadd.f32 %v1664, %v1761
        %v1820 = vadd.f32 %v1665, %v1762
        %v1821 = vadd.f32 %v1666, %v1764
        %v1822 = vadd.f32 %v1667, %v1766
        %v1823 = vadd.f32 %v1668, %v1767
        %v1824 = vadd.f32 %v1669, %v1769
        %v1825 = vadd.f32 %v1670, %v1771
        %v1826 = vadd.f32 %v1671, %v1772
        %v1827 = vadd.f32 %v1672, %v1774
        %v1828 = vadd.f32 %v1673, %v1776
        %v1829 = vadd.f32 %v1674, %v1777
        %v1830 = vadd.f32 %v1675, %v1779
        %v1831 = vadd.f32 %v1676, %v1781
        %v1832 = vadd.f32 %v1677, %v1782
        %v1833 = vadd.f32 %v1678, %v1784
        %v1834 = vadd.f32 %v1679, %v1786
        %v1835 = vld [vmem:[%s1009 + $0xc] sm:$0x3]
        %v1836 = vld [vmem:[%s1009 + $0x1c] sm:$0x3]
        %v1837 = vld [vmem:[%s1009 + $0x2c] sm:$0x3]
        %v1838 = vld [vmem:[%s1009 + $0x3c] sm:$0x3]
        %v1839 = vld [vmem:[%s1009 + $0x4c] sm:$0x3]
        %v1840 = vld [vmem:[%s1009 + $0x5c] sm:$0x3]
        %v1841 = vld [vmem:[%s1009 + $0x6c] sm:$0x3]
        %v1842 = vld [vmem:[%s1009 + $0x7c] sm:$0x3]
        %v1843 = vunpack.c.l.bf16 %v1835
        %v1844 = vunpack.c.l.bf16 %v1836
        %v1845 = vunpack.c.l.bf16 %v1837
        %v1846 = vunpack.c.l.bf16 %v1838
        %v1847 = vunpack.c.l.bf16 %v1839
        %v1848 = vunpack.c.l.bf16 %v1840
        %v1849 = vunpack.c.l.bf16 %v1841
        %v1850 = vunpack.c.l.bf16 %v1842
        %v1851 = vld [vmem:[#allocation6 + $0x6] sm:$0x1]
        %v1852 = vperm.slane %v1851, 0
        %v1853 = vmul.f32 %v1688, %v1852
        %v1854 = vmul.f32 %v1271, %v1852
        %v1855 = vmul.f32 %v1843, %v1852
        %v1856 = vmul.f32 %v1689, %v1852
        %v1857 = vmul.f32 %v1272, %v1852
        %v1858 = vmul.f32 %v1844, %v1852
        %v1859 = vmul.f32 %v1690, %v1852
        %v1860 = vmul.f32 %v1273, %v1852
        %v1861 = vmul.f32 %v1845, %v1852
        %v1862 = vmul.f32 %v1691, %v1852
        %v1863 = vmul.f32 %v1274, %v1852
        %v1864 = vmul.f32 %v1846, %v1852
        %v1865 = vmul.f32 %v1692, %v1852
        %v1866 = vmul.f32 %v1275, %v1852
        %v1867 = vmul.f32 %v1847, %v1852
        %v1868 = vmul.f32 %v1693, %v1852
        %v1869 = vmul.f32 %v1276, %v1852
        %v1870 = vmul.f32 %v1848, %v1852
        %v1871 = vmul.f32 %v1694, %v1852
        %v1872 = vmul.f32 %v1277, %v1852
        %v1873 = vmul.f32 %v1849, %v1852
        %v1874 = vmul.f32 %v1695, %v1852
        %v1875 = vmul.f32 %v1278, %v1852
        %v1876 = vmul.f32 %v1850, %v1852
        %vm1901 = vcmask 1041408
        %v1902 = vrot.slane %v1853, 6
        %v1903 = vrot.slane %v1854, 6
        %v1904 = vsel %vm1901, %v1902, %v1903
        %v1905 = vrot.slane %v1855, 6
        %v1906 = vsel %vm1901, %v1903, %v1905
        %v1907 = vrot.slane %v1856, 6
        %v1908 = vrot.slane %v1857, 6
        %v1909 = vsel %vm1901, %v1907, %v1908
        %v1910 = vrot.slane %v1858, 6
        %v1911 = vsel %vm1901, %v1908, %v1910
        %v1912 = vrot.slane %v1859, 6
        %v1913 = vrot.slane %v1860, 6
        %v1914 = vsel %vm1901, %v1912, %v1913
        %v1915 = vrot.slane %v1861, 6
        %v1916 = vsel %vm1901, %v1913, %v1915
        %v1917 = vrot.slane %v1862, 6
        %v1918 = vrot.slane %v1863, 6
        %v1919 = vsel %vm1901, %v1917, %v1918
        %v1920 = vrot.slane %v1864, 6
        %v1921 = vsel %vm1901, %v1918, %v1920
        %v1922 = vrot.slane %v1865, 6
        %v1923 = vrot.slane %v1866, 6
        %v1924 = vsel %vm1901, %v1922, %v1923
        %v1925 = vrot.slane %v1867, 6
        %v1926 = vsel %vm1901, %v1923, %v1925
        %v1927 = vrot.slane %v1868, 6
        %v1928 = vrot.slane %v1869, 6
        %v1929 = vsel %vm1901, %v1927, %v1928
        %v1930 = vrot.slane %v1870, 6
        %v1931 = vsel %vm1901, %v1928, %v1930
        %v1932 = vrot.slane %v1871, 6
        %v1933 = vrot.slane %v1872, 6
        %v1934 = vsel %vm1901, %v1932, %v1933
        %v1935 = vrot.slane %v1873, 6
        %v1936 = vsel %vm1901, %v1933, %v1935
        %v1937 = vrot.slane %v1874, 6
        %v1938 = vrot.slane %v1875, 6
        %v1939 = vsel %vm1901, %v1937, %v1938
        %v1940 = vrot.slane %v1876, 6
        %v1941 = vsel %vm1901, %v1938, %v1940
        %v1966 = vadd.f32 %v1811, %v1902
        %v1967 = vadd.f32 %v1812, %v1904
        %v1968 = vadd.f32 %v1813, %v1906
        %v1969 = vadd.f32 %v1814, %v1907
        %v1970 = vadd.f32 %v1815, %v1909
        %v1971 = vadd.f32 %v1816, %v1911
        %v1972 = vadd.f32 %v1817, %v1912
        %v1973 = vadd.f32 %v1818, %v1914
        %v1974 = vadd.f32 %v1819, %v1916
        %v1975 = vadd.f32 %v1820, %v1917
        %v1976 = vadd.f32 %v1821, %v1919
        %v1977 = vadd.f32 %v1822, %v1921
        %v1978 = vadd.f32 %v1823, %v1922
        %v1979 = vadd.f32 %v1824, %v1924
        %v1980 = vadd.f32 %v1825, %v1926
        %v1981 = vadd.f32 %v1826, %v1927
        %v1982 = vadd.f32 %v1827, %v1929
        %v1983 = vadd.f32 %v1828, %v1931
        %v1984 = vadd.f32 %v1829, %v1932
        %v1985 = vadd.f32 %v1830, %v1934
        %v1986 = vadd.f32 %v1831, %v1936
        %v1987 = vadd.f32 %v1832, %v1937
        %v1988 = vadd.f32 %v1833, %v1939
        %v1989 = vadd.f32 %v1834, %v1941
        %s1990 = sadd.s32 %s1006, 1
        %s1991 = smul.u32 %s1990, 4
        %s1992 = smul.addr %s1991, 4
        %s1993 = scalar_lea.vmem [#allocation2], %s1992
        %v1994 = vld [vmem:[%s1993] sm:$0xc]
        %v1995 = vld [vmem:[%s1993 + $0x4] sm:$0xf]
        %v1996 = vld [vmem:[%s1993 + $0x8] sm:$0x7]
        %v1997 = vld [vmem:[%s1993 + $0x10] sm:$0xc]
        %v1998 = vld [vmem:[%s1993 + $0x14] sm:$0xf]
        %v1999 = vld [vmem:[%s1993 + $0x18] sm:$0x7]
        %v2000 = vld [vmem:[%s1993 + $0x20] sm:$0xc]
        %v2001 = vld [vmem:[%s1993 + $0x24] sm:$0xf]
        %v2002 = vld [vmem:[%s1993 + $0x28] sm:$0x7]
        %v2003 = vld [vmem:[%s1993 + $0x30] sm:$0xc]
        %v2004 = vld [vmem:[%s1993 + $0x34] sm:$0xf]
        %v2005 = vld [vmem:[%s1993 + $0x38] sm:$0x7]
        %v2006 = vld [vmem:[%s1993 + $0x40] sm:$0xc]
        %v2007 = vld [vmem:[%s1993 + $0x44] sm:$0xf]
        %v2008 = vld [vmem:[%s1993 + $0x48] sm:$0x7]
        %v2009 = vld [vmem:[%s1993 + $0x50] sm:$0xc]
        %v2010 = vld [vmem:[%s1993 + $0x54] sm:$0xf]
        %v2011 = vld [vmem:[%s1993 + $0x58] sm:$0x7]
        %v2012 = vld [vmem:[%s1993 + $0x60] sm:$0xc]
        %v2013 = vld [vmem:[%s1993 + $0x64] sm:$0xf]
        %v2014 = vld [vmem:[%s1993 + $0x68] sm:$0x7]
        %v2015 = vld [vmem:[%s1993 + $0x70] sm:$0xc]
        %v2016 = vld [vmem:[%s1993 + $0x74] sm:$0xf]
        %v2017 = vld [vmem:[%s1993 + $0x78] sm:$0x7]
        %v2018 = vunpack.c.l.bf16 %v1994
        %v2019 = vunpack.c.l.bf16 %v1995
        %v2020 = vunpack.c.l.bf16 %v1996
        %v2021 = vunpack.c.l.bf16 %v1997
        %v2022 = vunpack.c.l.bf16 %v1998
        %v2023 = vunpack.c.l.bf16 %v1999
        %v2024 = vunpack.c.l.bf16 %v2000
        %v2025 = vunpack.c.l.bf16 %v2001
        %v2026 = vunpack.c.l.bf16 %v2002
        %v2027 = vunpack.c.l.bf16 %v2003
        %v2028 = vunpack.c.l.bf16 %v2004
        %v2029 = vunpack.c.l.bf16 %v2005
        %v2030 = vunpack.c.l.bf16 %v2006
        %v2031 = vunpack.c.l.bf16 %v2007
        %v2032 = vunpack.c.l.bf16 %v2008
        %v2033 = vunpack.c.l.bf16 %v2009
        %v2034 = vunpack.c.l.bf16 %v2010
        %v2035 = vunpack.c.l.bf16 %v2011
        %v2036 = vunpack.c.l.bf16 %v2012
        %v2037 = vunpack.c.l.bf16 %v2013
        %v2038 = vunpack.c.l.bf16 %v2014
        %v2039 = vunpack.c.l.bf16 %v2015
        %v2040 = vunpack.c.l.bf16 %v2016
        %v2041 = vunpack.c.l.bf16 %v2017
        %v2042 = vld [vmem:[#allocation6 + $0x7] sm:$0x1]
        %v2043 = vperm.slane %v2042, 0
        %v2044 = vmul.f32 %v2018, %v2043
        %v2045 = vmul.f32 %v2019, %v2043
        %v2046 = vmul.f32 %v2020, %v2043
        %v2047 = vmul.f32 %v2021, %v2043
        %v2048 = vmul.f32 %v2022, %v2043
        %v2049 = vmul.f32 %v2023, %v2043
        %v2050 = vmul.f32 %v2024, %v2043
        %v2051 = vmul.f32 %v2025, %v2043
        %v2052 = vmul.f32 %v2026, %v2043
        %v2053 = vmul.f32 %v2027, %v2043
        %v2054 = vmul.f32 %v2028, %v2043
        %v2055 = vmul.f32 %v2029, %v2043
        %v2056 = vmul.f32 %v2030, %v2043
        %v2057 = vmul.f32 %v2031, %v2043
        %v2058 = vmul.f32 %v2032, %v2043
        %v2059 = vmul.f32 %v2033, %v2043
        %v2060 = vmul.f32 %v2034, %v2043
        %v2061 = vmul.f32 %v2035, %v2043
        %v2062 = vmul.f32 %v2036, %v2043
        %v2063 = vmul.f32 %v2037, %v2043
        %v2064 = vmul.f32 %v2038, %v2043
        %v2065 = vmul.f32 %v2039, %v2043
        %v2066 = vmul.f32 %v2040, %v2043
        %v2067 = vmul.f32 %v2041, %v2043
        %v2068 = vadd.f32 %v1966, %v2044
        %v2069 = vadd.f32 %v1967, %v2045
        %v2070 = vadd.f32 %v1968, %v2046
        %v2071 = vadd.f32 %v1969, %v2047
        %v2072 = vadd.f32 %v1970, %v2048
        %v2073 = vadd.f32 %v1971, %v2049
        %v2074 = vadd.f32 %v1972, %v2050
        %v2075 = vadd.f32 %v1973, %v2051
        %v2076 = vadd.f32 %v1974, %v2052
        %v2077 = vadd.f32 %v1975, %v2053
        %v2078 = vadd.f32 %v1976, %v2054
        %v2079 = vadd.f32 %v1977, %v2055
        %v2080 = vadd.f32 %v1978, %v2056
        %v2081 = vadd.f32 %v1979, %v2057
        %v2082 = vadd.f32 %v1980, %v2058
        %v2083 = vadd.f32 %v1981, %v2059
        %v2084 = vadd.f32 %v1982, %v2060
        %v2085 = vadd.f32 %v1983, %v2061
        %v2086 = vadd.f32 %v1984, %v2062
        %v2087 = vadd.f32 %v1985, %v2063
        %v2088 = vadd.f32 %v1986, %v2064
        %v2089 = vadd.f32 %v1987, %v2065
        %v2090 = vadd.f32 %v1988, %v2066
        %v2091 = vadd.f32 %v1989, %v2067
        %v2092 = vld [vmem:[%s1993] sm:$0x8]
        %v2093 = vld [vmem:[%s1993 + $0x10] sm:$0x8]
        %v2094 = vld [vmem:[%s1993 + $0x20] sm:$0x8]
        %v2095 = vld [vmem:[%s1993 + $0x30] sm:$0x8]
        %v2096 = vld [vmem:[%s1993 + $0x40] sm:$0x8]
        %v2097 = vld [vmem:[%s1993 + $0x50] sm:$0x8]
        %v2098 = vld [vmem:[%s1993 + $0x60] sm:$0x8]
        %v2099 = vld [vmem:[%s1993 + $0x70] sm:$0x8]
        %v2100 = vunpack.c.l.bf16 %v2092
        %v2101 = vunpack.c.l.bf16 %v2093
        %v2102 = vunpack.c.l.bf16 %v2094
        %v2103 = vunpack.c.l.bf16 %v2095
        %v2104 = vunpack.c.l.bf16 %v2096
        %v2105 = vunpack.c.l.bf16 %v2097
        %v2106 = vunpack.c.l.bf16 %v2098
        %v2107 = vunpack.c.l.bf16 %v2099
        %v2108 = vld [vmem:[#allocation6 + $0x8] sm:$0x1]
        %v2109 = vperm.slane %v2108, 0
        %v2110 = vmul.f32 %v2100, %v2109
        %v2111 = vmul.f32 %v2019, %v2109
        %v2112 = vmul.f32 %v2020, %v2109
        %v2113 = vmul.f32 %v2101, %v2109
        %v2114 = vmul.f32 %v2022, %v2109
        %v2115 = vmul.f32 %v2023, %v2109
        %v2116 = vmul.f32 %v2102, %v2109
        %v2117 = vmul.f32 %v2025, %v2109
        %v2118 = vmul.f32 %v2026, %v2109
        %v2119 = vmul.f32 %v2103, %v2109
        %v2120 = vmul.f32 %v2028, %v2109
        %v2121 = vmul.f32 %v2029, %v2109
        %v2122 = vmul.f32 %v2104, %v2109
        %v2123 = vmul.f32 %v2031, %v2109
        %v2124 = vmul.f32 %v2032, %v2109
        %v2125 = vmul.f32 %v2105, %v2109
        %v2126 = vmul.f32 %v2034, %v2109
        %v2127 = vmul.f32 %v2035, %v2109
        %v2128 = vmul.f32 %v2106, %v2109
        %v2129 = vmul.f32 %v2037, %v2109
        %v2130 = vmul.f32 %v2038, %v2109
        %v2131 = vmul.f32 %v2107, %v2109
        %v2132 = vmul.f32 %v2040, %v2109
        %v2133 = vmul.f32 %v2041, %v2109
        %v2158 = vrot.slane %v2110, 1
        %v2159 = vrot.slane %v2111, 1
        %v2160 = vsel %vm1174, %v2158, %v2159
        %v2161 = vrot.slane %v2112, 1
        %v2162 = vsel %vm1174, %v2159, %v2161
        %v2163 = vrot.slane %v2113, 1
        %v2164 = vrot.slane %v2114, 1
        %v2165 = vsel %vm1174, %v2163, %v2164
        %v2166 = vrot.slane %v2115, 1
        %v2167 = vsel %vm1174, %v2164, %v2166
        %v2168 = vrot.slane %v2116, 1
        %v2169 = vrot.slane %v2117, 1
        %v2170 = vsel %vm1174, %v2168, %v2169
        %v2171 = vrot.slane %v2118, 1
        %v2172 = vsel %vm1174, %v2169, %v2171
        %v2173 = vrot.slane %v2119, 1
        %v2174 = vrot.slane %v2120, 1
        %v2175 = vsel %vm1174, %v2173, %v2174
        %v2176 = vrot.slane %v2121, 1
        %v2177 = vsel %vm1174, %v2174, %v2176
        %v2178 = vrot.slane %v2122, 1
        %v2179 = vrot.slane %v2123, 1
        %v2180 = vsel %vm1174, %v2178, %v2179
        %v2181 = vrot.slane %v2124, 1
        %v2182 = vsel %vm1174, %v2179, %v2181
        %v2183 = vrot.slane %v2125, 1
        %v2184 = vrot.slane %v2126, 1
        %v2185 = vsel %vm1174, %v2183, %v2184
        %v2186 = vrot.slane %v2127, 1
        %v2187 = vsel %vm1174, %v2184, %v2186
        %v2188 = vrot.slane %v2128, 1
        %v2189 = vrot.slane %v2129, 1
        %v2190 = vsel %vm1174, %v2188, %v2189
        %v2191 = vrot.slane %v2130, 1
        %v2192 = vsel %vm1174, %v2189, %v2191
        %v2193 = vrot.slane %v2131, 1
        %v2194 = vrot.slane %v2132, 1
        %v2195 = vsel %vm1174, %v2193, %v2194
        %v2196 = vrot.slane %v2133, 1
        %v2197 = vsel %vm1174, %v2194, %v2196
        %v2222 = vadd.f32 %v2068, %v2160
        %v2223 = vadd.f32 %v2069, %v2162
        %v2224 = vadd.f32 %v2070, %v2161
        %v2225 = vadd.f32 %v2071, %v2165
        %v2226 = vadd.f32 %v2072, %v2167
        %v2227 = vadd.f32 %v2073, %v2166
        %v2228 = vadd.f32 %v2074, %v2170
        %v2229 = vadd.f32 %v2075, %v2172
        %v2230 = vadd.f32 %v2076, %v2171
        %v2231 = vadd.f32 %v2077, %v2175
        %v2232 = vadd.f32 %v2078, %v2177
        %v2233 = vadd.f32 %v2079, %v2176
        %v2234 = vadd.f32 %v2080, %v2180
        %v2235 = vadd.f32 %v2081, %v2182
        %v2236 = vadd.f32 %v2082, %v2181
        %v2237 = vadd.f32 %v2083, %v2185
        %v2238 = vadd.f32 %v2084, %v2187
        %v2239 = vadd.f32 %v2085, %v2186
        %v2240 = vadd.f32 %v2086, %v2190
        %v2241 = vadd.f32 %v2087, %v2192
        %v2242 = vadd.f32 %v2088, %v2191
        %v2243 = vadd.f32 %v2089, %v2195
        %v2244 = vadd.f32 %v2090, %v2197
        %v2245 = vadd.f32 %v2091, %v2196
        %v2246 = vld [vmem:[%s1993 + $0x8] sm:$0xf]
        %v2247 = vld [vmem:[%s1993 + $0x18] sm:$0xf]
        %v2248 = vld [vmem:[%s1993 + $0x28] sm:$0xf]
        %v2249 = vld [vmem:[%s1993 + $0x38] sm:$0xf]
        %v2250 = vld [vmem:[%s1993 + $0x48] sm:$0xf]
        %v2251 = vld [vmem:[%s1993 + $0x58] sm:$0xf]
        %v2252 = vld [vmem:[%s1993 + $0x68] sm:$0xf]
        %v2253 = vld [vmem:[%s1993 + $0x78] sm:$0xf]
        %v2254 = vunpack.c.l.bf16 %v2246
        %v2255 = vunpack.c.l.bf16 %v2247
        %v2256 = vunpack.c.l.bf16 %v2248
        %v2257 = vunpack.c.l.bf16 %v2249
        %v2258 = vunpack.c.l.bf16 %v2250
        %v2259 = vunpack.c.l.bf16 %v2251
        %v2260 = vunpack.c.l.bf16 %v2252
        %v2261 = vunpack.c.l.bf16 %v2253
        %v2262 = vld [vmem:[#allocation6 + $0x9] sm:$0x1]
        %v2263 = vperm.slane %v2262, 0
        %v2264 = vmul.f32 %v2100, %v2263
        %v2265 = vmul.f32 %v2019, %v2263
        %v2266 = vmul.f32 %v2254, %v2263
        %v2267 = vmul.f32 %v2101, %v2263
        %v2268 = vmul.f32 %v2022, %v2263
        %v2269 = vmul.f32 %v2255, %v2263
        %v2270 = vmul.f32 %v2102, %v2263
        %v2271 = vmul.f32 %v2025, %v2263
        %v2272 = vmul.f32 %v2256, %v2263
        %v2273 = vmul.f32 %v2103, %v2263
        %v2274 = vmul.f32 %v2028, %v2263
        %v2275 = vmul.f32 %v2257, %v2263
        %v2276 = vmul.f32 %v2104, %v2263
        %v2277 = vmul.f32 %v2031, %v2263
        %v2278 = vmul.f32 %v2258, %v2263
        %v2279 = vmul.f32 %v2105, %v2263
        %v2280 = vmul.f32 %v2034, %v2263
        %v2281 = vmul.f32 %v2259, %v2263
        %v2282 = vmul.f32 %v2106, %v2263
        %v2283 = vmul.f32 %v2037, %v2263
        %v2284 = vmul.f32 %v2260, %v2263
        %v2285 = vmul.f32 %v2107, %v2263
        %v2286 = vmul.f32 %v2040, %v2263
        %v2287 = vmul.f32 %v2261, %v2263
        %v2312 = vrot.slane %v2264, 2
        %v2313 = vrot.slane %v2265, 2
        %v2314 = vsel %vm1329, %v2312, %v2313
        %v2315 = vrot.slane %v2266, 2
        %v2316 = vsel %vm1329, %v2313, %v2315
        %v2317 = vrot.slane %v2267, 2
        %v2318 = vrot.slane %v2268, 2
        %v2319 = vsel %vm1329, %v2317, %v2318
        %v2320 = vrot.slane %v2269, 2
        %v2321 = vsel %vm1329, %v2318, %v2320
        %v2322 = vrot.slane %v2270, 2
        %v2323 = vrot.slane %v2271, 2
        %v2324 = vsel %vm1329, %v2322, %v2323
        %v2325 = vrot.slane %v2272, 2
        %v2326 = vsel %vm1329, %v2323, %v2325
        %v2327 = vrot.slane %v2273, 2
        %v2328 = vrot.slane %v2274, 2
        %v2329 = vsel %vm1329, %v2327, %v2328
        %v2330 = vrot.slane %v2275, 2
        %v2331 = vsel %vm1329, %v2328, %v2330
        %v2332 = vrot.slane %v2276, 2
        %v2333 = vrot.slane %v2277, 2
        %v2334 = vsel %vm1329, %v2332, %v2333
        %v2335 = vrot.slane %v2278, 2
        %v2336 = vsel %vm1329, %v2333, %v2335
        %v2337 = vrot.slane %v2279, 2
        %v2338 = vrot.slane %v2280, 2
        %v2339 = vsel %vm1329, %v2337, %v2338
        %v2340 = vrot.slane %v2281, 2
        %v2341 = vsel %vm1329, %v2338, %v2340
        %v2342 = vrot.slane %v2282, 2
        %v2343 = vrot.slane %v2283, 2
        %v2344 = vsel %vm1329, %v2342, %v2343
        %v2345 = vrot.slane %v2284, 2
        %v2346 = vsel %vm1329, %v2343, %v2345
        %v2347 = vrot.slane %v2285, 2
        %v2348 = vrot.slane %v2286, 2
        %v2349 = vsel %vm1329, %v2347, %v2348
        %v2350 = vrot.slane %v2287, 2
        %v2351 = vsel %vm1329, %v2348, %v2350
        %v2376 = vadd.f32 %v2222, %v2314
        %v2377 = vadd.f32 %v2223, %v2316
        %v2378 = vadd.f32 %v2224, %v2315
        %v2379 = vadd.f32 %v2225, %v2319
        %v2380 = vadd.f32 %v2226, %v2321
        %v2381 = vadd.f32 %v2227, %v2320
        %v2382 = vadd.f32 %v2228, %v2324
        %v2383 = vadd.f32 %v2229, %v2326
        %v2384 = vadd.f32 %v2230, %v2325
        %v2385 = vadd.f32 %v2231, %v2329
        %v2386 = vadd.f32 %v2232, %v2331
        %v2387 = vadd.f32 %v2233, %v2330
        %v2388 = vadd.f32 %v2234, %v2334
        %v2389 = vadd.f32 %v2235, %v2336
        %v2390 = vadd.f32 %v2236, %v2335
        %v2391 = vadd.f32 %v2237, %v2339
        %v2392 = vadd.f32 %v2238, %v2341
        %v2393 = vadd.f32 %v2239, %v2340
        %v2394 = vadd.f32 %v2240, %v2344
        %v2395 = vadd.f32 %v2241, %v2346
        %v2396 = vadd.f32 %v2242, %v2345
        %v2397 = vadd.f32 %v2243, %v2349
        %v2398 = vadd.f32 %v2244, %v2351
        %v2399 = vadd.f32 %v2245, %v2350
        %v2400 = vld [vmem:[#allocation6 + $0xa] sm:$0x1]
        %v2401 = vperm.slane %v2400, 0
        %v2402 = vmul.f32 %v2019, %v2401
        %v2403 = vmul.f32 %v2254, %v2401
        %v2404 = vmul.f32 %v2022, %v2401
        %v2405 = vmul.f32 %v2255, %v2401
        %v2406 = vmul.f32 %v2025, %v2401
        %v2407 = vmul.f32 %v2256, %v2401
        %v2408 = vmul.f32 %v2028, %v2401
        %v2409 = vmul.f32 %v2257, %v2401
        %v2410 = vmul.f32 %v2031, %v2401
        %v2411 = vmul.f32 %v2258, %v2401
        %v2412 = vmul.f32 %v2034, %v2401
        %v2413 = vmul.f32 %v2259, %v2401
        %v2414 = vmul.f32 %v2037, %v2401
        %v2415 = vmul.f32 %v2260, %v2401
        %v2416 = vmul.f32 %v2040, %v2401
        %v2417 = vmul.f32 %v2261, %v2401
        %v2434 = vrot.slane %v2402, 3
        %v2435 = vrot.slane %v2403, 3
        %v2436 = vsel %vm1452, %v2434, %v2435
        %v2437 = vrot.slane %v2404, 3
        %v2438 = vrot.slane %v2405, 3
        %v2439 = vsel %vm1452, %v2437, %v2438
        %v2440 = vrot.slane %v2406, 3
        %v2441 = vrot.slane %v2407, 3
        %v2442 = vsel %vm1452, %v2440, %v2441
        %v2443 = vrot.slane %v2408, 3
        %v2444 = vrot.slane %v2409, 3
        %v2445 = vsel %vm1452, %v2443, %v2444
        %v2446 = vrot.slane %v2410, 3
        %v2447 = vrot.slane %v2411, 3
        %v2448 = vsel %vm1452, %v2446, %v2447
        %v2449 = vrot.slane %v2412, 3
        %v2450 = vrot.slane %v2413, 3
        %v2451 = vsel %vm1452, %v2449, %v2450
        %v2452 = vrot.slane %v2414, 3
        %v2453 = vrot.slane %v2415, 3
        %v2454 = vsel %vm1452, %v2452, %v2453
        %v2455 = vrot.slane %v2416, 3
        %v2456 = vrot.slane %v2417, 3
        %v2457 = vsel %vm1452, %v2455, %v2456
        %v2482 = vadd.f32 %v2376, %v2434
        %v2483 = vadd.f32 %v2377, %v2436
        %v2484 = vadd.f32 %v2378, %v2435
        %v2485 = vadd.f32 %v2379, %v2437
        %v2486 = vadd.f32 %v2380, %v2439
        %v2487 = vadd.f32 %v2381, %v2438
        %v2488 = vadd.f32 %v2382, %v2440
        %v2489 = vadd.f32 %v2383, %v2442
        %v2490 = vadd.f32 %v2384, %v2441
        %v2491 = vadd.f32 %v2385, %v2443
        %v2492 = vadd.f32 %v2386, %v2445
        %v2493 = vadd.f32 %v2387, %v2444
        %v2494 = vadd.f32 %v2388, %v2446
        %v2495 = vadd.f32 %v2389, %v2448
        %v2496 = vadd.f32 %v2390, %v2447
        %v2497 = vadd.f32 %v2391, %v2449
        %v2498 = vadd.f32 %v2392, %v2451
        %v2499 = vadd.f32 %v2393, %v2450
        %v2500 = vadd.f32 %v2394, %v2452
        %v2501 = vadd.f32 %v2395, %v2454
        %v2502 = vadd.f32 %v2396, %v2453
        %v2503 = vadd.f32 %v2397, %v2455
        %v2504 = vadd.f32 %v2398, %v2457
        %v2505 = vadd.f32 %v2399, %v2456
        %v2506 = vld [vmem:[%s1993 + $0xc] sm:$0x1]
        %v2507 = vld [vmem:[%s1993 + $0x1c] sm:$0x1]
        %v2508 = vld [vmem:[%s1993 + $0x2c] sm:$0x1]
        %v2509 = vld [vmem:[%s1993 + $0x3c] sm:$0x1]
        %v2510 = vld [vmem:[%s1993 + $0x4c] sm:$0x1]
        %v2511 = vld [vmem:[%s1993 + $0x5c] sm:$0x1]
        %v2512 = vld [vmem:[%s1993 + $0x6c] sm:$0x1]
        %v2513 = vld [vmem:[%s1993 + $0x7c] sm:$0x1]
        %v2514 = vunpack.c.l.bf16 %v2506
        %v2515 = vunpack.c.l.bf16 %v2507
        %v2516 = vunpack.c.l.bf16 %v2508
        %v2517 = vunpack.c.l.bf16 %v2509
        %v2518 = vunpack.c.l.bf16 %v2510
        %v2519 = vunpack.c.l.bf16 %v2511
        %v2520 = vunpack.c.l.bf16 %v2512
        %v2521 = vunpack.c.l.bf16 %v2513
        %v2522 = vld [vmem:[#allocation6 + $0xb] sm:$0x1]
        %v2523 = vperm.slane %v2522, 0
        %v2524 = vmul.f32 %v2019, %v2523
        %v2525 = vmul.f32 %v2254, %v2523
        %v2526 = vmul.f32 %v2514, %v2523
        %v2527 = vmul.f32 %v2022, %v2523
        %v2528 = vmul.f32 %v2255, %v2523
        %v2529 = vmul.f32 %v2515, %v2523
        %v2530 = vmul.f32 %v2025, %v2523
        %v2531 = vmul.f32 %v2256, %v2523
        %v2532 = vmul.f32 %v2516, %v2523
        %v2533 = vmul.f32 %v2028, %v2523
        %v2534 = vmul.f32 %v2257, %v2523
        %v2535 = vmul.f32 %v2517, %v2523
        %v2536 = vmul.f32 %v2031, %v2523
        %v2537 = vmul.f32 %v2258, %v2523
        %v2538 = vmul.f32 %v2518, %v2523
        %v2539 = vmul.f32 %v2034, %v2523
        %v2540 = vmul.f32 %v2259, %v2523
        %v2541 = vmul.f32 %v2519, %v2523
        %v2542 = vmul.f32 %v2037, %v2523
        %v2543 = vmul.f32 %v2260, %v2523
        %v2544 = vmul.f32 %v2520, %v2523
        %v2545 = vmul.f32 %v2040, %v2523
        %v2546 = vmul.f32 %v2261, %v2523
        %v2547 = vmul.f32 %v2521, %v2523
        %v2572 = vrot.slane %v2524, 4
        %v2573 = vrot.slane %v2525, 4
        %v2574 = vsel %vm1591, %v2572, %v2573
        %v2575 = vrot.slane %v2526, 4
        %v2576 = vsel %vm1591, %v2573, %v2575
        %v2577 = vrot.slane %v2527, 4
        %v2578 = vrot.slane %v2528, 4
        %v2579 = vsel %vm1591, %v2577, %v2578
        %v2580 = vrot.slane %v2529, 4
        %v2581 = vsel %vm1591, %v2578, %v2580
        %v2582 = vrot.slane %v2530, 4
        %v2583 = vrot.slane %v2531, 4
        %v2584 = vsel %vm1591, %v2582, %v2583
        %v2585 = vrot.slane %v2532, 4
        %v2586 = vsel %vm1591, %v2583, %v2585
        %v2587 = vrot.slane %v2533, 4
        %v2588 = vrot.slane %v2534, 4
        %v2589 = vsel %vm1591, %v2587, %v2588
        %v2590 = vrot.slane %v2535, 4
        %v2591 = vsel %vm1591, %v2588, %v2590
        %v2592 = vrot.slane %v2536, 4
        %v2593 = vrot.slane %v2537, 4
        %v2594 = vsel %vm1591, %v2592, %v2593
        %v2595 = vrot.slane %v2538, 4
        %v2596 = vsel %vm1591, %v2593, %v2595
        %v2597 = vrot.slane %v2539, 4
        %v2598 = vrot.slane %v2540, 4
        %v2599 = vsel %vm1591, %v2597, %v2598
        %v2600 = vrot.slane %v2541, 4
        %v2601 = vsel %vm1591, %v2598, %v2600
        %v2602 = vrot.slane %v2542, 4
        %v2603 = vrot.slane %v2543, 4
        %v2604 = vsel %vm1591, %v2602, %v2603
        %v2605 = vrot.slane %v2544, 4
        %v2606 = vsel %vm1591, %v2603, %v2605
        %v2607 = vrot.slane %v2545, 4
        %v2608 = vrot.slane %v2546, 4
        %v2609 = vsel %vm1591, %v2607, %v2608
        %v2610 = vrot.slane %v2547, 4
        %v2611 = vsel %vm1591, %v2608, %v2610
        %v2636 = vadd.f32 %v2482, %v2572
        %v2637 = vadd.f32 %v2483, %v2574
        %v2638 = vadd.f32 %v2484, %v2576
        %v2639 = vadd.f32 %v2485, %v2577
        %v2640 = vadd.f32 %v2486, %v2579
        %v2641 = vadd.f32 %v2487, %v2581
        %v2642 = vadd.f32 %v2488, %v2582
        %v2643 = vadd.f32 %v2489, %v2584
        %v2644 = vadd.f32 %v2490, %v2586
        %v2645 = vadd.f32 %v2491, %v2587
        %v2646 = vadd.f32 %v2492, %v2589
        %v2647 = vadd.f32 %v2493, %v2591
        %v2648 = vadd.f32 %v2494, %v2592
        %v2649 = vadd.f32 %v2495, %v2594
        %v2650 = vadd.f32 %v2496, %v2596
        %v2651 = vadd.f32 %v2497, %v2597
        %v2652 = vadd.f32 %v2498, %v2599
        %v2653 = vadd.f32 %v2499, %v2601
        %v2654 = vadd.f32 %v2500, %v2602
        %v2655 = vadd.f32 %v2501, %v2604
        %v2656 = vadd.f32 %v2502, %v2606
        %v2657 = vadd.f32 %v2503, %v2607
        %v2658 = vadd.f32 %v2504, %v2609
        %v2659 = vadd.f32 %v2505, %v2611
        %v2660 = vld [vmem:[%s1993 + $0x4] sm:$0xe]
        %v2661 = vld [vmem:[%s1993 + $0x14] sm:$0xe]
        %v2662 = vld [vmem:[%s1993 + $0x24] sm:$0xe]
        %v2663 = vld [vmem:[%s1993 + $0x34] sm:$0xe]
        %v2664 = vld [vmem:[%s1993 + $0x44] sm:$0xe]
        %v2665 = vld [vmem:[%s1993 + $0x54] sm:$0xe]
        %v2666 = vld [vmem:[%s1993 + $0x64] sm:$0xe]
        %v2667 = vld [vmem:[%s1993 + $0x74] sm:$0xe]
        %v2668 = vunpack.c.l.bf16 %v2660
        %v2669 = vunpack.c.l.bf16 %v2661
        %v2670 = vunpack.c.l.bf16 %v2662
        %v2671 = vunpack.c.l.bf16 %v2663
        %v2672 = vunpack.c.l.bf16 %v2664
        %v2673 = vunpack.c.l.bf16 %v2665
        %v2674 = vunpack.c.l.bf16 %v2666
        %v2675 = vunpack.c.l.bf16 %v2667
        %v2676 = vld [vmem:[#allocation6 + $0xc] sm:$0x1]
        %v2677 = vperm.slane %v2676, 0
        %v2678 = vmul.f32 %v2668, %v2677
        %v2679 = vmul.f32 %v2254, %v2677
        %v2680 = vmul.f32 %v2514, %v2677
        %v2681 = vmul.f32 %v2669, %v2677
        %v2682 = vmul.f32 %v2255, %v2677
        %v2683 = vmul.f32 %v2515, %v2677
        %v2684 = vmul.f32 %v2670, %v2677
        %v2685 = vmul.f32 %v2256, %v2677
        %v2686 = vmul.f32 %v2516, %v2677
        %v2687 = vmul.f32 %v2671, %v2677
        %v2688 = vmul.f32 %v2257, %v2677
        %v2689 = vmul.f32 %v2517, %v2677
        %v2690 = vmul.f32 %v2672, %v2677
        %v2691 = vmul.f32 %v2258, %v2677
        %v2692 = vmul.f32 %v2518, %v2677
        %v2693 = vmul.f32 %v2673, %v2677
        %v2694 = vmul.f32 %v2259, %v2677
        %v2695 = vmul.f32 %v2519, %v2677
        %v2696 = vmul.f32 %v2674, %v2677
        %v2697 = vmul.f32 %v2260, %v2677
        %v2698 = vmul.f32 %v2520, %v2677
        %v2699 = vmul.f32 %v2675, %v2677
        %v2700 = vmul.f32 %v2261, %v2677
        %v2701 = vmul.f32 %v2521, %v2677
        %v2726 = vrot.slane %v2678, 5
        %v2727 = vrot.slane %v2679, 5
        %v2728 = vsel %vm1746, %v2726, %v2727
        %v2729 = vrot.slane %v2680, 5
        %v2730 = vsel %vm1746, %v2727, %v2729
        %v2731 = vrot.slane %v2681, 5
        %v2732 = vrot.slane %v2682, 5
        %v2733 = vsel %vm1746, %v2731, %v2732
        %v2734 = vrot.slane %v2683, 5
        %v2735 = vsel %vm1746, %v2732, %v2734
        %v2736 = vrot.slane %v2684, 5
        %v2737 = vrot.slane %v2685, 5
        %v2738 = vsel %vm1746, %v2736, %v2737
        %v2739 = vrot.slane %v2686, 5
        %v2740 = vsel %vm1746, %v2737, %v2739
        %v2741 = vrot.slane %v2687, 5
        %v2742 = vrot.slane %v2688, 5
        %v2743 = vsel %vm1746, %v2741, %v2742
        %v2744 = vrot.slane %v2689, 5
        %v2745 = vsel %vm1746, %v2742, %v2744
        %v2746 = vrot.slane %v2690, 5
        %v2747 = vrot.slane %v2691, 5
        %v2748 = vsel %vm1746, %v2746, %v2747
        %v2749 = vrot.slane %v2692, 5
        %v2750 = vsel %vm1746, %v2747, %v2749
        %v2751 = vrot.slane %v2693, 5
        %v2752 = vrot.slane %v2694, 5
        %v2753 = vsel %vm1746, %v2751, %v2752
        %v2754 = vrot.slane %v2695, 5
        %v2755 = vsel %vm1746, %v2752, %v2754
        %v2756 = vrot.slane %v2696, 5
        %v2757 = vrot.slane %v2697, 5
        %v2758 = vsel %vm1746, %v2756, %v2757
        %v2759 = vrot.slane %v2698, 5
        %v2760 = vsel %vm1746, %v2757, %v2759
        %v2761 = vrot.slane %v2699, 5
        %v2762 = vrot.slane %v2700, 5
        %v2763 = vsel %vm1746, %v2761, %v2762
        %v2764 = vrot.slane %v2701, 5
        %v2765 = vsel %vm1746, %v2762, %v2764
        %v2790 = vadd.f32 %v2636, %v2726
        %v2791 = vadd.f32 %v2637, %v2728
        %v2792 = vadd.f32 %v2638, %v2730
        %v2793 = vadd.f32 %v2639, %v2731
        %v2794 = vadd.f32 %v2640, %v2733
        %v2795 = vadd.f32 %v2641, %v2735
        %v2796 = vadd.f32 %v2642, %v2736
        %v2797 = vadd.f32 %v2643, %v2738
        %v2798 = vadd.f32 %v2644, %v2740
        %v2799 = vadd.f32 %v2645, %v2741
        %v2800 = vadd.f32 %v2646, %v2743
        %v2801 = vadd.f32 %v2647, %v2745
        %v2802 = vadd.f32 %v2648, %v2746
        %v2803 = vadd.f32 %v2649, %v2748
        %v2804 = vadd.f32 %v2650, %v2750
        %v2805 = vadd.f32 %v2651, %v2751
        %v2806 = vadd.f32 %v2652, %v2753
        %v2807 = vadd.f32 %v2653, %v2755
        %v2808 = vadd.f32 %v2654, %v2756
        %v2809 = vadd.f32 %v2655, %v2758
        %v2810 = vadd.f32 %v2656, %v2760
        %v2811 = vadd.f32 %v2657, %v2761
        %v2812 = vadd.f32 %v2658, %v2763
        %v2813 = vadd.f32 %v2659, %v2765
        %v2814 = vld [vmem:[%s1993 + $0xc] sm:$0x3]
        %v2815 = vld [vmem:[%s1993 + $0x1c] sm:$0x3]
        %v2816 = vld [vmem:[%s1993 + $0x2c] sm:$0x3]
        %v2817 = vld [vmem:[%s1993 + $0x3c] sm:$0x3]
        %v2818 = vld [vmem:[%s1993 + $0x4c] sm:$0x3]
        %v2819 = vld [vmem:[%s1993 + $0x5c] sm:$0x3]
        %v2820 = vld [vmem:[%s1993 + $0x6c] sm:$0x3]
        %v2821 = vld [vmem:[%s1993 + $0x7c] sm:$0x3]
        %v2822 = vunpack.c.l.bf16 %v2814
        %v2823 = vunpack.c.l.bf16 %v2815
        %v2824 = vunpack.c.l.bf16 %v2816
        %v2825 = vunpack.c.l.bf16 %v2817
        %v2826 = vunpack.c.l.bf16 %v2818
        %v2827 = vunpack.c.l.bf16 %v2819
        %v2828 = vunpack.c.l.bf16 %v2820
        %v2829 = vunpack.c.l.bf16 %v2821
        %v2830 = vld [vmem:[#allocation6 + $0xd] sm:$0x1]
        %v2831 = vperm.slane %v2830, 0
        %v2832 = vmul.f32 %v2668, %v2831
        %v2833 = vmul.f32 %v2254, %v2831
        %v2834 = vmul.f32 %v2822, %v2831
        %v2835 = vmul.f32 %v2669, %v2831
        %v2836 = vmul.f32 %v2255, %v2831
        %v2837 = vmul.f32 %v2823, %v2831
        %v2838 = vmul.f32 %v2670, %v2831
        %v2839 = vmul.f32 %v2256, %v2831
        %v2840 = vmul.f32 %v2824, %v2831
        %v2841 = vmul.f32 %v2671, %v2831
        %v2842 = vmul.f32 %v2257, %v2831
        %v2843 = vmul.f32 %v2825, %v2831
        %v2844 = vmul.f32 %v2672, %v2831
        %v2845 = vmul.f32 %v2258, %v2831
        %v2846 = vmul.f32 %v2826, %v2831
        %v2847 = vmul.f32 %v2673, %v2831
        %v2848 = vmul.f32 %v2259, %v2831
        %v2849 = vmul.f32 %v2827, %v2831
        %v2850 = vmul.f32 %v2674, %v2831
        %v2851 = vmul.f32 %v2260, %v2831
        %v2852 = vmul.f32 %v2828, %v2831
        %v2853 = vmul.f32 %v2675, %v2831
        %v2854 = vmul.f32 %v2261, %v2831
        %v2855 = vmul.f32 %v2829, %v2831
        %v2880 = vrot.slane %v2832, 6
        %v2881 = vrot.slane %v2833, 6
        %v2882 = vsel %vm1901, %v2880, %v2881
        %v2883 = vrot.slane %v2834, 6
        %v2884 = vsel %vm1901, %v2881, %v2883
        %v2885 = vrot.slane %v2835, 6
        %v2886 = vrot.slane %v2836, 6
        %v2887 = vsel %vm1901, %v2885, %v2886
        %v2888 = vrot.slane %v2837, 6
        %v2889 = vsel %vm1901, %v2886, %v2888
        %v2890 = vrot.slane %v2838, 6
        %v2891 = vrot.slane %v2839, 6
        %v2892 = vsel %vm1901, %v2890, %v2891
        %v2893 = vrot.slane %v2840, 6
        %v2894 = vsel %vm1901, %v2891, %v2893
        %v2895 = vrot.slane %v2841, 6
        %v2896 = vrot.slane %v2842, 6
        %v2897 = vsel %vm1901, %v2895, %v2896
        %v2898 = vrot.slane %v2843, 6
        %v2899 = vsel %vm1901, %v2896, %v2898
        %v2900 = vrot.slane %v2844, 6
        %v2901 = vrot.slane %v2845, 6
        %v2902 = vsel %vm1901, %v2900, %v2901
        %v2903 = vrot.slane %v2846, 6
        %v2904 = vsel %vm1901, %v2901, %v2903
        %v2905 = vrot.slane %v2847, 6
        %v2906 = vrot.slane %v2848, 6
        %v2907 = vsel %vm1901, %v2905, %v2906
        %v2908 = vrot.slane %v2849, 6
        %v2909 = vsel %vm1901, %v2906, %v2908
        %v2910 = vrot.slane %v2850, 6
        %v2911 = vrot.slane %v2851, 6
        %v2912 = vsel %vm1901, %v2910, %v2911
        %v2913 = vrot.slane %v2852, 6
        %v2914 = vsel %vm1901, %v2911, %v2913
        %v2915 = vrot.slane %v2853, 6
        %v2916 = vrot.slane %v2854, 6
        %v2917 = vsel %vm1901, %v2915, %v2916
        %v2918 = vrot.slane %v2855, 6
        %v2919 = vsel %vm1901, %v2916, %v2918
        %v2944 = vadd.f32 %v2790, %v2880
        %v2945 = vadd.f32 %v2791, %v2882
        %v2946 = vadd.f32 %v2792, %v2884
        %v2947 = vadd.f32 %v2793, %v2885
        %v2948 = vadd.f32 %v2794, %v2887
        %v2949 = vadd.f32 %v2795, %v2889
        %v2950 = vadd.f32 %v2796, %v2890
        %v2951 = vadd.f32 %v2797, %v2892
        %v2952 = vadd.f32 %v2798, %v2894
        %v2953 = vadd.f32 %v2799, %v2895
        %v2954 = vadd.f32 %v2800, %v2897
        %v2955 = vadd.f32 %v2801, %v2899
        %v2956 = vadd.f32 %v2802, %v2900
        %v2957 = vadd.f32 %v2803, %v2902
        %v2958 = vadd.f32 %v2804, %v2904
        %v2959 = vadd.f32 %v2805, %v2905
        %v2960 = vadd.f32 %v2806, %v2907
        %v2961 = vadd.f32 %v2807, %v2909
        %v2962 = vadd.f32 %v2808, %v2910
        %v2963 = vadd.f32 %v2809, %v2912
        %v2964 = vadd.f32 %v2810, %v2914
        %v2965 = vadd.f32 %v2811, %v2915
        %v2966 = vadd.f32 %v2812, %v2917
        %v2967 = vadd.f32 %v2813, %v2919
        %s2968 = sadd.s32 %s1006, 2
        %s2969 = smul.u32 %s2968, 4
        %s2970 = smul.addr %s2969, 4
        %s2971 = scalar_lea.vmem [#allocation2], %s2970
        %v2972 = vld [vmem:[%s2971] sm:$0xc]
        %v2973 = vld [vmem:[%s2971 + $0x4] sm:$0xf]
        %v2974 = vld [vmem:[%s2971 + $0x8] sm:$0x7]
        %v2975 = vld [vmem:[%s2971 + $0x10] sm:$0xc]
        %v2976 = vld [vmem:[%s2971 + $0x14] sm:$0xf]
        %v2977 = vld [vmem:[%s2971 + $0x18] sm:$0x7]
        %v2978 = vld [vmem:[%s2971 + $0x20] sm:$0xc]
        %v2979 = vld [vmem:[%s2971 + $0x24] sm:$0xf]
        %v2980 = vld [vmem:[%s2971 + $0x28] sm:$0x7]
        %v2981 = vld [vmem:[%s2971 + $0x30] sm:$0xc]
        %v2982 = vld [vmem:[%s2971 + $0x34] sm:$0xf]
        %v2983 = vld [vmem:[%s2971 + $0x38] sm:$0x7]
        %v2984 = vld [vmem:[%s2971 + $0x40] sm:$0xc]
        %v2985 = vld [vmem:[%s2971 + $0x44] sm:$0xf]
        %v2986 = vld [vmem:[%s2971 + $0x48] sm:$0x7]
        %v2987 = vld [vmem:[%s2971 + $0x50] sm:$0xc]
        %v2988 = vld [vmem:[%s2971 + $0x54] sm:$0xf]
        %v2989 = vld [vmem:[%s2971 + $0x58] sm:$0x7]
        %v2990 = vld [vmem:[%s2971 + $0x60] sm:$0xc]
        %v2991 = vld [vmem:[%s2971 + $0x64] sm:$0xf]
        %v2992 = vld [vmem:[%s2971 + $0x68] sm:$0x7]
        %v2993 = vld [vmem:[%s2971 + $0x70] sm:$0xc]
        %v2994 = vld [vmem:[%s2971 + $0x74] sm:$0xf]
        %v2995 = vld [vmem:[%s2971 + $0x78] sm:$0x7]
        %v2996 = vunpack.c.l.bf16 %v2972
        %v2997 = vunpack.c.l.bf16 %v2973
        %v2998 = vunpack.c.l.bf16 %v2974
        %v2999 = vunpack.c.l.bf16 %v2975
        %v3000 = vunpack.c.l.bf16 %v2976
        %v3001 = vunpack.c.l.bf16 %v2977
        %v3002 = vunpack.c.l.bf16 %v2978
        %v3003 = vunpack.c.l.bf16 %v2979
        %v3004 = vunpack.c.l.bf16 %v2980
        %v3005 = vunpack.c.l.bf16 %v2981
        %v3006 = vunpack.c.l.bf16 %v2982
        %v3007 = vunpack.c.l.bf16 %v2983
        %v3008 = vunpack.c.l.bf16 %v2984
        %v3009 = vunpack.c.l.bf16 %v2985
        %v3010 = vunpack.c.l.bf16 %v2986
        %v3011 = vunpack.c.l.bf16 %v2987
        %v3012 = vunpack.c.l.bf16 %v2988
        %v3013 = vunpack.c.l.bf16 %v2989
        %v3014 = vunpack.c.l.bf16 %v2990
        %v3015 = vunpack.c.l.bf16 %v2991
        %v3016 = vunpack.c.l.bf16 %v2992
        %v3017 = vunpack.c.l.bf16 %v2993
        %v3018 = vunpack.c.l.bf16 %v2994
        %v3019 = vunpack.c.l.bf16 %v2995
        %v3020 = vld [vmem:[#allocation6 + $0xe] sm:$0x1]
        %v3021 = vperm.slane %v3020, 0
        %v3022 = vmul.f32 %v2996, %v3021
        %v3023 = vmul.f32 %v2997, %v3021
        %v3024 = vmul.f32 %v2998, %v3021
        %v3025 = vmul.f32 %v2999, %v3021
        %v3026 = vmul.f32 %v3000, %v3021
        %v3027 = vmul.f32 %v3001, %v3021
        %v3028 = vmul.f32 %v3002, %v3021
        %v3029 = vmul.f32 %v3003, %v3021
        %v3030 = vmul.f32 %v3004, %v3021
        %v3031 = vmul.f32 %v3005, %v3021
        %v3032 = vmul.f32 %v3006, %v3021
        %v3033 = vmul.f32 %v3007, %v3021
        %v3034 = vmul.f32 %v3008, %v3021
        %v3035 = vmul.f32 %v3009, %v3021
        %v3036 = vmul.f32 %v3010, %v3021
        %v3037 = vmul.f32 %v3011, %v3021
        %v3038 = vmul.f32 %v3012, %v3021
        %v3039 = vmul.f32 %v3013, %v3021
        %v3040 = vmul.f32 %v3014, %v3021
        %v3041 = vmul.f32 %v3015, %v3021
        %v3042 = vmul.f32 %v3016, %v3021
        %v3043 = vmul.f32 %v3017, %v3021
        %v3044 = vmul.f32 %v3018, %v3021
        %v3045 = vmul.f32 %v3019, %v3021
        %v3046 = vadd.f32 %v2944, %v3022
        %v3047 = vadd.f32 %v2945, %v3023
        %v3048 = vadd.f32 %v2946, %v3024
        %v3049 = vadd.f32 %v2947, %v3025
        %v3050 = vadd.f32 %v2948, %v3026
        %v3051 = vadd.f32 %v2949, %v3027
        %v3052 = vadd.f32 %v2950, %v3028
        %v3053 = vadd.f32 %v2951, %v3029
        %v3054 = vadd.f32 %v2952, %v3030
        %v3055 = vadd.f32 %v2953, %v3031
        %v3056 = vadd.f32 %v2954, %v3032
        %v3057 = vadd.f32 %v2955, %v3033
        %v3058 = vadd.f32 %v2956, %v3034
        %v3059 = vadd.f32 %v2957, %v3035
        %v3060 = vadd.f32 %v2958, %v3036
        %v3061 = vadd.f32 %v2959, %v3037
        %v3062 = vadd.f32 %v2960, %v3038
        %v3063 = vadd.f32 %v2961, %v3039
        %v3064 = vadd.f32 %v2962, %v3040
        %v3065 = vadd.f32 %v2963, %v3041
        %v3066 = vadd.f32 %v2964, %v3042
        %v3067 = vadd.f32 %v2965, %v3043
        %v3068 = vadd.f32 %v2966, %v3044
        %v3069 = vadd.f32 %v2967, %v3045
        %v3070 = vld [vmem:[%s2971] sm:$0x8]
        %v3071 = vld [vmem:[%s2971 + $0x10] sm:$0x8]
        %v3072 = vld [vmem:[%s2971 + $0x20] sm:$0x8]
        %v3073 = vld [vmem:[%s2971 + $0x30] sm:$0x8]
        %v3074 = vld [vmem:[%s2971 + $0x40] sm:$0x8]
        %v3075 = vld [vmem:[%s2971 + $0x50] sm:$0x8]
        %v3076 = vld [vmem:[%s2971 + $0x60] sm:$0x8]
        %v3077 = vld [vmem:[%s2971 + $0x70] sm:$0x8]
        %v3078 = vunpack.c.l.bf16 %v3070
        %v3079 = vunpack.c.l.bf16 %v3071
        %v3080 = vunpack.c.l.bf16 %v3072
        %v3081 = vunpack.c.l.bf16 %v3073
        %v3082 = vunpack.c.l.bf16 %v3074
        %v3083 = vunpack.c.l.bf16 %v3075
        %v3084 = vunpack.c.l.bf16 %v3076
        %v3085 = vunpack.c.l.bf16 %v3077
        %v3086 = vld [vmem:[#allocation6 + $0xf] sm:$0x1]
        %v3087 = vperm.slane %v3086, 0
        %v3088 = vmul.f32 %v3078, %v3087
        %v3089 = vmul.f32 %v2997, %v3087
        %v3090 = vmul.f32 %v2998, %v3087
        %v3091 = vmul.f32 %v3079, %v3087
        %v3092 = vmul.f32 %v3000, %v3087
        %v3093 = vmul.f32 %v3001, %v3087
        %v3094 = vmul.f32 %v3080, %v3087
        %v3095 = vmul.f32 %v3003, %v3087
        %v3096 = vmul.f32 %v3004, %v3087
        %v3097 = vmul.f32 %v3081, %v3087
        %v3098 = vmul.f32 %v3006, %v3087
        %v3099 = vmul.f32 %v3007, %v3087
        %v3100 = vmul.f32 %v3082, %v3087
        %v3101 = vmul.f32 %v3009, %v3087
        %v3102 = vmul.f32 %v3010, %v3087
        %v3103 = vmul.f32 %v3083, %v3087
        %v3104 = vmul.f32 %v3012, %v3087
        %v3105 = vmul.f32 %v3013, %v3087
        %v3106 = vmul.f32 %v3084, %v3087
        %v3107 = vmul.f32 %v3015, %v3087
        %v3108 = vmul.f32 %v3016, %v3087
        %v3109 = vmul.f32 %v3085, %v3087
        %v3110 = vmul.f32 %v3018, %v3087
        %v3111 = vmul.f32 %v3019, %v3087
        %v3136 = vrot.slane %v3088, 1
        %v3137 = vrot.slane %v3089, 1
        %v3138 = vsel %vm1174, %v3136, %v3137
        %v3139 = vrot.slane %v3090, 1
        %v3140 = vsel %vm1174, %v3137, %v3139
        %v3141 = vrot.slane %v3091, 1
        %v3142 = vrot.slane %v3092, 1
        %v3143 = vsel %vm1174, %v3141, %v3142
        %v3144 = vrot.slane %v3093, 1
        %v3145 = vsel %vm1174, %v3142, %v3144
        %v3146 = vrot.slane %v3094, 1
        %v3147 = vrot.slane %v3095, 1
        %v3148 = vsel %vm1174, %v3146, %v3147
        %v3149 = vrot.slane %v3096, 1
        %v3150 = vsel %vm1174, %v3147, %v3149
        %v3151 = vrot.slane %v3097, 1
        %v3152 = vrot.slane %v3098, 1
        %v3153 = vsel %vm1174, %v3151, %v3152
        %v3154 = vrot.slane %v3099, 1
        %v3155 = vsel %vm1174, %v3152, %v3154
        %v3156 = vrot.slane %v3100, 1
        %v3157 = vrot.slane %v3101, 1
        %v3158 = vsel %vm1174, %v3156, %v3157
        %v3159 = vrot.slane %v3102, 1
        %v3160 = vsel %vm1174, %v3157, %v3159
        %v3161 = vrot.slane %v3103, 1
        %v3162 = vrot.slane %v3104, 1
        %v3163 = vsel %vm1174, %v3161, %v3162
        %v3164 = vrot.slane %v3105, 1
        %v3165 = vsel %vm1174, %v3162, %v3164
        %v3166 = vrot.slane %v3106, 1
        %v3167 = vrot.slane %v3107, 1
        %v3168 = vsel %vm1174, %v3166, %v3167
        %v3169 = vrot.slane %v3108, 1
        %v3170 = vsel %vm1174, %v3167, %v3169
        %v3171 = vrot.slane %v3109, 1
        %v3172 = vrot.slane %v3110, 1
        %v3173 = vsel %vm1174, %v3171, %v3172
        %v3174 = vrot.slane %v3111, 1
        %v3175 = vsel %vm1174, %v3172, %v3174
        %v3200 = vadd.f32 %v3046, %v3138
        %v3201 = vadd.f32 %v3047, %v3140
        %v3202 = vadd.f32 %v3048, %v3139
        %v3203 = vadd.f32 %v3049, %v3143
        %v3204 = vadd.f32 %v3050, %v3145
        %v3205 = vadd.f32 %v3051, %v3144
        %v3206 = vadd.f32 %v3052, %v3148
        %v3207 = vadd.f32 %v3053, %v3150
        %v3208 = vadd.f32 %v3054, %v3149
        %v3209 = vadd.f32 %v3055, %v3153
        %v3210 = vadd.f32 %v3056, %v3155
        %v3211 = vadd.f32 %v3057, %v3154
        %v3212 = vadd.f32 %v3058, %v3158
        %v3213 = vadd.f32 %v3059, %v3160
        %v3214 = vadd.f32 %v3060, %v3159
        %v3215 = vadd.f32 %v3061, %v3163
        %v3216 = vadd.f32 %v3062, %v3165
        %v3217 = vadd.f32 %v3063, %v3164
        %v3218 = vadd.f32 %v3064, %v3168
        %v3219 = vadd.f32 %v3065, %v3170
        %v3220 = vadd.f32 %v3066, %v3169
        %v3221 = vadd.f32 %v3067, %v3173
        %v3222 = vadd.f32 %v3068, %v3175
        %v3223 = vadd.f32 %v3069, %v3174
        %v3224 = vld [vmem:[%s2971 + $0x8] sm:$0xf]
        %v3225 = vld [vmem:[%s2971 + $0x18] sm:$0xf]
        %v3226 = vld [vmem:[%s2971 + $0x28] sm:$0xf]
        %v3227 = vld [vmem:[%s2971 + $0x38] sm:$0xf]
        %v3228 = vld [vmem:[%s2971 + $0x48] sm:$0xf]
        %v3229 = vld [vmem:[%s2971 + $0x58] sm:$0xf]
        %v3230 = vld [vmem:[%s2971 + $0x68] sm:$0xf]
        %v3231 = vld [vmem:[%s2971 + $0x78] sm:$0xf]
        %v3232 = vunpack.c.l.bf16 %v3224
        %v3233 = vunpack.c.l.bf16 %v3225
        %v3234 = vunpack.c.l.bf16 %v3226
        %v3235 = vunpack.c.l.bf16 %v3227
        %v3236 = vunpack.c.l.bf16 %v3228
        %v3237 = vunpack.c.l.bf16 %v3229
        %v3238 = vunpack.c.l.bf16 %v3230
        %v3239 = vunpack.c.l.bf16 %v3231
        %v3240 = vld [vmem:[#allocation6 + $0x10] sm:$0x1]
        %v3241 = vperm.slane %v3240, 0
        %v3242 = vmul.f32 %v3078, %v3241
        %v3243 = vmul.f32 %v2997, %v3241
        %v3244 = vmul.f32 %v3232, %v3241
        %v3245 = vmul.f32 %v3079, %v3241
        %v3246 = vmul.f32 %v3000, %v3241
        %v3247 = vmul.f32 %v3233, %v3241
        %v3248 = vmul.f32 %v3080, %v3241
        %v3249 = vmul.f32 %v3003, %v3241
        %v3250 = vmul.f32 %v3234, %v3241
        %v3251 = vmul.f32 %v3081, %v3241
        %v3252 = vmul.f32 %v3006, %v3241
        %v3253 = vmul.f32 %v3235, %v3241
        %v3254 = vmul.f32 %v3082, %v3241
        %v3255 = vmul.f32 %v3009, %v3241
        %v3256 = vmul.f32 %v3236, %v3241
        %v3257 = vmul.f32 %v3083, %v3241
        %v3258 = vmul.f32 %v3012, %v3241
        %v3259 = vmul.f32 %v3237, %v3241
        %v3260 = vmul.f32 %v3084, %v3241
        %v3261 = vmul.f32 %v3015, %v3241
        %v3262 = vmul.f32 %v3238, %v3241
        %v3263 = vmul.f32 %v3085, %v3241
        %v3264 = vmul.f32 %v3018, %v3241
        %v3265 = vmul.f32 %v3239, %v3241
        %v3290 = vrot.slane %v3242, 2
        %v3291 = vrot.slane %v3243, 2
        %v3292 = vsel %vm1329, %v3290, %v3291
        %v3293 = vrot.slane %v3244, 2
        %v3294 = vsel %vm1329, %v3291, %v3293
        %v3295 = vrot.slane %v3245, 2
        %v3296 = vrot.slane %v3246, 2
        %v3297 = vsel %vm1329, %v3295, %v3296
        %v3298 = vrot.slane %v3247, 2
        %v3299 = vsel %vm1329, %v3296, %v3298
        %v3300 = vrot.slane %v3248, 2
        %v3301 = vrot.slane %v3249, 2
        %v3302 = vsel %vm1329, %v3300, %v3301
        %v3303 = vrot.slane %v3250, 2
        %v3304 = vsel %vm1329, %v3301, %v3303
        %v3305 = vrot.slane %v3251, 2
        %v3306 = vrot.slane %v3252, 2
        %v3307 = vsel %vm1329, %v3305, %v3306
        %v3308 = vrot.slane %v3253, 2
        %v3309 = vsel %vm1329, %v3306, %v3308
        %v3310 = vrot.slane %v3254, 2
        %v3311 = vrot.slane %v3255, 2
        %v3312 = vsel %vm1329, %v3310, %v3311
        %v3313 = vrot.slane %v3256, 2
        %v3314 = vsel %vm1329, %v3311, %v3313
        %v3315 = vrot.slane %v3257, 2
        %v3316 = vrot.slane %v3258, 2
        %v3317 = vsel %vm1329, %v3315, %v3316
        %v3318 = vrot.slane %v3259, 2
        %v3319 = vsel %vm1329, %v3316, %v3318
        %v3320 = vrot.slane %v3260, 2
        %v3321 = vrot.slane %v3261, 2
        %v3322 = vsel %vm1329, %v3320, %v3321
        %v3323 = vrot.slane %v3262, 2
        %v3324 = vsel %vm1329, %v3321, %v3323
        %v3325 = vrot.slane %v3263, 2
        %v3326 = vrot.slane %v3264, 2
        %v3327 = vsel %vm1329, %v3325, %v3326
        %v3328 = vrot.slane %v3265, 2
        %v3329 = vsel %vm1329, %v3326, %v3328
        %v3354 = vadd.f32 %v3200, %v3292
        %v3355 = vadd.f32 %v3201, %v3294
        %v3356 = vadd.f32 %v3202, %v3293
        %v3357 = vadd.f32 %v3203, %v3297
        %v3358 = vadd.f32 %v3204, %v3299
        %v3359 = vadd.f32 %v3205, %v3298
        %v3360 = vadd.f32 %v3206, %v3302
        %v3361 = vadd.f32 %v3207, %v3304
        %v3362 = vadd.f32 %v3208, %v3303
        %v3363 = vadd.f32 %v3209, %v3307
        %v3364 = vadd.f32 %v3210, %v3309
        %v3365 = vadd.f32 %v3211, %v3308
        %v3366 = vadd.f32 %v3212, %v3312
        %v3367 = vadd.f32 %v3213, %v3314
        %v3368 = vadd.f32 %v3214, %v3313
        %v3369 = vadd.f32 %v3215, %v3317
        %v3370 = vadd.f32 %v3216, %v3319
        %v3371 = vadd.f32 %v3217, %v3318
        %v3372 = vadd.f32 %v3218, %v3322
        %v3373 = vadd.f32 %v3219, %v3324
        %v3374 = vadd.f32 %v3220, %v3323
        %v3375 = vadd.f32 %v3221, %v3327
        %v3376 = vadd.f32 %v3222, %v3329
        %v3377 = vadd.f32 %v3223, %v3328
        %v3378 = vld [vmem:[#allocation6 + $0x11] sm:$0x1]
        %v3379 = vperm.slane %v3378, 0
        %v3380 = vmul.f32 %v2997, %v3379
        %v3381 = vmul.f32 %v3232, %v3379
        %v3382 = vmul.f32 %v3000, %v3379
        %v3383 = vmul.f32 %v3233, %v3379
        %v3384 = vmul.f32 %v3003, %v3379
        %v3385 = vmul.f32 %v3234, %v3379
        %v3386 = vmul.f32 %v3006, %v3379
        %v3387 = vmul.f32 %v3235, %v3379
        %v3388 = vmul.f32 %v3009, %v3379
        %v3389 = vmul.f32 %v3236, %v3379
        %v3390 = vmul.f32 %v3012, %v3379
        %v3391 = vmul.f32 %v3237, %v3379
        %v3392 = vmul.f32 %v3015, %v3379
        %v3393 = vmul.f32 %v3238, %v3379
        %v3394 = vmul.f32 %v3018, %v3379
        %v3395 = vmul.f32 %v3239, %v3379
        %v3412 = vrot.slane %v3380, 3
        %v3413 = vrot.slane %v3381, 3
        %v3414 = vsel %vm1452, %v3412, %v3413
        %v3415 = vrot.slane %v3382, 3
        %v3416 = vrot.slane %v3383, 3
        %v3417 = vsel %vm1452, %v3415, %v3416
        %v3418 = vrot.slane %v3384, 3
        %v3419 = vrot.slane %v3385, 3
        %v3420 = vsel %vm1452, %v3418, %v3419
        %v3421 = vrot.slane %v3386, 3
        %v3422 = vrot.slane %v3387, 3
        %v3423 = vsel %vm1452, %v3421, %v3422
        %v3424 = vrot.slane %v3388, 3
        %v3425 = vrot.slane %v3389, 3
        %v3426 = vsel %vm1452, %v3424, %v3425
        %v3427 = vrot.slane %v3390, 3
        %v3428 = vrot.slane %v3391, 3
        %v3429 = vsel %vm1452, %v3427, %v3428
        %v3430 = vrot.slane %v3392, 3
        %v3431 = vrot.slane %v3393, 3
        %v3432 = vsel %vm1452, %v3430, %v3431
        %v3433 = vrot.slane %v3394, 3
        %v3434 = vrot.slane %v3395, 3
        %v3435 = vsel %vm1452, %v3433, %v3434
        %v3460 = vadd.f32 %v3354, %v3412
        %v3461 = vadd.f32 %v3355, %v3414
        %v3462 = vadd.f32 %v3356, %v3413
        %v3463 = vadd.f32 %v3357, %v3415
        %v3464 = vadd.f32 %v3358, %v3417
        %v3465 = vadd.f32 %v3359, %v3416
        %v3466 = vadd.f32 %v3360, %v3418
        %v3467 = vadd.f32 %v3361, %v3420
        %v3468 = vadd.f32 %v3362, %v3419
        %v3469 = vadd.f32 %v3363, %v3421
        %v3470 = vadd.f32 %v3364, %v3423
        %v3471 = vadd.f32 %v3365, %v3422
        %v3472 = vadd.f32 %v3366, %v3424
        %v3473 = vadd.f32 %v3367, %v3426
        %v3474 = vadd.f32 %v3368, %v3425
        %v3475 = vadd.f32 %v3369, %v3427
        %v3476 = vadd.f32 %v3370, %v3429
        %v3477 = vadd.f32 %v3371, %v3428
        %v3478 = vadd.f32 %v3372, %v3430
        %v3479 = vadd.f32 %v3373, %v3432
        %v3480 = vadd.f32 %v3374, %v3431
        %v3481 = vadd.f32 %v3375, %v3433
        %v3482 = vadd.f32 %v3376, %v3435
        %v3483 = vadd.f32 %v3377, %v3434
        %v3484 = vld [vmem:[%s2971 + $0xc] sm:$0x1]
        %v3485 = vld [vmem:[%s2971 + $0x1c] sm:$0x1]
        %v3486 = vld [vmem:[%s2971 + $0x2c] sm:$0x1]
        %v3487 = vld [vmem:[%s2971 + $0x3c] sm:$0x1]
        %v3488 = vld [vmem:[%s2971 + $0x4c] sm:$0x1]
        %v3489 = vld [vmem:[%s2971 + $0x5c] sm:$0x1]
        %v3490 = vld [vmem:[%s2971 + $0x6c] sm:$0x1]
        %v3491 = vld [vmem:[%s2971 + $0x7c] sm:$0x1]
        %v3492 = vunpack.c.l.bf16 %v3484
        %v3493 = vunpack.c.l.bf16 %v3485
        %v3494 = vunpack.c.l.bf16 %v3486
        %v3495 = vunpack.c.l.bf16 %v3487
        %v3496 = vunpack.c.l.bf16 %v3488
        %v3497 = vunpack.c.l.bf16 %v3489
        %v3498 = vunpack.c.l.bf16 %v3490
        %v3499 = vunpack.c.l.bf16 %v3491
        %v3500 = vld [vmem:[#allocation6 + $0x12] sm:$0x1]
        %v3501 = vperm.slane %v3500, 0
        %v3502 = vmul.f32 %v2997, %v3501
        %v3503 = vmul.f32 %v3232, %v3501
        %v3504 = vmul.f32 %v3492, %v3501
        %v3505 = vmul.f32 %v3000, %v3501
        %v3506 = vmul.f32 %v3233, %v3501
        %v3507 = vmul.f32 %v3493, %v3501
        %v3508 = vmul.f32 %v3003, %v3501
        %v3509 = vmul.f32 %v3234, %v3501
        %v3510 = vmul.f32 %v3494, %v3501
        %v3511 = vmul.f32 %v3006, %v3501
        %v3512 = vmul.f32 %v3235, %v3501
        %v3513 = vmul.f32 %v3495, %v3501
        %v3514 = vmul.f32 %v3009, %v3501
        %v3515 = vmul.f32 %v3236, %v3501
        %v3516 = vmul.f32 %v3496, %v3501
        %v3517 = vmul.f32 %v3012, %v3501
        %v3518 = vmul.f32 %v3237, %v3501
        %v3519 = vmul.f32 %v3497, %v3501
        %v3520 = vmul.f32 %v3015, %v3501
        %v3521 = vmul.f32 %v3238, %v3501
        %v3522 = vmul.f32 %v3498, %v3501
        %v3523 = vmul.f32 %v3018, %v3501
        %v3524 = vmul.f32 %v3239, %v3501
        %v3525 = vmul.f32 %v3499, %v3501
        %v3550 = vrot.slane %v3502, 4
        %v3551 = vrot.slane %v3503, 4
        %v3552 = vsel %vm1591, %v3550, %v3551
        %v3553 = vrot.slane %v3504, 4
        %v3554 = vsel %vm1591, %v3551, %v3553
        %v3555 = vrot.slane %v3505, 4
        %v3556 = vrot.slane %v3506, 4
        %v3557 = vsel %vm1591, %v3555, %v3556
        %v3558 = vrot.slane %v3507, 4
        %v3559 = vsel %vm1591, %v3556, %v3558
        %v3560 = vrot.slane %v3508, 4
        %v3561 = vrot.slane %v3509, 4
        %v3562 = vsel %vm1591, %v3560, %v3561
        %v3563 = vrot.slane %v3510, 4
        %v3564 = vsel %vm1591, %v3561, %v3563
        %v3565 = vrot.slane %v3511, 4
        %v3566 = vrot.slane %v3512, 4
        %v3567 = vsel %vm1591, %v3565, %v3566
        %v3568 = vrot.slane %v3513, 4
        %v3569 = vsel %vm1591, %v3566, %v3568
        %v3570 = vrot.slane %v3514, 4
        %v3571 = vrot.slane %v3515, 4
        %v3572 = vsel %vm1591, %v3570, %v3571
        %v3573 = vrot.slane %v3516, 4
        %v3574 = vsel %vm1591, %v3571, %v3573
        %v3575 = vrot.slane %v3517, 4
        %v3576 = vrot.slane %v3518, 4
        %v3577 = vsel %vm1591, %v3575, %v3576
        %v3578 = vrot.slane %v3519, 4
        %v3579 = vsel %vm1591, %v3576, %v3578
        %v3580 = vrot.slane %v3520, 4
        %v3581 = vrot.slane %v3521, 4
        %v3582 = vsel %vm1591, %v3580, %v3581
        %v3583 = vrot.slane %v3522, 4
        %v3584 = vsel %vm1591, %v3581, %v3583
        %v3585 = vrot.slane %v3523, 4
        %v3586 = vrot.slane %v3524, 4
        %v3587 = vsel %vm1591, %v3585, %v3586
        %v3588 = vrot.slane %v3525, 4
        %v3589 = vsel %vm1591, %v3586, %v3588
        %v3614 = vadd.f32 %v3460, %v3550
        %v3615 = vadd.f32 %v3461, %v3552
        %v3616 = vadd.f32 %v3462, %v3554
        %v3617 = vadd.f32 %v3463, %v3555
        %v3618 = vadd.f32 %v3464, %v3557
        %v3619 = vadd.f32 %v3465, %v3559
        %v3620 = vadd.f32 %v3466, %v3560
        %v3621 = vadd.f32 %v3467, %v3562
        %v3622 = vadd.f32 %v3468, %v3564
        %v3623 = vadd.f32 %v3469, %v3565
        %v3624 = vadd.f32 %v3470, %v3567
        %v3625 = vadd.f32 %v3471, %v3569
        %v3626 = vadd.f32 %v3472, %v3570
        %v3627 = vadd.f32 %v3473, %v3572
        %v3628 = vadd.f32 %v3474, %v3574
        %v3629 = vadd.f32 %v3475, %v3575
        %v3630 = vadd.f32 %v3476, %v3577
        %v3631 = vadd.f32 %v3477, %v3579
        %v3632 = vadd.f32 %v3478, %v3580
        %v3633 = vadd.f32 %v3479, %v3582
        %v3634 = vadd.f32 %v3480, %v3584
        %v3635 = vadd.f32 %v3481, %v3585
        %v3636 = vadd.f32 %v3482, %v3587
        %v3637 = vadd.f32 %v3483, %v3589
        %v3638 = vld [vmem:[%s2971 + $0x4] sm:$0xe]
        %v3639 = vld [vmem:[%s2971 + $0x14] sm:$0xe]
        %v3640 = vld [vmem:[%s2971 + $0x24] sm:$0xe]
        %v3641 = vld [vmem:[%s2971 + $0x34] sm:$0xe]
        %v3642 = vld [vmem:[%s2971 + $0x44] sm:$0xe]
        %v3643 = vld [vmem:[%s2971 + $0x54] sm:$0xe]
        %v3644 = vld [vmem:[%s2971 + $0x64] sm:$0xe]
        %v3645 = vld [vmem:[%s2971 + $0x74] sm:$0xe]
        %v3646 = vunpack.c.l.bf16 %v3638
        %v3647 = vunpack.c.l.bf16 %v3639
        %v3648 = vunpack.c.l.bf16 %v3640
        %v3649 = vunpack.c.l.bf16 %v3641
        %v3650 = vunpack.c.l.bf16 %v3642
        %v3651 = vunpack.c.l.bf16 %v3643
        %v3652 = vunpack.c.l.bf16 %v3644
        %v3653 = vunpack.c.l.bf16 %v3645
        %v3654 = vld [vmem:[#allocation6 + $0x13] sm:$0x1]
        %v3655 = vperm.slane %v3654, 0
        %v3656 = vmul.f32 %v3646, %v3655
        %v3657 = vmul.f32 %v3232, %v3655
        %v3658 = vmul.f32 %v3492, %v3655
        %v3659 = vmul.f32 %v3647, %v3655
        %v3660 = vmul.f32 %v3233, %v3655
        %v3661 = vmul.f32 %v3493, %v3655
        %v3662 = vmul.f32 %v3648, %v3655
        %v3663 = vmul.f32 %v3234, %v3655
        %v3664 = vmul.f32 %v3494, %v3655
        %v3665 = vmul.f32 %v3649, %v3655
        %v3666 = vmul.f32 %v3235, %v3655
        %v3667 = vmul.f32 %v3495, %v3655
        %v3668 = vmul.f32 %v3650, %v3655
        %v3669 = vmul.f32 %v3236, %v3655
        %v3670 = vmul.f32 %v3496, %v3655
        %v3671 = vmul.f32 %v3651, %v3655
        %v3672 = vmul.f32 %v3237, %v3655
        %v3673 = vmul.f32 %v3497, %v3655
        %v3674 = vmul.f32 %v3652, %v3655
        %v3675 = vmul.f32 %v3238, %v3655
        %v3676 = vmul.f32 %v3498, %v3655
        %v3677 = vmul.f32 %v3653, %v3655
        %v3678 = vmul.f32 %v3239, %v3655
        %v3679 = vmul.f32 %v3499, %v3655
        %v3704 = vrot.slane %v3656, 5
        %v3705 = vrot.slane %v3657, 5
        %v3706 = vsel %vm1746, %v3704, %v3705
        %v3707 = vrot.slane %v3658, 5
        %v3708 = vsel %vm1746, %v3705, %v3707
        %v3709 = vrot.slane %v3659, 5
        %v3710 = vrot.slane %v3660, 5
        %v3711 = vsel %vm1746, %v3709, %v3710
        %v3712 = vrot.slane %v3661, 5
        %v3713 = vsel %vm1746, %v3710, %v3712
        %v3714 = vrot.slane %v3662, 5
        %v3715 = vrot.slane %v3663, 5
        %v3716 = vsel %vm1746, %v3714, %v3715
        %v3717 = vrot.slane %v3664, 5
        %v3718 = vsel %vm1746, %v3715, %v3717
        %v3719 = vrot.slane %v3665, 5
        %v3720 = vrot.slane %v3666, 5
        %v3721 = vsel %vm1746, %v3719, %v3720
        %v3722 = vrot.slane %v3667, 5
        %v3723 = vsel %vm1746, %v3720, %v3722
        %v3724 = vrot.slane %v3668, 5
        %v3725 = vrot.slane %v3669, 5
        %v3726 = vsel %vm1746, %v3724, %v3725
        %v3727 = vrot.slane %v3670, 5
        %v3728 = vsel %vm1746, %v3725, %v3727
        %v3729 = vrot.slane %v3671, 5
        %v3730 = vrot.slane %v3672, 5
        %v3731 = vsel %vm1746, %v3729, %v3730
        %v3732 = vrot.slane %v3673, 5
        %v3733 = vsel %vm1746, %v3730, %v3732
        %v3734 = vrot.slane %v3674, 5
        %v3735 = vrot.slane %v3675, 5
        %v3736 = vsel %vm1746, %v3734, %v3735
        %v3737 = vrot.slane %v3676, 5
        %v3738 = vsel %vm1746, %v3735, %v3737
        %v3739 = vrot.slane %v3677, 5
        %v3740 = vrot.slane %v3678, 5
        %v3741 = vsel %vm1746, %v3739, %v3740
        %v3742 = vrot.slane %v3679, 5
        %v3743 = vsel %vm1746, %v3740, %v3742
        %v3768 = vadd.f32 %v3614, %v3704
        %v3769 = vadd.f32 %v3615, %v3706
        %v3770 = vadd.f32 %v3616, %v3708
        %v3771 = vadd.f32 %v3617, %v3709
        %v3772 = vadd.f32 %v3618, %v3711
        %v3773 = vadd.f32 %v3619, %v3713
        %v3774 = vadd.f32 %v3620, %v3714
        %v3775 = vadd.f32 %v3621, %v3716
        %v3776 = vadd.f32 %v3622, %v3718
        %v3777 = vadd.f32 %v3623, %v3719
        %v3778 = vadd.f32 %v3624, %v3721
        %v3779 = vadd.f32 %v3625, %v3723
        %v3780 = vadd.f32 %v3626, %v3724
        %v3781 = vadd.f32 %v3627, %v3726
        %v3782 = vadd.f32 %v3628, %v3728
        %v3783 = vadd.f32 %v3629, %v3729
        %v3784 = vadd.f32 %v3630, %v3731
        %v3785 = vadd.f32 %v3631, %v3733
        %v3786 = vadd.f32 %v3632, %v3734
        %v3787 = vadd.f32 %v3633, %v3736
        %v3788 = vadd.f32 %v3634, %v3738
        %v3789 = vadd.f32 %v3635, %v3739
        %v3790 = vadd.f32 %v3636, %v3741
        %v3791 = vadd.f32 %v3637, %v3743
        %v3792 = vld [vmem:[%s2971 + $0xc] sm:$0x3]
        %v3793 = vld [vmem:[%s2971 + $0x1c] sm:$0x3]
        %v3794 = vld [vmem:[%s2971 + $0x2c] sm:$0x3]
        %v3795 = vld [vmem:[%s2971 + $0x3c] sm:$0x3]
        %v3796 = vld [vmem:[%s2971 + $0x4c] sm:$0x3]
        %v3797 = vld [vmem:[%s2971 + $0x5c] sm:$0x3]
        %v3798 = vld [vmem:[%s2971 + $0x6c] sm:$0x3]
        %v3799 = vld [vmem:[%s2971 + $0x7c] sm:$0x3]
        %v3800 = vunpack.c.l.bf16 %v3792
        %v3801 = vunpack.c.l.bf16 %v3793
        %v3802 = vunpack.c.l.bf16 %v3794
        %v3803 = vunpack.c.l.bf16 %v3795
        %v3804 = vunpack.c.l.bf16 %v3796
        %v3805 = vunpack.c.l.bf16 %v3797
        %v3806 = vunpack.c.l.bf16 %v3798
        %v3807 = vunpack.c.l.bf16 %v3799
        %v3808 = vld [vmem:[#allocation6 + $0x14] sm:$0x1]
        %v3809 = vperm.slane %v3808, 0
        %v3810 = vmul.f32 %v3646, %v3809
        %v3811 = vmul.f32 %v3232, %v3809
        %v3812 = vmul.f32 %v3800, %v3809
        %v3813 = vmul.f32 %v3647, %v3809
        %v3814 = vmul.f32 %v3233, %v3809
        %v3815 = vmul.f32 %v3801, %v3809
        %v3816 = vmul.f32 %v3648, %v3809
        %v3817 = vmul.f32 %v3234, %v3809
        %v3818 = vmul.f32 %v3802, %v3809
        %v3819 = vmul.f32 %v3649, %v3809
        %v3820 = vmul.f32 %v3235, %v3809
        %v3821 = vmul.f32 %v3803, %v3809
        %v3822 = vmul.f32 %v3650, %v3809
        %v3823 = vmul.f32 %v3236, %v3809
        %v3824 = vmul.f32 %v3804, %v3809
        %v3825 = vmul.f32 %v3651, %v3809
        %v3826 = vmul.f32 %v3237, %v3809
        %v3827 = vmul.f32 %v3805, %v3809
        %v3828 = vmul.f32 %v3652, %v3809
        %v3829 = vmul.f32 %v3238, %v3809
        %v3830 = vmul.f32 %v3806, %v3809
        %v3831 = vmul.f32 %v3653, %v3809
        %v3832 = vmul.f32 %v3239, %v3809
        %v3833 = vmul.f32 %v3807, %v3809
        %v3858 = vrot.slane %v3810, 6
        %v3859 = vrot.slane %v3811, 6
        %v3860 = vsel %vm1901, %v3858, %v3859
        %v3861 = vrot.slane %v3812, 6
        %v3862 = vsel %vm1901, %v3859, %v3861
        %v3863 = vrot.slane %v3813, 6
        %v3864 = vrot.slane %v3814, 6
        %v3865 = vsel %vm1901, %v3863, %v3864
        %v3866 = vrot.slane %v3815, 6
        %v3867 = vsel %vm1901, %v3864, %v3866
        %v3868 = vrot.slane %v3816, 6
        %v3869 = vrot.slane %v3817, 6
        %v3870 = vsel %vm1901, %v3868, %v3869
        %v3871 = vrot.slane %v3818, 6
        %v3872 = vsel %vm1901, %v3869, %v3871
        %v3873 = vrot.slane %v3819, 6
        %v3874 = vrot.slane %v3820, 6
        %v3875 = vsel %vm1901, %v3873, %v3874
        %v3876 = vrot.slane %v3821, 6
        %v3877 = vsel %vm1901, %v3874, %v3876
        %v3878 = vrot.slane %v3822, 6
        %v3879 = vrot.slane %v3823, 6
        %v3880 = vsel %vm1901, %v3878, %v3879
        %v3881 = vrot.slane %v3824, 6
        %v3882 = vsel %vm1901, %v3879, %v3881
        %v3883 = vrot.slane %v3825, 6
        %v3884 = vrot.slane %v3826, 6
        %v3885 = vsel %vm1901, %v3883, %v3884
        %v3886 = vrot.slane %v3827, 6
        %v3887 = vsel %vm1901, %v3884, %v3886
        %v3888 = vrot.slane %v3828, 6
        %v3889 = vrot.slane %v3829, 6
        %v3890 = vsel %vm1901, %v3888, %v3889
        %v3891 = vrot.slane %v3830, 6
        %v3892 = vsel %vm1901, %v3889, %v3891
        %v3893 = vrot.slane %v3831, 6
        %v3894 = vrot.slane %v3832, 6
        %v3895 = vsel %vm1901, %v3893, %v3894
        %v3896 = vrot.slane %v3833, 6
        %v3897 = vsel %vm1901, %v3894, %v3896
        %v3922 = vadd.f32 %v3768, %v3858
        %v3923 = vadd.f32 %v3769, %v3860
        %v3924 = vadd.f32 %v3770, %v3862
        %v3925 = vadd.f32 %v3771, %v3863
        %v3926 = vadd.f32 %v3772, %v3865
        %v3927 = vadd.f32 %v3773, %v3867
        %v3928 = vadd.f32 %v3774, %v3868
        %v3929 = vadd.f32 %v3775, %v3870
        %v3930 = vadd.f32 %v3776, %v3872
        %v3931 = vadd.f32 %v3777, %v3873
        %v3932 = vadd.f32 %v3778, %v3875
        %v3933 = vadd.f32 %v3779, %v3877
        %v3934 = vadd.f32 %v3780, %v3878
        %v3935 = vadd.f32 %v3781, %v3880
        %v3936 = vadd.f32 %v3782, %v3882
        %v3937 = vadd.f32 %v3783, %v3883
        %v3938 = vadd.f32 %v3784, %v3885
        %v3939 = vadd.f32 %v3785, %v3887
        %v3940 = vadd.f32 %v3786, %v3888
        %v3941 = vadd.f32 %v3787, %v3890
        %v3942 = vadd.f32 %v3788, %v3892
        %v3943 = vadd.f32 %v3789, %v3893
        %v3944 = vadd.f32 %v3790, %v3895
        %v3945 = vadd.f32 %v3791, %v3897
        %s3946 = sadd.s32 %s1006, 3
        %s3947 = smul.u32 %s3946, 4
        %s3948 = smul.addr %s3947, 4
        %s3949 = scalar_lea.vmem [#allocation2], %s3948
        %v3950 = vld [vmem:[%s3949] sm:$0xc]
        %v3951 = vld [vmem:[%s3949 + $0x4] sm:$0xf]
        %v3952 = vld [vmem:[%s3949 + $0x8] sm:$0x7]
        %v3953 = vld [vmem:[%s3949 + $0x10] sm:$0xc]
        %v3954 = vld [vmem:[%s3949 + $0x14] sm:$0xf]
        %v3955 = vld [vmem:[%s3949 + $0x18] sm:$0x7]
        %v3956 = vld [vmem:[%s3949 + $0x20] sm:$0xc]
        %v3957 = vld [vmem:[%s3949 + $0x24] sm:$0xf]
        %v3958 = vld [vmem:[%s3949 + $0x28] sm:$0x7]
        %v3959 = vld [vmem:[%s3949 + $0x30] sm:$0xc]
        %v3960 = vld [vmem:[%s3949 + $0x34] sm:$0xf]
        %v3961 = vld [vmem:[%s3949 + $0x38] sm:$0x7]
        %v3962 = vld [vmem:[%s3949 + $0x40] sm:$0xc]
        %v3963 = vld [vmem:[%s3949 + $0x44] sm:$0xf]
        %v3964 = vld [vmem:[%s3949 + $0x48] sm:$0x7]
        %v3965 = vld [vmem:[%s3949 + $0x50] sm:$0xc]
        %v3966 = vld [vmem:[%s3949 + $0x54] sm:$0xf]
        %v3967 = vld [vmem:[%s3949 + $0x58] sm:$0x7]
        %v3968 = vld [vmem:[%s3949 + $0x60] sm:$0xc]
        %v3969 = vld [vmem:[%s3949 + $0x64] sm:$0xf]
        %v3970 = vld [vmem:[%s3949 + $0x68] sm:$0x7]
        %v3971 = vld [vmem:[%s3949 + $0x70] sm:$0xc]
        %v3972 = vld [vmem:[%s3949 + $0x74] sm:$0xf]
        %v3973 = vld [vmem:[%s3949 + $0x78] sm:$0x7]
        %v3974 = vunpack.c.l.bf16 %v3950
        %v3975 = vunpack.c.l.bf16 %v3951
        %v3976 = vunpack.c.l.bf16 %v3952
        %v3977 = vunpack.c.l.bf16 %v3953
        %v3978 = vunpack.c.l.bf16 %v3954
        %v3979 = vunpack.c.l.bf16 %v3955
        %v3980 = vunpack.c.l.bf16 %v3956
        %v3981 = vunpack.c.l.bf16 %v3957
        %v3982 = vunpack.c.l.bf16 %v3958
        %v3983 = vunpack.c.l.bf16 %v3959
        %v3984 = vunpack.c.l.bf16 %v3960
        %v3985 = vunpack.c.l.bf16 %v3961
        %v3986 = vunpack.c.l.bf16 %v3962
        %v3987 = vunpack.c.l.bf16 %v3963
        %v3988 = vunpack.c.l.bf16 %v3964
        %v3989 = vunpack.c.l.bf16 %v3965
        %v3990 = vunpack.c.l.bf16 %v3966
        %v3991 = vunpack.c.l.bf16 %v3967
        %v3992 = vunpack.c.l.bf16 %v3968
        %v3993 = vunpack.c.l.bf16 %v3969
        %v3994 = vunpack.c.l.bf16 %v3970
        %v3995 = vunpack.c.l.bf16 %v3971
        %v3996 = vunpack.c.l.bf16 %v3972
        %v3997 = vunpack.c.l.bf16 %v3973
        %v3998 = vld [vmem:[#allocation6 + $0x15] sm:$0x1]
        %v3999 = vperm.slane %v3998, 0
        %v4000 = vmul.f32 %v3974, %v3999
        %v4001 = vmul.f32 %v3975, %v3999
        %v4002 = vmul.f32 %v3976, %v3999
        %v4003 = vmul.f32 %v3977, %v3999
        %v4004 = vmul.f32 %v3978, %v3999
        %v4005 = vmul.f32 %v3979, %v3999
        %v4006 = vmul.f32 %v3980, %v3999
        %v4007 = vmul.f32 %v3981, %v3999
        %v4008 = vmul.f32 %v3982, %v3999
        %v4009 = vmul.f32 %v3983, %v3999
        %v4010 = vmul.f32 %v3984, %v3999
        %v4011 = vmul.f32 %v3985, %v3999
        %v4012 = vmul.f32 %v3986, %v3999
        %v4013 = vmul.f32 %v3987, %v3999
        %v4014 = vmul.f32 %v3988, %v3999
        %v4015 = vmul.f32 %v3989, %v3999
        %v4016 = vmul.f32 %v3990, %v3999
        %v4017 = vmul.f32 %v3991, %v3999
        %v4018 = vmul.f32 %v3992, %v3999
        %v4019 = vmul.f32 %v3993, %v3999
        %v4020 = vmul.f32 %v3994, %v3999
        %v4021 = vmul.f32 %v3995, %v3999
        %v4022 = vmul.f32 %v3996, %v3999
        %v4023 = vmul.f32 %v3997, %v3999
        %v4024 = vadd.f32 %v3922, %v4000
        %v4025 = vadd.f32 %v3923, %v4001
        %v4026 = vadd.f32 %v3924, %v4002
        %v4027 = vadd.f32 %v3925, %v4003
        %v4028 = vadd.f32 %v3926, %v4004
        %v4029 = vadd.f32 %v3927, %v4005
        %v4030 = vadd.f32 %v3928, %v4006
        %v4031 = vadd.f32 %v3929, %v4007
        %v4032 = vadd.f32 %v3930, %v4008
        %v4033 = vadd.f32 %v3931, %v4009
        %v4034 = vadd.f32 %v3932, %v4010
        %v4035 = vadd.f32 %v3933, %v4011
        %v4036 = vadd.f32 %v3934, %v4012
        %v4037 = vadd.f32 %v3935, %v4013
        %v4038 = vadd.f32 %v3936, %v4014
        %v4039 = vadd.f32 %v3937, %v4015
        %v4040 = vadd.f32 %v3938, %v4016
        %v4041 = vadd.f32 %v3939, %v4017
        %v4042 = vadd.f32 %v3940, %v4018
        %v4043 = vadd.f32 %v3941, %v4019
        %v4044 = vadd.f32 %v3942, %v4020
        %v4045 = vadd.f32 %v3943, %v4021
        %v4046 = vadd.f32 %v3944, %v4022
        %v4047 = vadd.f32 %v3945, %v4023
        %v4048 = vld [vmem:[%s3949] sm:$0x8]
        %v4049 = vld [vmem:[%s3949 + $0x10] sm:$0x8]
        %v4050 = vld [vmem:[%s3949 + $0x20] sm:$0x8]
        %v4051 = vld [vmem:[%s3949 + $0x30] sm:$0x8]
        %v4052 = vld [vmem:[%s3949 + $0x40] sm:$0x8]
        %v4053 = vld [vmem:[%s3949 + $0x50] sm:$0x8]
        %v4054 = vld [vmem:[%s3949 + $0x60] sm:$0x8]
        %v4055 = vld [vmem:[%s3949 + $0x70] sm:$0x8]
        %v4056 = vunpack.c.l.bf16 %v4048
        %v4057 = vunpack.c.l.bf16 %v4049
        %v4058 = vunpack.c.l.bf16 %v4050
        %v4059 = vunpack.c.l.bf16 %v4051
        %v4060 = vunpack.c.l.bf16 %v4052
        %v4061 = vunpack.c.l.bf16 %v4053
        %v4062 = vunpack.c.l.bf16 %v4054
        %v4063 = vunpack.c.l.bf16 %v4055
        %v4064 = vld [vmem:[#allocation6 + $0x16] sm:$0x1]
        %v4065 = vperm.slane %v4064, 0
        %v4066 = vmul.f32 %v4056, %v4065
        %v4067 = vmul.f32 %v3975, %v4065
        %v4068 = vmul.f32 %v3976, %v4065
        %v4069 = vmul.f32 %v4057, %v4065
        %v4070 = vmul.f32 %v3978, %v4065
        %v4071 = vmul.f32 %v3979, %v4065
        %v4072 = vmul.f32 %v4058, %v4065
        %v4073 = vmul.f32 %v3981, %v4065
        %v4074 = vmul.f32 %v3982, %v4065
        %v4075 = vmul.f32 %v4059, %v4065
        %v4076 = vmul.f32 %v3984, %v4065
        %v4077 = vmul.f32 %v3985, %v4065
        %v4078 = vmul.f32 %v4060, %v4065
        %v4079 = vmul.f32 %v3987, %v4065
        %v4080 = vmul.f32 %v3988, %v4065
        %v4081 = vmul.f32 %v4061, %v4065
        %v4082 = vmul.f32 %v3990, %v4065
        %v4083 = vmul.f32 %v3991, %v4065
        %v4084 = vmul.f32 %v4062, %v4065
        %v4085 = vmul.f32 %v3993, %v4065
        %v4086 = vmul.f32 %v3994, %v4065
        %v4087 = vmul.f32 %v4063, %v4065
        %v4088 = vmul.f32 %v3996, %v4065
        %v4089 = vmul.f32 %v3997, %v4065
        %v4114 = vrot.slane %v4066, 1
        %v4115 = vrot.slane %v4067, 1
        %v4116 = vsel %vm1174, %v4114, %v4115
        %v4117 = vrot.slane %v4068, 1
        %v4118 = vsel %vm1174, %v4115, %v4117
        %v4119 = vrot.slane %v4069, 1
        %v4120 = vrot.slane %v4070, 1
        %v4121 = vsel %vm1174, %v4119, %v4120
        %v4122 = vrot.slane %v4071, 1
        %v4123 = vsel %vm1174, %v4120, %v4122
        %v4124 = vrot.slane %v4072, 1
        %v4125 = vrot.slane %v4073, 1
        %v4126 = vsel %vm1174, %v4124, %v4125
        %v4127 = vrot.slane %v4074, 1
        %v4128 = vsel %vm1174, %v4125, %v4127
        %v4129 = vrot.slane %v4075, 1
        %v4130 = vrot.slane %v4076, 1
        %v4131 = vsel %vm1174, %v4129, %v4130
        %v4132 = vrot.slane %v4077, 1
        %v4133 = vsel %vm1174, %v4130, %v4132
        %v4134 = vrot.slane %v4078, 1
        %v4135 = vrot.slane %v4079, 1
        %v4136 = vsel %vm1174, %v4134, %v4135
        %v4137 = vrot.slane %v4080, 1
        %v4138 = vsel %vm1174, %v4135, %v4137
        %v4139 = vrot.slane %v4081, 1
        %v4140 = vrot.slane %v4082, 1
        %v4141 = vsel %vm1174, %v4139, %v4140
        %v4142 = vrot.slane %v4083, 1
        %v4143 = vsel %vm1174, %v4140, %v4142
        %v4144 = vrot.slane %v4084, 1
        %v4145 = vrot.slane %v4085, 1
        %v4146 = vsel %vm1174, %v4144, %v4145
        %v4147 = vrot.slane %v4086, 1
        %v4148 = vsel %vm1174, %v4145, %v4147
        %v4149 = vrot.slane %v4087, 1
        %v4150 = vrot.slane %v4088, 1
        %v4151 = vsel %vm1174, %v4149, %v4150
        %v4152 = vrot.slane %v4089, 1
        %v4153 = vsel %vm1174, %v4150, %v4152
        %v4178 = vadd.f32 %v4024, %v4116
        %v4179 = vadd.f32 %v4025, %v4118
        %v4180 = vadd.f32 %v4026, %v4117
        %v4181 = vadd.f32 %v4027, %v4121
        %v4182 = vadd.f32 %v4028, %v4123
        %v4183 = vadd.f32 %v4029, %v4122
        %v4184 = vadd.f32 %v4030, %v4126
        %v4185 = vadd.f32 %v4031, %v4128
        %v4186 = vadd.f32 %v4032, %v4127
        %v4187 = vadd.f32 %v4033, %v4131
        %v4188 = vadd.f32 %v4034, %v4133
        %v4189 = vadd.f32 %v4035, %v4132
        %v4190 = vadd.f32 %v4036, %v4136
        %v4191 = vadd.f32 %v4037, %v4138
        %v4192 = vadd.f32 %v4038, %v4137
        %v4193 = vadd.f32 %v4039, %v4141
        %v4194 = vadd.f32 %v4040, %v4143
        %v4195 = vadd.f32 %v4041, %v4142
        %v4196 = vadd.f32 %v4042, %v4146
        %v4197 = vadd.f32 %v4043, %v4148
        %v4198 = vadd.f32 %v4044, %v4147
        %v4199 = vadd.f32 %v4045, %v4151
        %v4200 = vadd.f32 %v4046, %v4153
        %v4201 = vadd.f32 %v4047, %v4152
        %v4202 = vld [vmem:[%s3949 + $0x8] sm:$0xf]
        %v4203 = vld [vmem:[%s3949 + $0x18] sm:$0xf]
        %v4204 = vld [vmem:[%s3949 + $0x28] sm:$0xf]
        %v4205 = vld [vmem:[%s3949 + $0x38] sm:$0xf]
        %v4206 = vld [vmem:[%s3949 + $0x48] sm:$0xf]
        %v4207 = vld [vmem:[%s3949 + $0x58] sm:$0xf]
        %v4208 = vld [vmem:[%s3949 + $0x68] sm:$0xf]
        %v4209 = vld [vmem:[%s3949 + $0x78] sm:$0xf]
        %v4210 = vunpack.c.l.bf16 %v4202
        %v4211 = vunpack.c.l.bf16 %v4203
        %v4212 = vunpack.c.l.bf16 %v4204
        %v4213 = vunpack.c.l.bf16 %v4205
        %v4214 = vunpack.c.l.bf16 %v4206
        %v4215 = vunpack.c.l.bf16 %v4207
        %v4216 = vunpack.c.l.bf16 %v4208
        %v4217 = vunpack.c.l.bf16 %v4209
        %v4218 = vld [vmem:[#allocation6 + $0x17] sm:$0x1]
        %v4219 = vperm.slane %v4218, 0
        %v4220 = vmul.f32 %v4056, %v4219
        %v4221 = vmul.f32 %v3975, %v4219
        %v4222 = vmul.f32 %v4210, %v4219
        %v4223 = vmul.f32 %v4057, %v4219
        %v4224 = vmul.f32 %v3978, %v4219
        %v4225 = vmul.f32 %v4211, %v4219
        %v4226 = vmul.f32 %v4058, %v4219
        %v4227 = vmul.f32 %v3981, %v4219
        %v4228 = vmul.f32 %v4212, %v4219
        %v4229 = vmul.f32 %v4059, %v4219
        %v4230 = vmul.f32 %v3984, %v4219
        %v4231 = vmul.f32 %v4213, %v4219
        %v4232 = vmul.f32 %v4060, %v4219
        %v4233 = vmul.f32 %v3987, %v4219
        %v4234 = vmul.f32 %v4214, %v4219
        %v4235 = vmul.f32 %v4061, %v4219
        %v4236 = vmul.f32 %v3990, %v4219
        %v4237 = vmul.f32 %v4215, %v4219
        %v4238 = vmul.f32 %v4062, %v4219
        %v4239 = vmul.f32 %v3993, %v4219
        %v4240 = vmul.f32 %v4216, %v4219
        %v4241 = vmul.f32 %v4063, %v4219
        %v4242 = vmul.f32 %v3996, %v4219
        %v4243 = vmul.f32 %v4217, %v4219
        %v4268 = vrot.slane %v4220, 2
        %v4269 = vrot.slane %v4221, 2
        %v4270 = vsel %vm1329, %v4268, %v4269
        %v4271 = vrot.slane %v4222, 2
        %v4272 = vsel %vm1329, %v4269, %v4271
        %v4273 = vrot.slane %v4223, 2
        %v4274 = vrot.slane %v4224, 2
        %v4275 = vsel %vm1329, %v4273, %v4274
        %v4276 = vrot.slane %v4225, 2
        %v4277 = vsel %vm1329, %v4274, %v4276
        %v4278 = vrot.slane %v4226, 2
        %v4279 = vrot.slane %v4227, 2
        %v4280 = vsel %vm1329, %v4278, %v4279
        %v4281 = vrot.slane %v4228, 2
        %v4282 = vsel %vm1329, %v4279, %v4281
        %v4283 = vrot.slane %v4229, 2
        %v4284 = vrot.slane %v4230, 2
        %v4285 = vsel %vm1329, %v4283, %v4284
        %v4286 = vrot.slane %v4231, 2
        %v4287 = vsel %vm1329, %v4284, %v4286
        %v4288 = vrot.slane %v4232, 2
        %v4289 = vrot.slane %v4233, 2
        %v4290 = vsel %vm1329, %v4288, %v4289
        %v4291 = vrot.slane %v4234, 2
        %v4292 = vsel %vm1329, %v4289, %v4291
        %v4293 = vrot.slane %v4235, 2
        %v4294 = vrot.slane %v4236, 2
        %v4295 = vsel %vm1329, %v4293, %v4294
        %v4296 = vrot.slane %v4237, 2
        %v4297 = vsel %vm1329, %v4294, %v4296
        %v4298 = vrot.slane %v4238, 2
        %v4299 = vrot.slane %v4239, 2
        %v4300 = vsel %vm1329, %v4298, %v4299
        %v4301 = vrot.slane %v4240, 2
        %v4302 = vsel %vm1329, %v4299, %v4301
        %v4303 = vrot.slane %v4241, 2
        %v4304 = vrot.slane %v4242, 2
        %v4305 = vsel %vm1329, %v4303, %v4304
        %v4306 = vrot.slane %v4243, 2
        %v4307 = vsel %vm1329, %v4304, %v4306
        %v4332 = vadd.f32 %v4178, %v4270
        %v4333 = vadd.f32 %v4179, %v4272
        %v4334 = vadd.f32 %v4180, %v4271
        %v4335 = vadd.f32 %v4181, %v4275
        %v4336 = vadd.f32 %v4182, %v4277
        %v4337 = vadd.f32 %v4183, %v4276
        %v4338 = vadd.f32 %v4184, %v4280
        %v4339 = vadd.f32 %v4185, %v4282
        %v4340 = vadd.f32 %v4186, %v4281
        %v4341 = vadd.f32 %v4187, %v4285
        %v4342 = vadd.f32 %v4188, %v4287
        %v4343 = vadd.f32 %v4189, %v4286
        %v4344 = vadd.f32 %v4190, %v4290
        %v4345 = vadd.f32 %v4191, %v4292
        %v4346 = vadd.f32 %v4192, %v4291
        %v4347 = vadd.f32 %v4193, %v4295
        %v4348 = vadd.f32 %v4194, %v4297
        %v4349 = vadd.f32 %v4195, %v4296
        %v4350 = vadd.f32 %v4196, %v4300
        %v4351 = vadd.f32 %v4197, %v4302
        %v4352 = vadd.f32 %v4198, %v4301
        %v4353 = vadd.f32 %v4199, %v4305
        %v4354 = vadd.f32 %v4200, %v4307
        %v4355 = vadd.f32 %v4201, %v4306
        %v4356 = vld [vmem:[#allocation6 + $0x18] sm:$0x1]
        %v4357 = vperm.slane %v4356, 0
        %v4358 = vmul.f32 %v3975, %v4357
        %v4359 = vmul.f32 %v4210, %v4357
        %v4360 = vmul.f32 %v3978, %v4357
        %v4361 = vmul.f32 %v4211, %v4357
        %v4362 = vmul.f32 %v3981, %v4357
        %v4363 = vmul.f32 %v4212, %v4357
        %v4364 = vmul.f32 %v3984, %v4357
        %v4365 = vmul.f32 %v4213, %v4357
        %v4366 = vmul.f32 %v3987, %v4357
        %v4367 = vmul.f32 %v4214, %v4357
        %v4368 = vmul.f32 %v3990, %v4357
        %v4369 = vmul.f32 %v4215, %v4357
        %v4370 = vmul.f32 %v3993, %v4357
        %v4371 = vmul.f32 %v4216, %v4357
        %v4372 = vmul.f32 %v3996, %v4357
        %v4373 = vmul.f32 %v4217, %v4357
        %v4390 = vrot.slane %v4358, 3
        %v4391 = vrot.slane %v4359, 3
        %v4392 = vsel %vm1452, %v4390, %v4391
        %v4393 = vrot.slane %v4360, 3
        %v4394 = vrot.slane %v4361, 3
        %v4395 = vsel %vm1452, %v4393, %v4394
        %v4396 = vrot.slane %v4362, 3
        %v4397 = vrot.slane %v4363, 3
        %v4398 = vsel %vm1452, %v4396, %v4397
        %v4399 = vrot.slane %v4364, 3
        %v4400 = vrot.slane %v4365, 3
        %v4401 = vsel %vm1452, %v4399, %v4400
        %v4402 = vrot.slane %v4366, 3
        %v4403 = vrot.slane %v4367, 3
        %v4404 = vsel %vm1452, %v4402, %v4403
        %v4405 = vrot.slane %v4368, 3
        %v4406 = vrot.slane %v4369, 3
        %v4407 = vsel %vm1452, %v4405, %v4406
        %v4408 = vrot.slane %v4370, 3
        %v4409 = vrot.slane %v4371, 3
        %v4410 = vsel %vm1452, %v4408, %v4409
        %v4411 = vrot.slane %v4372, 3
        %v4412 = vrot.slane %v4373, 3
        %v4413 = vsel %vm1452, %v4411, %v4412
        %v4438 = vadd.f32 %v4332, %v4390
        %v4439 = vadd.f32 %v4333, %v4392
        %v4440 = vadd.f32 %v4334, %v4391
        %v4441 = vadd.f32 %v4335, %v4393
        %v4442 = vadd.f32 %v4336, %v4395
        %v4443 = vadd.f32 %v4337, %v4394
        %v4444 = vadd.f32 %v4338, %v4396
        %v4445 = vadd.f32 %v4339, %v4398
        %v4446 = vadd.f32 %v4340, %v4397
        %v4447 = vadd.f32 %v4341, %v4399
        %v4448 = vadd.f32 %v4342, %v4401
        %v4449 = vadd.f32 %v4343, %v4400
        %v4450 = vadd.f32 %v4344, %v4402
        %v4451 = vadd.f32 %v4345, %v4404
        %v4452 = vadd.f32 %v4346, %v4403
        %v4453 = vadd.f32 %v4347, %v4405
        %v4454 = vadd.f32 %v4348, %v4407
        %v4455 = vadd.f32 %v4349, %v4406
        %v4456 = vadd.f32 %v4350, %v4408
        %v4457 = vadd.f32 %v4351, %v4410
        %v4458 = vadd.f32 %v4352, %v4409
        %v4459 = vadd.f32 %v4353, %v4411
        %v4460 = vadd.f32 %v4354, %v4413
        %v4461 = vadd.f32 %v4355, %v4412
        %v4462 = vld [vmem:[%s3949 + $0xc] sm:$0x1]
        %v4463 = vld [vmem:[%s3949 + $0x1c] sm:$0x1]
        %v4464 = vld [vmem:[%s3949 + $0x2c] sm:$0x1]
        %v4465 = vld [vmem:[%s3949 + $0x3c] sm:$0x1]
        %v4466 = vld [vmem:[%s3949 + $0x4c] sm:$0x1]
        %v4467 = vld [vmem:[%s3949 + $0x5c] sm:$0x1]
        %v4468 = vld [vmem:[%s3949 + $0x6c] sm:$0x1]
        %v4469 = vld [vmem:[%s3949 + $0x7c] sm:$0x1]
        %v4470 = vunpack.c.l.bf16 %v4462
        %v4471 = vunpack.c.l.bf16 %v4463
        %v4472 = vunpack.c.l.bf16 %v4464
        %v4473 = vunpack.c.l.bf16 %v4465
        %v4474 = vunpack.c.l.bf16 %v4466
        %v4475 = vunpack.c.l.bf16 %v4467
        %v4476 = vunpack.c.l.bf16 %v4468
        %v4477 = vunpack.c.l.bf16 %v4469
        %v4478 = vld [vmem:[#allocation6 + $0x19] sm:$0x1]
        %v4479 = vperm.slane %v4478, 0
        %v4480 = vmul.f32 %v3975, %v4479
        %v4481 = vmul.f32 %v4210, %v4479
        %v4482 = vmul.f32 %v4470, %v4479
        %v4483 = vmul.f32 %v3978, %v4479
        %v4484 = vmul.f32 %v4211, %v4479
        %v4485 = vmul.f32 %v4471, %v4479
        %v4486 = vmul.f32 %v3981, %v4479
        %v4487 = vmul.f32 %v4212, %v4479
        %v4488 = vmul.f32 %v4472, %v4479
        %v4489 = vmul.f32 %v3984, %v4479
        %v4490 = vmul.f32 %v4213, %v4479
        %v4491 = vmul.f32 %v4473, %v4479
        %v4492 = vmul.f32 %v3987, %v4479
        %v4493 = vmul.f32 %v4214, %v4479
        %v4494 = vmul.f32 %v4474, %v4479
        %v4495 = vmul.f32 %v3990, %v4479
        %v4496 = vmul.f32 %v4215, %v4479
        %v4497 = vmul.f32 %v4475, %v4479
        %v4498 = vmul.f32 %v3993, %v4479
        %v4499 = vmul.f32 %v4216, %v4479
        %v4500 = vmul.f32 %v4476, %v4479
        %v4501 = vmul.f32 %v3996, %v4479
        %v4502 = vmul.f32 %v4217, %v4479
        %v4503 = vmul.f32 %v4477, %v4479
        %v4528 = vrot.slane %v4480, 4
        %v4529 = vrot.slane %v4481, 4
        %v4530 = vsel %vm1591, %v4528, %v4529
        %v4531 = vrot.slane %v4482, 4
        %v4532 = vsel %vm1591, %v4529, %v4531
        %v4533 = vrot.slane %v4483, 4
        %v4534 = vrot.slane %v4484, 4
        %v4535 = vsel %vm1591, %v4533, %v4534
        %v4536 = vrot.slane %v4485, 4
        %v4537 = vsel %vm1591, %v4534, %v4536
        %v4538 = vrot.slane %v4486, 4
        %v4539 = vrot.slane %v4487, 4
        %v4540 = vsel %vm1591, %v4538, %v4539
        %v4541 = vrot.slane %v4488, 4
        %v4542 = vsel %vm1591, %v4539, %v4541
        %v4543 = vrot.slane %v4489, 4
        %v4544 = vrot.slane %v4490, 4
        %v4545 = vsel %vm1591, %v4543, %v4544
        %v4546 = vrot.slane %v4491, 4
        %v4547 = vsel %vm1591, %v4544, %v4546
        %v4548 = vrot.slane %v4492, 4
        %v4549 = vrot.slane %v4493, 4
        %v4550 = vsel %vm1591, %v4548, %v4549
        %v4551 = vrot.slane %v4494, 4
        %v4552 = vsel %vm1591, %v4549, %v4551
        %v4553 = vrot.slane %v4495, 4
        %v4554 = vrot.slane %v4496, 4
        %v4555 = vsel %vm1591, %v4553, %v4554
        %v4556 = vrot.slane %v4497, 4
        %v4557 = vsel %vm1591, %v4554, %v4556
        %v4558 = vrot.slane %v4498, 4
        %v4559 = vrot.slane %v4499, 4
        %v4560 = vsel %vm1591, %v4558, %v4559
        %v4561 = vrot.slane %v4500, 4
        %v4562 = vsel %vm1591, %v4559, %v4561
        %v4563 = vrot.slane %v4501, 4
        %v4564 = vrot.slane %v4502, 4
        %v4565 = vsel %vm1591, %v4563, %v4564
        %v4566 = vrot.slane %v4503, 4
        %v4567 = vsel %vm1591, %v4564, %v4566
        %v4592 = vadd.f32 %v4438, %v4528
        %v4593 = vadd.f32 %v4439, %v4530
        %v4594 = vadd.f32 %v4440, %v4532
        %v4595 = vadd.f32 %v4441, %v4533
        %v4596 = vadd.f32 %v4442, %v4535
        %v4597 = vadd.f32 %v4443, %v4537
        %v4598 = vadd.f32 %v4444, %v4538
        %v4599 = vadd.f32 %v4445, %v4540
        %v4600 = vadd.f32 %v4446, %v4542
        %v4601 = vadd.f32 %v4447, %v4543
        %v4602 = vadd.f32 %v4448, %v4545
        %v4603 = vadd.f32 %v4449, %v4547
        %v4604 = vadd.f32 %v4450, %v4548
        %v4605 = vadd.f32 %v4451, %v4550
        %v4606 = vadd.f32 %v4452, %v4552
        %v4607 = vadd.f32 %v4453, %v4553
        %v4608 = vadd.f32 %v4454, %v4555
        %v4609 = vadd.f32 %v4455, %v4557
        %v4610 = vadd.f32 %v4456, %v4558
        %v4611 = vadd.f32 %v4457, %v4560
        %v4612 = vadd.f32 %v4458, %v4562
        %v4613 = vadd.f32 %v4459, %v4563
        %v4614 = vadd.f32 %v4460, %v4565
        %v4615 = vadd.f32 %v4461, %v4567
        %v4616 = vld [vmem:[%s3949 + $0x4] sm:$0xe]
        %v4617 = vld [vmem:[%s3949 + $0x14] sm:$0xe]
        %v4618 = vld [vmem:[%s3949 + $0x24] sm:$0xe]
        %v4619 = vld [vmem:[%s3949 + $0x34] sm:$0xe]
        %v4620 = vld [vmem:[%s3949 + $0x44] sm:$0xe]
        %v4621 = vld [vmem:[%s3949 + $0x54] sm:$0xe]
        %v4622 = vld [vmem:[%s3949 + $0x64] sm:$0xe]
        %v4623 = vld [vmem:[%s3949 + $0x74] sm:$0xe]
        %v4624 = vunpack.c.l.bf16 %v4616
        %v4625 = vunpack.c.l.bf16 %v4617
        %v4626 = vunpack.c.l.bf16 %v4618
        %v4627 = vunpack.c.l.bf16 %v4619
        %v4628 = vunpack.c.l.bf16 %v4620
        %v4629 = vunpack.c.l.bf16 %v4621
        %v4630 = vunpack.c.l.bf16 %v4622
        %v4631 = vunpack.c.l.bf16 %v4623
        %v4632 = vld [vmem:[#allocation6 + $0x1a] sm:$0x1]
        %v4633 = vperm.slane %v4632, 0
        %v4634 = vmul.f32 %v4624, %v4633
        %v4635 = vmul.f32 %v4210, %v4633
        %v4636 = vmul.f32 %v4470, %v4633
        %v4637 = vmul.f32 %v4625, %v4633
        %v4638 = vmul.f32 %v4211, %v4633
        %v4639 = vmul.f32 %v4471, %v4633
        %v4640 = vmul.f32 %v4626, %v4633
        %v4641 = vmul.f32 %v4212, %v4633
        %v4642 = vmul.f32 %v4472, %v4633
        %v4643 = vmul.f32 %v4627, %v4633
        %v4644 = vmul.f32 %v4213, %v4633
        %v4645 = vmul.f32 %v4473, %v4633
        %v4646 = vmul.f32 %v4628, %v4633
        %v4647 = vmul.f32 %v4214, %v4633
        %v4648 = vmul.f32 %v4474, %v4633
        %v4649 = vmul.f32 %v4629, %v4633
        %v4650 = vmul.f32 %v4215, %v4633
        %v4651 = vmul.f32 %v4475, %v4633
        %v4652 = vmul.f32 %v4630, %v4633
        %v4653 = vmul.f32 %v4216, %v4633
        %v4654 = vmul.f32 %v4476, %v4633
        %v4655 = vmul.f32 %v4631, %v4633
        %v4656 = vmul.f32 %v4217, %v4633
        %v4657 = vmul.f32 %v4477, %v4633
        %v4682 = vrot.slane %v4634, 5
        %v4683 = vrot.slane %v4635, 5
        %v4684 = vsel %vm1746, %v4682, %v4683
        %v4685 = vrot.slane %v4636, 5
        %v4686 = vsel %vm1746, %v4683, %v4685
        %v4687 = vrot.slane %v4637, 5
        %v4688 = vrot.slane %v4638, 5
        %v4689 = vsel %vm1746, %v4687, %v4688
        %v4690 = vrot.slane %v4639, 5
        %v4691 = vsel %vm1746, %v4688, %v4690
        %v4692 = vrot.slane %v4640, 5
        %v4693 = vrot.slane %v4641, 5
        %v4694 = vsel %vm1746, %v4692, %v4693
        %v4695 = vrot.slane %v4642, 5
        %v4696 = vsel %vm1746, %v4693, %v4695
        %v4697 = vrot.slane %v4643, 5
        %v4698 = vrot.slane %v4644, 5
        %v4699 = vsel %vm1746, %v4697, %v4698
        %v4700 = vrot.slane %v4645, 5
        %v4701 = vsel %vm1746, %v4698, %v4700
        %v4702 = vrot.slane %v4646, 5
        %v4703 = vrot.slane %v4647, 5
        %v4704 = vsel %vm1746, %v4702, %v4703
        %v4705 = vrot.slane %v4648, 5
        %v4706 = vsel %vm1746, %v4703, %v4705
        %v4707 = vrot.slane %v4649, 5
        %v4708 = vrot.slane %v4650, 5
        %v4709 = vsel %vm1746, %v4707, %v4708
        %v4710 = vrot.slane %v4651, 5
        %v4711 = vsel %vm1746, %v4708, %v4710
        %v4712 = vrot.slane %v4652, 5
        %v4713 = vrot.slane %v4653, 5
        %v4714 = vsel %vm1746, %v4712, %v4713
        %v4715 = vrot.slane %v4654, 5
        %v4716 = vsel %vm1746, %v4713, %v4715
        %v4717 = vrot.slane %v4655, 5
        %v4718 = vrot.slane %v4656, 5
        %v4719 = vsel %vm1746, %v4717, %v4718
        %v4720 = vrot.slane %v4657, 5
        %v4721 = vsel %vm1746, %v4718, %v4720
        %v4746 = vadd.f32 %v4592, %v4682
        %v4747 = vadd.f32 %v4593, %v4684
        %v4748 = vadd.f32 %v4594, %v4686
        %v4749 = vadd.f32 %v4595, %v4687
        %v4750 = vadd.f32 %v4596, %v4689
        %v4751 = vadd.f32 %v4597, %v4691
        %v4752 = vadd.f32 %v4598, %v4692
        %v4753 = vadd.f32 %v4599, %v4694
        %v4754 = vadd.f32 %v4600, %v4696
        %v4755 = vadd.f32 %v4601, %v4697
        %v4756 = vadd.f32 %v4602, %v4699
        %v4757 = vadd.f32 %v4603, %v4701
        %v4758 = vadd.f32 %v4604, %v4702
        %v4759 = vadd.f32 %v4605, %v4704
        %v4760 = vadd.f32 %v4606, %v4706
        %v4761 = vadd.f32 %v4607, %v4707
        %v4762 = vadd.f32 %v4608, %v4709
        %v4763 = vadd.f32 %v4609, %v4711
        %v4764 = vadd.f32 %v4610, %v4712
        %v4765 = vadd.f32 %v4611, %v4714
        %v4766 = vadd.f32 %v4612, %v4716
        %v4767 = vadd.f32 %v4613, %v4717
        %v4768 = vadd.f32 %v4614, %v4719
        %v4769 = vadd.f32 %v4615, %v4721
        %v4770 = vld [vmem:[%s3949 + $0xc] sm:$0x3]
        %v4771 = vld [vmem:[%s3949 + $0x1c] sm:$0x3]
        %v4772 = vld [vmem:[%s3949 + $0x2c] sm:$0x3]
        %v4773 = vld [vmem:[%s3949 + $0x3c] sm:$0x3]
        %v4774 = vld [vmem:[%s3949 + $0x4c] sm:$0x3]
        %v4775 = vld [vmem:[%s3949 + $0x5c] sm:$0x3]
        %v4776 = vld [vmem:[%s3949 + $0x6c] sm:$0x3]
        %v4777 = vld [vmem:[%s3949 + $0x7c] sm:$0x3]
        %v4778 = vunpack.c.l.bf16 %v4770
        %v4779 = vunpack.c.l.bf16 %v4771
        %v4780 = vunpack.c.l.bf16 %v4772
        %v4781 = vunpack.c.l.bf16 %v4773
        %v4782 = vunpack.c.l.bf16 %v4774
        %v4783 = vunpack.c.l.bf16 %v4775
        %v4784 = vunpack.c.l.bf16 %v4776
        %v4785 = vunpack.c.l.bf16 %v4777
        %v4786 = vld [vmem:[#allocation6 + $0x1b] sm:$0x1]
        %v4787 = vperm.slane %v4786, 0
        %v4788 = vmul.f32 %v4624, %v4787
        %v4789 = vmul.f32 %v4210, %v4787
        %v4790 = vmul.f32 %v4778, %v4787
        %v4791 = vmul.f32 %v4625, %v4787
        %v4792 = vmul.f32 %v4211, %v4787
        %v4793 = vmul.f32 %v4779, %v4787
        %v4794 = vmul.f32 %v4626, %v4787
        %v4795 = vmul.f32 %v4212, %v4787
        %v4796 = vmul.f32 %v4780, %v4787
        %v4797 = vmul.f32 %v4627, %v4787
        %v4798 = vmul.f32 %v4213, %v4787
        %v4799 = vmul.f32 %v4781, %v4787
        %v4800 = vmul.f32 %v4628, %v4787
        %v4801 = vmul.f32 %v4214, %v4787
        %v4802 = vmul.f32 %v4782, %v4787
        %v4803 = vmul.f32 %v4629, %v4787
        %v4804 = vmul.f32 %v4215, %v4787
        %v4805 = vmul.f32 %v4783, %v4787
        %v4806 = vmul.f32 %v4630, %v4787
        %v4807 = vmul.f32 %v4216, %v4787
        %v4808 = vmul.f32 %v4784, %v4787
        %v4809 = vmul.f32 %v4631, %v4787
        %v4810 = vmul.f32 %v4217, %v4787
        %v4811 = vmul.f32 %v4785, %v4787
        %v4836 = vrot.slane %v4788, 6
        %v4837 = vrot.slane %v4789, 6
        %v4838 = vsel %vm1901, %v4836, %v4837
        %v4839 = vrot.slane %v4790, 6
        %v4840 = vsel %vm1901, %v4837, %v4839
        %v4841 = vrot.slane %v4791, 6
        %v4842 = vrot.slane %v4792, 6
        %v4843 = vsel %vm1901, %v4841, %v4842
        %v4844 = vrot.slane %v4793, 6
        %v4845 = vsel %vm1901, %v4842, %v4844
        %v4846 = vrot.slane %v4794, 6
        %v4847 = vrot.slane %v4795, 6
        %v4848 = vsel %vm1901, %v4846, %v4847
        %v4849 = vrot.slane %v4796, 6
        %v4850 = vsel %vm1901, %v4847, %v4849
        %v4851 = vrot.slane %v4797, 6
        %v4852 = vrot.slane %v4798, 6
        %v4853 = vsel %vm1901, %v4851, %v4852
        %v4854 = vrot.slane %v4799, 6
        %v4855 = vsel %vm1901, %v4852, %v4854
        %v4856 = vrot.slane %v4800, 6
        %v4857 = vrot.slane %v4801, 6
        %v4858 = vsel %vm1901, %v4856, %v4857
        %v4859 = vrot.slane %v4802, 6
        %v4860 = vsel %vm1901, %v4857, %v4859
        %v4861 = vrot.slane %v4803, 6
        %v4862 = vrot.slane %v4804, 6
        %v4863 = vsel %vm1901, %v4861, %v4862
        %v4864 = vrot.slane %v4805, 6
        %v4865 = vsel %vm1901, %v4862, %v4864
        %v4866 = vrot.slane %v4806, 6
        %v4867 = vrot.slane %v4807, 6
        %v4868 = vsel %vm1901, %v4866, %v4867
        %v4869 = vrot.slane %v4808, 6
        %v4870 = vsel %vm1901, %v4867, %v4869
        %v4871 = vrot.slane %v4809, 6
        %v4872 = vrot.slane %v4810, 6
        %v4873 = vsel %vm1901, %v4871, %v4872
        %v4874 = vrot.slane %v4811, 6
        %v4875 = vsel %vm1901, %v4872, %v4874
        %v4900 = vadd.f32 %v4746, %v4836
        %v4901 = vadd.f32 %v4747, %v4838
        %v4902 = vadd.f32 %v4748, %v4840
        %v4903 = vadd.f32 %v4749, %v4841
        %v4904 = vadd.f32 %v4750, %v4843
        %v4905 = vadd.f32 %v4751, %v4845
        %v4906 = vadd.f32 %v4752, %v4846
        %v4907 = vadd.f32 %v4753, %v4848
        %v4908 = vadd.f32 %v4754, %v4850
        %v4909 = vadd.f32 %v4755, %v4851
        %v4910 = vadd.f32 %v4756, %v4853
        %v4911 = vadd.f32 %v4757, %v4855
        %v4912 = vadd.f32 %v4758, %v4856
        %v4913 = vadd.f32 %v4759, %v4858
        %v4914 = vadd.f32 %v4760, %v4860
        %v4915 = vadd.f32 %v4761, %v4861
        %v4916 = vadd.f32 %v4762, %v4863
        %v4917 = vadd.f32 %v4763, %v4865
        %v4918 = vadd.f32 %v4764, %v4866
        %v4919 = vadd.f32 %v4765, %v4868
        %v4920 = vadd.f32 %v4766, %v4870
        %v4921 = vadd.f32 %v4767, %v4871
        %v4922 = vadd.f32 %v4768, %v4873
        %v4923 = vadd.f32 %v4769, %v4875
        %s4924 = sadd.s32 %s1006, 4
        %s4925 = smul.u32 %s4924, 4
        %s4926 = smul.addr %s4925, 4
        %s4927 = scalar_lea.vmem [#allocation2], %s4926
        %v4928 = vld [vmem:[%s4927] sm:$0xc]
        %v4929 = vld [vmem:[%s4927 + $0x4] sm:$0xf]
        %v4930 = vld [vmem:[%s4927 + $0x8] sm:$0x7]
        %v4931 = vld [vmem:[%s4927 + $0x10] sm:$0xc]
        %v4932 = vld [vmem:[%s4927 + $0x14] sm:$0xf]
        %v4933 = vld [vmem:[%s4927 + $0x18] sm:$0x7]
        %v4934 = vld [vmem:[%s4927 + $0x20] sm:$0xc]
        %v4935 = vld [vmem:[%s4927 + $0x24] sm:$0xf]
        %v4936 = vld [vmem:[%s4927 + $0x28] sm:$0x7]
        %v4937 = vld [vmem:[%s4927 + $0x30] sm:$0xc]
        %v4938 = vld [vmem:[%s4927 + $0x34] sm:$0xf]
        %v4939 = vld [vmem:[%s4927 + $0x38] sm:$0x7]
        %v4940 = vld [vmem:[%s4927 + $0x40] sm:$0xc]
        %v4941 = vld [vmem:[%s4927 + $0x44] sm:$0xf]
        %v4942 = vld [vmem:[%s4927 + $0x48] sm:$0x7]
        %v4943 = vld [vmem:[%s4927 + $0x50] sm:$0xc]
        %v4944 = vld [vmem:[%s4927 + $0x54] sm:$0xf]
        %v4945 = vld [vmem:[%s4927 + $0x58] sm:$0x7]
        %v4946 = vld [vmem:[%s4927 + $0x60] sm:$0xc]
        %v4947 = vld [vmem:[%s4927 + $0x64] sm:$0xf]
        %v4948 = vld [vmem:[%s4927 + $0x68] sm:$0x7]
        %v4949 = vld [vmem:[%s4927 + $0x70] sm:$0xc]
        %v4950 = vld [vmem:[%s4927 + $0x74] sm:$0xf]
        %v4951 = vld [vmem:[%s4927 + $0x78] sm:$0x7]
        %v4952 = vunpack.c.l.bf16 %v4928
        %v4953 = vunpack.c.l.bf16 %v4929
        %v4954 = vunpack.c.l.bf16 %v4930
        %v4955 = vunpack.c.l.bf16 %v4931
        %v4956 = vunpack.c.l.bf16 %v4932
        %v4957 = vunpack.c.l.bf16 %v4933
        %v4958 = vunpack.c.l.bf16 %v4934
        %v4959 = vunpack.c.l.bf16 %v4935
        %v4960 = vunpack.c.l.bf16 %v4936
        %v4961 = vunpack.c.l.bf16 %v4937
        %v4962 = vunpack.c.l.bf16 %v4938
        %v4963 = vunpack.c.l.bf16 %v4939
        %v4964 = vunpack.c.l.bf16 %v4940
        %v4965 = vunpack.c.l.bf16 %v4941
        %v4966 = vunpack.c.l.bf16 %v4942
        %v4967 = vunpack.c.l.bf16 %v4943
        %v4968 = vunpack.c.l.bf16 %v4944
        %v4969 = vunpack.c.l.bf16 %v4945
        %v4970 = vunpack.c.l.bf16 %v4946
        %v4971 = vunpack.c.l.bf16 %v4947
        %v4972 = vunpack.c.l.bf16 %v4948
        %v4973 = vunpack.c.l.bf16 %v4949
        %v4974 = vunpack.c.l.bf16 %v4950
        %v4975 = vunpack.c.l.bf16 %v4951
        %v4976 = vld [vmem:[#allocation6 + $0x1c] sm:$0x1]
        %v4977 = vperm.slane %v4976, 0
        %v4978 = vmul.f32 %v4952, %v4977
        %v4979 = vmul.f32 %v4953, %v4977
        %v4980 = vmul.f32 %v4954, %v4977
        %v4981 = vmul.f32 %v4955, %v4977
        %v4982 = vmul.f32 %v4956, %v4977
        %v4983 = vmul.f32 %v4957, %v4977
        %v4984 = vmul.f32 %v4958, %v4977
        %v4985 = vmul.f32 %v4959, %v4977
        %v4986 = vmul.f32 %v4960, %v4977
        %v4987 = vmul.f32 %v4961, %v4977
        %v4988 = vmul.f32 %v4962, %v4977
        %v4989 = vmul.f32 %v4963, %v4977
        %v4990 = vmul.f32 %v4964, %v4977
        %v4991 = vmul.f32 %v4965, %v4977
        %v4992 = vmul.f32 %v4966, %v4977
        %v4993 = vmul.f32 %v4967, %v4977
        %v4994 = vmul.f32 %v4968, %v4977
        %v4995 = vmul.f32 %v4969, %v4977
        %v4996 = vmul.f32 %v4970, %v4977
        %v4997 = vmul.f32 %v4971, %v4977
        %v4998 = vmul.f32 %v4972, %v4977
        %v4999 = vmul.f32 %v4973, %v4977
        %v5000 = vmul.f32 %v4974, %v4977
        %v5001 = vmul.f32 %v4975, %v4977
        %v5002 = vadd.f32 %v4900, %v4978
        %v5003 = vadd.f32 %v4901, %v4979
        %v5004 = vadd.f32 %v4902, %v4980
        %v5005 = vadd.f32 %v4903, %v4981
        %v5006 = vadd.f32 %v4904, %v4982
        %v5007 = vadd.f32 %v4905, %v4983
        %v5008 = vadd.f32 %v4906, %v4984
        %v5009 = vadd.f32 %v4907, %v4985
        %v5010 = vadd.f32 %v4908, %v4986
        %v5011 = vadd.f32 %v4909, %v4987
        %v5012 = vadd.f32 %v4910, %v4988
        %v5013 = vadd.f32 %v4911, %v4989
        %v5014 = vadd.f32 %v4912, %v4990
        %v5015 = vadd.f32 %v4913, %v4991
        %v5016 = vadd.f32 %v4914, %v4992
        %v5017 = vadd.f32 %v4915, %v4993
        %v5018 = vadd.f32 %v4916, %v4994
        %v5019 = vadd.f32 %v4917, %v4995
        %v5020 = vadd.f32 %v4918, %v4996
        %v5021 = vadd.f32 %v4919, %v4997
        %v5022 = vadd.f32 %v4920, %v4998
        %v5023 = vadd.f32 %v4921, %v4999
        %v5024 = vadd.f32 %v4922, %v5000
        %v5025 = vadd.f32 %v4923, %v5001
        %v5026 = vld [vmem:[%s4927] sm:$0x8]
        %v5027 = vld [vmem:[%s4927 + $0x10] sm:$0x8]
        %v5028 = vld [vmem:[%s4927 + $0x20] sm:$0x8]
        %v5029 = vld [vmem:[%s4927 + $0x30] sm:$0x8]
        %v5030 = vld [vmem:[%s4927 + $0x40] sm:$0x8]
        %v5031 = vld [vmem:[%s4927 + $0x50] sm:$0x8]
        %v5032 = vld [vmem:[%s4927 + $0x60] sm:$0x8]
        %v5033 = vld [vmem:[%s4927 + $0x70] sm:$0x8]
        %v5034 = vunpack.c.l.bf16 %v5026
        %v5035 = vunpack.c.l.bf16 %v5027
        %v5036 = vunpack.c.l.bf16 %v5028
        %v5037 = vunpack.c.l.bf16 %v5029
        %v5038 = vunpack.c.l.bf16 %v5030
        %v5039 = vunpack.c.l.bf16 %v5031
        %v5040 = vunpack.c.l.bf16 %v5032
        %v5041 = vunpack.c.l.bf16 %v5033
        %v5042 = vld [vmem:[#allocation6 + $0x1d] sm:$0x1]
        %v5043 = vperm.slane %v5042, 0
        %v5044 = vmul.f32 %v5034, %v5043
        %v5045 = vmul.f32 %v4953, %v5043
        %v5046 = vmul.f32 %v4954, %v5043
        %v5047 = vmul.f32 %v5035, %v5043
        %v5048 = vmul.f32 %v4956, %v5043
        %v5049 = vmul.f32 %v4957, %v5043
        %v5050 = vmul.f32 %v5036, %v5043
        %v5051 = vmul.f32 %v4959, %v5043
        %v5052 = vmul.f32 %v4960, %v5043
        %v5053 = vmul.f32 %v5037, %v5043
        %v5054 = vmul.f32 %v4962, %v5043
        %v5055 = vmul.f32 %v4963, %v5043
        %v5056 = vmul.f32 %v5038, %v5043
        %v5057 = vmul.f32 %v4965, %v5043
        %v5058 = vmul.f32 %v4966, %v5043
        %v5059 = vmul.f32 %v5039, %v5043
        %v5060 = vmul.f32 %v4968, %v5043
        %v5061 = vmul.f32 %v4969, %v5043
        %v5062 = vmul.f32 %v5040, %v5043
        %v5063 = vmul.f32 %v4971, %v5043
        %v5064 = vmul.f32 %v4972, %v5043
        %v5065 = vmul.f32 %v5041, %v5043
        %v5066 = vmul.f32 %v4974, %v5043
        %v5067 = vmul.f32 %v4975, %v5043
        %v5092 = vrot.slane %v5044, 1
        %v5093 = vrot.slane %v5045, 1
        %v5094 = vsel %vm1174, %v5092, %v5093
        %v5095 = vrot.slane %v5046, 1
        %v5096 = vsel %vm1174, %v5093, %v5095
        %v5097 = vrot.slane %v5047, 1
        %v5098 = vrot.slane %v5048, 1
        %v5099 = vsel %vm1174, %v5097, %v5098
        %v5100 = vrot.slane %v5049, 1
        %v5101 = vsel %vm1174, %v5098, %v5100
        %v5102 = vrot.slane %v5050, 1
        %v5103 = vrot.slane %v5051, 1
        %v5104 = vsel %vm1174, %v5102, %v5103
        %v5105 = vrot.slane %v5052, 1
        %v5106 = vsel %vm1174, %v5103, %v5105
        %v5107 = vrot.slane %v5053, 1
        %v5108 = vrot.slane %v5054, 1
        %v5109 = vsel %vm1174, %v5107, %v5108
        %v5110 = vrot.slane %v5055, 1
        %v5111 = vsel %vm1174, %v5108, %v5110
        %v5112 = vrot.slane %v5056, 1
        %v5113 = vrot.slane %v5057, 1
        %v5114 = vsel %vm1174, %v5112, %v5113
        %v5115 = vrot.slane %v5058, 1
        %v5116 = vsel %vm1174, %v5113, %v5115
        %v5117 = vrot.slane %v5059, 1
        %v5118 = vrot.slane %v5060, 1
        %v5119 = vsel %vm1174, %v5117, %v5118
        %v5120 = vrot.slane %v5061, 1
        %v5121 = vsel %vm1174, %v5118, %v5120
        %v5122 = vrot.slane %v5062, 1
        %v5123 = vrot.slane %v5063, 1
        %v5124 = vsel %vm1174, %v5122, %v5123
        %v5125 = vrot.slane %v5064, 1
        %v5126 = vsel %vm1174, %v5123, %v5125
        %v5127 = vrot.slane %v5065, 1
        %v5128 = vrot.slane %v5066, 1
        %v5129 = vsel %vm1174, %v5127, %v5128
        %v5130 = vrot.slane %v5067, 1
        %v5131 = vsel %vm1174, %v5128, %v5130
        %v5156 = vadd.f32 %v5002, %v5094
        %v5157 = vadd.f32 %v5003, %v5096
        %v5158 = vadd.f32 %v5004, %v5095
        %v5159 = vadd.f32 %v5005, %v5099
        %v5160 = vadd.f32 %v5006, %v5101
        %v5161 = vadd.f32 %v5007, %v5100
        %v5162 = vadd.f32 %v5008, %v5104
        %v5163 = vadd.f32 %v5009, %v5106
        %v5164 = vadd.f32 %v5010, %v5105
        %v5165 = vadd.f32 %v5011, %v5109
        %v5166 = vadd.f32 %v5012, %v5111
        %v5167 = vadd.f32 %v5013, %v5110
        %v5168 = vadd.f32 %v5014, %v5114
        %v5169 = vadd.f32 %v5015, %v5116
        %v5170 = vadd.f32 %v5016, %v5115
        %v5171 = vadd.f32 %v5017, %v5119
        %v5172 = vadd.f32 %v5018, %v5121
        %v5173 = vadd.f32 %v5019, %v5120
        %v5174 = vadd.f32 %v5020, %v5124
        %v5175 = vadd.f32 %v5021, %v5126
        %v5176 = vadd.f32 %v5022, %v5125
        %v5177 = vadd.f32 %v5023, %v5129
        %v5178 = vadd.f32 %v5024, %v5131
        %v5179 = vadd.f32 %v5025, %v5130
        %v5180 = vld [vmem:[%s4927 + $0x8] sm:$0xf]
        %v5181 = vld [vmem:[%s4927 + $0x18] sm:$0xf]
        %v5182 = vld [vmem:[%s4927 + $0x28] sm:$0xf]
        %v5183 = vld [vmem:[%s4927 + $0x38] sm:$0xf]
        %v5184 = vld [vmem:[%s4927 + $0x48] sm:$0xf]
        %v5185 = vld [vmem:[%s4927 + $0x58] sm:$0xf]
        %v5186 = vld [vmem:[%s4927 + $0x68] sm:$0xf]
        %v5187 = vld [vmem:[%s4927 + $0x78] sm:$0xf]
        %v5188 = vunpack.c.l.bf16 %v5180
        %v5189 = vunpack.c.l.bf16 %v5181
        %v5190 = vunpack.c.l.bf16 %v5182
        %v5191 = vunpack.c.l.bf16 %v5183
        %v5192 = vunpack.c.l.bf16 %v5184
        %v5193 = vunpack.c.l.bf16 %v5185
        %v5194 = vunpack.c.l.bf16 %v5186
        %v5195 = vunpack.c.l.bf16 %v5187
        %v5196 = vld [vmem:[#allocation6 + $0x1e] sm:$0x1]
        %v5197 = vperm.slane %v5196, 0
        %v5198 = vmul.f32 %v5034, %v5197
        %v5199 = vmul.f32 %v4953, %v5197
        %v5200 = vmul.f32 %v5188, %v5197
        %v5201 = vmul.f32 %v5035, %v5197
        %v5202 = vmul.f32 %v4956, %v5197
        %v5203 = vmul.f32 %v5189, %v5197
        %v5204 = vmul.f32 %v5036, %v5197
        %v5205 = vmul.f32 %v4959, %v5197
        %v5206 = vmul.f32 %v5190, %v5197
        %v5207 = vmul.f32 %v5037, %v5197
        %v5208 = vmul.f32 %v4962, %v5197
        %v5209 = vmul.f32 %v5191, %v5197
        %v5210 = vmul.f32 %v5038, %v5197
        %v5211 = vmul.f32 %v4965, %v5197
        %v5212 = vmul.f32 %v5192, %v5197
        %v5213 = vmul.f32 %v5039, %v5197
        %v5214 = vmul.f32 %v4968, %v5197
        %v5215 = vmul.f32 %v5193, %v5197
        %v5216 = vmul.f32 %v5040, %v5197
        %v5217 = vmul.f32 %v4971, %v5197
        %v5218 = vmul.f32 %v5194, %v5197
        %v5219 = vmul.f32 %v5041, %v5197
        %v5220 = vmul.f32 %v4974, %v5197
        %v5221 = vmul.f32 %v5195, %v5197
        %v5246 = vrot.slane %v5198, 2
        %v5247 = vrot.slane %v5199, 2
        %v5248 = vsel %vm1329, %v5246, %v5247
        %v5249 = vrot.slane %v5200, 2
        %v5250 = vsel %vm1329, %v5247, %v5249
        %v5251 = vrot.slane %v5201, 2
        %v5252 = vrot.slane %v5202, 2
        %v5253 = vsel %vm1329, %v5251, %v5252
        %v5254 = vrot.slane %v5203, 2
        %v5255 = vsel %vm1329, %v5252, %v5254
        %v5256 = vrot.slane %v5204, 2
        %v5257 = vrot.slane %v5205, 2
        %v5258 = vsel %vm1329, %v5256, %v5257
        %v5259 = vrot.slane %v5206, 2
        %v5260 = vsel %vm1329, %v5257, %v5259
        %v5261 = vrot.slane %v5207, 2
        %v5262 = vrot.slane %v5208, 2
        %v5263 = vsel %vm1329, %v5261, %v5262
        %v5264 = vrot.slane %v5209, 2
        %v5265 = vsel %vm1329, %v5262, %v5264
        %v5266 = vrot.slane %v5210, 2
        %v5267 = vrot.slane %v5211, 2
        %v5268 = vsel %vm1329, %v5266, %v5267
        %v5269 = vrot.slane %v5212, 2
        %v5270 = vsel %vm1329, %v5267, %v5269
        %v5271 = vrot.slane %v5213, 2
        %v5272 = vrot.slane %v5214, 2
        %v5273 = vsel %vm1329, %v5271, %v5272
        %v5274 = vrot.slane %v5215, 2
        %v5275 = vsel %vm1329, %v5272, %v5274
        %v5276 = vrot.slane %v5216, 2
        %v5277 = vrot.slane %v5217, 2
        %v5278 = vsel %vm1329, %v5276, %v5277
        %v5279 = vrot.slane %v5218, 2
        %v5280 = vsel %vm1329, %v5277, %v5279
        %v5281 = vrot.slane %v5219, 2
        %v5282 = vrot.slane %v5220, 2
        %v5283 = vsel %vm1329, %v5281, %v5282
        %v5284 = vrot.slane %v5221, 2
        %v5285 = vsel %vm1329, %v5282, %v5284
        %v5310 = vadd.f32 %v5156, %v5248
        %v5311 = vadd.f32 %v5157, %v5250
        %v5312 = vadd.f32 %v5158, %v5249
        %v5313 = vadd.f32 %v5159, %v5253
        %v5314 = vadd.f32 %v5160, %v5255
        %v5315 = vadd.f32 %v5161, %v5254
        %v5316 = vadd.f32 %v5162, %v5258
        %v5317 = vadd.f32 %v5163, %v5260
        %v5318 = vadd.f32 %v5164, %v5259
        %v5319 = vadd.f32 %v5165, %v5263
        %v5320 = vadd.f32 %v5166, %v5265
        %v5321 = vadd.f32 %v5167, %v5264
        %v5322 = vadd.f32 %v5168, %v5268
        %v5323 = vadd.f32 %v5169, %v5270
        %v5324 = vadd.f32 %v5170, %v5269
        %v5325 = vadd.f32 %v5171, %v5273
        %v5326 = vadd.f32 %v5172, %v5275
        %v5327 = vadd.f32 %v5173, %v5274
        %v5328 = vadd.f32 %v5174, %v5278
        %v5329 = vadd.f32 %v5175, %v5280
        %v5330 = vadd.f32 %v5176, %v5279
        %v5331 = vadd.f32 %v5177, %v5283
        %v5332 = vadd.f32 %v5178, %v5285
        %v5333 = vadd.f32 %v5179, %v5284
        %v5334 = vld [vmem:[#allocation6 + $0x1f] sm:$0x1]
        %v5335 = vperm.slane %v5334, 0
        %v5336 = vmul.f32 %v4953, %v5335
        %v5337 = vmul.f32 %v5188, %v5335
        %v5338 = vmul.f32 %v4956, %v5335
        %v5339 = vmul.f32 %v5189, %v5335
        %v5340 = vmul.f32 %v4959, %v5335
        %v5341 = vmul.f32 %v5190, %v5335
        %v5342 = vmul.f32 %v4962, %v5335
        %v5343 = vmul.f32 %v5191, %v5335
        %v5344 = vmul.f32 %v4965, %v5335
        %v5345 = vmul.f32 %v5192, %v5335
        %v5346 = vmul.f32 %v4968, %v5335
        %v5347 = vmul.f32 %v5193, %v5335
        %v5348 = vmul.f32 %v4971, %v5335
        %v5349 = vmul.f32 %v5194, %v5335
        %v5350 = vmul.f32 %v4974, %v5335
        %v5351 = vmul.f32 %v5195, %v5335
        %v5368 = vrot.slane %v5336, 3
        %v5369 = vrot.slane %v5337, 3
        %v5370 = vsel %vm1452, %v5368, %v5369
        %v5371 = vrot.slane %v5338, 3
        %v5372 = vrot.slane %v5339, 3
        %v5373 = vsel %vm1452, %v5371, %v5372
        %v5374 = vrot.slane %v5340, 3
        %v5375 = vrot.slane %v5341, 3
        %v5376 = vsel %vm1452, %v5374, %v5375
        %v5377 = vrot.slane %v5342, 3
        %v5378 = vrot.slane %v5343, 3
        %v5379 = vsel %vm1452, %v5377, %v5378
        %v5380 = vrot.slane %v5344, 3
        %v5381 = vrot.slane %v5345, 3
        %v5382 = vsel %vm1452, %v5380, %v5381
        %v5383 = vrot.slane %v5346, 3
        %v5384 = vrot.slane %v5347, 3
        %v5385 = vsel %vm1452, %v5383, %v5384
        %v5386 = vrot.slane %v5348, 3
        %v5387 = vrot.slane %v5349, 3
        %v5388 = vsel %vm1452, %v5386, %v5387
        %v5389 = vrot.slane %v5350, 3
        %v5390 = vrot.slane %v5351, 3
        %v5391 = vsel %vm1452, %v5389, %v5390
        %v5416 = vadd.f32 %v5310, %v5368
        %v5417 = vadd.f32 %v5311, %v5370
        %v5418 = vadd.f32 %v5312, %v5369
        %v5419 = vadd.f32 %v5313, %v5371
        %v5420 = vadd.f32 %v5314, %v5373
        %v5421 = vadd.f32 %v5315, %v5372
        %v5422 = vadd.f32 %v5316, %v5374
        %v5423 = vadd.f32 %v5317, %v5376
        %v5424 = vadd.f32 %v5318, %v5375
        %v5425 = vadd.f32 %v5319, %v5377
        %v5426 = vadd.f32 %v5320, %v5379
        %v5427 = vadd.f32 %v5321, %v5378
        %v5428 = vadd.f32 %v5322, %v5380
        %v5429 = vadd.f32 %v5323, %v5382
        %v5430 = vadd.f32 %v5324, %v5381
        %v5431 = vadd.f32 %v5325, %v5383
        %v5432 = vadd.f32 %v5326, %v5385
        %v5433 = vadd.f32 %v5327, %v5384
        %v5434 = vadd.f32 %v5328, %v5386
        %v5435 = vadd.f32 %v5329, %v5388
        %v5436 = vadd.f32 %v5330, %v5387
        %v5437 = vadd.f32 %v5331, %v5389
        %v5438 = vadd.f32 %v5332, %v5391
        %v5439 = vadd.f32 %v5333, %v5390
        %v5440 = vld [vmem:[%s4927 + $0xc] sm:$0x1]
        %v5441 = vld [vmem:[%s4927 + $0x1c] sm:$0x1]
        %v5442 = vld [vmem:[%s4927 + $0x2c] sm:$0x1]
        %v5443 = vld [vmem:[%s4927 + $0x3c] sm:$0x1]
        %v5444 = vld [vmem:[%s4927 + $0x4c] sm:$0x1]
        %v5445 = vld [vmem:[%s4927 + $0x5c] sm:$0x1]
        %v5446 = vld [vmem:[%s4927 + $0x6c] sm:$0x1]
        %v5447 = vld [vmem:[%s4927 + $0x7c] sm:$0x1]
        %v5448 = vunpack.c.l.bf16 %v5440
        %v5449 = vunpack.c.l.bf16 %v5441
        %v5450 = vunpack.c.l.bf16 %v5442
        %v5451 = vunpack.c.l.bf16 %v5443
        %v5452 = vunpack.c.l.bf16 %v5444
        %v5453 = vunpack.c.l.bf16 %v5445
        %v5454 = vunpack.c.l.bf16 %v5446
        %v5455 = vunpack.c.l.bf16 %v5447
        %v5456 = vld [vmem:[#allocation6 + $0x20] sm:$0x1]
        %v5457 = vperm.slane %v5456, 0
        %v5458 = vmul.f32 %v4953, %v5457
        %v5459 = vmul.f32 %v5188, %v5457
        %v5460 = vmul.f32 %v5448, %v5457
        %v5461 = vmul.f32 %v4956, %v5457
        %v5462 = vmul.f32 %v5189, %v5457
        %v5463 = vmul.f32 %v5449, %v5457
        %v5464 = vmul.f32 %v4959, %v5457
        %v5465 = vmul.f32 %v5190, %v5457
        %v5466 = vmul.f32 %v5450, %v5457
        %v5467 = vmul.f32 %v4962, %v5457
        %v5468 = vmul.f32 %v5191, %v5457
        %v5469 = vmul.f32 %v5451, %v5457
        %v5470 = vmul.f32 %v4965, %v5457
        %v5471 = vmul.f32 %v5192, %v5457
        %v5472 = vmul.f32 %v5452, %v5457
        %v5473 = vmul.f32 %v4968, %v5457
        %v5474 = vmul.f32 %v5193, %v5457
        %v5475 = vmul.f32 %v5453, %v5457
        %v5476 = vmul.f32 %v4971, %v5457
        %v5477 = vmul.f32 %v5194, %v5457
        %v5478 = vmul.f32 %v5454, %v5457
        %v5479 = vmul.f32 %v4974, %v5457
        %v5480 = vmul.f32 %v5195, %v5457
        %v5481 = vmul.f32 %v5455, %v5457
        %v5506 = vrot.slane %v5458, 4
        %v5507 = vrot.slane %v5459, 4
        %v5508 = vsel %vm1591, %v5506, %v5507
        %v5509 = vrot.slane %v5460, 4
        %v5510 = vsel %vm1591, %v5507, %v5509
        %v5511 = vrot.slane %v5461, 4
        %v5512 = vrot.slane %v5462, 4
        %v5513 = vsel %vm1591, %v5511, %v5512
        %v5514 = vrot.slane %v5463, 4
        %v5515 = vsel %vm1591, %v5512, %v5514
        %v5516 = vrot.slane %v5464, 4
        %v5517 = vrot.slane %v5465, 4
        %v5518 = vsel %vm1591, %v5516, %v5517
        %v5519 = vrot.slane %v5466, 4
        %v5520 = vsel %vm1591, %v5517, %v5519
        %v5521 = vrot.slane %v5467, 4
        %v5522 = vrot.slane %v5468, 4
        %v5523 = vsel %vm1591, %v5521, %v5522
        %v5524 = vrot.slane %v5469, 4
        %v5525 = vsel %vm1591, %v5522, %v5524
        %v5526 = vrot.slane %v5470, 4
        %v5527 = vrot.slane %v5471, 4
        %v5528 = vsel %vm1591, %v5526, %v5527
        %v5529 = vrot.slane %v5472, 4
        %v5530 = vsel %vm1591, %v5527, %v5529
        %v5531 = vrot.slane %v5473, 4
        %v5532 = vrot.slane %v5474, 4
        %v5533 = vsel %vm1591, %v5531, %v5532
        %v5534 = vrot.slane %v5475, 4
        %v5535 = vsel %vm1591, %v5532, %v5534
        %v5536 = vrot.slane %v5476, 4
        %v5537 = vrot.slane %v5477, 4
        %v5538 = vsel %vm1591, %v5536, %v5537
        %v5539 = vrot.slane %v5478, 4
        %v5540 = vsel %vm1591, %v5537, %v5539
        %v5541 = vrot.slane %v5479, 4
        %v5542 = vrot.slane %v5480, 4
        %v5543 = vsel %vm1591, %v5541, %v5542
        %v5544 = vrot.slane %v5481, 4
        %v5545 = vsel %vm1591, %v5542, %v5544
        %v5570 = vadd.f32 %v5416, %v5506
        %v5571 = vadd.f32 %v5417, %v5508
        %v5572 = vadd.f32 %v5418, %v5510
        %v5573 = vadd.f32 %v5419, %v5511
        %v5574 = vadd.f32 %v5420, %v5513
        %v5575 = vadd.f32 %v5421, %v5515
        %v5576 = vadd.f32 %v5422, %v5516
        %v5577 = vadd.f32 %v5423, %v5518
        %v5578 = vadd.f32 %v5424, %v5520
        %v5579 = vadd.f32 %v5425, %v5521
        %v5580 = vadd.f32 %v5426, %v5523
        %v5581 = vadd.f32 %v5427, %v5525
        %v5582 = vadd.f32 %v5428, %v5526
        %v5583 = vadd.f32 %v5429, %v5528
        %v5584 = vadd.f32 %v5430, %v5530
        %v5585 = vadd.f32 %v5431, %v5531
        %v5586 = vadd.f32 %v5432, %v5533
        %v5587 = vadd.f32 %v5433, %v5535
        %v5588 = vadd.f32 %v5434, %v5536
        %v5589 = vadd.f32 %v5435, %v5538
        %v5590 = vadd.f32 %v5436, %v5540
        %v5591 = vadd.f32 %v5437, %v5541
        %v5592 = vadd.f32 %v5438, %v5543
        %v5593 = vadd.f32 %v5439, %v5545
        %v5594 = vld [vmem:[%s4927 + $0x4] sm:$0xe]
        %v5595 = vld [vmem:[%s4927 + $0x14] sm:$0xe]
        %v5596 = vld [vmem:[%s4927 + $0x24] sm:$0xe]
        %v5597 = vld [vmem:[%s4927 + $0x34] sm:$0xe]
        %v5598 = vld [vmem:[%s4927 + $0x44] sm:$0xe]
        %v5599 = vld [vmem:[%s4927 + $0x54] sm:$0xe]
        %v5600 = vld [vmem:[%s4927 + $0x64] sm:$0xe]
        %v5601 = vld [vmem:[%s4927 + $0x74] sm:$0xe]
        %v5602 = vunpack.c.l.bf16 %v5594
        %v5603 = vunpack.c.l.bf16 %v5595
        %v5604 = vunpack.c.l.bf16 %v5596
        %v5605 = vunpack.c.l.bf16 %v5597
        %v5606 = vunpack.c.l.bf16 %v5598
        %v5607 = vunpack.c.l.bf16 %v5599
        %v5608 = vunpack.c.l.bf16 %v5600
        %v5609 = vunpack.c.l.bf16 %v5601
        %v5610 = vld [vmem:[#allocation6 + $0x21] sm:$0x1]
        %v5611 = vperm.slane %v5610, 0
        %v5612 = vmul.f32 %v5602, %v5611
        %v5613 = vmul.f32 %v5188, %v5611
        %v5614 = vmul.f32 %v5448, %v5611
        %v5615 = vmul.f32 %v5603, %v5611
        %v5616 = vmul.f32 %v5189, %v5611
        %v5617 = vmul.f32 %v5449, %v5611
        %v5618 = vmul.f32 %v5604, %v5611
        %v5619 = vmul.f32 %v5190, %v5611
        %v5620 = vmul.f32 %v5450, %v5611
        %v5621 = vmul.f32 %v5605, %v5611
        %v5622 = vmul.f32 %v5191, %v5611
        %v5623 = vmul.f32 %v5451, %v5611
        %v5624 = vmul.f32 %v5606, %v5611
        %v5625 = vmul.f32 %v5192, %v5611
        %v5626 = vmul.f32 %v5452, %v5611
        %v5627 = vmul.f32 %v5607, %v5611
        %v5628 = vmul.f32 %v5193, %v5611
        %v5629 = vmul.f32 %v5453, %v5611
        %v5630 = vmul.f32 %v5608, %v5611
        %v5631 = vmul.f32 %v5194, %v5611
        %v5632 = vmul.f32 %v5454, %v5611
        %v5633 = vmul.f32 %v5609, %v5611
        %v5634 = vmul.f32 %v5195, %v5611
        %v5635 = vmul.f32 %v5455, %v5611
        %v5660 = vrot.slane %v5612, 5
        %v5661 = vrot.slane %v5613, 5
        %v5662 = vsel %vm1746, %v5660, %v5661
        %v5663 = vrot.slane %v5614, 5
        %v5664 = vsel %vm1746, %v5661, %v5663
        %v5665 = vrot.slane %v5615, 5
        %v5666 = vrot.slane %v5616, 5
        %v5667 = vsel %vm1746, %v5665, %v5666
        %v5668 = vrot.slane %v5617, 5
        %v5669 = vsel %vm1746, %v5666, %v5668
        %v5670 = vrot.slane %v5618, 5
        %v5671 = vrot.slane %v5619, 5
        %v5672 = vsel %vm1746, %v5670, %v5671
        %v5673 = vrot.slane %v5620, 5
        %v5674 = vsel %vm1746, %v5671, %v5673
        %v5675 = vrot.slane %v5621, 5
        %v5676 = vrot.slane %v5622, 5
        %v5677 = vsel %vm1746, %v5675, %v5676
        %v5678 = vrot.slane %v5623, 5
        %v5679 = vsel %vm1746, %v5676, %v5678
        %v5680 = vrot.slane %v5624, 5
        %v5681 = vrot.slane %v5625, 5
        %v5682 = vsel %vm1746, %v5680, %v5681
        %v5683 = vrot.slane %v5626, 5
        %v5684 = vsel %vm1746, %v5681, %v5683
        %v5685 = vrot.slane %v5627, 5
        %v5686 = vrot.slane %v5628, 5
        %v5687 = vsel %vm1746, %v5685, %v5686
        %v5688 = vrot.slane %v5629, 5
        %v5689 = vsel %vm1746, %v5686, %v5688
        %v5690 = vrot.slane %v5630, 5
        %v5691 = vrot.slane %v5631, 5
        %v5692 = vsel %vm1746, %v5690, %v5691
        %v5693 = vrot.slane %v5632, 5
        %v5694 = vsel %vm1746, %v5691, %v5693
        %v5695 = vrot.slane %v5633, 5
        %v5696 = vrot.slane %v5634, 5
        %v5697 = vsel %vm1746, %v5695, %v5696
        %v5698 = vrot.slane %v5635, 5
        %v5699 = vsel %vm1746, %v5696, %v5698
        %v5724 = vadd.f32 %v5570, %v5660
        %v5725 = vadd.f32 %v5571, %v5662
        %v5726 = vadd.f32 %v5572, %v5664
        %v5727 = vadd.f32 %v5573, %v5665
        %v5728 = vadd.f32 %v5574, %v5667
        %v5729 = vadd.f32 %v5575, %v5669
        %v5730 = vadd.f32 %v5576, %v5670
        %v5731 = vadd.f32 %v5577, %v5672
        %v5732 = vadd.f32 %v5578, %v5674
        %v5733 = vadd.f32 %v5579, %v5675
        %v5734 = vadd.f32 %v5580, %v5677
        %v5735 = vadd.f32 %v5581, %v5679
        %v5736 = vadd.f32 %v5582, %v5680
        %v5737 = vadd.f32 %v5583, %v5682
        %v5738 = vadd.f32 %v5584, %v5684
        %v5739 = vadd.f32 %v5585, %v5685
        %v5740 = vadd.f32 %v5586, %v5687
        %v5741 = vadd.f32 %v5587, %v5689
        %v5742 = vadd.f32 %v5588, %v5690
        %v5743 = vadd.f32 %v5589, %v5692
        %v5744 = vadd.f32 %v5590, %v5694
        %v5745 = vadd.f32 %v5591, %v5695
        %v5746 = vadd.f32 %v5592, %v5697
        %v5747 = vadd.f32 %v5593, %v5699
        %v5748 = vld [vmem:[%s4927 + $0xc] sm:$0x3]
        %v5749 = vld [vmem:[%s4927 + $0x1c] sm:$0x3]
        %v5750 = vld [vmem:[%s4927 + $0x2c] sm:$0x3]
        %v5751 = vld [vmem:[%s4927 + $0x3c] sm:$0x3]
        %v5752 = vld [vmem:[%s4927 + $0x4c] sm:$0x3]
        %v5753 = vld [vmem:[%s4927 + $0x5c] sm:$0x3]
        %v5754 = vld [vmem:[%s4927 + $0x6c] sm:$0x3]
        %v5755 = vld [vmem:[%s4927 + $0x7c] sm:$0x3]
        %v5756 = vunpack.c.l.bf16 %v5748
        %v5757 = vunpack.c.l.bf16 %v5749
        %v5758 = vunpack.c.l.bf16 %v5750
        %v5759 = vunpack.c.l.bf16 %v5751
        %v5760 = vunpack.c.l.bf16 %v5752
        %v5761 = vunpack.c.l.bf16 %v5753
        %v5762 = vunpack.c.l.bf16 %v5754
        %v5763 = vunpack.c.l.bf16 %v5755
        %v5764 = vld [vmem:[#allocation6 + $0x22] sm:$0x1]
        %v5765 = vperm.slane %v5764, 0
        %v5766 = vmul.f32 %v5602, %v5765
        %v5767 = vmul.f32 %v5188, %v5765
        %v5768 = vmul.f32 %v5756, %v5765
        %v5769 = vmul.f32 %v5603, %v5765
        %v5770 = vmul.f32 %v5189, %v5765
        %v5771 = vmul.f32 %v5757, %v5765
        %v5772 = vmul.f32 %v5604, %v5765
        %v5773 = vmul.f32 %v5190, %v5765
        %v5774 = vmul.f32 %v5758, %v5765
        %v5775 = vmul.f32 %v5605, %v5765
        %v5776 = vmul.f32 %v5191, %v5765
        %v5777 = vmul.f32 %v5759, %v5765
        %v5778 = vmul.f32 %v5606, %v5765
        %v5779 = vmul.f32 %v5192, %v5765
        %v5780 = vmul.f32 %v5760, %v5765
        %v5781 = vmul.f32 %v5607, %v5765
        %v5782 = vmul.f32 %v5193, %v5765
        %v5783 = vmul.f32 %v5761, %v5765
        %v5784 = vmul.f32 %v5608, %v5765
        %v5785 = vmul.f32 %v5194, %v5765
        %v5786 = vmul.f32 %v5762, %v5765
        %v5787 = vmul.f32 %v5609, %v5765
        %v5788 = vmul.f32 %v5195, %v5765
        %v5789 = vmul.f32 %v5763, %v5765
        %v5814 = vrot.slane %v5766, 6
        %v5815 = vrot.slane %v5767, 6
        %v5816 = vsel %vm1901, %v5814, %v5815
        %v5817 = vrot.slane %v5768, 6
        %v5818 = vsel %vm1901, %v5815, %v5817
        %v5819 = vrot.slane %v5769, 6
        %v5820 = vrot.slane %v5770, 6
        %v5821 = vsel %vm1901, %v5819, %v5820
        %v5822 = vrot.slane %v5771, 6
        %v5823 = vsel %vm1901, %v5820, %v5822
        %v5824 = vrot.slane %v5772, 6
        %v5825 = vrot.slane %v5773, 6
        %v5826 = vsel %vm1901, %v5824, %v5825
        %v5827 = vrot.slane %v5774, 6
        %v5828 = vsel %vm1901, %v5825, %v5827
        %v5829 = vrot.slane %v5775, 6
        %v5830 = vrot.slane %v5776, 6
        %v5831 = vsel %vm1901, %v5829, %v5830
        %v5832 = vrot.slane %v5777, 6
        %v5833 = vsel %vm1901, %v5830, %v5832
        %v5834 = vrot.slane %v5778, 6
        %v5835 = vrot.slane %v5779, 6
        %v5836 = vsel %vm1901, %v5834, %v5835
        %v5837 = vrot.slane %v5780, 6
        %v5838 = vsel %vm1901, %v5835, %v5837
        %v5839 = vrot.slane %v5781, 6
        %v5840 = vrot.slane %v5782, 6
        %v5841 = vsel %vm1901, %v5839, %v5840
        %v5842 = vrot.slane %v5783, 6
        %v5843 = vsel %vm1901, %v5840, %v5842
        %v5844 = vrot.slane %v5784, 6
        %v5845 = vrot.slane %v5785, 6
        %v5846 = vsel %vm1901, %v5844, %v5845
        %v5847 = vrot.slane %v5786, 6
        %v5848 = vsel %vm1901, %v5845, %v5847
        %v5849 = vrot.slane %v5787, 6
        %v5850 = vrot.slane %v5788, 6
        %v5851 = vsel %vm1901, %v5849, %v5850
        %v5852 = vrot.slane %v5789, 6
        %v5853 = vsel %vm1901, %v5850, %v5852
        %v5878 = vadd.f32 %v5724, %v5814
        %v5879 = vadd.f32 %v5725, %v5816
        %v5880 = vadd.f32 %v5726, %v5818
        %v5881 = vadd.f32 %v5727, %v5819
        %v5882 = vadd.f32 %v5728, %v5821
        %v5883 = vadd.f32 %v5729, %v5823
        %v5884 = vadd.f32 %v5730, %v5824
        %v5885 = vadd.f32 %v5731, %v5826
        %v5886 = vadd.f32 %v5732, %v5828
        %v5887 = vadd.f32 %v5733, %v5829
        %v5888 = vadd.f32 %v5734, %v5831
        %v5889 = vadd.f32 %v5735, %v5833
        %v5890 = vadd.f32 %v5736, %v5834
        %v5891 = vadd.f32 %v5737, %v5836
        %v5892 = vadd.f32 %v5738, %v5838
        %v5893 = vadd.f32 %v5739, %v5839
        %v5894 = vadd.f32 %v5740, %v5841
        %v5895 = vadd.f32 %v5741, %v5843
        %v5896 = vadd.f32 %v5742, %v5844
        %v5897 = vadd.f32 %v5743, %v5846
        %v5898 = vadd.f32 %v5744, %v5848
        %v5899 = vadd.f32 %v5745, %v5849
        %v5900 = vadd.f32 %v5746, %v5851
        %v5901 = vadd.f32 %v5747, %v5853
        %s5902 = sadd.s32 %s1006, 5
        %s5903 = smul.u32 %s5902, 4
        %s5904 = smul.addr %s5903, 4
        %s5905 = scalar_lea.vmem [#allocation2], %s5904
        %v5906 = vld [vmem:[%s5905] sm:$0xc]
        %v5907 = vld [vmem:[%s5905 + $0x4] sm:$0xf]
        %v5908 = vld [vmem:[%s5905 + $0x8] sm:$0x7]
        %v5909 = vld [vmem:[%s5905 + $0x10] sm:$0xc]
        %v5910 = vld [vmem:[%s5905 + $0x14] sm:$0xf]
        %v5911 = vld [vmem:[%s5905 + $0x18] sm:$0x7]
        %v5912 = vld [vmem:[%s5905 + $0x20] sm:$0xc]
        %v5913 = vld [vmem:[%s5905 + $0x24] sm:$0xf]
        %v5914 = vld [vmem:[%s5905 + $0x28] sm:$0x7]
        %v5915 = vld [vmem:[%s5905 + $0x30] sm:$0xc]
        %v5916 = vld [vmem:[%s5905 + $0x34] sm:$0xf]
        %v5917 = vld [vmem:[%s5905 + $0x38] sm:$0x7]
        %v5918 = vld [vmem:[%s5905 + $0x40] sm:$0xc]
        %v5919 = vld [vmem:[%s5905 + $0x44] sm:$0xf]
        %v5920 = vld [vmem:[%s5905 + $0x48] sm:$0x7]
        %v5921 = vld [vmem:[%s5905 + $0x50] sm:$0xc]
        %v5922 = vld [vmem:[%s5905 + $0x54] sm:$0xf]
        %v5923 = vld [vmem:[%s5905 + $0x58] sm:$0x7]
        %v5924 = vld [vmem:[%s5905 + $0x60] sm:$0xc]
        %v5925 = vld [vmem:[%s5905 + $0x64] sm:$0xf]
        %v5926 = vld [vmem:[%s5905 + $0x68] sm:$0x7]
        %v5927 = vld [vmem:[%s5905 + $0x70] sm:$0xc]
        %v5928 = vld [vmem:[%s5905 + $0x74] sm:$0xf]
        %v5929 = vld [vmem:[%s5905 + $0x78] sm:$0x7]
        %v5930 = vunpack.c.l.bf16 %v5906
        %v5931 = vunpack.c.l.bf16 %v5907
        %v5932 = vunpack.c.l.bf16 %v5908
        %v5933 = vunpack.c.l.bf16 %v5909
        %v5934 = vunpack.c.l.bf16 %v5910
        %v5935 = vunpack.c.l.bf16 %v5911
        %v5936 = vunpack.c.l.bf16 %v5912
        %v5937 = vunpack.c.l.bf16 %v5913
        %v5938 = vunpack.c.l.bf16 %v5914
        %v5939 = vunpack.c.l.bf16 %v5915
        %v5940 = vunpack.c.l.bf16 %v5916
        %v5941 = vunpack.c.l.bf16 %v5917
        %v5942 = vunpack.c.l.bf16 %v5918
        %v5943 = vunpack.c.l.bf16 %v5919
        %v5944 = vunpack.c.l.bf16 %v5920
        %v5945 = vunpack.c.l.bf16 %v5921
        %v5946 = vunpack.c.l.bf16 %v5922
        %v5947 = vunpack.c.l.bf16 %v5923
        %v5948 = vunpack.c.l.bf16 %v5924
        %v5949 = vunpack.c.l.bf16 %v5925
        %v5950 = vunpack.c.l.bf16 %v5926
        %v5951 = vunpack.c.l.bf16 %v5927
        %v5952 = vunpack.c.l.bf16 %v5928
        %v5953 = vunpack.c.l.bf16 %v5929
        %v5954 = vld [vmem:[#allocation6 + $0x23] sm:$0x1]
        %v5955 = vperm.slane %v5954, 0
        %v5956 = vmul.f32 %v5930, %v5955
        %v5957 = vmul.f32 %v5931, %v5955
        %v5958 = vmul.f32 %v5932, %v5955
        %v5959 = vmul.f32 %v5933, %v5955
        %v5960 = vmul.f32 %v5934, %v5955
        %v5961 = vmul.f32 %v5935, %v5955
        %v5962 = vmul.f32 %v5936, %v5955
        %v5963 = vmul.f32 %v5937, %v5955
        %v5964 = vmul.f32 %v5938, %v5955
        %v5965 = vmul.f32 %v5939, %v5955
        %v5966 = vmul.f32 %v5940, %v5955
        %v5967 = vmul.f32 %v5941, %v5955
        %v5968 = vmul.f32 %v5942, %v5955
        %v5969 = vmul.f32 %v5943, %v5955
        %v5970 = vmul.f32 %v5944, %v5955
        %v5971 = vmul.f32 %v5945, %v5955
        %v5972 = vmul.f32 %v5946, %v5955
        %v5973 = vmul.f32 %v5947, %v5955
        %v5974 = vmul.f32 %v5948, %v5955
        %v5975 = vmul.f32 %v5949, %v5955
        %v5976 = vmul.f32 %v5950, %v5955
        %v5977 = vmul.f32 %v5951, %v5955
        %v5978 = vmul.f32 %v5952, %v5955
        %v5979 = vmul.f32 %v5953, %v5955
        %v5980 = vadd.f32 %v5878, %v5956
        %v5981 = vadd.f32 %v5879, %v5957
        %v5982 = vadd.f32 %v5880, %v5958
        %v5983 = vadd.f32 %v5881, %v5959
        %v5984 = vadd.f32 %v5882, %v5960
        %v5985 = vadd.f32 %v5883, %v5961
        %v5986 = vadd.f32 %v5884, %v5962
        %v5987 = vadd.f32 %v5885, %v5963
        %v5988 = vadd.f32 %v5886, %v5964
        %v5989 = vadd.f32 %v5887, %v5965
        %v5990 = vadd.f32 %v5888, %v5966
        %v5991 = vadd.f32 %v5889, %v5967
        %v5992 = vadd.f32 %v5890, %v5968
        %v5993 = vadd.f32 %v5891, %v5969
        %v5994 = vadd.f32 %v5892, %v5970
        %v5995 = vadd.f32 %v5893, %v5971
        %v5996 = vadd.f32 %v5894, %v5972
        %v5997 = vadd.f32 %v5895, %v5973
        %v5998 = vadd.f32 %v5896, %v5974
        %v5999 = vadd.f32 %v5897, %v5975
        %v6000 = vadd.f32 %v5898, %v5976
        %v6001 = vadd.f32 %v5899, %v5977
        %v6002 = vadd.f32 %v5900, %v5978
        %v6003 = vadd.f32 %v5901, %v5979
        %v6004 = vld [vmem:[%s5905] sm:$0x8]
        %v6005 = vld [vmem:[%s5905 + $0x10] sm:$0x8]
        %v6006 = vld [vmem:[%s5905 + $0x20] sm:$0x8]
        %v6007 = vld [vmem:[%s5905 + $0x30] sm:$0x8]
        %v6008 = vld [vmem:[%s5905 + $0x40] sm:$0x8]
        %v6009 = vld [vmem:[%s5905 + $0x50] sm:$0x8]
        %v6010 = vld [vmem:[%s5905 + $0x60] sm:$0x8]
        %v6011 = vld [vmem:[%s5905 + $0x70] sm:$0x8]
        %v6012 = vunpack.c.l.bf16 %v6004
        %v6013 = vunpack.c.l.bf16 %v6005
        %v6014 = vunpack.c.l.bf16 %v6006
        %v6015 = vunpack.c.l.bf16 %v6007
        %v6016 = vunpack.c.l.bf16 %v6008
        %v6017 = vunpack.c.l.bf16 %v6009
        %v6018 = vunpack.c.l.bf16 %v6010
        %v6019 = vunpack.c.l.bf16 %v6011
        %v6020 = vld [vmem:[#allocation6 + $0x24] sm:$0x1]
        %v6021 = vperm.slane %v6020, 0
        %v6022 = vmul.f32 %v6012, %v6021
        %v6023 = vmul.f32 %v5931, %v6021
        %v6024 = vmul.f32 %v5932, %v6021
        %v6025 = vmul.f32 %v6013, %v6021
        %v6026 = vmul.f32 %v5934, %v6021
        %v6027 = vmul.f32 %v5935, %v6021
        %v6028 = vmul.f32 %v6014, %v6021
        %v6029 = vmul.f32 %v5937, %v6021
        %v6030 = vmul.f32 %v5938, %v6021
        %v6031 = vmul.f32 %v6015, %v6021
        %v6032 = vmul.f32 %v5940, %v6021
        %v6033 = vmul.f32 %v5941, %v6021
        %v6034 = vmul.f32 %v6016, %v6021
        %v6035 = vmul.f32 %v5943, %v6021
        %v6036 = vmul.f32 %v5944, %v6021
        %v6037 = vmul.f32 %v6017, %v6021
        %v6038 = vmul.f32 %v5946, %v6021
        %v6039 = vmul.f32 %v5947, %v6021
        %v6040 = vmul.f32 %v6018, %v6021
        %v6041 = vmul.f32 %v5949, %v6021
        %v6042 = vmul.f32 %v5950, %v6021
        %v6043 = vmul.f32 %v6019, %v6021
        %v6044 = vmul.f32 %v5952, %v6021
        %v6045 = vmul.f32 %v5953, %v6021
        %v6070 = vrot.slane %v6022, 1
        %v6071 = vrot.slane %v6023, 1
        %v6072 = vsel %vm1174, %v6070, %v6071
        %v6073 = vrot.slane %v6024, 1
        %v6074 = vsel %vm1174, %v6071, %v6073
        %v6075 = vrot.slane %v6025, 1
        %v6076 = vrot.slane %v6026, 1
        %v6077 = vsel %vm1174, %v6075, %v6076
        %v6078 = vrot.slane %v6027, 1
        %v6079 = vsel %vm1174, %v6076, %v6078
        %v6080 = vrot.slane %v6028, 1
        %v6081 = vrot.slane %v6029, 1
        %v6082 = vsel %vm1174, %v6080, %v6081
        %v6083 = vrot.slane %v6030, 1
        %v6084 = vsel %vm1174, %v6081, %v6083
        %v6085 = vrot.slane %v6031, 1
        %v6086 = vrot.slane %v6032, 1
        %v6087 = vsel %vm1174, %v6085, %v6086
        %v6088 = vrot.slane %v6033, 1
        %v6089 = vsel %vm1174, %v6086, %v6088
        %v6090 = vrot.slane %v6034, 1
        %v6091 = vrot.slane %v6035, 1
        %v6092 = vsel %vm1174, %v6090, %v6091
        %v6093 = vrot.slane %v6036, 1
        %v6094 = vsel %vm1174, %v6091, %v6093
        %v6095 = vrot.slane %v6037, 1
        %v6096 = vrot.slane %v6038, 1
        %v6097 = vsel %vm1174, %v6095, %v6096
        %v6098 = vrot.slane %v6039, 1
        %v6099 = vsel %vm1174, %v6096, %v6098
        %v6100 = vrot.slane %v6040, 1
        %v6101 = vrot.slane %v6041, 1
        %v6102 = vsel %vm1174, %v6100, %v6101
        %v6103 = vrot.slane %v6042, 1
        %v6104 = vsel %vm1174, %v6101, %v6103
        %v6105 = vrot.slane %v6043, 1
        %v6106 = vrot.slane %v6044, 1
        %v6107 = vsel %vm1174, %v6105, %v6106
        %v6108 = vrot.slane %v6045, 1
        %v6109 = vsel %vm1174, %v6106, %v6108
        %v6134 = vadd.f32 %v5980, %v6072
        %v6135 = vadd.f32 %v5981, %v6074
        %v6136 = vadd.f32 %v5982, %v6073
        %v6137 = vadd.f32 %v5983, %v6077
        %v6138 = vadd.f32 %v5984, %v6079
        %v6139 = vadd.f32 %v5985, %v6078
        %v6140 = vadd.f32 %v5986, %v6082
        %v6141 = vadd.f32 %v5987, %v6084
        %v6142 = vadd.f32 %v5988, %v6083
        %v6143 = vadd.f32 %v5989, %v6087
        %v6144 = vadd.f32 %v5990, %v6089
        %v6145 = vadd.f32 %v5991, %v6088
        %v6146 = vadd.f32 %v5992, %v6092
        %v6147 = vadd.f32 %v5993, %v6094
        %v6148 = vadd.f32 %v5994, %v6093
        %v6149 = vadd.f32 %v5995, %v6097
        %v6150 = vadd.f32 %v5996, %v6099
        %v6151 = vadd.f32 %v5997, %v6098
        %v6152 = vadd.f32 %v5998, %v6102
        %v6153 = vadd.f32 %v5999, %v6104
        %v6154 = vadd.f32 %v6000, %v6103
        %v6155 = vadd.f32 %v6001, %v6107
        %v6156 = vadd.f32 %v6002, %v6109
        %v6157 = vadd.f32 %v6003, %v6108
        %v6158 = vld [vmem:[%s5905 + $0x8] sm:$0xf]
        %v6159 = vld [vmem:[%s5905 + $0x18] sm:$0xf]
        %v6160 = vld [vmem:[%s5905 + $0x28] sm:$0xf]
        %v6161 = vld [vmem:[%s5905 + $0x38] sm:$0xf]
        %v6162 = vld [vmem:[%s5905 + $0x48] sm:$0xf]
        %v6163 = vld [vmem:[%s5905 + $0x58] sm:$0xf]
        %v6164 = vld [vmem:[%s5905 + $0x68] sm:$0xf]
        %v6165 = vld [vmem:[%s5905 + $0x78] sm:$0xf]
        %v6166 = vunpack.c.l.bf16 %v6158
        %v6167 = vunpack.c.l.bf16 %v6159
        %v6168 = vunpack.c.l.bf16 %v6160
        %v6169 = vunpack.c.l.bf16 %v6161
        %v6170 = vunpack.c.l.bf16 %v6162
        %v6171 = vunpack.c.l.bf16 %v6163
        %v6172 = vunpack.c.l.bf16 %v6164
        %v6173 = vunpack.c.l.bf16 %v6165
        %v6174 = vld [vmem:[#allocation6 + $0x25] sm:$0x1]
        %v6175 = vperm.slane %v6174, 0
        %v6176 = vmul.f32 %v6012, %v6175
        %v6177 = vmul.f32 %v5931, %v6175
        %v6178 = vmul.f32 %v6166, %v6175
        %v6179 = vmul.f32 %v6013, %v6175
        %v6180 = vmul.f32 %v5934, %v6175
        %v6181 = vmul.f32 %v6167, %v6175
        %v6182 = vmul.f32 %v6014, %v6175
        %v6183 = vmul.f32 %v5937, %v6175
        %v6184 = vmul.f32 %v6168, %v6175
        %v6185 = vmul.f32 %v6015, %v6175
        %v6186 = vmul.f32 %v5940, %v6175
        %v6187 = vmul.f32 %v6169, %v6175
        %v6188 = vmul.f32 %v6016, %v6175
        %v6189 = vmul.f32 %v5943, %v6175
        %v6190 = vmul.f32 %v6170, %v6175
        %v6191 = vmul.f32 %v6017, %v6175
        %v6192 = vmul.f32 %v5946, %v6175
        %v6193 = vmul.f32 %v6171, %v6175
        %v6194 = vmul.f32 %v6018, %v6175
        %v6195 = vmul.f32 %v5949, %v6175
        %v6196 = vmul.f32 %v6172, %v6175
        %v6197 = vmul.f32 %v6019, %v6175
        %v6198 = vmul.f32 %v5952, %v6175
        %v6199 = vmul.f32 %v6173, %v6175
        %v6224 = vrot.slane %v6176, 2
        %v6225 = vrot.slane %v6177, 2
        %v6226 = vsel %vm1329, %v6224, %v6225
        %v6227 = vrot.slane %v6178, 2
        %v6228 = vsel %vm1329, %v6225, %v6227
        %v6229 = vrot.slane %v6179, 2
        %v6230 = vrot.slane %v6180, 2
        %v6231 = vsel %vm1329, %v6229, %v6230
        %v6232 = vrot.slane %v6181, 2
        %v6233 = vsel %vm1329, %v6230, %v6232
        %v6234 = vrot.slane %v6182, 2
        %v6235 = vrot.slane %v6183, 2
        %v6236 = vsel %vm1329, %v6234, %v6235
        %v6237 = vrot.slane %v6184, 2
        %v6238 = vsel %vm1329, %v6235, %v6237
        %v6239 = vrot.slane %v6185, 2
        %v6240 = vrot.slane %v6186, 2
        %v6241 = vsel %vm1329, %v6239, %v6240
        %v6242 = vrot.slane %v6187, 2
        %v6243 = vsel %vm1329, %v6240, %v6242
        %v6244 = vrot.slane %v6188, 2
        %v6245 = vrot.slane %v6189, 2
        %v6246 = vsel %vm1329, %v6244, %v6245
        %v6247 = vrot.slane %v6190, 2
        %v6248 = vsel %vm1329, %v6245, %v6247
        %v6249 = vrot.slane %v6191, 2
        %v6250 = vrot.slane %v6192, 2
        %v6251 = vsel %vm1329, %v6249, %v6250
        %v6252 = vrot.slane %v6193, 2
        %v6253 = vsel %vm1329, %v6250, %v6252
        %v6254 = vrot.slane %v6194, 2
        %v6255 = vrot.slane %v6195, 2
        %v6256 = vsel %vm1329, %v6254, %v6255
        %v6257 = vrot.slane %v6196, 2
        %v6258 = vsel %vm1329, %v6255, %v6257
        %v6259 = vrot.slane %v6197, 2
        %v6260 = vrot.slane %v6198, 2
        %v6261 = vsel %vm1329, %v6259, %v6260
        %v6262 = vrot.slane %v6199, 2
        %v6263 = vsel %vm1329, %v6260, %v6262
        %v6288 = vadd.f32 %v6134, %v6226
        %v6289 = vadd.f32 %v6135, %v6228
        %v6290 = vadd.f32 %v6136, %v6227
        %v6291 = vadd.f32 %v6137, %v6231
        %v6292 = vadd.f32 %v6138, %v6233
        %v6293 = vadd.f32 %v6139, %v6232
        %v6294 = vadd.f32 %v6140, %v6236
        %v6295 = vadd.f32 %v6141, %v6238
        %v6296 = vadd.f32 %v6142, %v6237
        %v6297 = vadd.f32 %v6143, %v6241
        %v6298 = vadd.f32 %v6144, %v6243
        %v6299 = vadd.f32 %v6145, %v6242
        %v6300 = vadd.f32 %v6146, %v6246
        %v6301 = vadd.f32 %v6147, %v6248
        %v6302 = vadd.f32 %v6148, %v6247
        %v6303 = vadd.f32 %v6149, %v6251
        %v6304 = vadd.f32 %v6150, %v6253
        %v6305 = vadd.f32 %v6151, %v6252
        %v6306 = vadd.f32 %v6152, %v6256
        %v6307 = vadd.f32 %v6153, %v6258
        %v6308 = vadd.f32 %v6154, %v6257
        %v6309 = vadd.f32 %v6155, %v6261
        %v6310 = vadd.f32 %v6156, %v6263
        %v6311 = vadd.f32 %v6157, %v6262
        %v6312 = vld [vmem:[#allocation6 + $0x26] sm:$0x1]
        %v6313 = vperm.slane %v6312, 0
        %v6314 = vmul.f32 %v5931, %v6313
        %v6315 = vmul.f32 %v6166, %v6313
        %v6316 = vmul.f32 %v5934, %v6313
        %v6317 = vmul.f32 %v6167, %v6313
        %v6318 = vmul.f32 %v5937, %v6313
        %v6319 = vmul.f32 %v6168, %v6313
        %v6320 = vmul.f32 %v5940, %v6313
        %v6321 = vmul.f32 %v6169, %v6313
        %v6322 = vmul.f32 %v5943, %v6313
        %v6323 = vmul.f32 %v6170, %v6313
        %v6324 = vmul.f32 %v5946, %v6313
        %v6325 = vmul.f32 %v6171, %v6313
        %v6326 = vmul.f32 %v5949, %v6313
        %v6327 = vmul.f32 %v6172, %v6313
        %v6328 = vmul.f32 %v5952, %v6313
        %v6329 = vmul.f32 %v6173, %v6313
        %v6346 = vrot.slane %v6314, 3
        %v6347 = vrot.slane %v6315, 3
        %v6348 = vsel %vm1452, %v6346, %v6347
        %v6349 = vrot.slane %v6316, 3
        %v6350 = vrot.slane %v6317, 3
        %v6351 = vsel %vm1452, %v6349, %v6350
        %v6352 = vrot.slane %v6318, 3
        %v6353 = vrot.slane %v6319, 3
        %v6354 = vsel %vm1452, %v6352, %v6353
        %v6355 = vrot.slane %v6320, 3
        %v6356 = vrot.slane %v6321, 3
        %v6357 = vsel %vm1452, %v6355, %v6356
        %v6358 = vrot.slane %v6322, 3
        %v6359 = vrot.slane %v6323, 3
        %v6360 = vsel %vm1452, %v6358, %v6359
        %v6361 = vrot.slane %v6324, 3
        %v6362 = vrot.slane %v6325, 3
        %v6363 = vsel %vm1452, %v6361, %v6362
        %v6364 = vrot.slane %v6326, 3
        %v6365 = vrot.slane %v6327, 3
        %v6366 = vsel %vm1452, %v6364, %v6365
        %v6367 = vrot.slane %v6328, 3
        %v6368 = vrot.slane %v6329, 3
        %v6369 = vsel %vm1452, %v6367, %v6368
        %v6394 = vadd.f32 %v6288, %v6346
        %v6395 = vadd.f32 %v6289, %v6348
        %v6396 = vadd.f32 %v6290, %v6347
        %v6397 = vadd.f32 %v6291, %v6349
        %v6398 = vadd.f32 %v6292, %v6351
        %v6399 = vadd.f32 %v6293, %v6350
        %v6400 = vadd.f32 %v6294, %v6352
        %v6401 = vadd.f32 %v6295, %v6354
        %v6402 = vadd.f32 %v6296, %v6353
        %v6403 = vadd.f32 %v6297, %v6355
        %v6404 = vadd.f32 %v6298, %v6357
        %v6405 = vadd.f32 %v6299, %v6356
        %v6406 = vadd.f32 %v6300, %v6358
        %v6407 = vadd.f32 %v6301, %v6360
        %v6408 = vadd.f32 %v6302, %v6359
        %v6409 = vadd.f32 %v6303, %v6361
        %v6410 = vadd.f32 %v6304, %v6363
        %v6411 = vadd.f32 %v6305, %v6362
        %v6412 = vadd.f32 %v6306, %v6364
        %v6413 = vadd.f32 %v6307, %v6366
        %v6414 = vadd.f32 %v6308, %v6365
        %v6415 = vadd.f32 %v6309, %v6367
        %v6416 = vadd.f32 %v6310, %v6369
        %v6417 = vadd.f32 %v6311, %v6368
        %v6418 = vld [vmem:[%s5905 + $0xc] sm:$0x1]
        %v6419 = vld [vmem:[%s5905 + $0x1c] sm:$0x1]
        %v6420 = vld [vmem:[%s5905 + $0x2c] sm:$0x1]
        %v6421 = vld [vmem:[%s5905 + $0x3c] sm:$0x1]
        %v6422 = vld [vmem:[%s5905 + $0x4c] sm:$0x1]
        %v6423 = vld [vmem:[%s5905 + $0x5c] sm:$0x1]
        %v6424 = vld [vmem:[%s5905 + $0x6c] sm:$0x1]
        %v6425 = vld [vmem:[%s5905 + $0x7c] sm:$0x1]
        %v6426 = vunpack.c.l.bf16 %v6418
        %v6427 = vunpack.c.l.bf16 %v6419
        %v6428 = vunpack.c.l.bf16 %v6420
        %v6429 = vunpack.c.l.bf16 %v6421
        %v6430 = vunpack.c.l.bf16 %v6422
        %v6431 = vunpack.c.l.bf16 %v6423
        %v6432 = vunpack.c.l.bf16 %v6424
        %v6433 = vunpack.c.l.bf16 %v6425
        %v6434 = vld [vmem:[#allocation6 + $0x27] sm:$0x1]
        %v6435 = vperm.slane %v6434, 0
        %v6436 = vmul.f32 %v5931, %v6435
        %v6437 = vmul.f32 %v6166, %v6435
        %v6438 = vmul.f32 %v6426, %v6435
        %v6439 = vmul.f32 %v5934, %v6435
        %v6440 = vmul.f32 %v6167, %v6435
        %v6441 = vmul.f32 %v6427, %v6435
        %v6442 = vmul.f32 %v5937, %v6435
        %v6443 = vmul.f32 %v6168, %v6435
        %v6444 = vmul.f32 %v6428, %v6435
        %v6445 = vmul.f32 %v5940, %v6435
        %v6446 = vmul.f32 %v6169, %v6435
        %v6447 = vmul.f32 %v6429, %v6435
        %v6448 = vmul.f32 %v5943, %v6435
        %v6449 = vmul.f32 %v6170, %v6435
        %v6450 = vmul.f32 %v6430, %v6435
        %v6451 = vmul.f32 %v5946, %v6435
        %v6452 = vmul.f32 %v6171, %v6435
        %v6453 = vmul.f32 %v6431, %v6435
        %v6454 = vmul.f32 %v5949, %v6435
        %v6455 = vmul.f32 %v6172, %v6435
        %v6456 = vmul.f32 %v6432, %v6435
        %v6457 = vmul.f32 %v5952, %v6435
        %v6458 = vmul.f32 %v6173, %v6435
        %v6459 = vmul.f32 %v6433, %v6435
        %v6484 = vrot.slane %v6436, 4
        %v6485 = vrot.slane %v6437, 4
        %v6486 = vsel %vm1591, %v6484, %v6485
        %v6487 = vrot.slane %v6438, 4
        %v6488 = vsel %vm1591, %v6485, %v6487
        %v6489 = vrot.slane %v6439, 4
        %v6490 = vrot.slane %v6440, 4
        %v6491 = vsel %vm1591, %v6489, %v6490
        %v6492 = vrot.slane %v6441, 4
        %v6493 = vsel %vm1591, %v6490, %v6492
        %v6494 = vrot.slane %v6442, 4
        %v6495 = vrot.slane %v6443, 4
        %v6496 = vsel %vm1591, %v6494, %v6495
        %v6497 = vrot.slane %v6444, 4
        %v6498 = vsel %vm1591, %v6495, %v6497
        %v6499 = vrot.slane %v6445, 4
        %v6500 = vrot.slane %v6446, 4
        %v6501 = vsel %vm1591, %v6499, %v6500
        %v6502 = vrot.slane %v6447, 4
        %v6503 = vsel %vm1591, %v6500, %v6502
        %v6504 = vrot.slane %v6448, 4
        %v6505 = vrot.slane %v6449, 4
        %v6506 = vsel %vm1591, %v6504, %v6505
        %v6507 = vrot.slane %v6450, 4
        %v6508 = vsel %vm1591, %v6505, %v6507
        %v6509 = vrot.slane %v6451, 4
        %v6510 = vrot.slane %v6452, 4
        %v6511 = vsel %vm1591, %v6509, %v6510
        %v6512 = vrot.slane %v6453, 4
        %v6513 = vsel %vm1591, %v6510, %v6512
        %v6514 = vrot.slane %v6454, 4
        %v6515 = vrot.slane %v6455, 4
        %v6516 = vsel %vm1591, %v6514, %v6515
        %v6517 = vrot.slane %v6456, 4
        %v6518 = vsel %vm1591, %v6515, %v6517
        %v6519 = vrot.slane %v6457, 4
        %v6520 = vrot.slane %v6458, 4
        %v6521 = vsel %vm1591, %v6519, %v6520
        %v6522 = vrot.slane %v6459, 4
        %v6523 = vsel %vm1591, %v6520, %v6522
        %v6548 = vadd.f32 %v6394, %v6484
        %v6549 = vadd.f32 %v6395, %v6486
        %v6550 = vadd.f32 %v6396, %v6488
        %v6551 = vadd.f32 %v6397, %v6489
        %v6552 = vadd.f32 %v6398, %v6491
        %v6553 = vadd.f32 %v6399, %v6493
        %v6554 = vadd.f32 %v6400, %v6494
        %v6555 = vadd.f32 %v6401, %v6496
        %v6556 = vadd.f32 %v6402, %v6498
        %v6557 = vadd.f32 %v6403, %v6499
        %v6558 = vadd.f32 %v6404, %v6501
        %v6559 = vadd.f32 %v6405, %v6503
        %v6560 = vadd.f32 %v6406, %v6504
        %v6561 = vadd.f32 %v6407, %v6506
        %v6562 = vadd.f32 %v6408, %v6508
        %v6563 = vadd.f32 %v6409, %v6509
        %v6564 = vadd.f32 %v6410, %v6511
        %v6565 = vadd.f32 %v6411, %v6513
        %v6566 = vadd.f32 %v6412, %v6514
        %v6567 = vadd.f32 %v6413, %v6516
        %v6568 = vadd.f32 %v6414, %v6518
        %v6569 = vadd.f32 %v6415, %v6519
        %v6570 = vadd.f32 %v6416, %v6521
        %v6571 = vadd.f32 %v6417, %v6523
        %v6572 = vld [vmem:[%s5905 + $0x4] sm:$0xe]
        %v6573 = vld [vmem:[%s5905 + $0x14] sm:$0xe]
        %v6574 = vld [vmem:[%s5905 + $0x24] sm:$0xe]
        %v6575 = vld [vmem:[%s5905 + $0x34] sm:$0xe]
        %v6576 = vld [vmem:[%s5905 + $0x44] sm:$0xe]
        %v6577 = vld [vmem:[%s5905 + $0x54] sm:$0xe]
        %v6578 = vld [vmem:[%s5905 + $0x64] sm:$0xe]
        %v6579 = vld [vmem:[%s5905 + $0x74] sm:$0xe]
        %v6580 = vunpack.c.l.bf16 %v6572
        %v6581 = vunpack.c.l.bf16 %v6573
        %v6582 = vunpack.c.l.bf16 %v6574
        %v6583 = vunpack.c.l.bf16 %v6575
        %v6584 = vunpack.c.l.bf16 %v6576
        %v6585 = vunpack.c.l.bf16 %v6577
        %v6586 = vunpack.c.l.bf16 %v6578
        %v6587 = vunpack.c.l.bf16 %v6579
        %v6588 = vld [vmem:[#allocation6 + $0x28] sm:$0x1]
        %v6589 = vperm.slane %v6588, 0
        %v6590 = vmul.f32 %v6580, %v6589
        %v6591 = vmul.f32 %v6166, %v6589
        %v6592 = vmul.f32 %v6426, %v6589
        %v6593 = vmul.f32 %v6581, %v6589
        %v6594 = vmul.f32 %v6167, %v6589
        %v6595 = vmul.f32 %v6427, %v6589
        %v6596 = vmul.f32 %v6582, %v6589
        %v6597 = vmul.f32 %v6168, %v6589
        %v6598 = vmul.f32 %v6428, %v6589
        %v6599 = vmul.f32 %v6583, %v6589
        %v6600 = vmul.f32 %v6169, %v6589
        %v6601 = vmul.f32 %v6429, %v6589
        %v6602 = vmul.f32 %v6584, %v6589
        %v6603 = vmul.f32 %v6170, %v6589
        %v6604 = vmul.f32 %v6430, %v6589
        %v6605 = vmul.f32 %v6585, %v6589
        %v6606 = vmul.f32 %v6171, %v6589
        %v6607 = vmul.f32 %v6431, %v6589
        %v6608 = vmul.f32 %v6586, %v6589
        %v6609 = vmul.f32 %v6172, %v6589
        %v6610 = vmul.f32 %v6432, %v6589
        %v6611 = vmul.f32 %v6587, %v6589
        %v6612 = vmul.f32 %v6173, %v6589
        %v6613 = vmul.f32 %v6433, %v6589
        %v6638 = vrot.slane %v6590, 5
        %v6639 = vrot.slane %v6591, 5
        %v6640 = vsel %vm1746, %v6638, %v6639
        %v6641 = vrot.slane %v6592, 5
        %v6642 = vsel %vm1746, %v6639, %v6641
        %v6643 = vrot.slane %v6593, 5
        %v6644 = vrot.slane %v6594, 5
        %v6645 = vsel %vm1746, %v6643, %v6644
        %v6646 = vrot.slane %v6595, 5
        %v6647 = vsel %vm1746, %v6644, %v6646
        %v6648 = vrot.slane %v6596, 5
        %v6649 = vrot.slane %v6597, 5
        %v6650 = vsel %vm1746, %v6648, %v6649
        %v6651 = vrot.slane %v6598, 5
        %v6652 = vsel %vm1746, %v6649, %v6651
        %v6653 = vrot.slane %v6599, 5
        %v6654 = vrot.slane %v6600, 5
        %v6655 = vsel %vm1746, %v6653, %v6654
        %v6656 = vrot.slane %v6601, 5
        %v6657 = vsel %vm1746, %v6654, %v6656
        %v6658 = vrot.slane %v6602, 5
        %v6659 = vrot.slane %v6603, 5
        %v6660 = vsel %vm1746, %v6658, %v6659
        %v6661 = vrot.slane %v6604, 5
        %v6662 = vsel %vm1746, %v6659, %v6661
        %v6663 = vrot.slane %v6605, 5
        %v6664 = vrot.slane %v6606, 5
        %v6665 = vsel %vm1746, %v6663, %v6664
        %v6666 = vrot.slane %v6607, 5
        %v6667 = vsel %vm1746, %v6664, %v6666
        %v6668 = vrot.slane %v6608, 5
        %v6669 = vrot.slane %v6609, 5
        %v6670 = vsel %vm1746, %v6668, %v6669
        %v6671 = vrot.slane %v6610, 5
        %v6672 = vsel %vm1746, %v6669, %v6671
        %v6673 = vrot.slane %v6611, 5
        %v6674 = vrot.slane %v6612, 5
        %v6675 = vsel %vm1746, %v6673, %v6674
        %v6676 = vrot.slane %v6613, 5
        %v6677 = vsel %vm1746, %v6674, %v6676
        %v6702 = vadd.f32 %v6548, %v6638
        %v6703 = vadd.f32 %v6549, %v6640
        %v6704 = vadd.f32 %v6550, %v6642
        %v6705 = vadd.f32 %v6551, %v6643
        %v6706 = vadd.f32 %v6552, %v6645
        %v6707 = vadd.f32 %v6553, %v6647
        %v6708 = vadd.f32 %v6554, %v6648
        %v6709 = vadd.f32 %v6555, %v6650
        %v6710 = vadd.f32 %v6556, %v6652
        %v6711 = vadd.f32 %v6557, %v6653
        %v6712 = vadd.f32 %v6558, %v6655
        %v6713 = vadd.f32 %v6559, %v6657
        %v6714 = vadd.f32 %v6560, %v6658
        %v6715 = vadd.f32 %v6561, %v6660
        %v6716 = vadd.f32 %v6562, %v6662
        %v6717 = vadd.f32 %v6563, %v6663
        %v6718 = vadd.f32 %v6564, %v6665
        %v6719 = vadd.f32 %v6565, %v6667
        %v6720 = vadd.f32 %v6566, %v6668
        %v6721 = vadd.f32 %v6567, %v6670
        %v6722 = vadd.f32 %v6568, %v6672
        %v6723 = vadd.f32 %v6569, %v6673
        %v6724 = vadd.f32 %v6570, %v6675
        %v6725 = vadd.f32 %v6571, %v6677
        %v6726 = vld [vmem:[%s5905 + $0xc] sm:$0x3]
        %v6727 = vld [vmem:[%s5905 + $0x1c] sm:$0x3]
        %v6728 = vld [vmem:[%s5905 + $0x2c] sm:$0x3]
        %v6729 = vld [vmem:[%s5905 + $0x3c] sm:$0x3]
        %v6730 = vld [vmem:[%s5905 + $0x4c] sm:$0x3]
        %v6731 = vld [vmem:[%s5905 + $0x5c] sm:$0x3]
        %v6732 = vld [vmem:[%s5905 + $0x6c] sm:$0x3]
        %v6733 = vld [vmem:[%s5905 + $0x7c] sm:$0x3]
        %v6734 = vunpack.c.l.bf16 %v6726
        %v6735 = vunpack.c.l.bf16 %v6727
        %v6736 = vunpack.c.l.bf16 %v6728
        %v6737 = vunpack.c.l.bf16 %v6729
        %v6738 = vunpack.c.l.bf16 %v6730
        %v6739 = vunpack.c.l.bf16 %v6731
        %v6740 = vunpack.c.l.bf16 %v6732
        %v6741 = vunpack.c.l.bf16 %v6733
        %v6742 = vld [vmem:[#allocation6 + $0x29] sm:$0x1]
        %v6743 = vperm.slane %v6742, 0
        %v6744 = vmul.f32 %v6580, %v6743
        %v6745 = vmul.f32 %v6166, %v6743
        %v6746 = vmul.f32 %v6734, %v6743
        %v6747 = vmul.f32 %v6581, %v6743
        %v6748 = vmul.f32 %v6167, %v6743
        %v6749 = vmul.f32 %v6735, %v6743
        %v6750 = vmul.f32 %v6582, %v6743
        %v6751 = vmul.f32 %v6168, %v6743
        %v6752 = vmul.f32 %v6736, %v6743
        %v6753 = vmul.f32 %v6583, %v6743
        %v6754 = vmul.f32 %v6169, %v6743
        %v6755 = vmul.f32 %v6737, %v6743
        %v6756 = vmul.f32 %v6584, %v6743
        %v6757 = vmul.f32 %v6170, %v6743
        %v6758 = vmul.f32 %v6738, %v6743
        %v6759 = vmul.f32 %v6585, %v6743
        %v6760 = vmul.f32 %v6171, %v6743
        %v6761 = vmul.f32 %v6739, %v6743
        %v6762 = vmul.f32 %v6586, %v6743
        %v6763 = vmul.f32 %v6172, %v6743
        %v6764 = vmul.f32 %v6740, %v6743
        %v6765 = vmul.f32 %v6587, %v6743
        %v6766 = vmul.f32 %v6173, %v6743
        %v6767 = vmul.f32 %v6741, %v6743
        %v6792 = vrot.slane %v6744, 6
        %v6793 = vrot.slane %v6745, 6
        %v6794 = vsel %vm1901, %v6792, %v6793
        %v6795 = vrot.slane %v6746, 6
        %v6796 = vsel %vm1901, %v6793, %v6795
        %v6797 = vrot.slane %v6747, 6
        %v6798 = vrot.slane %v6748, 6
        %v6799 = vsel %vm1901, %v6797, %v6798
        %v6800 = vrot.slane %v6749, 6
        %v6801 = vsel %vm1901, %v6798, %v6800
        %v6802 = vrot.slane %v6750, 6
        %v6803 = vrot.slane %v6751, 6
        %v6804 = vsel %vm1901, %v6802, %v6803
        %v6805 = vrot.slane %v6752, 6
        %v6806 = vsel %vm1901, %v6803, %v6805
        %v6807 = vrot.slane %v6753, 6
        %v6808 = vrot.slane %v6754, 6
        %v6809 = vsel %vm1901, %v6807, %v6808
        %v6810 = vrot.slane %v6755, 6
        %v6811 = vsel %vm1901, %v6808, %v6810
        %v6812 = vrot.slane %v6756, 6
        %v6813 = vrot.slane %v6757, 6
        %v6814 = vsel %vm1901, %v6812, %v6813
        %v6815 = vrot.slane %v6758, 6
        %v6816 = vsel %vm1901, %v6813, %v6815
        %v6817 = vrot.slane %v6759, 6
        %v6818 = vrot.slane %v6760, 6
        %v6819 = vsel %vm1901, %v6817, %v6818
        %v6820 = vrot.slane %v6761, 6
        %v6821 = vsel %vm1901, %v6818, %v6820
        %v6822 = vrot.slane %v6762, 6
        %v6823 = vrot.slane %v6763, 6
        %v6824 = vsel %vm1901, %v6822, %v6823
        %v6825 = vrot.slane %v6764, 6
        %v6826 = vsel %vm1901, %v6823, %v6825
        %v6827 = vrot.slane %v6765, 6
        %v6828 = vrot.slane %v6766, 6
        %v6829 = vsel %vm1901, %v6827, %v6828
        %v6830 = vrot.slane %v6767, 6
        %v6831 = vsel %vm1901, %v6828, %v6830
        %v6856 = vadd.f32 %v6702, %v6792
        %v6857 = vadd.f32 %v6703, %v6794
        %v6858 = vadd.f32 %v6704, %v6796
        %v6859 = vadd.f32 %v6705, %v6797
        %v6860 = vadd.f32 %v6706, %v6799
        %v6861 = vadd.f32 %v6707, %v6801
        %v6862 = vadd.f32 %v6708, %v6802
        %v6863 = vadd.f32 %v6709, %v6804
        %v6864 = vadd.f32 %v6710, %v6806
        %v6865 = vadd.f32 %v6711, %v6807
        %v6866 = vadd.f32 %v6712, %v6809
        %v6867 = vadd.f32 %v6713, %v6811
        %v6868 = vadd.f32 %v6714, %v6812
        %v6869 = vadd.f32 %v6715, %v6814
        %v6870 = vadd.f32 %v6716, %v6816
        %v6871 = vadd.f32 %v6717, %v6817
        %v6872 = vadd.f32 %v6718, %v6819
        %v6873 = vadd.f32 %v6719, %v6821
        %v6874 = vadd.f32 %v6720, %v6822
        %v6875 = vadd.f32 %v6721, %v6824
        %v6876 = vadd.f32 %v6722, %v6826
        %v6877 = vadd.f32 %v6723, %v6827
        %v6878 = vadd.f32 %v6724, %v6829
        %v6879 = vadd.f32 %v6725, %v6831
        %s6880 = sadd.s32 %s1006, 6
        %s6881 = smul.u32 %s6880, 4
        %s6882 = smul.addr %s6881, 4
        %s6883 = scalar_lea.vmem [#allocation2], %s6882
        %v6884 = vld [vmem:[%s6883] sm:$0xc]
        %v6885 = vld [vmem:[%s6883 + $0x4] sm:$0xf]
        %v6886 = vld [vmem:[%s6883 + $0x8] sm:$0x7]
        %v6887 = vld [vmem:[%s6883 + $0x10] sm:$0xc]
        %v6888 = vld [vmem:[%s6883 + $0x14] sm:$0xf]
        %v6889 = vld [vmem:[%s6883 + $0x18] sm:$0x7]
        %v6890 = vld [vmem:[%s6883 + $0x20] sm:$0xc]
        %v6891 = vld [vmem:[%s6883 + $0x24] sm:$0xf]
        %v6892 = vld [vmem:[%s6883 + $0x28] sm:$0x7]
        %v6893 = vld [vmem:[%s6883 + $0x30] sm:$0xc]
        %v6894 = vld [vmem:[%s6883 + $0x34] sm:$0xf]
        %v6895 = vld [vmem:[%s6883 + $0x38] sm:$0x7]
        %v6896 = vld [vmem:[%s6883 + $0x40] sm:$0xc]
        %v6897 = vld [vmem:[%s6883 + $0x44] sm:$0xf]
        %v6898 = vld [vmem:[%s6883 + $0x48] sm:$0x7]
        %v6899 = vld [vmem:[%s6883 + $0x50] sm:$0xc]
        %v6900 = vld [vmem:[%s6883 + $0x54] sm:$0xf]
        %v6901 = vld [vmem:[%s6883 + $0x58] sm:$0x7]
        %v6902 = vld [vmem:[%s6883 + $0x60] sm:$0xc]
        %v6903 = vld [vmem:[%s6883 + $0x64] sm:$0xf]
        %v6904 = vld [vmem:[%s6883 + $0x68] sm:$0x7]
        %v6905 = vld [vmem:[%s6883 + $0x70] sm:$0xc]
        %v6906 = vld [vmem:[%s6883 + $0x74] sm:$0xf]
        %v6907 = vld [vmem:[%s6883 + $0x78] sm:$0x7]
        %v6908 = vunpack.c.l.bf16 %v6884
        %v6909 = vunpack.c.l.bf16 %v6885
        %v6910 = vunpack.c.l.bf16 %v6886
        %v6911 = vunpack.c.l.bf16 %v6887
        %v6912 = vunpack.c.l.bf16 %v6888
        %v6913 = vunpack.c.l.bf16 %v6889
        %v6914 = vunpack.c.l.bf16 %v6890
        %v6915 = vunpack.c.l.bf16 %v6891
        %v6916 = vunpack.c.l.bf16 %v6892
        %v6917 = vunpack.c.l.bf16 %v6893
        %v6918 = vunpack.c.l.bf16 %v6894
        %v6919 = vunpack.c.l.bf16 %v6895
        %v6920 = vunpack.c.l.bf16 %v6896
        %v6921 = vunpack.c.l.bf16 %v6897
        %v6922 = vunpack.c.l.bf16 %v6898
        %v6923 = vunpack.c.l.bf16 %v6899
        %v6924 = vunpack.c.l.bf16 %v6900
        %v6925 = vunpack.c.l.bf16 %v6901
        %v6926 = vunpack.c.l.bf16 %v6902
        %v6927 = vunpack.c.l.bf16 %v6903
        %v6928 = vunpack.c.l.bf16 %v6904
        %v6929 = vunpack.c.l.bf16 %v6905
        %v6930 = vunpack.c.l.bf16 %v6906
        %v6931 = vunpack.c.l.bf16 %v6907
        %v6932 = vld [vmem:[#allocation6 + $0x2a] sm:$0x1]
        %v6933 = vperm.slane %v6932, 0
        %v6934 = vmul.f32 %v6908, %v6933
        %v6935 = vmul.f32 %v6909, %v6933
        %v6936 = vmul.f32 %v6910, %v6933
        %v6937 = vmul.f32 %v6911, %v6933
        %v6938 = vmul.f32 %v6912, %v6933
        %v6939 = vmul.f32 %v6913, %v6933
        %v6940 = vmul.f32 %v6914, %v6933
        %v6941 = vmul.f32 %v6915, %v6933
        %v6942 = vmul.f32 %v6916, %v6933
        %v6943 = vmul.f32 %v6917, %v6933
        %v6944 = vmul.f32 %v6918, %v6933
        %v6945 = vmul.f32 %v6919, %v6933
        %v6946 = vmul.f32 %v6920, %v6933
        %v6947 = vmul.f32 %v6921, %v6933
        %v6948 = vmul.f32 %v6922, %v6933
        %v6949 = vmul.f32 %v6923, %v6933
        %v6950 = vmul.f32 %v6924, %v6933
        %v6951 = vmul.f32 %v6925, %v6933
        %v6952 = vmul.f32 %v6926, %v6933
        %v6953 = vmul.f32 %v6927, %v6933
        %v6954 = vmul.f32 %v6928, %v6933
        %v6955 = vmul.f32 %v6929, %v6933
        %v6956 = vmul.f32 %v6930, %v6933
        %v6957 = vmul.f32 %v6931, %v6933
        %v6958 = vadd.f32 %v6856, %v6934
        %v6959 = vadd.f32 %v6857, %v6935
        %v6960 = vadd.f32 %v6858, %v6936
        %v6961 = vadd.f32 %v6859, %v6937
        %v6962 = vadd.f32 %v6860, %v6938
        %v6963 = vadd.f32 %v6861, %v6939
        %v6964 = vadd.f32 %v6862, %v6940
        %v6965 = vadd.f32 %v6863, %v6941
        %v6966 = vadd.f32 %v6864, %v6942
        %v6967 = vadd.f32 %v6865, %v6943
        %v6968 = vadd.f32 %v6866, %v6944
        %v6969 = vadd.f32 %v6867, %v6945
        %v6970 = vadd.f32 %v6868, %v6946
        %v6971 = vadd.f32 %v6869, %v6947
        %v6972 = vadd.f32 %v6870, %v6948
        %v6973 = vadd.f32 %v6871, %v6949
        %v6974 = vadd.f32 %v6872, %v6950
        %v6975 = vadd.f32 %v6873, %v6951
        %v6976 = vadd.f32 %v6874, %v6952
        %v6977 = vadd.f32 %v6875, %v6953
        %v6978 = vadd.f32 %v6876, %v6954
        %v6979 = vadd.f32 %v6877, %v6955
        %v6980 = vadd.f32 %v6878, %v6956
        %v6981 = vadd.f32 %v6879, %v6957
        %v6982 = vld [vmem:[%s6883] sm:$0x8]
        %v6983 = vld [vmem:[%s6883 + $0x10] sm:$0x8]
        %v6984 = vld [vmem:[%s6883 + $0x20] sm:$0x8]
        %v6985 = vld [vmem:[%s6883 + $0x30] sm:$0x8]
        %v6986 = vld [vmem:[%s6883 + $0x40] sm:$0x8]
        %v6987 = vld [vmem:[%s6883 + $0x50] sm:$0x8]
        %v6988 = vld [vmem:[%s6883 + $0x60] sm:$0x8]
        %v6989 = vld [vmem:[%s6883 + $0x70] sm:$0x8]
        %v6990 = vunpack.c.l.bf16 %v6982
        %v6991 = vunpack.c.l.bf16 %v6983
        %v6992 = vunpack.c.l.bf16 %v6984
        %v6993 = vunpack.c.l.bf16 %v6985
        %v6994 = vunpack.c.l.bf16 %v6986
        %v6995 = vunpack.c.l.bf16 %v6987
        %v6996 = vunpack.c.l.bf16 %v6988
        %v6997 = vunpack.c.l.bf16 %v6989
        %v6998 = vld [vmem:[#allocation6 + $0x2b] sm:$0x1]
        %v6999 = vperm.slane %v6998, 0
        %v7000 = vmul.f32 %v6990, %v6999
        %v7001 = vmul.f32 %v6909, %v6999
        %v7002 = vmul.f32 %v6910, %v6999
        %v7003 = vmul.f32 %v6991, %v6999
        %v7004 = vmul.f32 %v6912, %v6999
        %v7005 = vmul.f32 %v6913, %v6999
        %v7006 = vmul.f32 %v6992, %v6999
        %v7007 = vmul.f32 %v6915, %v6999
        %v7008 = vmul.f32 %v6916, %v6999
        %v7009 = vmul.f32 %v6993, %v6999
        %v7010 = vmul.f32 %v6918, %v6999
        %v7011 = vmul.f32 %v6919, %v6999
        %v7012 = vmul.f32 %v6994, %v6999
        %v7013 = vmul.f32 %v6921, %v6999
        %v7014 = vmul.f32 %v6922, %v6999
        %v7015 = vmul.f32 %v6995, %v6999
        %v7016 = vmul.f32 %v6924, %v6999
        %v7017 = vmul.f32 %v6925, %v6999
        %v7018 = vmul.f32 %v6996, %v6999
        %v7019 = vmul.f32 %v6927, %v6999
        %v7020 = vmul.f32 %v6928, %v6999
        %v7021 = vmul.f32 %v6997, %v6999
        %v7022 = vmul.f32 %v6930, %v6999
        %v7023 = vmul.f32 %v6931, %v6999
        %v7048 = vrot.slane %v7000, 1
        %v7049 = vrot.slane %v7001, 1
        %v7050 = vsel %vm1174, %v7048, %v7049
        %v7051 = vrot.slane %v7002, 1
        %v7052 = vsel %vm1174, %v7049, %v7051
        %v7053 = vrot.slane %v7003, 1
        %v7054 = vrot.slane %v7004, 1
        %v7055 = vsel %vm1174, %v7053, %v7054
        %v7056 = vrot.slane %v7005, 1
        %v7057 = vsel %vm1174, %v7054, %v7056
        %v7058 = vrot.slane %v7006, 1
        %v7059 = vrot.slane %v7007, 1
        %v7060 = vsel %vm1174, %v7058, %v7059
        %v7061 = vrot.slane %v7008, 1
        %v7062 = vsel %vm1174, %v7059, %v7061
        %v7063 = vrot.slane %v7009, 1
        %v7064 = vrot.slane %v7010, 1
        %v7065 = vsel %vm1174, %v7063, %v7064
        %v7066 = vrot.slane %v7011, 1
        %v7067 = vsel %vm1174, %v7064, %v7066
        %v7068 = vrot.slane %v7012, 1
        %v7069 = vrot.slane %v7013, 1
        %v7070 = vsel %vm1174, %v7068, %v7069
        %v7071 = vrot.slane %v7014, 1
        %v7072 = vsel %vm1174, %v7069, %v7071
        %v7073 = vrot.slane %v7015, 1
        %v7074 = vrot.slane %v7016, 1
        %v7075 = vsel %vm1174, %v7073, %v7074
        %v7076 = vrot.slane %v7017, 1
        %v7077 = vsel %vm1174, %v7074, %v7076
        %v7078 = vrot.slane %v7018, 1
        %v7079 = vrot.slane %v7019, 1
        %v7080 = vsel %vm1174, %v7078, %v7079
        %v7081 = vrot.slane %v7020, 1
        %v7082 = vsel %vm1174, %v7079, %v7081
        %v7083 = vrot.slane %v7021, 1
        %v7084 = vrot.slane %v7022, 1
        %v7085 = vsel %vm1174, %v7083, %v7084
        %v7086 = vrot.slane %v7023, 1
        %v7087 = vsel %vm1174, %v7084, %v7086
        %v7112 = vadd.f32 %v6958, %v7050
        %v7113 = vadd.f32 %v6959, %v7052
        %v7114 = vadd.f32 %v6960, %v7051
        %v7115 = vadd.f32 %v6961, %v7055
        %v7116 = vadd.f32 %v6962, %v7057
        %v7117 = vadd.f32 %v6963, %v7056
        %v7118 = vadd.f32 %v6964, %v7060
        %v7119 = vadd.f32 %v6965, %v7062
        %v7120 = vadd.f32 %v6966, %v7061
        %v7121 = vadd.f32 %v6967, %v7065
        %v7122 = vadd.f32 %v6968, %v7067
        %v7123 = vadd.f32 %v6969, %v7066
        %v7124 = vadd.f32 %v6970, %v7070
        %v7125 = vadd.f32 %v6971, %v7072
        %v7126 = vadd.f32 %v6972, %v7071
        %v7127 = vadd.f32 %v6973, %v7075
        %v7128 = vadd.f32 %v6974, %v7077
        %v7129 = vadd.f32 %v6975, %v7076
        %v7130 = vadd.f32 %v6976, %v7080
        %v7131 = vadd.f32 %v6977, %v7082
        %v7132 = vadd.f32 %v6978, %v7081
        %v7133 = vadd.f32 %v6979, %v7085
        %v7134 = vadd.f32 %v6980, %v7087
        %v7135 = vadd.f32 %v6981, %v7086
        %v7136 = vld [vmem:[%s6883 + $0x8] sm:$0xf]
        %v7137 = vld [vmem:[%s6883 + $0x18] sm:$0xf]
        %v7138 = vld [vmem:[%s6883 + $0x28] sm:$0xf]
        %v7139 = vld [vmem:[%s6883 + $0x38] sm:$0xf]
        %v7140 = vld [vmem:[%s6883 + $0x48] sm:$0xf]
        %v7141 = vld [vmem:[%s6883 + $0x58] sm:$0xf]
        %v7142 = vld [vmem:[%s6883 + $0x68] sm:$0xf]
        %v7143 = vld [vmem:[%s6883 + $0x78] sm:$0xf]
        %v7144 = vunpack.c.l.bf16 %v7136
        %v7145 = vunpack.c.l.bf16 %v7137
        %v7146 = vunpack.c.l.bf16 %v7138
        %v7147 = vunpack.c.l.bf16 %v7139
        %v7148 = vunpack.c.l.bf16 %v7140
        %v7149 = vunpack.c.l.bf16 %v7141
        %v7150 = vunpack.c.l.bf16 %v7142
        %v7151 = vunpack.c.l.bf16 %v7143
        %v7152 = vld [vmem:[#allocation6 + $0x2c] sm:$0x1]
        %v7153 = vperm.slane %v7152, 0
        %v7154 = vmul.f32 %v6990, %v7153
        %v7155 = vmul.f32 %v6909, %v7153
        %v7156 = vmul.f32 %v7144, %v7153
        %v7157 = vmul.f32 %v6991, %v7153
        %v7158 = vmul.f32 %v6912, %v7153
        %v7159 = vmul.f32 %v7145, %v7153
        %v7160 = vmul.f32 %v6992, %v7153
        %v7161 = vmul.f32 %v6915, %v7153
        %v7162 = vmul.f32 %v7146, %v7153
        %v7163 = vmul.f32 %v6993, %v7153
        %v7164 = vmul.f32 %v6918, %v7153
        %v7165 = vmul.f32 %v7147, %v7153
        %v7166 = vmul.f32 %v6994, %v7153
        %v7167 = vmul.f32 %v6921, %v7153
        %v7168 = vmul.f32 %v7148, %v7153
        %v7169 = vmul.f32 %v6995, %v7153
        %v7170 = vmul.f32 %v6924, %v7153
        %v7171 = vmul.f32 %v7149, %v7153
        %v7172 = vmul.f32 %v6996, %v7153
        %v7173 = vmul.f32 %v6927, %v7153
        %v7174 = vmul.f32 %v7150, %v7153
        %v7175 = vmul.f32 %v6997, %v7153
        %v7176 = vmul.f32 %v6930, %v7153
        %v7177 = vmul.f32 %v7151, %v7153
        %v7202 = vrot.slane %v7154, 2
        %v7203 = vrot.slane %v7155, 2
        %v7204 = vsel %vm1329, %v7202, %v7203
        %v7205 = vrot.slane %v7156, 2
        %v7206 = vsel %vm1329, %v7203, %v7205
        %v7207 = vrot.slane %v7157, 2
        %v7208 = vrot.slane %v7158, 2
        %v7209 = vsel %vm1329, %v7207, %v7208
        %v7210 = vrot.slane %v7159, 2
        %v7211 = vsel %vm1329, %v7208, %v7210
        %v7212 = vrot.slane %v7160, 2
        %v7213 = vrot.slane %v7161, 2
        %v7214 = vsel %vm1329, %v7212, %v7213
        %v7215 = vrot.slane %v7162, 2
        %v7216 = vsel %vm1329, %v7213, %v7215
        %v7217 = vrot.slane %v7163, 2
        %v7218 = vrot.slane %v7164, 2
        %v7219 = vsel %vm1329, %v7217, %v7218
        %v7220 = vrot.slane %v7165, 2
        %v7221 = vsel %vm1329, %v7218, %v7220
        %v7222 = vrot.slane %v7166, 2
        %v7223 = vrot.slane %v7167, 2
        %v7224 = vsel %vm1329, %v7222, %v7223
        %v7225 = vrot.slane %v7168, 2
        %v7226 = vsel %vm1329, %v7223, %v7225
        %v7227 = vrot.slane %v7169, 2
        %v7228 = vrot.slane %v7170, 2
        %v7229 = vsel %vm1329, %v7227, %v7228
        %v7230 = vrot.slane %v7171, 2
        %v7231 = vsel %vm1329, %v7228, %v7230
        %v7232 = vrot.slane %v7172, 2
        %v7233 = vrot.slane %v7173, 2
        %v7234 = vsel %vm1329, %v7232, %v7233
        %v7235 = vrot.slane %v7174, 2
        %v7236 = vsel %vm1329, %v7233, %v7235
        %v7237 = vrot.slane %v7175, 2
        %v7238 = vrot.slane %v7176, 2
        %v7239 = vsel %vm1329, %v7237, %v7238
        %v7240 = vrot.slane %v7177, 2
        %v7241 = vsel %vm1329, %v7238, %v7240
        %v7266 = vadd.f32 %v7112, %v7204
        %v7267 = vadd.f32 %v7113, %v7206
        %v7268 = vadd.f32 %v7114, %v7205
        %v7269 = vadd.f32 %v7115, %v7209
        %v7270 = vadd.f32 %v7116, %v7211
        %v7271 = vadd.f32 %v7117, %v7210
        %v7272 = vadd.f32 %v7118, %v7214
        %v7273 = vadd.f32 %v7119, %v7216
        %v7274 = vadd.f32 %v7120, %v7215
        %v7275 = vadd.f32 %v7121, %v7219
        %v7276 = vadd.f32 %v7122, %v7221
        %v7277 = vadd.f32 %v7123, %v7220
        %v7278 = vadd.f32 %v7124, %v7224
        %v7279 = vadd.f32 %v7125, %v7226
        %v7280 = vadd.f32 %v7126, %v7225
        %v7281 = vadd.f32 %v7127, %v7229
        %v7282 = vadd.f32 %v7128, %v7231
        %v7283 = vadd.f32 %v7129, %v7230
        %v7284 = vadd.f32 %v7130, %v7234
        %v7285 = vadd.f32 %v7131, %v7236
        %v7286 = vadd.f32 %v7132, %v7235
        %v7287 = vadd.f32 %v7133, %v7239
        %v7288 = vadd.f32 %v7134, %v7241
        %v7289 = vadd.f32 %v7135, %v7240
        %v7290 = vld [vmem:[#allocation6 + $0x2d] sm:$0x1]
        %v7291 = vperm.slane %v7290, 0
        %v7292 = vmul.f32 %v6909, %v7291
        %v7293 = vmul.f32 %v7144, %v7291
        %v7294 = vmul.f32 %v6912, %v7291
        %v7295 = vmul.f32 %v7145, %v7291
        %v7296 = vmul.f32 %v6915, %v7291
        %v7297 = vmul.f32 %v7146, %v7291
        %v7298 = vmul.f32 %v6918, %v7291
        %v7299 = vmul.f32 %v7147, %v7291
        %v7300 = vmul.f32 %v6921, %v7291
        %v7301 = vmul.f32 %v7148, %v7291
        %v7302 = vmul.f32 %v6924, %v7291
        %v7303 = vmul.f32 %v7149, %v7291
        %v7304 = vmul.f32 %v6927, %v7291
        %v7305 = vmul.f32 %v7150, %v7291
        %v7306 = vmul.f32 %v6930, %v7291
        %v7307 = vmul.f32 %v7151, %v7291
        %v7324 = vrot.slane %v7292, 3
        %v7325 = vrot.slane %v7293, 3
        %v7326 = vsel %vm1452, %v7324, %v7325
        %v7327 = vrot.slane %v7294, 3
        %v7328 = vrot.slane %v7295, 3
        %v7329 = vsel %vm1452, %v7327, %v7328
        %v7330 = vrot.slane %v7296, 3
        %v7331 = vrot.slane %v7297, 3
        %v7332 = vsel %vm1452, %v7330, %v7331
        %v7333 = vrot.slane %v7298, 3
        %v7334 = vrot.slane %v7299, 3
        %v7335 = vsel %vm1452, %v7333, %v7334
        %v7336 = vrot.slane %v7300, 3
        %v7337 = vrot.slane %v7301, 3
        %v7338 = vsel %vm1452, %v7336, %v7337
        %v7339 = vrot.slane %v7302, 3
        %v7340 = vrot.slane %v7303, 3
        %v7341 = vsel %vm1452, %v7339, %v7340
        %v7342 = vrot.slane %v7304, 3
        %v7343 = vrot.slane %v7305, 3
        %v7344 = vsel %vm1452, %v7342, %v7343
        %v7345 = vrot.slane %v7306, 3
        %v7346 = vrot.slane %v7307, 3
        %v7347 = vsel %vm1452, %v7345, %v7346
        %v7372 = vadd.f32 %v7266, %v7324
        %v7373 = vadd.f32 %v7267, %v7326
        %v7374 = vadd.f32 %v7268, %v7325
        %v7375 = vadd.f32 %v7269, %v7327
        %v7376 = vadd.f32 %v7270, %v7329
        %v7377 = vadd.f32 %v7271, %v7328
        %v7378 = vadd.f32 %v7272, %v7330
        %v7379 = vadd.f32 %v7273, %v7332
        %v7380 = vadd.f32 %v7274, %v7331
        %v7381 = vadd.f32 %v7275, %v7333
        %v7382 = vadd.f32 %v7276, %v7335
        %v7383 = vadd.f32 %v7277, %v7334
        %v7384 = vadd.f32 %v7278, %v7336
        %v7385 = vadd.f32 %v7279, %v7338
        %v7386 = vadd.f32 %v7280, %v7337
        %v7387 = vadd.f32 %v7281, %v7339
        %v7388 = vadd.f32 %v7282, %v7341
        %v7389 = vadd.f32 %v7283, %v7340
        %v7390 = vadd.f32 %v7284, %v7342
        %v7391 = vadd.f32 %v7285, %v7344
        %v7392 = vadd.f32 %v7286, %v7343
        %v7393 = vadd.f32 %v7287, %v7345
        %v7394 = vadd.f32 %v7288, %v7347
        %v7395 = vadd.f32 %v7289, %v7346
        %v7396 = vld [vmem:[%s6883 + $0xc] sm:$0x1]
        %v7397 = vld [vmem:[%s6883 + $0x1c] sm:$0x1]
        %v7398 = vld [vmem:[%s6883 + $0x2c] sm:$0x1]
        %v7399 = vld [vmem:[%s6883 + $0x3c] sm:$0x1]
        %v7400 = vld [vmem:[%s6883 + $0x4c] sm:$0x1]
        %v7401 = vld [vmem:[%s6883 + $0x5c] sm:$0x1]
        %v7402 = vld [vmem:[%s6883 + $0x6c] sm:$0x1]
        %v7403 = vld [vmem:[%s6883 + $0x7c] sm:$0x1]
        %v7404 = vunpack.c.l.bf16 %v7396
        %v7405 = vunpack.c.l.bf16 %v7397
        %v7406 = vunpack.c.l.bf16 %v7398
        %v7407 = vunpack.c.l.bf16 %v7399
        %v7408 = vunpack.c.l.bf16 %v7400
        %v7409 = vunpack.c.l.bf16 %v7401
        %v7410 = vunpack.c.l.bf16 %v7402
        %v7411 = vunpack.c.l.bf16 %v7403
        %v7412 = vld [vmem:[#allocation6 + $0x2e] sm:$0x1]
        %v7413 = vperm.slane %v7412, 0
        %v7414 = vmul.f32 %v6909, %v7413
        %v7415 = vmul.f32 %v7144, %v7413
        %v7416 = vmul.f32 %v7404, %v7413
        %v7417 = vmul.f32 %v6912, %v7413
        %v7418 = vmul.f32 %v7145, %v7413
        %v7419 = vmul.f32 %v7405, %v7413
        %v7420 = vmul.f32 %v6915, %v7413
        %v7421 = vmul.f32 %v7146, %v7413
        %v7422 = vmul.f32 %v7406, %v7413
        %v7423 = vmul.f32 %v6918, %v7413
        %v7424 = vmul.f32 %v7147, %v7413
        %v7425 = vmul.f32 %v7407, %v7413
        %v7426 = vmul.f32 %v6921, %v7413
        %v7427 = vmul.f32 %v7148, %v7413
        %v7428 = vmul.f32 %v7408, %v7413
        %v7429 = vmul.f32 %v6924, %v7413
        %v7430 = vmul.f32 %v7149, %v7413
        %v7431 = vmul.f32 %v7409, %v7413
        %v7432 = vmul.f32 %v6927, %v7413
        %v7433 = vmul.f32 %v7150, %v7413
        %v7434 = vmul.f32 %v7410, %v7413
        %v7435 = vmul.f32 %v6930, %v7413
        %v7436 = vmul.f32 %v7151, %v7413
        %v7437 = vmul.f32 %v7411, %v7413
        %v7462 = vrot.slane %v7414, 4
        %v7463 = vrot.slane %v7415, 4
        %v7464 = vsel %vm1591, %v7462, %v7463
        %v7465 = vrot.slane %v7416, 4
        %v7466 = vsel %vm1591, %v7463, %v7465
        %v7467 = vrot.slane %v7417, 4
        %v7468 = vrot.slane %v7418, 4
        %v7469 = vsel %vm1591, %v7467, %v7468
        %v7470 = vrot.slane %v7419, 4
        %v7471 = vsel %vm1591, %v7468, %v7470
        %v7472 = vrot.slane %v7420, 4
        %v7473 = vrot.slane %v7421, 4
        %v7474 = vsel %vm1591, %v7472, %v7473
        %v7475 = vrot.slane %v7422, 4
        %v7476 = vsel %vm1591, %v7473, %v7475
        %v7477 = vrot.slane %v7423, 4
        %v7478 = vrot.slane %v7424, 4
        %v7479 = vsel %vm1591, %v7477, %v7478
        %v7480 = vrot.slane %v7425, 4
        %v7481 = vsel %vm1591, %v7478, %v7480
        %v7482 = vrot.slane %v7426, 4
        %v7483 = vrot.slane %v7427, 4
        %v7484 = vsel %vm1591, %v7482, %v7483
        %v7485 = vrot.slane %v7428, 4
        %v7486 = vsel %vm1591, %v7483, %v7485
        %v7487 = vrot.slane %v7429, 4
        %v7488 = vrot.slane %v7430, 4
        %v7489 = vsel %vm1591, %v7487, %v7488
        %v7490 = vrot.slane %v7431, 4
        %v7491 = vsel %vm1591, %v7488, %v7490
        %v7492 = vrot.slane %v7432, 4
        %v7493 = vrot.slane %v7433, 4
        %v7494 = vsel %vm1591, %v7492, %v7493
        %v7495 = vrot.slane %v7434, 4
        %v7496 = vsel %vm1591, %v7493, %v7495
        %v7497 = vrot.slane %v7435, 4
        %v7498 = vrot.slane %v7436, 4
        %v7499 = vsel %vm1591, %v7497, %v7498
        %v7500 = vrot.slane %v7437, 4
        %v7501 = vsel %vm1591, %v7498, %v7500
        %v7526 = vadd.f32 %v7372, %v7462
        %v7527 = vadd.f32 %v7373, %v7464
        %v7528 = vadd.f32 %v7374, %v7466
        %v7529 = vadd.f32 %v7375, %v7467
        %v7530 = vadd.f32 %v7376, %v7469
        %v7531 = vadd.f32 %v7377, %v7471
        %v7532 = vadd.f32 %v7378, %v7472
        %v7533 = vadd.f32 %v7379, %v7474
        %v7534 = vadd.f32 %v7380, %v7476
        %v7535 = vadd.f32 %v7381, %v7477
        %v7536 = vadd.f32 %v7382, %v7479
        %v7537 = vadd.f32 %v7383, %v7481
        %v7538 = vadd.f32 %v7384, %v7482
        %v7539 = vadd.f32 %v7385, %v7484
        %v7540 = vadd.f32 %v7386, %v7486
        %v7541 = vadd.f32 %v7387, %v7487
        %v7542 = vadd.f32 %v7388, %v7489
        %v7543 = vadd.f32 %v7389, %v7491
        %v7544 = vadd.f32 %v7390, %v7492
        %v7545 = vadd.f32 %v7391, %v7494
        %v7546 = vadd.f32 %v7392, %v7496
        %v7547 = vadd.f32 %v7393, %v7497
        %v7548 = vadd.f32 %v7394, %v7499
        %v7549 = vadd.f32 %v7395, %v7501
        %v7550 = vld [vmem:[%s6883 + $0x4] sm:$0xe]
        %v7551 = vld [vmem:[%s6883 + $0x14] sm:$0xe]
        %v7552 = vld [vmem:[%s6883 + $0x24] sm:$0xe]
        %v7553 = vld [vmem:[%s6883 + $0x34] sm:$0xe]
        %v7554 = vld [vmem:[%s6883 + $0x44] sm:$0xe]
        %v7555 = vld [vmem:[%s6883 + $0x54] sm:$0xe]
        %v7556 = vld [vmem:[%s6883 + $0x64] sm:$0xe]
        %v7557 = vld [vmem:[%s6883 + $0x74] sm:$0xe]
        %v7558 = vunpack.c.l.bf16 %v7550
        %v7559 = vunpack.c.l.bf16 %v7551
        %v7560 = vunpack.c.l.bf16 %v7552
        %v7561 = vunpack.c.l.bf16 %v7553
        %v7562 = vunpack.c.l.bf16 %v7554
        %v7563 = vunpack.c.l.bf16 %v7555
        %v7564 = vunpack.c.l.bf16 %v7556
        %v7565 = vunpack.c.l.bf16 %v7557
        %v7566 = vld [vmem:[#allocation6 + $0x2f] sm:$0x1]
        %v7567 = vperm.slane %v7566, 0
        %v7568 = vmul.f32 %v7558, %v7567
        %v7569 = vmul.f32 %v7144, %v7567
        %v7570 = vmul.f32 %v7404, %v7567
        %v7571 = vmul.f32 %v7559, %v7567
        %v7572 = vmul.f32 %v7145, %v7567
        %v7573 = vmul.f32 %v7405, %v7567
        %v7574 = vmul.f32 %v7560, %v7567
        %v7575 = vmul.f32 %v7146, %v7567
        %v7576 = vmul.f32 %v7406, %v7567
        %v7577 = vmul.f32 %v7561, %v7567
        %v7578 = vmul.f32 %v7147, %v7567
        %v7579 = vmul.f32 %v7407, %v7567
        %v7580 = vmul.f32 %v7562, %v7567
        %v7581 = vmul.f32 %v7148, %v7567
        %v7582 = vmul.f32 %v7408, %v7567
        %v7583 = vmul.f32 %v7563, %v7567
        %v7584 = vmul.f32 %v7149, %v7567
        %v7585 = vmul.f32 %v7409, %v7567
        %v7586 = vmul.f32 %v7564, %v7567
        %v7587 = vmul.f32 %v7150, %v7567
        %v7588 = vmul.f32 %v7410, %v7567
        %v7589 = vmul.f32 %v7565, %v7567
        %v7590 = vmul.f32 %v7151, %v7567
        %v7591 = vmul.f32 %v7411, %v7567
        %v7616 = vrot.slane %v7568, 5
        %v7617 = vrot.slane %v7569, 5
        %v7618 = vsel %vm1746, %v7616, %v7617
        %v7619 = vrot.slane %v7570, 5
        %v7620 = vsel %vm1746, %v7617, %v7619
        %v7621 = vrot.slane %v7571, 5
        %v7622 = vrot.slane %v7572, 5
        %v7623 = vsel %vm1746, %v7621, %v7622
        %v7624 = vrot.slane %v7573, 5
        %v7625 = vsel %vm1746, %v7622, %v7624
        %v7626 = vrot.slane %v7574, 5
        %v7627 = vrot.slane %v7575, 5
        %v7628 = vsel %vm1746, %v7626, %v7627
        %v7629 = vrot.slane %v7576, 5
        %v7630 = vsel %vm1746, %v7627, %v7629
        %v7631 = vrot.slane %v7577, 5
        %v7632 = vrot.slane %v7578, 5
        %v7633 = vsel %vm1746, %v7631, %v7632
        %v7634 = vrot.slane %v7579, 5
        %v7635 = vsel %vm1746, %v7632, %v7634
        %v7636 = vrot.slane %v7580, 5
        %v7637 = vrot.slane %v7581, 5
        %v7638 = vsel %vm1746, %v7636, %v7637
        %v7639 = vrot.slane %v7582, 5
        %v7640 = vsel %vm1746, %v7637, %v7639
        %v7641 = vrot.slane %v7583, 5
        %v7642 = vrot.slane %v7584, 5
        %v7643 = vsel %vm1746, %v7641, %v7642
        %v7644 = vrot.slane %v7585, 5
        %v7645 = vsel %vm1746, %v7642, %v7644
        %v7646 = vrot.slane %v7586, 5
        %v7647 = vrot.slane %v7587, 5
        %v7648 = vsel %vm1746, %v7646, %v7647
        %v7649 = vrot.slane %v7588, 5
        %v7650 = vsel %vm1746, %v7647, %v7649
        %v7651 = vrot.slane %v7589, 5
        %v7652 = vrot.slane %v7590, 5
        %v7653 = vsel %vm1746, %v7651, %v7652
        %v7654 = vrot.slane %v7591, 5
        %v7655 = vsel %vm1746, %v7652, %v7654
        %v7680 = vadd.f32 %v7526, %v7616
        %v7681 = vadd.f32 %v7527, %v7618
        %v7682 = vadd.f32 %v7528, %v7620
        %v7683 = vadd.f32 %v7529, %v7621
        %v7684 = vadd.f32 %v7530, %v7623
        %v7685 = vadd.f32 %v7531, %v7625
        %v7686 = vadd.f32 %v7532, %v7626
        %v7687 = vadd.f32 %v7533, %v7628
        %v7688 = vadd.f32 %v7534, %v7630
        %v7689 = vadd.f32 %v7535, %v7631
        %v7690 = vadd.f32 %v7536, %v7633
        %v7691 = vadd.f32 %v7537, %v7635
        %v7692 = vadd.f32 %v7538, %v7636
        %v7693 = vadd.f32 %v7539, %v7638
        %v7694 = vadd.f32 %v7540, %v7640
        %v7695 = vadd.f32 %v7541, %v7641
        %v7696 = vadd.f32 %v7542, %v7643
        %v7697 = vadd.f32 %v7543, %v7645
        %v7698 = vadd.f32 %v7544, %v7646
        %v7699 = vadd.f32 %v7545, %v7648
        %v7700 = vadd.f32 %v7546, %v7650
        %v7701 = vadd.f32 %v7547, %v7651
        %v7702 = vadd.f32 %v7548, %v7653
        %v7703 = vadd.f32 %v7549, %v7655
        %v7704 = vld [vmem:[%s6883 + $0xc] sm:$0x3]
        %v7705 = vld [vmem:[%s6883 + $0x1c] sm:$0x3]
        %v7706 = vld [vmem:[%s6883 + $0x2c] sm:$0x3]
        %v7707 = vld [vmem:[%s6883 + $0x3c] sm:$0x3]
        %v7708 = vld [vmem:[%s6883 + $0x4c] sm:$0x3]
        %v7709 = vld [vmem:[%s6883 + $0x5c] sm:$0x3]
        %v7710 = vld [vmem:[%s6883 + $0x6c] sm:$0x3]
        %v7711 = vld [vmem:[%s6883 + $0x7c] sm:$0x3]
        %v7712 = vunpack.c.l.bf16 %v7704
        %v7713 = vunpack.c.l.bf16 %v7705
        %v7714 = vunpack.c.l.bf16 %v7706
        %v7715 = vunpack.c.l.bf16 %v7707
        %v7716 = vunpack.c.l.bf16 %v7708
        %v7717 = vunpack.c.l.bf16 %v7709
        %v7718 = vunpack.c.l.bf16 %v7710
        %v7719 = vunpack.c.l.bf16 %v7711
        %v7720 = vld [vmem:[#allocation6 + $0x30] sm:$0x1]
        %v7721 = vperm.slane %v7720, 0
        %v7722 = vmul.f32 %v7558, %v7721
        %v7723 = vmul.f32 %v7144, %v7721
        %v7724 = vmul.f32 %v7712, %v7721
        %v7725 = vmul.f32 %v7559, %v7721
        %v7726 = vmul.f32 %v7145, %v7721
        %v7727 = vmul.f32 %v7713, %v7721
        %v7728 = vmul.f32 %v7560, %v7721
        %v7729 = vmul.f32 %v7146, %v7721
        %v7730 = vmul.f32 %v7714, %v7721
        %v7731 = vmul.f32 %v7561, %v7721
        %v7732 = vmul.f32 %v7147, %v7721
        %v7733 = vmul.f32 %v7715, %v7721
        %v7734 = vmul.f32 %v7562, %v7721
        %v7735 = vmul.f32 %v7148, %v7721
        %v7736 = vmul.f32 %v7716, %v7721
        %v7737 = vmul.f32 %v7563, %v7721
        %v7738 = vmul.f32 %v7149, %v7721
        %v7739 = vmul.f32 %v7717, %v7721
        %v7740 = vmul.f32 %v7564, %v7721
        %v7741 = vmul.f32 %v7150, %v7721
        %v7742 = vmul.f32 %v7718, %v7721
        %v7743 = vmul.f32 %v7565, %v7721
        %v7744 = vmul.f32 %v7151, %v7721
        %v7745 = vmul.f32 %v7719, %v7721
        %v7770 = vrot.slane %v7722, 6
        %v7771 = vrot.slane %v7723, 6
        %v7772 = vsel %vm1901, %v7770, %v7771
        %v7773 = vrot.slane %v7724, 6
        %v7774 = vsel %vm1901, %v7771, %v7773
        %v7775 = vrot.slane %v7725, 6
        %v7776 = vrot.slane %v7726, 6
        %v7777 = vsel %vm1901, %v7775, %v7776
        %v7778 = vrot.slane %v7727, 6
        %v7779 = vsel %vm1901, %v7776, %v7778
        %v7780 = vrot.slane %v7728, 6
        %v7781 = vrot.slane %v7729, 6
        %v7782 = vsel %vm1901, %v7780, %v7781
        %v7783 = vrot.slane %v7730, 6
        %v7784 = vsel %vm1901, %v7781, %v7783
        %v7785 = vrot.slane %v7731, 6
        %v7786 = vrot.slane %v7732, 6
        %v7787 = vsel %vm1901, %v7785, %v7786
        %v7788 = vrot.slane %v7733, 6
        %v7789 = vsel %vm1901, %v7786, %v7788
        %v7790 = vrot.slane %v7734, 6
        %v7791 = vrot.slane %v7735, 6
        %v7792 = vsel %vm1901, %v7790, %v7791
        %v7793 = vrot.slane %v7736, 6
        %v7794 = vsel %vm1901, %v7791, %v7793
        %v7795 = vrot.slane %v7737, 6
        %v7796 = vrot.slane %v7738, 6
        %v7797 = vsel %vm1901, %v7795, %v7796
        %v7798 = vrot.slane %v7739, 6
        %v7799 = vsel %vm1901, %v7796, %v7798
        %v7800 = vrot.slane %v7740, 6
        %v7801 = vrot.slane %v7741, 6
        %v7802 = vsel %vm1901, %v7800, %v7801
        %v7803 = vrot.slane %v7742, 6
        %v7804 = vsel %vm1901, %v7801, %v7803
        %v7805 = vrot.slane %v7743, 6
        %v7806 = vrot.slane %v7744, 6
        %v7807 = vsel %vm1901, %v7805, %v7806
        %v7808 = vrot.slane %v7745, 6
        %v7809 = vsel %vm1901, %v7806, %v7808
        %v7834 = vadd.f32 %v7680, %v7770
        %v7835 = vadd.f32 %v7681, %v7772
        %v7836 = vadd.f32 %v7682, %v7774
        %v7837 = vadd.f32 %v7683, %v7775
        %v7838 = vadd.f32 %v7684, %v7777
        %v7839 = vadd.f32 %v7685, %v7779
        %v7840 = vadd.f32 %v7686, %v7780
        %v7841 = vadd.f32 %v7687, %v7782
        %v7842 = vadd.f32 %v7688, %v7784
        %v7843 = vadd.f32 %v7689, %v7785
        %v7844 = vadd.f32 %v7690, %v7787
        %v7845 = vadd.f32 %v7691, %v7789
        %v7846 = vadd.f32 %v7692, %v7790
        %v7847 = vadd.f32 %v7693, %v7792
        %v7848 = vadd.f32 %v7694, %v7794
        %v7849 = vadd.f32 %v7695, %v7795
        %v7850 = vadd.f32 %v7696, %v7797
        %v7851 = vadd.f32 %v7697, %v7799
        %v7852 = vadd.f32 %v7698, %v7800
        %v7853 = vadd.f32 %v7699, %v7802
        %v7854 = vadd.f32 %v7700, %v7804
        %v7855 = vadd.f32 %v7701, %v7805
        %v7856 = vadd.f32 %v7702, %v7807
        %v7857 = vadd.f32 %v7703, %v7809
        %v7858 = vld [vmem:[%s6] sm:$0x1]
        %v7860 = vperm.slane %v7858, 0
        %v7862 = vadd.f32 %v7834, %v7860
        %v7863 = vadd.f32 %v7835, %v7860
        %v7864 = vadd.f32 %v7836, %v7860
        %v7865 = vadd.f32 %v7837, %v7860
        %v7866 = vadd.f32 %v7838, %v7860
        %v7867 = vadd.f32 %v7839, %v7860
        %v7868 = vadd.f32 %v7840, %v7860
        %v7869 = vadd.f32 %v7841, %v7860
        %v7870 = vadd.f32 %v7842, %v7860
        %v7871 = vadd.f32 %v7843, %v7860
        %v7872 = vadd.f32 %v7844, %v7860
        %v7873 = vadd.f32 %v7845, %v7860
        %v7874 = vadd.f32 %v7846, %v7860
        %v7875 = vadd.f32 %v7847, %v7860
        %v7876 = vadd.f32 %v7848, %v7860
        %v7877 = vadd.f32 %v7849, %v7860
        %v7878 = vadd.f32 %v7850, %v7860
        %v7879 = vadd.f32 %v7851, %v7860
        %v7880 = vadd.f32 %v7852, %v7860
        %v7881 = vadd.f32 %v7853, %v7860
        %v7882 = vadd.f32 %v7854, %v7860
        %v7883 = vadd.f32 %v7855, %v7860
        %v7884 = vadd.f32 %v7856, %v7860
        %v7885 = vadd.f32 %v7857, %v7860
        %v7886 = vpack.c.bf16 %v7862, %v7862
        %v7887 = vpack.c.bf16 %v7863, %v7863
        %v7888 = vpack.c.bf16 %v7864, %v7864
        %v7889 = vpack.c.bf16 %v7865, %v7865
        %v7890 = vpack.c.bf16 %v7866, %v7866
        %v7891 = vpack.c.bf16 %v7867, %v7867
        %v7892 = vpack.c.bf16 %v7868, %v7868
        %v7893 = vpack.c.bf16 %v7869, %v7869
        %v7894 = vpack.c.bf16 %v7870, %v7870
        %v7895 = vpack.c.bf16 %v7871, %v7871
        %v7896 = vpack.c.bf16 %v7872, %v7872
        %v7897 = vpack.c.bf16 %v7873, %v7873
        %v7898 = vpack.c.bf16 %v7874, %v7874
        %v7899 = vpack.c.bf16 %v7875, %v7875
        %v7900 = vpack.c.bf16 %v7876, %v7876
        %v7901 = vpack.c.bf16 %v7877, %v7877
        %v7902 = vpack.c.bf16 %v7878, %v7878
        %v7903 = vpack.c.bf16 %v7879, %v7879
        %v7904 = vpack.c.bf16 %v7880, %v7880
        %v7905 = vpack.c.bf16 %v7881, %v7881
        %v7906 = vpack.c.bf16 %v7882, %v7882
        %v7907 = vpack.c.bf16 %v7883, %v7883
        %v7908 = vpack.c.bf16 %v7884, %v7884
        %v7909 = vpack.c.bf16 %v7885, %v7885
        %vm7910 = vsmask.f32 1280
        %vm7911 = vsmask.f32 5392
        %vm7912 = vmor %vm7910, %vm7911
        %v7914 = vshrl.u32 %v7886, 16
        %v7916 = vrot.slane %v7914, 6
        %v7917 = vshll.u32 %v7886, 16
        %v7919 = vrot.slane %v7917, 7
        %v7920 = vor.u32 %v7916, %v7919
        %v7921 = vrot.slane %v7920, 4
        %v7923 = vshrl.u32 %v7887, 16
        %v7925 = vrot.slane %v7923, 6
        %v7926 = vshll.u32 %v7887, 16
        %v7928 = vrot.slane %v7926, 7
        %v7929 = vor.u32 %v7925, %v7928
        %v7930 = vsel %vm7912, %v7921, %v7929
        %v7931 = vrot.slane %v7929, 4
        %v7933 = vshrl.u32 %v7888, 16
        %v7935 = vrot.slane %v7933, 6
        %v7936 = vshll.u32 %v7888, 16
        %v7938 = vrot.slane %v7936, 7
        %v7939 = vor.u32 %v7935, %v7938
        %v7940 = vsel %vm7912, %v7931, %v7939
        %v7942 = vshrl.u32 %v7889, 16
        %v7944 = vrot.slane %v7942, 6
        %v7945 = vshll.u32 %v7889, 16
        %v7947 = vrot.slane %v7945, 7
        %v7948 = vor.u32 %v7944, %v7947
        %v7949 = vrot.slane %v7948, 4
        %v7951 = vshrl.u32 %v7890, 16
        %v7953 = vrot.slane %v7951, 6
        %v7954 = vshll.u32 %v7890, 16
        %v7956 = vrot.slane %v7954, 7
        %v7957 = vor.u32 %v7953, %v7956
        %v7958 = vsel %vm7912, %v7949, %v7957
        %v7959 = vrot.slane %v7957, 4
        %v7961 = vshrl.u32 %v7891, 16
        %v7963 = vrot.slane %v7961, 6
        %v7964 = vshll.u32 %v7891, 16
        %v7966 = vrot.slane %v7964, 7
        %v7967 = vor.u32 %v7963, %v7966
        %v7968 = vsel %vm7912, %v7959, %v7967
        %v7970 = vshrl.u32 %v7892, 16
        %v7972 = vrot.slane %v7970, 6
        %v7973 = vshll.u32 %v7892, 16
        %v7975 = vrot.slane %v7973, 7
        %v7976 = vor.u32 %v7972, %v7975
        %v7977 = vrot.slane %v7976, 4
        %v7979 = vshrl.u32 %v7893, 16
        %v7981 = vrot.slane %v7979, 6
        %v7982 = vshll.u32 %v7893, 16
        %v7984 = vrot.slane %v7982, 7
        %v7985 = vor.u32 %v7981, %v7984
        %v7986 = vsel %vm7912, %v7977, %v7985
        %v7987 = vrot.slane %v7985, 4
        %v7989 = vshrl.u32 %v7894, 16
        %v7991 = vrot.slane %v7989, 6
        %v7992 = vshll.u32 %v7894, 16
        %v7994 = vrot.slane %v7992, 7
        %v7995 = vor.u32 %v7991, %v7994
        %v7996 = vsel %vm7912, %v7987, %v7995
        %v7998 = vshrl.u32 %v7895, 16
        %v8000 = vrot.slane %v7998, 6
        %v8001 = vshll.u32 %v7895, 16
        %v8003 = vrot.slane %v8001, 7
        %v8004 = vor.u32 %v8000, %v8003
        %v8005 = vrot.slane %v8004, 4
        %v8007 = vshrl.u32 %v7896, 16
        %v8009 = vrot.slane %v8007, 6
        %v8010 = vshll.u32 %v7896, 16
        %v8012 = vrot.slane %v8010, 7
        %v8013 = vor.u32 %v8009, %v8012
        %v8014 = vsel %vm7912, %v8005, %v8013
        %v8015 = vrot.slane %v8013, 4
        %v8017 = vshrl.u32 %v7897, 16
        %v8019 = vrot.slane %v8017, 6
        %v8020 = vshll.u32 %v7897, 16
        %v8022 = vrot.slane %v8020, 7
        %v8023 = vor.u32 %v8019, %v8022
        %v8024 = vsel %vm7912, %v8015, %v8023
        %v8026 = vshrl.u32 %v7898, 16
        %v8028 = vrot.slane %v8026, 6
        %v8029 = vshll.u32 %v7898, 16
        %v8031 = vrot.slane %v8029, 7
        %v8032 = vor.u32 %v8028, %v8031
        %v8033 = vrot.slane %v8032, 4
        %v8035 = vshrl.u32 %v7899, 16
        %v8037 = vrot.slane %v8035, 6
        %v8038 = vshll.u32 %v7899, 16
        %v8040 = vrot.slane %v8038, 7
        %v8041 = vor.u32 %v8037, %v8040
        %v8042 = vsel %vm7912, %v8033, %v8041
        %v8043 = vrot.slane %v8041, 4
        %v8045 = vshrl.u32 %v7900, 16
        %v8047 = vrot.slane %v8045, 6
        %v8048 = vshll.u32 %v7900, 16
        %v8050 = vrot.slane %v8048, 7
        %v8051 = vor.u32 %v8047, %v8050
        %v8052 = vsel %vm7912, %v8043, %v8051
        %v8054 = vshrl.u32 %v7901, 16
        %v8056 = vrot.slane %v8054, 6
        %v8057 = vshll.u32 %v7901, 16
        %v8059 = vrot.slane %v8057, 7
        %v8060 = vor.u32 %v8056, %v8059
        %v8061 = vrot.slane %v8060, 4
        %v8063 = vshrl.u32 %v7902, 16
        %v8065 = vrot.slane %v8063, 6
        %v8066 = vshll.u32 %v7902, 16
        %v8068 = vrot.slane %v8066, 7
        %v8069 = vor.u32 %v8065, %v8068
        %v8070 = vsel %vm7912, %v8061, %v8069
        %v8071 = vrot.slane %v8069, 4
        %v8073 = vshrl.u32 %v7903, 16
        %v8075 = vrot.slane %v8073, 6
        %v8076 = vshll.u32 %v7903, 16
        %v8078 = vrot.slane %v8076, 7
        %v8079 = vor.u32 %v8075, %v8078
        %v8080 = vsel %vm7912, %v8071, %v8079
        %v8082 = vshrl.u32 %v7904, 16
        %v8084 = vrot.slane %v8082, 6
        %v8085 = vshll.u32 %v7904, 16
        %v8087 = vrot.slane %v8085, 7
        %v8088 = vor.u32 %v8084, %v8087
        %v8089 = vrot.slane %v8088, 4
        %v8091 = vshrl.u32 %v7905, 16
        %v8093 = vrot.slane %v8091, 6
        %v8094 = vshll.u32 %v7905, 16
        %v8096 = vrot.slane %v8094, 7
        %v8097 = vor.u32 %v8093, %v8096
        %v8098 = vsel %vm7912, %v8089, %v8097
        %v8099 = vrot.slane %v8097, 4
        %v8101 = vshrl.u32 %v7906, 16
        %v8103 = vrot.slane %v8101, 6
        %v8104 = vshll.u32 %v7906, 16
        %v8106 = vrot.slane %v8104, 7
        %v8107 = vor.u32 %v8103, %v8106
        %v8108 = vsel %vm7912, %v8099, %v8107
        %v8110 = vshrl.u32 %v7907, 16
        %v8112 = vrot.slane %v8110, 6
        %v8113 = vshll.u32 %v7907, 16
        %v8115 = vrot.slane %v8113, 7
        %v8116 = vor.u32 %v8112, %v8115
        %v8117 = vrot.slane %v8116, 4
        %v8119 = vshrl.u32 %v7908, 16
        %v8121 = vrot.slane %v8119, 6
        %v8122 = vshll.u32 %v7908, 16
        %v8124 = vrot.slane %v8122, 7
        %v8125 = vor.u32 %v8121, %v8124
        %v8126 = vsel %vm7912, %v8117, %v8125
        %v8127 = vrot.slane %v8125, 4
        %v8129 = vshrl.u32 %v7909, 16
        %v8131 = vrot.slane %v8129, 6
        %v8132 = vshll.u32 %v7909, 16
        %v8134 = vrot.slane %v8132, 7
        %v8135 = vor.u32 %v8131, %v8134
        %v8136 = vsel %vm7912, %v8127, %v8135
        %vm8153 = vcmask 502784
        %8154 = vst.msk [vmem:[%s364] sm:$0xf] %vm8153, %v7930
        %8155 = vst.msk [vmem:[%s364 + $0x4] sm:$0xf] %vm8153, %v7940
        %8156 = vst.msk [vmem:[%s364 + $0x8] sm:$0xf] %vm8153, %v7958
        %8157 = vst.msk [vmem:[%s364 + $0xc] sm:$0xf] %vm8153, %v7968
        %8158 = vst.msk [vmem:[%s364 + $0x10] sm:$0xf] %vm8153, %v7986
        %8159 = vst.msk [vmem:[%s364 + $0x14] sm:$0xf] %vm8153, %v7996
        %8160 = vst.msk [vmem:[%s364 + $0x18] sm:$0xf] %vm8153, %v8014
        %8161 = vst.msk [vmem:[%s364 + $0x1c] sm:$0xf] %vm8153, %v8024
        %8162 = vst.msk [vmem:[%s364 + $0x20] sm:$0xf] %vm8153, %v8042
        %8163 = vst.msk [vmem:[%s364 + $0x24] sm:$0xf] %vm8153, %v8052
        %8164 = vst.msk [vmem:[%s364 + $0x28] sm:$0xf] %vm8153, %v8070
        %8165 = vst.msk [vmem:[%s364 + $0x2c] sm:$0xf] %vm8153, %v8080
        %8166 = vst.msk [vmem:[%s364 + $0x30] sm:$0xf] %vm8153, %v8098
        %8167 = vst.msk [vmem:[%s364 + $0x34] sm:$0xf] %vm8153, %v8108
        %8168 = vst.msk [vmem:[%s364 + $0x38] sm:$0xf] %vm8153, %v8126
        %8169 = vst.msk [vmem:[%s364 + $0x3c] sm:$0xf] %vm8153, %v8136
        %p8170 = scmp.lt.s32.totalorder %s31, 1
        %s8171 = scalar_select %p8170, %s31, 1
        %s8172 = smul.addr %s8171, 32
        %s8173 = smul.addr %s8172, 4
        %s8174 = scalar_lea.vmem %s7, %s8173
        %s8175 = sand.u32 %s227, 1
        %s8176 = scalar_lea.sflag [#allocation5], %s8175
        %s8177 = sand.u32 %s227, 1
        %s8178 = smul.addr %s8177, 64
        %s8179 = scalar_lea.vmem [#allocation8], %s8178
        // Predicated region
        $region61: #{tpu_custom_call.1} parent=47 // pred_check
          %p8180 = pneg %p209
        $region62: #{tpu_custom_call.1} parent=47 // pred_check_branch
          %8182 = sbr.rel (%p8180) target = $region64
        $region63: #{tpu_custom_call.1} parent=47 // pred_region
          _
        $region64: #{tpu_custom_call.1} parent=47 // pred_fallthru
          _
        // Predicated region
        $region65: #{tpu_custom_call.1} parent=47 // pred_check
          %p8183 = pneg %p237
        $region66: #{tpu_custom_call.1} parent=47 // pred_check_branch
          %8185 = sbr.rel (%p8183) target = $region68
        $region67: #{tpu_custom_call.1} parent=47 // pred_region
          %s8186 = smul.u32 8, %s32
          %8188 = vsyncadd %s8176, 0
          %s8189 = smul.addr %s8186, 2
          %s8190 = smul.addr %s31, 32
          %s8191 = sadd.s32 %s8189, %s8190
          %s8192 = smul.addr %s8191, 4
          %s8193 = scalar_lea.hbm %s8, %s8192
          %s8194 = sshll.u32 %s8179, 4
          %s8195 = int_to_ptr.vmem [resolvable:$true] %s8194
          %s8196 = sshll.u32 %s8193, 4
          %s8197 = int_to_ptr.hbm [resolvable:$true] %s8196
          %8202 = dma.vmem_to_hbm [thread:$0]  %s8195, 1024, %s8197, %s8176, 64, 64, 4
        $region68: #{tpu_custom_call.1} parent=47 // pred_fallthru
          _
      $region48: #{tpu_custom_call.1} parent=5 // pred_fallthru
        _
      %p8203 = scmp.le.s32.totalorder 2, %s22
      // Predicated region
      $region69: #{tpu_custom_call.1} parent=5 // pred_check
        %p8204 = pneg %p8203
      $region70: #{tpu_custom_call.1} parent=5 // pred_check_branch
        %8206 = sbr.rel (%p8204) target = $region72
      $region71: #{tpu_custom_call.1} parent=5 // pred_region
        %s8207 = ssub.s32 %s22, 2
        // Predicated region
        $region73: #{tpu_custom_call.1} parent=71 // pred_check
          %p8208 = pneg %p215
        $region74: #{tpu_custom_call.1} parent=71 // pred_check_branch
          %8210 = sbr.rel (%p8208) target = $region76
        $region75: #{tpu_custom_call.1} parent=71 // pred_region
          %p8211 = scmp.lt.s32.totalorder %s33, 1
          %s8212 = scalar_select %p8211, %s33, 1
          %s8213 = smul.addr %s8212, 32
          %s8214 = smul.addr %s8213, 4
          %s8215 = scalar_lea.vmem %s7, %s8214
        $region76: #{tpu_custom_call.1} parent=71 // pred_fallthru
          _
        // Predicated region
        $region77: #{tpu_custom_call.1} parent=71 // pred_check
          %p8216 = pneg %p243
        $region78: #{tpu_custom_call.1} parent=71 // pred_check_branch
          %8218 = sbr.rel (%p8216) target = $region80
        $region79: #{tpu_custom_call.1} parent=71 // pred_region
          %s8219 = sand.u32 %s228, 1
          %s8220 = scalar_lea.sflag [#allocation5], %s8219
          %s8221 = sand.u32 %s228, 1
          %s8222 = smul.addr %s8221, 64
          %s8223 = scalar_lea.vmem [#allocation8], %s8222
          %8225 = dma.done %s8220, 1024
        $region80: #{tpu_custom_call.1} parent=71 // pred_fallthru
          _
      $region72: #{tpu_custom_call.1} parent=5 // pred_fallthru
        _
    $region6: #{tpu_custom_call.1} parent=1 // loop_footer
      %s26 = sadd.s32 1, %s22
    $region7: #{tpu_custom_call.1} parent=1 // loop_footer_branch
      %21 = sbr.rel target = $region3
    $region8: #{tpu_custom_call.1} parent=1 // loop_exit
      _
    %8226 = vsyncpa [#allocation4], 1
    %s8227 = scalar_lea.sflag [#allocation4], 1
    %8228 = vsyncpa %s8227, 1
    %8229 = vsyncpa [#allocation7], 1
    %8230 = vsyncpa [#allocation5], 1
    %s8231 = scalar_lea.sflag [#allocation5], 1
    %8232 = vsyncpa %s8231, 1

</llo_original>
